<compile_context>
chip_gen: v7x
topology: tpu7x:2x2x1
jax: 0.10.0
libtpu: 0.0.40
codegen_flags: <defaults>
</compile_context>

<pallas_src>
import math

import jax
import jax.numpy as jnp
import numpy as np
from jax.experimental import pallas as pl
from jax.experimental.pallas import tpu as pltpu

DOWN_SAMPLE = 4
_VMEM_LIMIT = 48 * 1024 * 1024        # comfortably below v7x's 64 MiB physical VMEM
_ACT_VMEM_BUDGET = 28 * 1024 * 1024   # cap for the double-buffered per-step working set


# ----------------------------- fused Pallas kernel -----------------------------


def _fused_kernel(audio_ref, emb_ref, ch_ref, ft_ref, wir_ref, wif_ref,
                  tw_ref, tb_ref, mw_ref, mb_ref,
                  dp2w_ref, dp2b_ref, dp3w_ref, dp3b_ref,
                  w1_ref, b1_ref, w2_ref, b2_ref,
                  low_ref, high_ref):
    """One grid step = BB batch elements, both output streams.

    audio_ref: (BB*T/4, 4*512) bf16   WavEncoder output, 4 frames grouped along channels
    emb_ref:   (BB*T/4, 4*Dw)  bf16   word embeddings, same grouping (Dw padded to 384)
    ch_ref:    (BB, Th, 1536)  bf16   cached_audio_high
    ft_ref:    (BB, Tf, 512)   bf16   finetune_audio_high (unpadded; padding folded into wif)
    wir/wif:   (tar, Th)/(tar, Tf) bf16  align_corners=True interpolation matrices
    tw/tb:     text_encoder_body Linear(384->512)
    mw/mb:     mix_audio_text    Linear(1024->512)
    dp2/dp3:   audio_down_proj_2/3 Linear(768->512)
    w1/b1,w2/b2: audio_high_mapping Mlp(1536 -> H -> audio_f)
    low_ref:   (BB*T/4, 512) f32      audio_low  (flattened batch*time)
    high_ref:  (BB*tar, AF)  f32      audio_high (flattened batch*time)
    """
    f32 = jnp.float32
    bf16 = jnp.bfloat16

    # ------------- audio_low: pool first (exact), then Linears on T/4 rows -------------
    ca = mw_ref.shape[0] // 2          # 512
    dw = tw_ref.shape[0]               # 384 (padded word dim)
    a_g = audio_ref[...]               # (M, 4*ca) bf16
    e_g = emb_ref[...]                 # (M, 4*dw) bf16
    a_p = (a_g[:, 0 * ca:1 * ca].astype(f32) + a_g[:, 1 * ca:2 * ca].astype(f32)
           + a_g[:, 2 * ca:3 * ca].astype(f32) + a_g[:, 3 * ca:4 * ca].astype(f32)) * 0.25
    e_p = (e_g[:, 0 * dw:1 * dw].astype(f32) + e_g[:, 1 * dw:2 * dw].astype(f32)
           + e_g[:, 2 * dw:3 * dw].astype(f32) + e_g[:, 3 * dw:4 * dw].astype(f32)) * 0.25

    text = jnp.dot(e_p.astype(bf16), tw_ref[...],
                   preferred_element_type=f32) + tb_ref[...]
    # mix_audio_text(cat([audio, text], -1)) == row-split weight matmuls (no concat)
    mixed = (jnp.dot(a_p.astype(bf16), mw_ref[:ca, :], preferred_element_type=f32)
             + jnp.dot(text.astype(bf16), mw_ref[ca:, :], preferred_element_type=f32)
             + mb_ref[...])
    low_ref[...] = mixed.astype(low_ref.dtype)

    # ------------- audio_high: interpolate first (exact), then Linears on tar rows -----
    bb = ch_ref.shape[0]
    wir = wir_ref[...]
    wif = wif_ref[...]
    ch_rows, ft_rows = [], []
    for b in range(bb):                # static unroll; tiny per-sample interp matmuls
        ch_rows.append(jnp.dot(wir, ch_ref[b], preferred_element_type=f32).astype(bf16))
        ft_rows.append(jnp.dot(wif, ft_ref[b], preferred_element_type=f32).astype(bf16))
    ch_i = jnp.concatenate(ch_rows, axis=0)      # (bb*tar, 1536)
    ft_i = jnp.concatenate(ft_rows, axis=0)      # (bb*tar, 512)

    rd = dp2w_ref.shape[0]             # 768
    r = jnp.dot(ch_i[:, :rd], dp2w_ref[...], preferred_element_type=f32) + dp2b_ref[...]
    s = jnp.dot(ch_i[:, rd:], dp3w_ref[...], preferred_element_type=f32) + dp3b_ref[...]

    # cat([finetune_high, raw_high], -1) @ w1 == row-split matmuls (no VMEM concat)
    c0 = ft_i.shape[-1]
    c1 = c0 + r.shape[-1]
    h = (jnp.dot(ft_i, w1_ref[:c0, :], preferred_element_type=f32)
         + jnp.dot(r.astype(bf16), w1_ref[c0:c1, :], preferred_element_type=f32)
         + jnp.dot(s.astype(bf16), w1_ref[c1:, :], preferred_element_type=f32)
         + b1_ref[...])
    # TODO(synk): `Mlp` class body not provided; assuming Linear -> ReLU -> Linear.
    h = jnp.maximum(h, 0.0)
    out = jnp.dot(h.astype(bf16), w2_ref[...], preferred_element_type=f32) + b2_ref[...]
    high_ref[...] = out.astype(high_ref.dtype)


# ------------------------ host-built interpolation matrices ------------------------


def _interp_matrix(t_in, t_out):
    """Matches F.interpolate(mode='linear', align_corners=True)."""
    W = np.zeros((t_out, t_in), np.float32)
    if t_out == 1:
        W[0, 0] = 1.0
        return W
    scale = (t_in - 1) / (t_out - 1)
    for t in range(t_out):
        src = t * scale
        i0 = int(math.floor(src))
        i1 = min(i0 + 1, t_in - 1)
        f = src - i0
        W[t, i0] += 1.0 - f
        W[t, i1] += f
    return W


def _interp_matrix_finetune(t_f, t_raw, t_out):
    """Interp matrix for the finetune stream with the tail padding
    (cat([ft, ft[:, -diff:]], dim=1)) folded into the columns — exact, no HBM concat."""
    diff = t_raw - t_f
    if diff <= 0:
        return _interp_matrix(t_f, t_out)
    assert diff <= t_f, "finetune stream must cover at least half of the raw stream"
    W = _interp_matrix(t_raw, t_out)
    Wf = W[:, :t_f].copy()
    Wf[:, t_f - diff:] += W[:, t_f:]          # padded frame t_f+j == source frame t_f-diff+j
    return Wf


# ------------------------------ parameter construction ------------------------------


def _linear_params(key, fan_in, fan_out):
    # nn.Linear default init: U(-1/sqrt(fan_in), 1/sqrt(fan_in)); stored as (in, out).
    kw, kb = jax.random.split(key)
    bound = 1.0 / math.sqrt(fan_in)
    w = jax.random.uniform(kw, (fan_in, fan_out), jnp.float32, -bound, bound)
    b = jax.random.uniform(kb, (fan_out,), jnp.float32, -bound, bound)
    return w.astype(jnp.bfloat16), b          # bf16 MXU operand, f32 bias epilogue


def make_params(key, hidden_size, audio_f, vocab, word_dim):
    ks = jax.random.split(key, 7)
    word_dim_pad = ((word_dim + 127) // 128) * 128   # 300 -> 384, lane-aligned K (exact)
    p = {}
    # TODO(synk): pretrained word-embedding table (vocab.pkl) unavailable -> random stand-in.
    emb = jax.random.normal(ks[0], (vocab, word_dim), jnp.float32) * 0.02
    p["emb_table"] = jnp.pad(emb, ((0, 0), (0, word_dim_pad - word_dim)))
    tw, p["text_b"] = _linear_params(ks[1], word_dim, 512)            # text_encoder_body
    p["text_w"] = jnp.pad(tw, ((0, word_dim_pad - word_dim), (0, 0)))
    p["mix_w"], p["mix_b"] = _linear_params(ks[2], 512 * 2, 512)      # mix_audio_text
    p["dp2_w"], p["dp2_b"] = _linear_params(ks[3], 768, 512)          # audio_down_proj_2
    p["dp3_w"], p["dp3_b"] = _linear_params(ks[4], 768, 512)          # audio_down_proj_3
    # audio_high_mapping = Mlp(512 + 512 + 512, hidden_size, audio_f)
    p["high_w1"], p["high_b1"] = _linear_params(ks[5], 512 * 3, hidden_size)
    p["high_w2"], p["high_b2"] = _linear_params(ks[6], hidden_size, audio_f)
    return p


# ----------------------------------- forward pass -----------------------------------


def _pick_block_batch(batch, act_bytes_per_sample, weight_bytes, rows_low, rows_high):
    """Largest divisor of `batch` whose double-buffered working set fits the v7x-safe
    VMEM budget and keeps the flattened row blocks sublane-aligned (or equals `batch`)."""
    for bb in range(batch, 0, -1):
        if batch % bb:
            continue
        aligned = (bb == batch) or ((bb * rows_low) % 8 == 0 and (bb * rows_high) % 8 == 0)
        if not aligned:
            continue
        if 2 * bb * act_bytes_per_sample + 2 * weight_bytes <= _ACT_VMEM_BUDGET:
            return bb
    return batch


def multimodal_encoder_forward(params, audio_feat, word, cached_audio_high,
                               finetune_audio_high):
    """Cached-audio training forward of MultiModalEncoderwithWavCNN.

    audio_feat:          (B, T, 512)   TODO(synk): stand-in for WavEncoder(audio_onset)
                                       (BasicBlock CNN body not provided).
    word:                (B, T)        int token ids
    cached_audio_high:   (B, Th, 1536)
    finetune_audio_high: (B, Tf, 512)  TODO(synk): stand-in for the pretrained Wav2Vec2
                                       (audio_encoder_fintune) 'high_level' output.
    """
    B, T, CA = audio_feat.shape
    assert 2 * CA == params["mix_w"].shape[0]
    bf16 = jnp.bfloat16

    # ----- low-path operands: group 4 frames along channels (free reshape) so the
    #       avg-pool becomes lane-sliced VPU adds inside the kernel -----
    T_eff = (T // DOWN_SAMPLE) * DOWN_SAMPLE     # avg_pool1d floor mode drops tail frames
    Tp = T_eff // DOWN_SAMPLE
    emb = jnp.take(params["emb_table"], word, axis=0)          # (B, T, Dwp) f32
    Dwp = emb.shape[-1]
    audio_g = audio_feat[:, :T_eff].astype(bf16).reshape(B * Tp, DOWN_SAMPLE * CA)
    emb_g = emb[:, :T_eff].astype(bf16).reshape(B * Tp, DOWN_SAMPLE * Dwp)

    # ----- high-path operands -----
    Th = cached_audio_high.shape[1]
    Tf = finetune_audio_high.shape[1]
    tar = max(round(Th / 50 * 30 / DOWN_SAMPLE), 1)
    wir = jnp.asarray(_interp_matrix(Th, tar), dtype=bf16)
    wif = jnp.asarray(_interp_matrix_finetune(Tf, Th, tar), dtype=bf16)
    ch = cached_audio_high.astype(bf16)
    ft = finetune_audio_high.astype(bf16)

    CH = ch.shape[-1]                 # 1536
    CF = ft.shape[-1]                 # 512
    H = params["high_w1"].shape[1]
    AF = params["high_w2"].shape[1]

    act_bytes = (Tp * DOWN_SAMPLE * CA * 2 + Tp * DOWN_SAMPLE * Dwp * 2
                 + Th * CH * 2 + Tf * CF * 2 + Tp * 512 * 4 + tar * AF * 4)
    weight_bytes = 2 * (Dwp * 512 + 2 * CA * 512 + 2 * 768 * 512 + 3 * 512 * H + H * AF)
    BB = _pick_block_batch(B, act_bytes, weight_bytes, Tp, tar)
    grid = (B // BB,)

    low2d, high2d = pl.pallas_call(
        _fused_kernel,
        out_shape=(jax.ShapeDtypeStruct((B * Tp, 512), jnp.float32),
                   jax.ShapeDtypeStruct((B * tar, AF), jnp.float32)),
        grid=grid,
        in_specs=[
            pl.BlockSpec((BB * Tp, DOWN_SAMPLE * CA), lambda i: (i, 0)),
            pl.BlockSpec((BB * Tp, DOWN_SAMPLE * Dwp), lambda i: (i, 0)),
            pl.BlockSpec((BB, Th, CH), lambda i: (i, 0, 0)),
            pl.BlockSpec((BB, Tf, CF), lambda i: (i, 0, 0)),
            pl.BlockSpec((tar, Th), lambda i: (0, 0)),
            pl.BlockSpec((tar, Tf), lambda i: (0, 0)),
            pl.BlockSpec((Dwp, 512), lambda i: (0, 0)),
            pl.BlockSpec((1, 512), lambda i: (0, 0)),
            pl.BlockSpec((2 * CA, 512), lambda i: (0, 0)),
            pl.BlockSpec((1, 512), lambda i: (0, 0)),
            pl.BlockSpec((768, 512), lambda i: (0, 0)),
            pl.BlockSpec((1, 512), lambda i: (0, 0)),
            pl.BlockSpec((768, 512), lambda i: (0, 0)),
            pl.BlockSpec((1, 512), lambda i: (0, 0)),
            pl.BlockSpec((3 * 512, H), lambda i: (0, 0)),
            pl.BlockSpec((1, H), lambda i: (0, 0)),
            pl.BlockSpec((H, AF), lambda i: (0, 0)),
            pl.BlockSpec((1, AF), lambda i: (0, 0)),
        ],
        out_specs=(
            pl.BlockSpec((BB * Tp, 512), lambda i: (i, 0)),
            pl.BlockSpec((BB * tar, AF), lambda i: (i, 0)),
        ),
        compiler_params=pltpu.CompilerParams(
            dimension_semantics=("parallel",),
            vmem_limit_bytes=_VMEM_LIMIT,
        ),
    )(
        audio_g, emb_g, ch, ft, wir, wif,
        params["text_w"], params["text_b"].reshape(1, -1),
        params["mix_w"], params["mix_b"].reshape(1, -1),
        params["dp2_w"], params["dp2_b"].reshape(1, -1),
        params["dp3_w"], params["dp3_b"].reshape(1, -1),
        params["high_w1"], params["high_b1"].reshape(1, -1),
        params["high_w2"], params["high_b2"].reshape(1, -1),
    )

    return {"audio_low": low2d.reshape(B, Tp, 512),
            "audio_high": high2d.reshape(B, tar, AF)}


# ------------------------ pure-JAX reference (original op order) ------------------------


def _reference_forward(params, audio_feat, word, cached_audio_high, finetune_audio_high):
    f32 = jnp.float32
    B, T, _ = audio_feat.shape
    emb = jnp.take(params["emb_table"], word, axis=0)
    text = emb @ params["text_w"].astype(f32) + params["text_b"]
    at = (jnp.concatenate([audio_feat, text], axis=-1) @ params["mix_w"].astype(f32)
          + params["mix_b"])
    Tp = T // DOWN_SAMPLE
    audio_low = at[:, :Tp * DOWN_SAMPLE].reshape(B, Tp, DOWN_SAMPLE, -1).mean(axis=2)

    ch = cached_audio_high
    r = ch[..., :768] @ params["dp2_w"].astype(f32) + params["dp2_b"]
    s = ch[..., 768:] @ params["dp3_w"].astype(f32) + params["dp3_b"]
    raw = jnp.concatenate([r, s], axis=-1)
    ft = finetune_audio_high
    diff = ch.shape[1] - ft.shape[1]
    if diff > 0:
        ft = jnp.concatenate([ft, ft[:, -diff:]], axis=1)
    tar = max(round(ch.shape[1] / 50 * 30 / DOWN_SAMPLE), 1)
    raw_i = jnp.einsum("th,bhc->btc", jnp.asarray(_interp_matrix(raw.shape[1], tar)), raw)
    ft_i = jnp.einsum("th,bhc->btc", jnp.asarray(_interp_matrix(ft.shape[1], tar)), ft)
    x = jnp.concatenate([ft_i, raw_i], axis=-1)
    h = jnp.maximum(x @ params["high_w1"].astype(f32) + params["high_b1"], 0.0)
    audio_high = h @ params["high_w2"].astype(f32) + params["high_b2"]
    return {"audio_low": audio_low, "audio_high": audio_high}


# ----------------------------------------- main -----------------------------------------

if __name__ == "__main__":
    B = 2
    T = 32          # WavEncoder output / word sequence length (real model: 256)
    T_HIGH = 40     # cached_audio_high frames
    T_FH = 36       # wav2vec2 high-level frames (shorter -> exercises the folded padding)
    HIDDEN = 256    # args.hidden_size
    AUDIO_F = 128   # args.audio_f (lane-dense output width)
    VOCAB, WORD_DIM = 100, 300

    key = jax.random.PRNGKey(0)
    k_par, k_af, k_wd, k_ch, k_fh = jax.random.split(key, 5)

    params = make_params(k_par, HIDDEN, AUDIO_F, VOCAB, WORD_DIM)

    audio_feat = jax.random.normal(k_af, (B, T, 512), jnp.float32)
    word = jax.random.randint(k_wd, (B, T), 0, VOCAB)
    cached_audio_high = jax.random.normal(k_ch, (B, T_HIGH, 1536), jnp.float32)
    finetune_audio_high = jax.random.normal(k_fh, (B, T_FH, 512), jnp.float32)

    fwd = jax.jit(multimodal_encoder_forward)
    out = fwd(params, audio_feat, word, cached_audio_high, finetune_audio_high)
    audio_low = np.asarray(jax.block_until_ready(out["audio_low"]))
    audio_high = np.asarray(jax.block_until_ready(out["audio_high"]))

    expected_tar = max(round(T_HIGH / 50 * 30 / DOWN_SAMPLE), 1)
    assert audio_low.shape == (B, T // DOWN_SAMPLE, 512), audio_low.shape
    assert audio_high.shape == (B, expected_tar, AUDIO_F), audio_high.shape
    assert np.all(np.isfinite(audio_low)) and np.all(np.isfinite(audio_high))

    ref = _reference_forward(params, audio_feat, word, cached_audio_high,
                             finetune_audio_high)
    np.testing.assert_allclose(audio_low, np.asarray(ref["audio_low"]),
                               rtol=5e-2, atol=5e-2)
    np.testing.assert_allclose(audio_high, np.asarray(ref["audio_high"]),
                               rtol=5e-2, atol=5e-2)

    print("KERNEL_OK")
</pallas_src>

<mosaic_0001>
module attributes {stable_mosaic.version = 11 : i64} {
  func.func @_fused_kernel(%arg0: i32, %arg1: memref<16x2048xbf16, #tpu.memory_space<vmem>>, %arg2: memref<16x1536xbf16, #tpu.memory_space<vmem>>, %arg3: memref<2x40x1536xbf16, #tpu.memory_space<vmem>>, %arg4: memref<2x36x512xbf16, #tpu.memory_space<vmem>>, %arg5: memref<6x40xbf16, #tpu.memory_space<vmem>>, %arg6: memref<6x36xbf16, #tpu.memory_space<vmem>>, %arg7: memref<384x512xbf16, #tpu.memory_space<vmem>>, %arg8: memref<1x512xf32, #tpu.memory_space<vmem>>, %arg9: memref<1024x512xbf16, #tpu.memory_space<vmem>>, %arg10: memref<1x512xf32, #tpu.memory_space<vmem>>, %arg11: memref<768x512xbf16, #tpu.memory_space<vmem>>, %arg12: memref<1x512xf32, #tpu.memory_space<vmem>>, %arg13: memref<768x512xbf16, #tpu.memory_space<vmem>>, %arg14: memref<1x512xf32, #tpu.memory_space<vmem>>, %arg15: memref<1536x256xbf16, #tpu.memory_space<vmem>>, %arg16: memref<1x256xf32, #tpu.memory_space<vmem>>, %arg17: memref<256x128xbf16, #tpu.memory_space<vmem>>, %arg18: memref<1x128xf32, #tpu.memory_space<vmem>>, %arg19: memref<16x512xf32, #tpu.memory_space<vmem>>, %arg20: memref<12x128xf32, #tpu.memory_space<vmem>>) attributes {dimension_semantics = [#tpu.dimension_semantics<parallel>], iteration_bounds = array<i64: 1>, scalar_prefetch = 0 : i64, scratch_operands = 0 : i64, tpu.core_type = #tpu.core_type<tc>, window_params = [{transform_indices = @transform_0, window_bounds = array<i64: 16, 2048>}, {transform_indices = @transform_1, window_bounds = array<i64: 16, 1536>}, {transform_indices = @transform_2, window_bounds = array<i64: 2, 40, 1536>}, {transform_indices = @transform_3, window_bounds = array<i64: 2, 36, 512>}, {pipeline_mode = #tpu.pipeline_mode<synchronous>, transform_indices = @transform_4, window_bounds = array<i64: 6, 40>}, {pipeline_mode = #tpu.pipeline_mode<synchronous>, transform_indices = @transform_5, window_bounds = array<i64: 6, 36>}, {pipeline_mode = #tpu.pipeline_mode<synchronous>, transform_indices = @transform_6, window_bounds = array<i64: 384, 512>}, {pipeline_mode = #tpu.pipeline_mode<synchronous>, transform_indices = @transform_7, window_bounds = array<i64: 1, 512>}, {pipeline_mode = #tpu.pipeline_mode<synchronous>, transform_indices = @transform_8, window_bounds = array<i64: 1024, 512>}, {pipeline_mode = #tpu.pipeline_mode<synchronous>, transform_indices = @transform_9, window_bounds = array<i64: 1, 512>}, {pipeline_mode = #tpu.pipeline_mode<synchronous>, transform_indices = @transform_10, window_bounds = array<i64: 768, 512>}, {pipeline_mode = #tpu.pipeline_mode<synchronous>, transform_indices = @transform_11, window_bounds = array<i64: 1, 512>}, {pipeline_mode = #tpu.pipeline_mode<synchronous>, transform_indices = @transform_12, window_bounds = array<i64: 768, 512>}, {pipeline_mode = #tpu.pipeline_mode<synchronous>, transform_indices = @transform_13, window_bounds = array<i64: 1, 512>}, {pipeline_mode = #tpu.pipeline_mode<synchronous>, transform_indices = @transform_14, window_bounds = array<i64: 1536, 256>}, {pipeline_mode = #tpu.pipeline_mode<synchronous>, transform_indices = @transform_15, window_bounds = array<i64: 1, 256>}, {pipeline_mode = #tpu.pipeline_mode<synchronous>, transform_indices = @transform_16, window_bounds = array<i64: 256, 128>}, {pipeline_mode = #tpu.pipeline_mode<synchronous>, transform_indices = @transform_17, window_bounds = array<i64: 1, 128>}, {transform_indices = @transform_18, window_bounds = array<i64: 16, 512>}, {transform_indices = @transform_19, window_bounds = array<i64: 12, 128>}]} {
    %c0 = arith.constant 0 : index
    %c0_0 = arith.constant 0 : index
    %0 = vector.load %arg1[%c0, %c0_0] : memref<16x2048xbf16, #tpu.memory_space<vmem>>, vector<16x2048xbf16>
    %c0_1 = arith.constant 0 : index
    %c0_2 = arith.constant 0 : index
    %1 = vector.load %arg2[%c0_1, %c0_2] : memref<16x1536xbf16, #tpu.memory_space<vmem>>, vector<16x1536xbf16>
    %2 = vector.extract_strided_slice %0 {offsets = [0, 0], sizes = [16, 512], strides = [1, 1]} : vector<16x2048xbf16> to vector<16x512xbf16>
    %3 = arith.extf %2 : vector<16x512xbf16> to vector<16x512xf32>
    %4 = vector.extract_strided_slice %0 {offsets = [0, 512], sizes = [16, 512], strides = [1, 1]} : vector<16x2048xbf16> to vector<16x512xbf16>
    %5 = arith.extf %4 : vector<16x512xbf16> to vector<16x512xf32>
    %6 = arith.addf %3, %5 : vector<16x512xf32>
    %7 = vector.extract_strided_slice %0 {offsets = [0, 1024], sizes = [16, 512], strides = [1, 1]} : vector<16x2048xbf16> to vector<16x512xbf16>
    %8 = arith.extf %7 : vector<16x512xbf16> to vector<16x512xf32>
    %9 = arith.addf %6, %8 : vector<16x512xf32>
    %10 = vector.extract_strided_slice %0 {offsets = [0, 1536], sizes = [16, 512], strides = [1, 1]} : vector<16x2048xbf16> to vector<16x512xbf16>
    %11 = arith.extf %10 : vector<16x512xbf16> to vector<16x512xf32>
    %12 = arith.addf %9, %11 : vector<16x512xf32>
    %cst = arith.constant 2.500000e-01 : f32
    %13 = vector.broadcast %cst : f32 to vector<16x512xf32>
    %14 = arith.mulf %12, %13 : vector<16x512xf32>
    %15 = vector.extract_strided_slice %1 {offsets = [0, 0], sizes = [16, 384], strides = [1, 1]} : vector<16x1536xbf16> to vector<16x384xbf16>
    %16 = arith.extf %15 : vector<16x384xbf16> to vector<16x384xf32>
    %17 = vector.extract_strided_slice %1 {offsets = [0, 384], sizes = [16, 384], strides = [1, 1]} : vector<16x1536xbf16> to vector<16x384xbf16>
    %18 = arith.extf %17 : vector<16x384xbf16> to vector<16x384xf32>
    %19 = arith.addf %16, %18 : vector<16x384xf32>
    %20 = vector.extract_strided_slice %1 {offsets = [0, 768], sizes = [16, 384], strides = [1, 1]} : vector<16x1536xbf16> to vector<16x384xbf16>
    %21 = arith.extf %20 : vector<16x384xbf16> to vector<16x384xf32>
    %22 = arith.addf %19, %21 : vector<16x384xf32>
    %23 = vector.extract_strided_slice %1 {offsets = [0, 1152], sizes = [16, 384], strides = [1, 1]} : vector<16x1536xbf16> to vector<16x384xbf16>
    %24 = arith.extf %23 : vector<16x384xbf16> to vector<16x384xf32>
    %25 = arith.addf %22, %24 : vector<16x384xf32>
    %cst_3 = arith.constant 2.500000e-01 : f32
    %26 = vector.broadcast %cst_3 : f32 to vector<16x384xf32>
    %27 = arith.mulf %25, %26 : vector<16x384xf32>
    %28 = arith.truncf %27 : vector<16x384xf32> to vector<16x384xbf16>
    %c0_4 = arith.constant 0 : index
    %c0_5 = arith.constant 0 : index
    %29 = vector.load %arg7[%c0_4, %c0_5] : memref<384x512xbf16, #tpu.memory_space<vmem>>, vector<384x512xbf16>
    %cst_6 = arith.constant dense<0.000000e+00> : vector<16x512xf32>
    %30 = tpu.matmul %28, %29, %cst_6 {dimension_numbers = #tpu.dot_dimension_numbers<[1], [0], [0], [1], [0, 0, 1, 1], [], []>} : vector<16x384xbf16>, vector<384x512xbf16>, vector<16x512xf32> -> vector<16x512xf32>
    %c0_7 = arith.constant 0 : index
    %c0_8 = arith.constant 0 : index
    %31 = vector.load %arg8[%c0_7, %c0_8] : memref<1x512xf32, #tpu.memory_space<vmem>>, vector<1x512xf32>
    %32 = vector.broadcast %31 : vector<1x512xf32> to vector<16x512xf32>
    %33 = arith.addf %30, %32 : vector<16x512xf32>
    %34 = arith.truncf %14 : vector<16x512xf32> to vector<16x512xbf16>
    %c0_9 = arith.constant 0 : index
    %c0_10 = arith.constant 0 : index
    %35 = vector.load %arg9[%c0_9, %c0_10] : memref<1024x512xbf16, #tpu.memory_space<vmem>>, vector<512x512xbf16>
    %cst_11 = arith.constant dense<0.000000e+00> : vector<16x512xf32>
    %36 = tpu.matmul %34, %35, %cst_11 {dimension_numbers = #tpu.dot_dimension_numbers<[1], [0], [0], [1], [0, 0, 1, 1], [], []>} : vector<16x512xbf16>, vector<512x512xbf16>, vector<16x512xf32> -> vector<16x512xf32>
    %37 = arith.truncf %33 : vector<16x512xf32> to vector<16x512xbf16>
    %c512 = arith.constant 512 : index
    %c0_12 = arith.constant 0 : index
    %38 = vector.load %arg9[%c512, %c0_12] : memref<1024x512xbf16, #tpu.memory_space<vmem>>, vector<512x512xbf16>
    %cst_13 = arith.constant dense<0.000000e+00> : vector<16x512xf32>
    %39 = tpu.matmul %37, %38, %cst_13 {dimension_numbers = #tpu.dot_dimension_numbers<[1], [0], [0], [1], [0, 0, 1, 1], [], []>} : vector<16x512xbf16>, vector<512x512xbf16>, vector<16x512xf32> -> vector<16x512xf32>
    %40 = arith.addf %36, %39 : vector<16x512xf32>
    %c0_14 = arith.constant 0 : index
    %c0_15 = arith.constant 0 : index
    %41 = vector.load %arg10[%c0_14, %c0_15] : memref<1x512xf32, #tpu.memory_space<vmem>>, vector<1x512xf32>
    %42 = vector.broadcast %41 : vector<1x512xf32> to vector<16x512xf32>
    %43 = arith.addf %40, %42 : vector<16x512xf32>
    %c0_16 = arith.constant 0 : index
    %c0_17 = arith.constant 0 : index
    %44 = vector.load %arg19[%c0_16, %c0_17] : memref<16x512xf32, #tpu.memory_space<vmem>>, vector<16x512xf32>
    tpu.vector_store %arg19[%c0_16, %c0_17], %43 {strides = array<i32>} : memref<16x512xf32, #tpu.memory_space<vmem>>, vector<16x512xf32>,
    %c0_18 = arith.constant 0 : index
    %c0_19 = arith.constant 0 : index
    %45 = vector.load %arg5[%c0_18, %c0_19] : memref<6x40xbf16, #tpu.memory_space<vmem>>, vector<6x40xbf16>
    %c0_20 = arith.constant 0 : index
    %c0_21 = arith.constant 0 : index
    %46 = vector.load %arg6[%c0_20, %c0_21] : memref<6x36xbf16, #tpu.memory_space<vmem>>, vector<6x36xbf16>
    %c0_22 = arith.constant 0 : index
    %c0_23 = arith.constant 0 : index
    %c0_24 = arith.constant 0 : index
    %47 = vector.load %arg3[%c0_22, %c0_23, %c0_24] : memref<2x40x1536xbf16, #tpu.memory_space<vmem>>, vector<1x40x1536xbf16>
    %48 = vector.shape_cast %47 : vector<1x40x1536xbf16> to vector<40x1536xbf16>
    %cst_25 = arith.constant dense<0.000000e+00> : vector<6x1536xf32>
    %49 = tpu.matmul %45, %48, %cst_25 {dimension_numbers = #tpu.dot_dimension_numbers<[1], [0], [0], [1], [0, 0, 1, 1], [], []>} : vector<6x40xbf16>, vector<40x1536xbf16>, vector<6x1536xf32> -> vector<6x1536xf32>
    %50 = arith.truncf %49 : vector<6x1536xf32> to vector<6x1536xbf16>
    %c0_26 = arith.constant 0 : index
    %c0_27 = arith.constant 0 : index
    %c0_28 = arith.constant 0 : index
    %51 = vector.load %arg4[%c0_26, %c0_27, %c0_28] : memref<2x36x512xbf16, #tpu.memory_space<vmem>>, vector<1x36x512xbf16>
    %52 = vector.shape_cast %51 : vector<1x36x512xbf16> to vector<36x512xbf16>
    %cst_29 = arith.constant dense<0.000000e+00> : vector<6x512xf32>
    %53 = tpu.matmul %46, %52, %cst_29 {dimension_numbers = #tpu.dot_dimension_numbers<[1], [0], [0], [1], [0, 0, 1, 1], [], []>} : vector<6x36xbf16>, vector<36x512xbf16>, vector<6x512xf32> -> vector<6x512xf32>
    %54 = arith.truncf %53 : vector<6x512xf32> to vector<6x512xbf16>
    %c1 = arith.constant 1 : index
    %c0_30 = arith.constant 0 : index
    %c0_31 = arith.constant 0 : index
    %55 = vector.load %arg3[%c1, %c0_30, %c0_31] : memref<2x40x1536xbf16, #tpu.memory_space<vmem>>, vector<1x40x1536xbf16>
    %56 = vector.shape_cast %55 : vector<1x40x1536xbf16> to vector<40x1536xbf16>
    %cst_32 = arith.constant dense<0.000000e+00> : vector<6x1536xf32>
    %57 = tpu.matmul %45, %56, %cst_32 {dimension_numbers = #tpu.dot_dimension_numbers<[1], [0], [0], [1], [0, 0, 1, 1], [], []>} : vector<6x40xbf16>, vector<40x1536xbf16>, vector<6x1536xf32> -> vector<6x1536xf32>
    %58 = arith.truncf %57 : vector<6x1536xf32> to vector<6x1536xbf16>
    %c1_33 = arith.constant 1 : index
    %c0_34 = arith.constant 0 : index
    %c0_35 = arith.constant 0 : index
    %59 = vector.load %arg4[%c1_33, %c0_34, %c0_35] : memref<2x36x512xbf16, #tpu.memory_space<vmem>>, vector<1x36x512xbf16>
    %60 = vector.shape_cast %59 : vector<1x36x512xbf16> to vector<36x512xbf16>
    %cst_36 = arith.constant dense<0.000000e+00> : vector<6x512xf32>
    %61 = tpu.matmul %46, %60, %cst_36 {dimension_numbers = #tpu.dot_dimension_numbers<[1], [0], [0], [1], [0, 0, 1, 1], [], []>} : vector<6x36xbf16>, vector<36x512xbf16>, vector<6x512xf32> -> vector<6x512xf32>
    %62 = arith.truncf %61 : vector<6x512xf32> to vector<6x512xbf16>
    %63 = tpu.concatenate %50, %58 in 0 : vector<6x1536xbf16>, vector<6x1536xbf16> -> vector<12x1536xbf16>
    %64 = tpu.concatenate %54, %62 in 0 : vector<6x512xbf16>, vector<6x512xbf16> -> vector<12x512xbf16>
    %65 = vector.extract_strided_slice %63 {offsets = [0, 0], sizes = [12, 768], strides = [1, 1]} : vector<12x1536xbf16> to vector<12x768xbf16>
    %c0_37 = arith.constant 0 : index
    %c0_38 = arith.constant 0 : index
    %66 = vector.load %arg11[%c0_37, %c0_38] : memref<768x512xbf16, #tpu.memory_space<vmem>>, vector<768x512xbf16>
    %cst_39 = arith.constant dense<0.000000e+00> : vector<12x512xf32>
    %67 = tpu.matmul %65, %66, %cst_39 {dimension_numbers = #tpu.dot_dimension_numbers<[1], [0], [0], [1], [0, 0, 1, 1], [], []>} : vector<12x768xbf16>, vector<768x512xbf16>, vector<12x512xf32> -> vector<12x512xf32>
    %c0_40 = arith.constant 0 : index
    %c0_41 = arith.constant 0 : index
    %68 = vector.load %arg12[%c0_40, %c0_41] : memref<1x512xf32, #tpu.memory_space<vmem>>, vector<1x512xf32>
    %69 = vector.broadcast %68 : vector<1x512xf32> to vector<12x512xf32>
    %70 = arith.addf %67, %69 : vector<12x512xf32>
    %71 = vector.extract_strided_slice %63 {offsets = [0, 768], sizes = [12, 768], strides = [1, 1]} : vector<12x1536xbf16> to vector<12x768xbf16>
    %c0_42 = arith.constant 0 : index
    %c0_43 = arith.constant 0 : index
    %72 = vector.load %arg13[%c0_42, %c0_43] : memref<768x512xbf16, #tpu.memory_space<vmem>>, vector<768x512xbf16>
    %cst_44 = arith.constant dense<0.000000e+00> : vector<12x512xf32>
    %73 = tpu.matmul %71, %72, %cst_44 {dimension_numbers = #tpu.dot_dimension_numbers<[1], [0], [0], [1], [0, 0, 1, 1], [], []>} : vector<12x768xbf16>, vector<768x512xbf16>, vector<12x512xf32> -> vector<12x512xf32>
    %c0_45 = arith.constant 0 : index
    %c0_46 = arith.constant 0 : index
    %74 = vector.load %arg14[%c0_45, %c0_46] : memref<1x512xf32, #tpu.memory_space<vmem>>, vector<1x512xf32>
    %75 = vector.broadcast %74 : vector<1x512xf32> to vector<12x512xf32>
    %76 = arith.addf %73, %75 : vector<12x512xf32>
    %c0_47 = arith.constant 0 : index
    %c0_48 = arith.constant 0 : index
    %77 = vector.load %arg15[%c0_47, %c0_48] : memref<1536x256xbf16, #tpu.memory_space<vmem>>, vector<512x256xbf16>
    %cst_49 = arith.constant dense<0.000000e+00> : vector<12x256xf32>
    %78 = tpu.matmul %64, %77, %cst_49 {dimension_numbers = #tpu.dot_dimension_numbers<[1], [0], [0], [1], [0, 0, 1, 1], [], []>} : vector<12x512xbf16>, vector<512x256xbf16>, vector<12x256xf32> -> vector<12x256xf32>
    %79 = arith.truncf %70 : vector<12x512xf32> to vector<12x512xbf16>
    %c512_50 = arith.constant 512 : index
    %c0_51 = arith.constant 0 : index
    %80 = vector.load %arg15[%c512_50, %c0_51] : memref<1536x256xbf16, #tpu.memory_space<vmem>>, vector<512x256xbf16>
    %cst_52 = arith.constant dense<0.000000e+00> : vector<12x256xf32>
    %81 = tpu.matmul %79, %80, %cst_52 {dimension_numbers = #tpu.dot_dimension_numbers<[1], [0], [0], [1], [0, 0, 1, 1], [], []>} : vector<12x512xbf16>, vector<512x256xbf16>, vector<12x256xf32> -> vector<12x256xf32>
    %82 = arith.addf %78, %81 : vector<12x256xf32>
    %83 = arith.truncf %76 : vector<12x512xf32> to vector<12x512xbf16>
    %c1024 = arith.constant 1024 : index
    %c0_53 = arith.constant 0 : index
    %84 = vector.load %arg15[%c1024, %c0_53] : memref<1536x256xbf16, #tpu.memory_space<vmem>>, vector<512x256xbf16>
    %cst_54 = arith.constant dense<0.000000e+00> : vector<12x256xf32>
    %85 = tpu.matmul %83, %84, %cst_54 {dimension_numbers = #tpu.dot_dimension_numbers<[1], [0], [0], [1], [0, 0, 1, 1], [], []>} : vector<12x512xbf16>, vector<512x256xbf16>, vector<12x256xf32> -> vector<12x256xf32>
    %86 = arith.addf %82, %85 : vector<12x256xf32>
    %c0_55 = arith.constant 0 : index
    %c0_56 = arith.constant 0 : index
    %87 = vector.load %arg16[%c0_55, %c0_56] : memref<1x256xf32, #tpu.memory_space<vmem>>, vector<1x256xf32>
    %88 = vector.broadcast %87 : vector<1x256xf32> to vector<12x256xf32>
    %89 = arith.addf %86, %88 : vector<12x256xf32>
    %cst_57 = arith.constant 0.000000e+00 : f32
    %90 = vector.broadcast %cst_57 : f32 to vector<12x256xf32>
    %91 = arith.maximumf %89, %90 : vector<12x256xf32>
    %92 = arith.truncf %91 : vector<12x256xf32> to vector<12x256xbf16>
    %c0_58 = arith.constant 0 : index
    %c0_59 = arith.constant 0 : index
    %93 = vector.load %arg17[%c0_58, %c0_59] : memref<256x128xbf16, #tpu.memory_space<vmem>>, vector<256x128xbf16>
    %cst_60 = arith.constant dense<0.000000e+00> : vector<12x128xf32>
    %94 = tpu.matmul %92, %93, %cst_60 {dimension_numbers = #tpu.dot_dimension_numbers<[1], [0], [0], [1], [0, 0, 1, 1], [], []>} : vector<12x256xbf16>, vector<256x128xbf16>, vector<12x128xf32> -> vector<12x128xf32>
    %c0_61 = arith.constant 0 : index
    %c0_62 = arith.constant 0 : index
    %95 = vector.load %arg18[%c0_61, %c0_62] : memref<1x128xf32, #tpu.memory_space<vmem>>, vector<1x128xf32>
    %96 = vector.broadcast %95 : vector<1x128xf32> to vector<12x128xf32>
    %97 = arith.addf %94, %96 : vector<12x128xf32>
    %c0_63 = arith.constant 0 : index
    %c0_64 = arith.constant 0 : index
    %98 = vector.load %arg20[%c0_63, %c0_64] : memref<12x128xf32, #tpu.memory_space<vmem>>, vector<12x128xf32>
    tpu.vector_store %arg20[%c0_63, %c0_64], %97 {strides = array<i32>} : memref<12x128xf32, #tpu.memory_space<vmem>>, vector<12x128xf32>,
    return
  }
  func.func @transform_0(%arg0: i32) -> (i32, i32) {
    %c0_i32 = arith.constant 0 : i32
    %c0_i32_0 = arith.constant 0 : i32
    return %arg0, %c0_i32 : i32, i32
  }
  func.func @transform_1(%arg0: i32) -> (i32, i32) {
    %c0_i32 = arith.constant 0 : i32
    %c0_i32_0 = arith.constant 0 : i32
    return %arg0, %c0_i32 : i32, i32
  }
  func.func @transform_2(%arg0: i32) -> (i32, i32, i32) {
    %c0_i32 = arith.constant 0 : i32
    %c0_i32_0 = arith.constant 0 : i32
    %c0_i32_1 = arith.constant 0 : i32
    return %arg0, %c0_i32, %c0_i32_0 : i32, i32, i32
  }
  func.func @transform_3(%arg0: i32) -> (i32, i32, i32) {
    %c0_i32 = arith.constant 0 : i32
    %c0_i32_0 = arith.constant 0 : i32
    %c0_i32_1 = arith.constant 0 : i32
    return %arg0, %c0_i32, %c0_i32_0 : i32, i32, i32
  }
  func.func @transform_4(%arg0: i32) -> (i32, i32) {
    %c0_i32 = arith.constant 0 : i32
    %c0_i32_0 = arith.constant 0 : i32
    %c0_i32_1 = arith.constant 0 : i32
    return %c0_i32, %c0_i32_0 : i32, i32
  }
  func.func @transform_5(%arg0: i32) -> (i32, i32) {
    %c0_i32 = arith.constant 0 : i32
    %c0_i32_0 = arith.constant 0 : i32
    %c0_i32_1 = arith.constant 0 : i32
    return %c0_i32, %c0_i32_0 : i32, i32
  }
  func.func @transform_6(%arg0: i32) -> (i32, i32) {
    %c0_i32 = arith.constant 0 : i32
    %c0_i32_0 = arith.constant 0 : i32
    %c0_i32_1 = arith.constant 0 : i32
    return %c0_i32, %c0_i32_0 : i32, i32
  }
  func.func @transform_7(%arg0: i32) -> (i32, i32) {
    %c0_i32 = arith.constant 0 : i32
    %c0_i32_0 = arith.constant 0 : i32
    %c0_i32_1 = arith.constant 0 : i32
    return %c0_i32, %c0_i32_0 : i32, i32
  }
  func.func @transform_8(%arg0: i32) -> (i32, i32) {
    %c0_i32 = arith.constant 0 : i32
    %c0_i32_0 = arith.constant 0 : i32
    %c0_i32_1 = arith.constant 0 : i32
    return %c0_i32, %c0_i32_0 : i32, i32
  }
  func.func @transform_9(%arg0: i32) -> (i32, i32) {
    %c0_i32 = arith.constant 0 : i32
    %c0_i32_0 = arith.constant 0 : i32
    %c0_i32_1 = arith.constant 0 : i32
    return %c0_i32, %c0_i32_0 : i32, i32
  }
  func.func @transform_10(%arg0: i32) -> (i32, i32) {
    %c0_i32 = arith.constant 0 : i32
    %c0_i32_0 = arith.constant 0 : i32
    %c0_i32_1 = arith.constant 0 : i32
    return %c0_i32, %c0_i32_0 : i32, i32
  }
  func.func @transform_11(%arg0: i32) -> (i32, i32) {
    %c0_i32 = arith.constant 0 : i32
    %c0_i32_0 = arith.constant 0 : i32
    %c0_i32_1 = arith.constant 0 : i32
    return %c0_i32, %c0_i32_0 : i32, i32
  }
  func.func @transform_12(%arg0: i32) -> (i32, i32) {
    %c0_i32 = arith.constant 0 : i32
    %c0_i32_0 = arith.constant 0 : i32
    %c0_i32_1 = arith.constant 0 : i32
    return %c0_i32, %c0_i32_0 : i32, i32
  }
  func.func @transform_13(%arg0: i32) -> (i32, i32) {
    %c0_i32 = arith.constant 0 : i32
    %c0_i32_0 = arith.constant 0 : i32
    %c0_i32_1 = arith.constant 0 : i32
    return %c0_i32, %c0_i32_0 : i32, i32
  }
  func.func @transform_14(%arg0: i32) -> (i32, i32) {
    %c0_i32 = arith.constant 0 : i32
    %c0_i32_0 = arith.constant 0 : i32
    %c0_i32_1 = arith.constant 0 : i32
    return %c0_i32, %c0_i32_0 : i32, i32
  }
  func.func @transform_15(%arg0: i32) -> (i32, i32) {
    %c0_i32 = arith.constant 0 : i32
    %c0_i32_0 = arith.constant 0 : i32
    %c0_i32_1 = arith.constant 0 : i32
    return %c0_i32, %c0_i32_0 : i32, i32
  }
  func.func @transform_16(%arg0: i32) -> (i32, i32) {
    %c0_i32 = arith.constant 0 : i32
    %c0_i32_0 = arith.constant 0 : i32
    %c0_i32_1 = arith.constant 0 : i32
    return %c0_i32, %c0_i32_0 : i32, i32
  }
  func.func @transform_17(%arg0: i32) -> (i32, i32) {
    %c0_i32 = arith.constant 0 : i32
    %c0_i32_0 = arith.constant 0 : i32
    %c0_i32_1 = arith.constant 0 : i32
    return %c0_i32, %c0_i32_0 : i32, i32
  }
  func.func @transform_18(%arg0: i32) -> (i32, i32) {
    %c0_i32 = arith.constant 0 : i32
    %c0_i32_0 = arith.constant 0 : i32
    return %arg0, %c0_i32 : i32, i32
  }
  func.func @transform_19(%arg0: i32) -> (i32, i32) {
    %c0_i32 = arith.constant 0 : i32
    %c0_i32_0 = arith.constant 0 : i32
    return %arg0, %c0_i32 : i32, i32
  }
}

</mosaic_0001>

<llo_original>
// kernel: multimodal_encoder_forward.1
$region0: #{multimodal_encoder_forward.1}
  #allocation0 [shape = 'u32[]', space=smem, size = 0x4, offset = 0x4, fixed_abs, tag = 'smem constant byte address 0x4 - core index']
  #allocation1 [shape = 'u32[144,128]{1,0:T(1,128)}', space=vmem, size = 0x12000, scoped, tag = 'internal scratch']
  %s0 = inlined_call_operand.vmem [shape: bf16[16,2048], index: 0, kind: input, shape index: {}]
  %s1 = inlined_call_operand.vmem [shape: bf16[16,1536], index: 1, kind: input, shape index: {}]
  %s2 = inlined_call_operand.vmem [shape: bf16[2,40,1536], index: 2, kind: input, shape index: {}]
  %s3 = inlined_call_operand.vmem [shape: bf16[2,36,512], index: 3, kind: input, shape index: {}]
  %s4 = inlined_call_operand.vmem [shape: bf16[6,40], index: 4, kind: input, shape index: {}]
  %s5 = inlined_call_operand.vmem [shape: bf16[6,36], index: 5, kind: input, shape index: {}]
  %s6 = inlined_call_operand.hbm [shape: bf16[384,512], index: 6, kind: input, shape index: {}]
  %s7 = inlined_call_operand.vmem [shape: f32[1,512], index: 7, kind: input, shape index: {}]
  %s8 = inlined_call_operand.vmem [shape: bf16[1024,512], index: 8, kind: input, shape index: {}]
  %s9 = inlined_call_operand.vmem [shape: f32[1,512], index: 9, kind: input, shape index: {}]
  %s10 = inlined_call_operand.vmem [shape: bf16[768,512], index: 10, kind: input, shape index: {}]
  %s11 = inlined_call_operand.vmem [shape: f32[1,512], index: 11, kind: input, shape index: {}]
  %s12 = inlined_call_operand.hbm [shape: bf16[768,512], index: 12, kind: input, shape index: {}]
  %s13 = inlined_call_operand.hbm [shape: f32[1,512], index: 13, kind: input, shape index: {}]
  %s14 = inlined_call_operand.hbm [shape: bf16[1536,256], index: 14, kind: input, shape index: {}]
  %s15 = inlined_call_operand.hbm [shape: f32[1,256], index: 15, kind: input, shape index: {}]
  %s16 = inlined_call_operand.hbm [shape: bf16[256,128], index: 16, kind: input, shape index: {}]
  %s17 = inlined_call_operand.hbm [shape: f32[1,128], index: 17, kind: input, shape index: {}]
  %s18 = inlined_call_operand.hbm [shape: f32[16,512], index: 18, kind: output, shape index: {0}]
  %s19 = inlined_call_operand.vmem [shape: f32[12,128], index: 19, kind: output, shape index: {1}]
  %20 = xla_tuple %s18, %s19
  %s21 = sld [smem:[#allocation0]]
  $region118: #{multimodal_encoder_forward.1} parent=0
    _
  %s23 = ssub.s32 1, %s21
  %s24 = scalar_select 0, %s23, %s21
  $region1: #{multimodal_encoder_forward.1} parent=0
    #allocation2 [shape = 'u8[393216]{0}', space=vmem, size = 0x60000, scoped, tag = 'input window, operand 6, single buffered']
    #allocation3 [shape = 's32[1]{0}', space=sflag, size = 0x4, scoped, tag = 'scoped memory for multimodal_encoder_forward.1']
    #allocation4 [shape = 's32[1]{0}', space=sflag, size = 0x4, scoped, tag = 'scoped memory for multimodal_encoder_forward.1']
    #allocation5 [shape = 'u8[786432]{0}', space=vmem, size = 0xc0000, scoped, tag = 'input window, operand 12, single buffered']
    #allocation6 [shape = 's32[1]{0}', space=sflag, size = 0x4, scoped, tag = 'scoped memory for multimodal_encoder_forward.1']
    #allocation7 [shape = 'u8[2048]{0}', space=vmem, size = 0x800, scoped, tag = 'input window, operand 13, single buffered']
    #allocation8 [shape = 'u8[786432]{0}', space=vmem, size = 0xc0000, scoped, tag = 'input window, operand 14, single buffered']
    #allocation9 [shape = 's32[1]{0}', space=sflag, size = 0x4, scoped, tag = 'scoped memory for multimodal_encoder_forward.1']
    #allocation10 [shape = 'u8[1024]{0}', space=vmem, size = 0x400, scoped, tag = 'input window, operand 15, single buffered']
    #allocation11 [shape = 'u8[65536]{0}', space=vmem, size = 0x10000, scoped, tag = 'input window, operand 16, single buffered']
    #allocation12 [shape = 's32[1]{0}', space=sflag, size = 0x4, scoped, tag = 'scoped memory for multimodal_encoder_forward.1']
    #allocation13 [shape = 'u8[512]{0}', space=vmem, size = 0x400, scoped, tag = 'input window, operand 17, single buffered']
    #allocation14 [shape = 'u8[32768]{0}', space=vmem, size = 0x8000, scoped, tag = 'output window, operand 0, single buffered']
    %25 = vsyncpa [#allocation3], 0
    %26 = vsyncpa [#allocation6], 0
    %27 = vsyncpa [#allocation9], 0
    %28 = vsyncpa [#allocation12], 0
    %29 = vsyncpa [#allocation4], 0
    // Predicated region
    $region2: #{multimodal_encoder_forward.1} parent=1 // pred_check
      _
    $region3: #{multimodal_encoder_forward.1} parent=1 // pred_check_branch
      %31 = sbr.rel (0) target = $region5
    $region4: #{multimodal_encoder_forward.1} parent=1 // pred_region
      _
    $region5: #{multimodal_encoder_forward.1} parent=1 // pred_fallthru
      _
    // Predicated region
    $region6: #{multimodal_encoder_forward.1} parent=1 // pred_check
      _
    $region7: #{multimodal_encoder_forward.1} parent=1 // pred_check_branch
      %33 = sbr.rel (0) target = $region9
    $region8: #{multimodal_encoder_forward.1} parent=1 // pred_region
      _
    $region9: #{multimodal_encoder_forward.1} parent=1 // pred_fallthru
      _
    // Predicated region
    $region10: #{multimodal_encoder_forward.1} parent=1 // pred_check
      _
    $region11: #{multimodal_encoder_forward.1} parent=1 // pred_check_branch
      %35 = sbr.rel (0) target = $region13
    $region12: #{multimodal_encoder_forward.1} parent=1 // pred_region
      _
    $region13: #{multimodal_encoder_forward.1} parent=1 // pred_fallthru
      _
    // Predicated region
    $region14: #{multimodal_encoder_forward.1} parent=1 // pred_check
      _
    $region15: #{multimodal_encoder_forward.1} parent=1 // pred_check_branch
      %37 = sbr.rel (0) target = $region17
    $region16: #{multimodal_encoder_forward.1} parent=1 // pred_region
      _
    $region17: #{multimodal_encoder_forward.1} parent=1 // pred_fallthru
      _
    // Predicated region
    $region18: #{multimodal_encoder_forward.1} parent=1 // pred_check
      _
    $region19: #{multimodal_encoder_forward.1} parent=1 // pred_check_branch
      %39 = sbr.rel (0) target = $region21
    $region20: #{multimodal_encoder_forward.1} parent=1 // pred_region
      _
    $region21: #{multimodal_encoder_forward.1} parent=1 // pred_fallthru
      _
    // Predicated region
    $region22: #{multimodal_encoder_forward.1} parent=1 // pred_check
      _
    $region23: #{multimodal_encoder_forward.1} parent=1 // pred_check_branch
      %41 = sbr.rel (0) target = $region25
    $region24: #{multimodal_encoder_forward.1} parent=1 // pred_region
      _
    $region25: #{multimodal_encoder_forward.1} parent=1 // pred_fallthru
      _
    // Predicated region
    $region26: #{multimodal_encoder_forward.1} parent=1 // pred_check
      _
    $region27: #{multimodal_encoder_forward.1} parent=1 // pred_check_branch
      %43 = sbr.rel (0) target = $region29
    $region28: #{multimodal_encoder_forward.1} parent=1 // pred_region
      %s45 = ssub.s32 12288, 12288
      %46 = vsyncadd [#allocation3], %s45
      %s47 = sshll.u32 [#allocation2], 4
      %s48 = int_to_ptr.vmem [resolvable:$true] %s47
      %53 = dma.hbm_to_vmem [thread:$0]  %s6, 12288, %s48, [#allocation3], 256, 256, 16
    $region29: #{multimodal_encoder_forward.1} parent=1 // pred_fallthru
      _
    // Predicated region
    $region30: #{multimodal_encoder_forward.1} parent=1 // pred_check
      _
    $region31: #{multimodal_encoder_forward.1} parent=1 // pred_check_branch
      %55 = sbr.rel (0) target = $region33
    $region32: #{multimodal_encoder_forward.1} parent=1 // pred_region
      _
    $region33: #{multimodal_encoder_forward.1} parent=1 // pred_fallthru
      _
    // Predicated region
    $region34: #{multimodal_encoder_forward.1} parent=1 // pred_check
      _
    $region35: #{multimodal_encoder_forward.1} parent=1 // pred_check_branch
      %57 = sbr.rel (0) target = $region37
    $region36: #{multimodal_encoder_forward.1} parent=1 // pred_region
      _
    $region37: #{multimodal_encoder_forward.1} parent=1 // pred_fallthru
      _
    // Predicated region
    $region38: #{multimodal_encoder_forward.1} parent=1 // pred_check
      _
    $region39: #{multimodal_encoder_forward.1} parent=1 // pred_check_branch
      %59 = sbr.rel (0) target = $region41
    $region40: #{multimodal_encoder_forward.1} parent=1 // pred_region
      _
    $region41: #{multimodal_encoder_forward.1} parent=1 // pred_fallthru
      _
    // Predicated region
    $region42: #{multimodal_encoder_forward.1} parent=1 // pred_check
      _
    $region43: #{multimodal_encoder_forward.1} parent=1 // pred_check_branch
      %61 = sbr.rel (0) target = $region45
    $region44: #{multimodal_encoder_forward.1} parent=1 // pred_region
      _
    $region45: #{multimodal_encoder_forward.1} parent=1 // pred_fallthru
      _
    // Predicated region
    $region46: #{multimodal_encoder_forward.1} parent=1 // pred_check
      _
    $region47: #{multimodal_encoder_forward.1} parent=1 // pred_check_branch
      %63 = sbr.rel (0) target = $region49
    $region48: #{multimodal_encoder_forward.1} parent=1 // pred_region
      _
    $region49: #{multimodal_encoder_forward.1} parent=1 // pred_fallthru
      _
    // Predicated region
    $region50: #{multimodal_encoder_forward.1} parent=1 // pred_check
      _
    $region51: #{multimodal_encoder_forward.1} parent=1 // pred_check_branch
      %65 = sbr.rel (0) target = $region53
    $region52: #{multimodal_encoder_forward.1} parent=1 // pred_region
      %s67 = ssub.s32 24576, 24576
      %68 = vsyncadd [#allocation6], %s67
      %s69 = sshll.u32 [#allocation5], 4
      %s70 = int_to_ptr.vmem [resolvable:$true] %s69
      %75 = dma.hbm_to_vmem [thread:$0]  %s12, 24576, %s70, [#allocation6], 256, 256, 16
    $region53: #{multimodal_encoder_forward.1} parent=1 // pred_fallthru
      _
    // Predicated region
    $region54: #{multimodal_encoder_forward.1} parent=1 // pred_check
      _
    $region55: #{multimodal_encoder_forward.1} parent=1 // pred_check_branch
      %77 = sbr.rel (0) target = $region57
    $region56: #{multimodal_encoder_forward.1} parent=1 // pred_region
      %s79 = ssub.s32 64, 64
      %80 = vsyncadd [#allocation6], %s79
      %s82 = sshll.u32 [#allocation7], 4
      %s83 = int_to_ptr.vmem [resolvable:$true] %s82
      %85 = dma.hbm_to_vmem [thread:$0]  %s13, 64, %s83, [#allocation6]
    $region57: #{multimodal_encoder_forward.1} parent=1 // pred_fallthru
      _
    // Predicated region
    $region58: #{multimodal_encoder_forward.1} parent=1 // pred_check
      _
    $region59: #{multimodal_encoder_forward.1} parent=1 // pred_check_branch
      %87 = sbr.rel (0) target = $region61
    $region60: #{multimodal_encoder_forward.1} parent=1 // pred_region
      %s89 = ssub.s32 24576, 24576
      %90 = vsyncadd [#allocation9], %s89
      %s91 = sshll.u32 [#allocation8], 4
      %s92 = int_to_ptr.vmem [resolvable:$true] %s91
      %97 = dma.hbm_to_vmem [thread:$0]  %s14, 24576, %s92, [#allocation9], 128, 128, 8
    $region61: #{multimodal_encoder_forward.1} parent=1 // pred_fallthru
      _
    // Predicated region
    $region62: #{multimodal_encoder_forward.1} parent=1 // pred_check
      _
    $region63: #{multimodal_encoder_forward.1} parent=1 // pred_check_branch
      %99 = sbr.rel (0) target = $region65
    $region64: #{multimodal_encoder_forward.1} parent=1 // pred_region
      %s101 = ssub.s32 32, 32
      %102 = vsyncadd [#allocation9], %s101
      %s104 = sshll.u32 [#allocation10], 4
      %s105 = int_to_ptr.vmem [resolvable:$true] %s104
      %107 = dma.hbm_to_vmem [thread:$0]  %s15, 32, %s105, [#allocation9]
    $region65: #{multimodal_encoder_forward.1} parent=1 // pred_fallthru
      _
    // Predicated region
    $region66: #{multimodal_encoder_forward.1} parent=1 // pred_check
      _
    $region67: #{multimodal_encoder_forward.1} parent=1 // pred_check_branch
      %109 = sbr.rel (0) target = $region69
    $region68: #{multimodal_encoder_forward.1} parent=1 // pred_region
      %s111 = ssub.s32 2048, 2048
      %112 = vsyncadd [#allocation12], %s111
      %s113 = sshll.u32 [#allocation11], 4
      %s114 = int_to_ptr.vmem [resolvable:$true] %s113
      %119 = dma.hbm_to_vmem [thread:$0]  %s16, 2048, %s114, [#allocation12], 64, 64, 4
    $region69: #{multimodal_encoder_forward.1} parent=1 // pred_fallthru
      _
    // Predicated region
    $region70: #{multimodal_encoder_forward.1} parent=1 // pred_check
      _
    $region71: #{multimodal_encoder_forward.1} parent=1 // pred_check_branch
      %121 = sbr.rel (0) target = $region73
    $region72: #{multimodal_encoder_forward.1} parent=1 // pred_region
      %s123 = ssub.s32 16, 16
      %124 = vsyncadd [#allocation12], %s123
      %s126 = sshll.u32 [#allocation13], 4
      %s127 = int_to_ptr.vmem [resolvable:$true] %s126
      %129 = dma.hbm_to_vmem [thread:$0]  %s17, 16, %s127, [#allocation12]
    $region73: #{multimodal_encoder_forward.1} parent=1 // pred_fallthru
      _
    // Predicated region
    $region74: #{multimodal_encoder_forward.1} parent=1 // pred_check
      _
    $region75: #{multimodal_encoder_forward.1} parent=1 // pred_check_branch
      %131 = sbr.rel (0) target = $region77
    $region76: #{multimodal_encoder_forward.1} parent=1 // pred_region
      %132 = dma.done [#allocation3], 12288
    $region77: #{multimodal_encoder_forward.1} parent=1 // pred_fallthru
      _
    // Predicated region
    $region78: #{multimodal_encoder_forward.1} parent=1 // pred_check
      _
    $region79: #{multimodal_encoder_forward.1} parent=1 // pred_check_branch
      %134 = sbr.rel (0) target = $region81
    $region80: #{multimodal_encoder_forward.1} parent=1 // pred_region
      %135 = dma.done [#allocation6], 24576
    $region81: #{multimodal_encoder_forward.1} parent=1 // pred_fallthru
      _
    // Predicated region
    $region82: #{multimodal_encoder_forward.1} parent=1 // pred_check
      _
    $region83: #{multimodal_encoder_forward.1} parent=1 // pred_check_branch
      %137 = sbr.rel (0) target = $region85
    $region84: #{multimodal_encoder_forward.1} parent=1 // pred_region
      %138 = dma.done [#allocation6], 64
    $region85: #{multimodal_encoder_forward.1} parent=1 // pred_fallthru
      _
    // Predicated region
    $region86: #{multimodal_encoder_forward.1} parent=1 // pred_check
      _
    $region87: #{multimodal_encoder_forward.1} parent=1 // pred_check_branch
      %140 = sbr.rel (0) target = $region89
    $region88: #{multimodal_encoder_forward.1} parent=1 // pred_region
      %141 = dma.done [#allocation9], 24576
    $region89: #{multimodal_encoder_forward.1} parent=1 // pred_fallthru
      _
    // Predicated region
    $region90: #{multimodal_encoder_forward.1} parent=1 // pred_check
      _
    $region91: #{multimodal_encoder_forward.1} parent=1 // pred_check_branch
      %143 = sbr.rel (0) target = $region93
    $region92: #{multimodal_encoder_forward.1} parent=1 // pred_region
      %144 = dma.done [#allocation9], 32
    $region93: #{multimodal_encoder_forward.1} parent=1 // pred_fallthru
      _
    // Predicated region
    $region94: #{multimodal_encoder_forward.1} parent=1 // pred_check
      _
    $region95: #{multimodal_encoder_forward.1} parent=1 // pred_check_branch
      %146 = sbr.rel (0) target = $region97
    $region96: #{multimodal_encoder_forward.1} parent=1 // pred_region
      %147 = dma.done [#allocation12], 2048
    $region97: #{multimodal_encoder_forward.1} parent=1 // pred_fallthru
      _
    // Predicated region
    $region98: #{multimodal_encoder_forward.1} parent=1 // pred_check
      _
    $region99: #{multimodal_encoder_forward.1} parent=1 // pred_check_branch
      %149 = sbr.rel (0) target = $region101
    $region100: #{multimodal_encoder_forward.1} parent=1 // pred_region
      %150 = dma.done [#allocation12], 16
    $region101: #{multimodal_encoder_forward.1} parent=1 // pred_fallthru
      _
    %v152 = vld [vmem:[%s0] sm:$0xff]
    %v153 = vld [vmem:[%s0 + $0x8] sm:$0xff]
    %v154 = vld [vmem:[%s0 + $0x10] sm:$0xff]
    %v155 = vld [vmem:[%s0 + $0x18] sm:$0xff]
    %v156 = vld [vmem:[%s0 + $0x20] sm:$0xff]
    %v157 = vld [vmem:[%s0 + $0x28] sm:$0xff]
    %v158 = vld [vmem:[%s0 + $0x30] sm:$0xff]
    %v159 = vld [vmem:[%s0 + $0x38] sm:$0xff]
    %v160 = vld [vmem:[%s0 + $0x40] sm:$0xff]
    %v161 = vld [vmem:[%s0 + $0x48] sm:$0xff]
    %v162 = vld [vmem:[%s0 + $0x50] sm:$0xff]
    %v163 = vld [vmem:[%s0 + $0x58] sm:$0xff]
    %v164 = vld [vmem:[%s0 + $0x60] sm:$0xff]
    %v165 = vld [vmem:[%s0 + $0x68] sm:$0xff]
    %v166 = vld [vmem:[%s0 + $0x70] sm:$0xff]
    %v167 = vld [vmem:[%s0 + $0x78] sm:$0xff]
    %v168 = vld [vmem:[%s1] sm:$0xff]
    %v169 = vld [vmem:[%s1 + $0x8] sm:$0xff]
    %v170 = vld [vmem:[%s1 + $0x10] sm:$0xff]
    %v171 = vld [vmem:[%s1 + $0x18] sm:$0xff]
    %v172 = vld [vmem:[%s1 + $0x20] sm:$0xff]
    %v173 = vld [vmem:[%s1 + $0x28] sm:$0xff]
    %v174 = vld [vmem:[%s1 + $0x30] sm:$0xff]
    %v175 = vld [vmem:[%s1 + $0x38] sm:$0xff]
    %v176 = vld [vmem:[%s1 + $0x40] sm:$0xff]
    %v177 = vld [vmem:[%s1 + $0x48] sm:$0xff]
    %v178 = vld [vmem:[%s1 + $0x50] sm:$0xff]
    %v179 = vld [vmem:[%s1 + $0x58] sm:$0xff]
    %v180 = vunpack.c.l.bf16 %v152
    %v181 = vunpack.c.h.bf16 %v152
    %v182 = vunpack.c.l.bf16 %v153
    %v183 = vunpack.c.h.bf16 %v153
    %v184 = vunpack.c.l.bf16 %v160
    %v185 = vunpack.c.h.bf16 %v160
    %v186 = vunpack.c.l.bf16 %v161
    %v187 = vunpack.c.h.bf16 %v161
    %v188 = vunpack.c.l.bf16 %v154
    %v189 = vunpack.c.h.bf16 %v154
    %v190 = vunpack.c.l.bf16 %v155
    %v191 = vunpack.c.h.bf16 %v155
    %v192 = vunpack.c.l.bf16 %v162
    %v193 = vunpack.c.h.bf16 %v162
    %v194 = vunpack.c.l.bf16 %v163
    %v195 = vunpack.c.h.bf16 %v163
    %v196 = vadd.f32 %v180, %v188
    %v197 = vadd.f32 %v181, %v189
    %v198 = vadd.f32 %v182, %v190
    %v199 = vadd.f32 %v183, %v191
    %v200 = vadd.f32 %v184, %v192
    %v201 = vadd.f32 %v185, %v193
    %v202 = vadd.f32 %v186, %v194
    %v203 = vadd.f32 %v187, %v195
    %v204 = vunpack.c.l.bf16 %v156
    %v205 = vunpack.c.h.bf16 %v156
    %v206 = vunpack.c.l.bf16 %v157
    %v207 = vunpack.c.h.bf16 %v157
    %v208 = vunpack.c.l.bf16 %v164
    %v209 = vunpack.c.h.bf16 %v164
    %v210 = vunpack.c.l.bf16 %v165
    %v211 = vunpack.c.h.bf16 %v165
    %v212 = vadd.f32 %v196, %v204
    %v213 = vadd.f32 %v197, %v205
    %v214 = vadd.f32 %v198, %v206
    %v215 = vadd.f32 %v199, %v207
    %v216 = vadd.f32 %v200, %v208
    %v217 = vadd.f32 %v201, %v209
    %v218 = vadd.f32 %v202, %v210
    %v219 = vadd.f32 %v203, %v211
    %v220 = vunpack.c.l.bf16 %v158
    %v221 = vunpack.c.h.bf16 %v158
    %v222 = vunpack.c.l.bf16 %v159
    %v223 = vunpack.c.h.bf16 %v159
    %v224 = vunpack.c.l.bf16 %v166
    %v225 = vunpack.c.h.bf16 %v166
    %v226 = vunpack.c.l.bf16 %v167
    %v227 = vunpack.c.h.bf16 %v167
    %v228 = vadd.f32 %v212, %v220
    %v229 = vadd.f32 %v213, %v221
    %v230 = vadd.f32 %v214, %v222
    %v231 = vadd.f32 %v215, %v223
    %v232 = vadd.f32 %v216, %v224
    %v233 = vadd.f32 %v217, %v225
    %v234 = vadd.f32 %v218, %v226
    %v235 = vadd.f32 %v219, %v227
    %v236 = vmul.f32 %v228, 0.25
    %v237 = vmul.f32 %v229, 0.25
    %v238 = vmul.f32 %v230, 0.25
    %v239 = vmul.f32 %v231, 0.25
    %v240 = vmul.f32 %v232, 0.25
    %v241 = vmul.f32 %v233, 0.25
    %v242 = vmul.f32 %v234, 0.25
    %v243 = vmul.f32 %v235, 0.25
    %v244 = vunpack.c.l.bf16 %v168
    %v245 = vunpack.c.h.bf16 %v168
    %v246 = vunpack.c.l.bf16 %v169
    %v247 = vunpack.c.l.bf16 %v174
    %v248 = vunpack.c.h.bf16 %v174
    %v249 = vunpack.c.l.bf16 %v175
    %v254 = vrot.slane %v169, 4
    %v255 = vrot.slane %v170, 4
    %v256 = vrot.slane %v175, 4
    %v257 = vrot.slane %v176, 4
    %vm258 = vcmask 1043456
    %v259 = vsel %vm258, %v254, %v255
    %v260 = vsel %vm258, %v256, %v257
    %v265 = vunpack.c.l.bf16 %v259
    %v266 = vunpack.c.h.bf16 %v259
    %v267 = vunpack.c.l.bf16 %v255
    %v268 = vunpack.c.l.bf16 %v260
    %v269 = vunpack.c.h.bf16 %v260
    %v270 = vunpack.c.l.bf16 %v257
    %v271 = vadd.f32 %v244, %v265
    %v272 = vadd.f32 %v245, %v266
    %v273 = vadd.f32 %v246, %v267
    %v274 = vadd.f32 %v247, %v268
    %v275 = vadd.f32 %v248, %v269
    %v276 = vadd.f32 %v249, %v270
    %v277 = vunpack.c.l.bf16 %v171
    %v278 = vunpack.c.h.bf16 %v171
    %v279 = vunpack.c.l.bf16 %v172
    %v280 = vunpack.c.l.bf16 %v177
    %v281 = vunpack.c.h.bf16 %v177
    %v282 = vunpack.c.l.bf16 %v178
    %v283 = vadd.f32 %v271, %v277
    %v284 = vadd.f32 %v272, %v278
    %v285 = vadd.f32 %v273, %v279
    %v286 = vadd.f32 %v274, %v280
    %v287 = vadd.f32 %v275, %v281
    %v288 = vadd.f32 %v276, %v282
    %v293 = vrot.slane %v172, 4
    %v294 = vrot.slane %v173, 4
    %v295 = vrot.slane %v178, 4
    %v296 = vrot.slane %v179, 4
    %v297 = vsel %vm258, %v293, %v294
    %v298 = vsel %vm258, %v295, %v296
    %v303 = vunpack.c.l.bf16 %v297
    %v304 = vunpack.c.h.bf16 %v297
    %v305 = vunpack.c.l.bf16 %v294
    %v306 = vunpack.c.l.bf16 %v298
    %v307 = vunpack.c.h.bf16 %v298
    %v308 = vunpack.c.l.bf16 %v296
    %v309 = vadd.f32 %v283, %v303
    %v310 = vadd.f32 %v284, %v304
    %v311 = vadd.f32 %v285, %v305
    %v312 = vadd.f32 %v286, %v306
    %v313 = vadd.f32 %v287, %v307
    %v314 = vadd.f32 %v288, %v308
    %v315 = vmul.f32 %v309, 0.25
    %v316 = vmul.f32 %v310, 0.25
    %v317 = vmul.f32 %v311, 0.25
    %v318 = vmul.f32 %v312, 0.25
    %v319 = vmul.f32 %v313, 0.25
    %v320 = vmul.f32 %v314, 0.25
    %v321 = vpack.c.bf16 %v318, %v315
    %v322 = vpack.c.bf16 %v319, %v316
    %v323 = vpack.c.bf16 %v320, %v317
    %v324 = vld [vmem:[#allocation2] sm:$0xff]
    %v325 = vld [vmem:[#allocation2 + $0x8] sm:$0xff]
    %v326 = vld [vmem:[#allocation2 + $0x10] sm:$0xff]
    %v327 = vld [vmem:[#allocation2 + $0x18] sm:$0xff]
    %v328 = vld [vmem:[#allocation2 + $0x20] sm:$0xff]
    %v329 = vld [vmem:[#allocation2 + $0x28] sm:$0xff]
    %v330 = vld [vmem:[#allocation2 + $0x30] sm:$0xff]
    %v331 = vld [vmem:[#allocation2 + $0x38] sm:$0xff]
    %v332 = vld [vmem:[#allocation2 + $0x40] sm:$0xff]
    %v333 = vld [vmem:[#allocation2 + $0x48] sm:$0xff]
    %v334 = vld [vmem:[#allocation2 + $0x50] sm:$0xff]
    %v335 = vld [vmem:[#allocation2 + $0x58] sm:$0xff]
    %v336 = vld [vmem:[#allocation2 + $0x60] sm:$0xff]
    %v337 = vld [vmem:[#allocation2 + $0x68] sm:$0xff]
    %v338 = vld [vmem:[#allocation2 + $0x70] sm:$0xff]
    %v339 = vld [vmem:[#allocation2 + $0x78] sm:$0xff]
    %v340 = vld [vmem:[#allocation2 + $0x80] sm:$0xff]
    %v341 = vld [vmem:[#allocation2 + $0x88] sm:$0xff]
    %v342 = vld [vmem:[#allocation2 + $0x90] sm:$0xff]
    %v343 = vld [vmem:[#allocation2 + $0x98] sm:$0xff]
    %v344 = vld [vmem:[#allocation2 + $0xa0] sm:$0xff]
    %v345 = vld [vmem:[#allocation2 + $0xa8] sm:$0xff]
    %v346 = vld [vmem:[#allocation2 + $0xb0] sm:$0xff]
    %v347 = vld [vmem:[#allocation2 + $0xb8] sm:$0xff]
    %v348 = vld [vmem:[#allocation2 + $0xc0] sm:$0xff]
    %v349 = vld [vmem:[#allocation2 + $0xc8] sm:$0xff]
    %v350 = vld [vmem:[#allocation2 + $0xd0] sm:$0xff]
    %v351 = vld [vmem:[#allocation2 + $0xd8] sm:$0xff]
    %v352 = vld [vmem:[#allocation2 + $0xe0] sm:$0xff]
    %v353 = vld [vmem:[#allocation2 + $0xe8] sm:$0xff]
    %v354 = vld [vmem:[#allocation2 + $0xf0] sm:$0xff]
    %v355 = vld [vmem:[#allocation2 + $0xf8] sm:$0xff]
    %v356 = vld [vmem:[#allocation2 + $0x100] sm:$0xff]
    %v357 = vld [vmem:[#allocation2 + $0x108] sm:$0xff]
    %v358 = vld [vmem:[#allocation2 + $0x110] sm:$0xff]
    %v359 = vld [vmem:[#allocation2 + $0x118] sm:$0xff]
    %v360 = vld [vmem:[#allocation2 + $0x120] sm:$0xff]
    %v361 = vld [vmem:[#allocation2 + $0x128] sm:$0xff]
    %v362 = vld [vmem:[#allocation2 + $0x130] sm:$0xff]
    %v363 = vld [vmem:[#allocation2 + $0x138] sm:$0xff]
    %v364 = vld [vmem:[#allocation2 + $0x140] sm:$0xff]
    %v365 = vld [vmem:[#allocation2 + $0x148] sm:$0xff]
    %v366 = vld [vmem:[#allocation2 + $0x150] sm:$0xff]
    %v367 = vld [vmem:[#allocation2 + $0x158] sm:$0xff]
    %v368 = vld [vmem:[#allocation2 + $0x160] sm:$0xff]
    %v369 = vld [vmem:[#allocation2 + $0x168] sm:$0xff]
    %v370 = vld [vmem:[#allocation2 + $0x170] sm:$0xff]
    %v371 = vld [vmem:[#allocation2 + $0x178] sm:$0xff]
    %v372 = vld [vmem:[#allocation2 + $0x180] sm:$0xff]
    %v373 = vld [vmem:[#allocation2 + $0x188] sm:$0xff]
    %v374 = vld [vmem:[#allocation2 + $0x190] sm:$0xff]
    %v375 = vld [vmem:[#allocation2 + $0x198] sm:$0xff]
    %v376 = vld [vmem:[#allocation2 + $0x1a0] sm:$0xff]
    %v377 = vld [vmem:[#allocation2 + $0x1a8] sm:$0xff]
    %v378 = vld [vmem:[#allocation2 + $0x1b0] sm:$0xff]
    %v379 = vld [vmem:[#allocation2 + $0x1b8] sm:$0xff]
    %v380 = vld [vmem:[#allocation2 + $0x1c0] sm:$0xff]
    %v381 = vld [vmem:[#allocation2 + $0x1c8] sm:$0xff]
    %v382 = vld [vmem:[#allocation2 + $0x1d0] sm:$0xff]
    %v383 = vld [vmem:[#allocation2 + $0x1d8] sm:$0xff]
    %v384 = vld [vmem:[#allocation2 + $0x1e0] sm:$0xff]
    %v385 = vld [vmem:[#allocation2 + $0x1e8] sm:$0xff]
    %v386 = vld [vmem:[#allocation2 + $0x1f0] sm:$0xff]
    %v387 = vld [vmem:[#allocation2 + $0x1f8] sm:$0xff]
    %v388 = vld [vmem:[#allocation2 + $0x200] sm:$0xff]
    %v389 = vld [vmem:[#allocation2 + $0x208] sm:$0xff]
    %v390 = vld [vmem:[#allocation2 + $0x210] sm:$0xff]
    %v391 = vld [vmem:[#allocation2 + $0x218] sm:$0xff]
    %v392 = vld [vmem:[#allocation2 + $0x220] sm:$0xff]
    %v393 = vld [vmem:[#allocation2 + $0x228] sm:$0xff]
    %v394 = vld [vmem:[#allocation2 + $0x230] sm:$0xff]
    %v395 = vld [vmem:[#allocation2 + $0x238] sm:$0xff]
    %v396 = vld [vmem:[#allocation2 + $0x240] sm:$0xff]
    %v397 = vld [vmem:[#allocation2 + $0x248] sm:$0xff]
    %v398 = vld [vmem:[#allocation2 + $0x250] sm:$0xff]
    %v399 = vld [vmem:[#allocation2 + $0x258] sm:$0xff]
    %v400 = vld [vmem:[#allocation2 + $0x260] sm:$0xff]
    %v401 = vld [vmem:[#allocation2 + $0x268] sm:$0xff]
    %v402 = vld [vmem:[#allocation2 + $0x270] sm:$0xff]
    %v403 = vld [vmem:[#allocation2 + $0x278] sm:$0xff]
    %v404 = vld [vmem:[#allocation2 + $0x280] sm:$0xff]
    %v405 = vld [vmem:[#allocation2 + $0x288] sm:$0xff]
    %v406 = vld [vmem:[#allocation2 + $0x290] sm:$0xff]
    %v407 = vld [vmem:[#allocation2 + $0x298] sm:$0xff]
    %v408 = vld [vmem:[#allocation2 + $0x2a0] sm:$0xff]
    %v409 = vld [vmem:[#allocation2 + $0x2a8] sm:$0xff]
    %v410 = vld [vmem:[#allocation2 + $0x2b0] sm:$0xff]
    %v411 = vld [vmem:[#allocation2 + $0x2b8] sm:$0xff]
    %v412 = vld [vmem:[#allocation2 + $0x2c0] sm:$0xff]
    %v413 = vld [vmem:[#allocation2 + $0x2c8] sm:$0xff]
    %v414 = vld [vmem:[#allocation2 + $0x2d0] sm:$0xff]
    %v415 = vld [vmem:[#allocation2 + $0x2d8] sm:$0xff]
    %v416 = vld [vmem:[#allocation2 + $0x2e0] sm:$0xff]
    %v417 = vld [vmem:[#allocation2 + $0x2e8] sm:$0xff]
    %v418 = vld [vmem:[#allocation2 + $0x2f0] sm:$0xff]
    %v419 = vld [vmem:[#allocation2 + $0x2f8] sm:$0xff]
    %v420 = vld [vmem:[%s7] sm:$0xf]
    %v422 = vlaneseq
    %v423 = vshrl.u32 %v422, 7
    %v424 = vsub.s32 0, %v423
    %v425 = vrot.slane %v420, %v424
    %v426 = vlaneseq
    %v427 = vshrl.u32 %v426, 7
    %v428 = vsub.s32 1, %v427
    %v429 = vrot.slane %v420, %v428
    %v430 = vlaneseq
    %v431 = vshrl.u32 %v430, 7
    %v432 = vsub.s32 2, %v431
    %v433 = vrot.slane %v420, %v432
    %v434 = vlaneseq
    %v435 = vshrl.u32 %v434, 7
    %v436 = vsub.s32 3, %v435
    %v437 = vrot.slane %v420, %v436
    %v538 = vunpack.c.l.b16 %v324
    %v539 = vunpack.c.h.b16 %v324
    %v540 = vunpack.c.l.b16 %v325
    %v541 = vunpack.c.h.b16 %v325
    %v542 = vunpack.c.l.b16 %v326
    %v543 = vunpack.c.h.b16 %v326
    %v544 = vunpack.c.l.b16 %v327
    %v545 = vunpack.c.h.b16 %v327
    %v546 = vunpack.c.l.b16 %v328
    %v547 = vunpack.c.h.b16 %v328
    %v548 = vunpack.c.l.b16 %v329
    %v549 = vunpack.c.h.b16 %v329
    %v550 = vunpack.c.l.b16 %v330
    %v551 = vunpack.c.h.b16 %v330
    %v552 = vunpack.c.l.b16 %v331
    %v553 = vunpack.c.h.b16 %v331
    %v554 = vunpack.c.l.b16 %v332
    %v555 = vunpack.c.h.b16 %v332
    %v556 = vunpack.c.l.b16 %v333
    %v557 = vunpack.c.h.b16 %v333
    %v558 = vunpack.c.l.b16 %v334
    %v559 = vunpack.c.h.b16 %v334
    %v560 = vunpack.c.l.b16 %v335
    %v561 = vunpack.c.h.b16 %v335
    %v562 = vunpack.c.l.b16 %v336
    %v563 = vunpack.c.h.b16 %v336
    %v564 = vunpack.c.l.b16 %v337
    %v565 = vunpack.c.h.b16 %v337
    %v566 = vunpack.c.l.b16 %v338
    %v567 = vunpack.c.h.b16 %v338
    %v568 = vunpack.c.l.b16 %v339
    %v569 = vunpack.c.h.b16 %v339
    %v570 = vunpack.c.l.b16 %v340
    %v571 = vunpack.c.h.b16 %v340
    %v572 = vunpack.c.l.b16 %v341
    %v573 = vunpack.c.h.b16 %v341
    %v574 = vunpack.c.l.b16 %v342
    %v575 = vunpack.c.h.b16 %v342
    %v576 = vunpack.c.l.b16 %v343
    %v577 = vunpack.c.h.b16 %v343
    %v578 = vunpack.c.l.b16 %v344
    %v579 = vunpack.c.h.b16 %v344
    %v580 = vunpack.c.l.b16 %v345
    %v581 = vunpack.c.h.b16 %v345
    %v582 = vunpack.c.l.b16 %v346
    %v583 = vunpack.c.h.b16 %v346
    %v584 = vunpack.c.l.b16 %v347
    %v585 = vunpack.c.h.b16 %v347
    %v586 = vunpack.c.l.b16 %v348
    %v587 = vunpack.c.h.b16 %v348
    %v588 = vunpack.c.l.b16 %v349
    %v589 = vunpack.c.h.b16 %v349
    %v590 = vunpack.c.l.b16 %v350
    %v591 = vunpack.c.h.b16 %v350
    %v592 = vunpack.c.l.b16 %v351
    %v593 = vunpack.c.h.b16 %v351
    %v594 = vunpack.c.l.b16 %v352
    %v595 = vunpack.c.h.b16 %v352
    %v596 = vunpack.c.l.b16 %v353
    %v597 = vunpack.c.h.b16 %v353
    %v598 = vunpack.c.l.b16 %v354
    %v599 = vunpack.c.h.b16 %v354
    %v600 = vunpack.c.l.b16 %v355
    %v601 = vunpack.c.h.b16 %v355
    %v602 = vunpack.c.l.b16 %v356
    %v603 = vunpack.c.h.b16 %v356
    %v604 = vunpack.c.l.b16 %v357
    %v605 = vunpack.c.h.b16 %v357
    %v606 = vunpack.c.l.b16 %v358
    %v607 = vunpack.c.h.b16 %v358
    %v608 = vunpack.c.l.b16 %v359
    %v609 = vunpack.c.h.b16 %v359
    %v610 = vunpack.c.l.b16 %v360
    %v611 = vunpack.c.h.b16 %v360
    %v612 = vunpack.c.l.b16 %v361
    %v613 = vunpack.c.h.b16 %v361
    %v614 = vunpack.c.l.b16 %v362
    %v615 = vunpack.c.h.b16 %v362
    %v616 = vunpack.c.l.b16 %v363
    %v617 = vunpack.c.h.b16 %v363
    %v618 = vunpack.c.l.b16 %v364
    %v619 = vunpack.c.h.b16 %v364
    %v620 = vunpack.c.l.b16 %v365
    %v621 = vunpack.c.h.b16 %v365
    %v622 = vunpack.c.l.b16 %v366
    %v623 = vunpack.c.h.b16 %v366
    %v624 = vunpack.c.l.b16 %v367
    %v625 = vunpack.c.h.b16 %v367
    %v626 = vunpack.c.l.b16 %v368
    %v627 = vunpack.c.h.b16 %v368
    %v628 = vunpack.c.l.b16 %v369
    %v629 = vunpack.c.h.b16 %v369
    %v630 = vunpack.c.l.b16 %v370
    %v631 = vunpack.c.h.b16 %v370
    %v632 = vunpack.c.l.b16 %v371
    %v633 = vunpack.c.h.b16 %v371
    %v634 = vunpack.c.l.b16 %v372
    %v635 = vunpack.c.h.b16 %v372
    %v636 = vunpack.c.l.b16 %v373
    %v637 = vunpack.c.h.b16 %v373
    %v638 = vunpack.c.l.b16 %v374
    %v639 = vunpack.c.h.b16 %v374
    %v640 = vunpack.c.l.b16 %v375
    %v641 = vunpack.c.h.b16 %v375
    %v642 = vunpack.c.l.b16 %v376
    %v643 = vunpack.c.h.b16 %v376
    %v644 = vunpack.c.l.b16 %v377
    %v645 = vunpack.c.h.b16 %v377
    %v646 = vunpack.c.l.b16 %v378
    %v647 = vunpack.c.h.b16 %v378
    %v648 = vunpack.c.l.b16 %v379
    %v649 = vunpack.c.h.b16 %v379
    %v650 = vunpack.c.l.b16 %v380
    %v651 = vunpack.c.h.b16 %v380
    %v652 = vunpack.c.l.b16 %v381
    %v653 = vunpack.c.h.b16 %v381
    %v654 = vunpack.c.l.b16 %v382
    %v655 = vunpack.c.h.b16 %v382
    %v656 = vunpack.c.l.b16 %v383
    %v657 = vunpack.c.h.b16 %v383
    %v658 = vunpack.c.l.b16 %v384
    %v659 = vunpack.c.h.b16 %v384
    %v660 = vunpack.c.l.b16 %v385
    %v661 = vunpack.c.h.b16 %v385
    %v662 = vunpack.c.l.b16 %v386
    %v663 = vunpack.c.h.b16 %v386
    %v664 = vunpack.c.l.b16 %v387
    %v665 = vunpack.c.h.b16 %v387
    %v666 = vunpack.c.l.b16 %v388
    %v667 = vunpack.c.h.b16 %v388
    %v668 = vunpack.c.l.b16 %v389
    %v669 = vunpack.c.h.b16 %v389
    %v670 = vunpack.c.l.b16 %v390
    %v671 = vunpack.c.h.b16 %v390
    %v672 = vunpack.c.l.b16 %v391
    %v673 = vunpack.c.h.b16 %v391
    %v674 = vunpack.c.l.b16 %v392
    %v675 = vunpack.c.h.b16 %v392
    %v676 = vunpack.c.l.b16 %v393
    %v677 = vunpack.c.h.b16 %v393
    %v678 = vunpack.c.l.b16 %v394
    %v679 = vunpack.c.h.b16 %v394
    %v680 = vunpack.c.l.b16 %v395
    %v681 = vunpack.c.h.b16 %v395
    %v682 = vunpack.c.l.b16 %v396
    %v683 = vunpack.c.h.b16 %v396
    %v684 = vunpack.c.l.b16 %v397
    %v685 = vunpack.c.h.b16 %v397
    %v686 = vunpack.c.l.b16 %v398
    %v687 = vunpack.c.h.b16 %v398
    %v688 = vunpack.c.l.b16 %v399
    %v689 = vunpack.c.h.b16 %v399
    %v690 = vunpack.c.l.b16 %v400
    %v691 = vunpack.c.h.b16 %v400
    %v692 = vunpack.c.l.b16 %v401
    %v693 = vunpack.c.h.b16 %v401
    %v694 = vunpack.c.l.b16 %v402
    %v695 = vunpack.c.h.b16 %v402
    %v696 = vunpack.c.l.b16 %v403
    %v697 = vunpack.c.h.b16 %v403
    %v698 = vunpack.c.l.b16 %v404
    %v699 = vunpack.c.h.b16 %v404
    %v700 = vunpack.c.l.b16 %v405
    %v701 = vunpack.c.h.b16 %v405
    %v702 = vunpack.c.l.b16 %v406
    %v703 = vunpack.c.h.b16 %v406
    %v704 = vunpack.c.l.b16 %v407
    %v705 = vunpack.c.h.b16 %v407
    %v706 = vunpack.c.l.b16 %v408
    %v707 = vunpack.c.h.b16 %v408
    %v708 = vunpack.c.l.b16 %v409
    %v709 = vunpack.c.h.b16 %v409
    %v710 = vunpack.c.l.b16 %v410
    %v711 = vunpack.c.h.b16 %v410
    %v712 = vunpack.c.l.b16 %v411
    %v713 = vunpack.c.h.b16 %v411
    %v714 = vunpack.c.l.b16 %v412
    %v715 = vunpack.c.h.b16 %v412
    %v716 = vunpack.c.l.b16 %v413
    %v717 = vunpack.c.h.b16 %v413
    %v718 = vunpack.c.l.b16 %v414
    %v719 = vunpack.c.h.b16 %v414
    %v720 = vunpack.c.l.b16 %v415
    %v721 = vunpack.c.h.b16 %v415
    %v722 = vunpack.c.l.b16 %v416
    %v723 = vunpack.c.h.b16 %v416
    %v724 = vunpack.c.l.b16 %v417
    %v725 = vunpack.c.h.b16 %v417
    %v726 = vunpack.c.l.b16 %v418
    %v727 = vunpack.c.h.b16 %v418
    %v728 = vunpack.c.l.b16 %v419
    %v729 = vunpack.c.h.b16 %v419
    %v730 = vpack.c.b16 %v542, %v538
    %v731 = vpack.c.b16 %v543, %v539
    %v732 = vpack.c.b16 %v544, %v540
    %v733 = vpack.c.b16 %v545, %v541
    %v734 = vpack.c.b16 %v550, %v546
    %v735 = vpack.c.b16 %v551, %v547
    %v736 = vpack.c.b16 %v552, %v548
    %v737 = vpack.c.b16 %v553, %v549
    %v738 = vpack.c.b16 %v558, %v554
    %v739 = vpack.c.b16 %v559, %v555
    %v740 = vpack.c.b16 %v560, %v556
    %v741 = vpack.c.b16 %v561, %v557
    %v742 = vpack.c.b16 %v566, %v562
    %v743 = vpack.c.b16 %v567, %v563
    %v744 = vpack.c.b16 %v568, %v564
    %v745 = vpack.c.b16 %v569, %v565
    %v746 = vpack.c.b16 %v574, %v570
    %v747 = vpack.c.b16 %v575, %v571
    %v748 = vpack.c.b16 %v576, %v572
    %v749 = vpack.c.b16 %v577, %v573
    %v750 = vpack.c.b16 %v582, %v578
    %v751 = vpack.c.b16 %v583, %v579
    %v752 = vpack.c.b16 %v584, %v580
    %v753 = vpack.c.b16 %v585, %v581
    %v754 = vpack.c.b16 %v590, %v586
    %v755 = vpack.c.b16 %v591, %v587
    %v756 = vpack.c.b16 %v592, %v588
    %v757 = vpack.c.b16 %v593, %v589
    %v758 = vpack.c.b16 %v598, %v594
    %v759 = vpack.c.b16 %v599, %v595
    %v760 = vpack.c.b16 %v600, %v596
    %v761 = vpack.c.b16 %v601, %v597
    %v762 = vpack.c.b16 %v606, %v602
    %v763 = vpack.c.b16 %v607, %v603
    %v764 = vpack.c.b16 %v608, %v604
    %v765 = vpack.c.b16 %v609, %v605
    %v766 = vpack.c.b16 %v614, %v610
    %v767 = vpack.c.b16 %v615, %v611
    %v768 = vpack.c.b16 %v616, %v612
    %v769 = vpack.c.b16 %v617, %v613
    %v770 = vpack.c.b16 %v622, %v618
    %v771 = vpack.c.b16 %v623, %v619
    %v772 = vpack.c.b16 %v624, %v620
    %v773 = vpack.c.b16 %v625, %v621
    %v774 = vpack.c.b16 %v630, %v626
    %v775 = vpack.c.b16 %v631, %v627
    %v776 = vpack.c.b16 %v632, %v628
    %v777 = vpack.c.b16 %v633, %v629
    %v778 = vpack.c.b16 %v638, %v634
    %v779 = vpack.c.b16 %v639, %v635
    %v780 = vpack.c.b16 %v640, %v636
    %v781 = vpack.c.b16 %v641, %v637
    %v782 = vpack.c.b16 %v646, %v642
    %v783 = vpack.c.b16 %v647, %v643
    %v784 = vpack.c.b16 %v648, %v644
    %v785 = vpack.c.b16 %v649, %v645
    %v786 = vpack.c.b16 %v654, %v650
    %v787 = vpack.c.b16 %v655, %v651
    %v788 = vpack.c.b16 %v656, %v652
    %v789 = vpack.c.b16 %v657, %v653
    %v790 = vpack.c.b16 %v662, %v658
    %v791 = vpack.c.b16 %v663, %v659
    %v792 = vpack.c.b16 %v664, %v660
    %v793 = vpack.c.b16 %v665, %v661
    %v794 = vpack.c.b16 %v670, %v666
    %v795 = vpack.c.b16 %v671, %v667
    %v796 = vpack.c.b16 %v672, %v668
    %v797 = vpack.c.b16 %v673, %v669
    %v798 = vpack.c.b16 %v678, %v674
    %v799 = vpack.c.b16 %v679, %v675
    %v800 = vpack.c.b16 %v680, %v676
    %v801 = vpack.c.b16 %v681, %v677
    %v802 = vpack.c.b16 %v686, %v682
    %v803 = vpack.c.b16 %v687, %v683
    %v804 = vpack.c.b16 %v688, %v684
    %v805 = vpack.c.b16 %v689, %v685
    %v806 = vpack.c.b16 %v694, %v690
    %v807 = vpack.c.b16 %v695, %v691
    %v808 = vpack.c.b16 %v696, %v692
    %v809 = vpack.c.b16 %v697, %v693
    %v810 = vpack.c.b16 %v702, %v698
    %v811 = vpack.c.b16 %v703, %v699
    %v812 = vpack.c.b16 %v704, %v700
    %v813 = vpack.c.b16 %v705, %v701
    %v814 = vpack.c.b16 %v710, %v706
    %v815 = vpack.c.b16 %v711, %v707
    %v816 = vpack.c.b16 %v712, %v708
    %v817 = vpack.c.b16 %v713, %v709
    %v818 = vpack.c.b16 %v718, %v714
    %v819 = vpack.c.b16 %v719, %v715
    %v820 = vpack.c.b16 %v720, %v716
    %v821 = vpack.c.b16 %v721, %v717
    %v822 = vpack.c.b16 %v726, %v722
    %v823 = vpack.c.b16 %v727, %v723
    %v824 = vpack.c.b16 %v728, %v724
    %v825 = vpack.c.b16 %v729, %v725
    %922 = vmatprep.subr.bf16.mxu0 %v731
    %923 = vmatpush1.bf16.msra.mxu0 %v730
    %924 = vmatprep.subr.bf16.mxu0 %v735
    %925 = vmatpush1.bf16.msra.mxu0 %v734
    %926 = vmatprep.subr.bf16.mxu0 %v739
    %927 = vmatpush1.bf16.msra.mxu0 %v738
    %928 = vmatprep.subr.bf16.mxu0 %v743
    %929 = vmatpush1.bf16.msra.mxu0 %v742
    %930 = vmatprep.subr.bf16.mxu0 %v747
    %931 = vmatpush1.bf16.msra.mxu0 %v746
    %932 = vmatprep.subr.bf16.mxu0 %v751
    %933 = vmatpush1.bf16.msra.mxu0 %v750
    %934 = vmatprep.subr.bf16.mxu0 %v755
    %935 = vmatpush1.bf16.msra.mxu0 %v754
    %936 = vmatprep.subr.bf16.mxu0 %v759
    %937 = vmatpush1.bf16.msra.mxu0 %v758
    %938 = vmatprep.subr.bf16.mxu0 %v763
    %939 = vmatpush1.bf16.msra.mxu0 %v762
    %940 = vmatprep.subr.bf16.mxu0 %v767
    %941 = vmatpush1.bf16.msra.mxu0 %v766
    %942 = vmatprep.subr.bf16.mxu0 %v771
    %943 = vmatpush1.bf16.msra.mxu0 %v770
    %944 = vmatprep.subr.bf16.mxu0 %v775
    %945 = vmatpush1.bf16.msra.mxu0 %v774
    %946 = vmatprep.subr.bf16.mxu0 %v779
    %947 = vmatpush1.bf16.msra.mxu0 %v778
    %948 = vmatprep.subr.bf16.mxu0 %v783
    %949 = vmatpush1.bf16.msra.mxu0 %v782
    %950 = vmatprep.subr.bf16.mxu0 %v787
    %951 = vmatpush1.bf16.msra.mxu0 %v786
    %952 = vmatprep.subr.bf16.mxu0 %v791
    %953 = vmatpush1.bf16.msra.mxu0 %v790
    %954 = vmatprep.mubr.bf16.mxu0 %v322
    %955 = vmatmul.mubr.bf16.gmra.mrb[0].mxu0 %v321
    %v956 = vpop.f32.mrb[0].mxu0
    %v957 = vadd.f32 %v425, %v956
    %v958 = vpop.f32.mrb[0].mxu0
    %v959 = vadd.f32 %v429, %v958
    %v960 = vpop.f32.mrb[0].mxu0
    %v961 = vadd.f32 %v425, %v960
    %v962 = vpop.f32.mrb[0].mxu0
    %v963 = vadd.f32 %v429, %v962
    %964 = vdwg.mxu0
    %965 = vmatprep.subr.bf16.mxu0 %v795
    %966 = vmatpush1.bf16.msra.mxu0 %v794
    %967 = vmatprep.subr.bf16.mxu0 %v799
    %968 = vmatpush1.bf16.msra.mxu0 %v798
    %969 = vmatprep.subr.bf16.mxu0 %v803
    %970 = vmatpush1.bf16.msra.mxu0 %v802
    %971 = vmatprep.subr.bf16.mxu0 %v807
    %972 = vmatpush1.bf16.msra.mxu0 %v806
    %973 = vmatprep.subr.bf16.mxu0 %v811
    %974 = vmatpush1.bf16.msra.mxu0 %v810
    %975 = vmatprep.subr.bf16.mxu0 %v815
    %976 = vmatpush1.bf16.msra.mxu0 %v814
    %977 = vmatprep.subr.bf16.mxu0 %v819
    %978 = vmatpush1.bf16.msra.mxu0 %v818
    %979 = vmatprep.subr.bf16.mxu0 %v823
    %980 = vmatpush1.bf16.msra.mxu0 %v822
    %981 = vmatprep.subr.bf16.mxu0 0
    %982 = vmatpush1.bf16.msra.mxu0 0
    %983 = vmatprep.subr.bf16.mxu0 0
    %984 = vmatpush1.bf16.msra.mxu0 0
    %985 = vmatprep.subr.bf16.mxu0 0
    %986 = vmatpush1.bf16.msra.mxu0 0
    %987 = vmatprep.subr.bf16.mxu0 0
    %988 = vmatpush1.bf16.msra.mxu0 0
    %989 = vmatprep.subr.bf16.mxu0 0
    %990 = vmatpush1.bf16.msra.mxu0 0
    %991 = vmatprep.subr.bf16.mxu0 0
    %992 = vmatpush1.bf16.msra.mxu0 0
    %993 = vmatprep.subr.bf16.mxu0 0
    %994 = vmatpush1.bf16.msra.mxu0 0
    %995 = vmatprep.subr.bf16.mxu0 0
    %996 = vmatpush1.bf16.msra.mxu0 0
    %997 = vmatprep.mubr.bf16.mxu0 0
    %998 = vmatmul.mubr.bf16.gmra.mrb[0].mxu0 %v323
    %v999 = vpop.f32.mrb[0].mxu0
    %v1000 = vadd.f32 %v957, %v999
    %v1001 = vpop.f32.mrb[0].mxu0
    %v1002 = vadd.f32 %v959, %v1001
    %v1003 = vpop.f32.mrb[0].mxu0
    %v1004 = vadd.f32 %v961, %v1003
    %v1005 = vpop.f32.mrb[0].mxu0
    %v1006 = vadd.f32 %v963, %v1005
    %1007 = vdwg.mxu0
    %1008 = vmatprep.subr.bf16.mxu0 %v733
    %1009 = vmatpush1.bf16.msra.mxu0 %v732
    %1010 = vmatprep.subr.bf16.mxu0 %v737
    %1011 = vmatpush1.bf16.msra.mxu0 %v736
    %1012 = vmatprep.subr.bf16.mxu0 %v741
    %1013 = vmatpush1.bf16.msra.mxu0 %v740
    %1014 = vmatprep.subr.bf16.mxu0 %v745
    %1015 = vmatpush1.bf16.msra.mxu0 %v744
    %1016 = vmatprep.subr.bf16.mxu0 %v749
    %1017 = vmatpush1.bf16.msra.mxu0 %v748
    %1018 = vmatprep.subr.bf16.mxu0 %v753
    %1019 = vmatpush1.bf16.msra.mxu0 %v752
    %1020 = vmatprep.subr.bf16.mxu0 %v757
    %1021 = vmatpush1.bf16.msra.mxu0 %v756
    %1022 = vmatprep.subr.bf16.mxu0 %v761
    %1023 = vmatpush1.bf16.msra.mxu0 %v760
    %1024 = vmatprep.subr.bf16.mxu0 %v765
    %1025 = vmatpush1.bf16.msra.mxu0 %v764
    %1026 = vmatprep.subr.bf16.mxu0 %v769
    %1027 = vmatpush1.bf16.msra.mxu0 %v768
    %1028 = vmatprep.subr.bf16.mxu0 %v773
    %1029 = vmatpush1.bf16.msra.mxu0 %v772
    %1030 = vmatprep.subr.bf16.mxu0 %v777
    %1031 = vmatpush1.bf16.msra.mxu0 %v776
    %1032 = vmatprep.subr.bf16.mxu0 %v781
    %1033 = vmatpush1.bf16.msra.mxu0 %v780
    %1034 = vmatprep.subr.bf16.mxu0 %v785
    %1035 = vmatpush1.bf16.msra.mxu0 %v784
    %1036 = vmatprep.subr.bf16.mxu0 %v789
    %1037 = vmatpush1.bf16.msra.mxu0 %v788
    %1038 = vmatprep.subr.bf16.mxu0 %v793
    %1039 = vmatpush1.bf16.msra.mxu0 %v792
    %1040 = vmatprep.mubr.bf16.mxu0 %v322
    %1041 = vmatmul.mubr.bf16.gmra.mrb[0].mxu0 %v321
    %v1042 = vpop.f32.mrb[0].mxu0
    %v1043 = vadd.f32 %v433, %v1042
    %v1044 = vpop.f32.mrb[0].mxu0
    %v1045 = vadd.f32 %v437, %v1044
    %v1046 = vpop.f32.mrb[0].mxu0
    %v1047 = vadd.f32 %v433, %v1046
    %v1048 = vpop.f32.mrb[0].mxu0
    %v1049 = vadd.f32 %v437, %v1048
    %1050 = vdwg.mxu0
    %1051 = vmatprep.subr.bf16.mxu0 %v797
    %1052 = vmatpush1.bf16.msra.mxu0 %v796
    %1053 = vmatprep.subr.bf16.mxu0 %v801
    %1054 = vmatpush1.bf16.msra.mxu0 %v800
    %1055 = vmatprep.subr.bf16.mxu0 %v805
    %1056 = vmatpush1.bf16.msra.mxu0 %v804
    %1057 = vmatprep.subr.bf16.mxu0 %v809
    %1058 = vmatpush1.bf16.msra.mxu0 %v808
    %1059 = vmatprep.subr.bf16.mxu0 %v813
    %1060 = vmatpush1.bf16.msra.mxu0 %v812
    %1061 = vmatprep.subr.bf16.mxu0 %v817
    %1062 = vmatpush1.bf16.msra.mxu0 %v816
    %1063 = vmatprep.subr.bf16.mxu0 %v821
    %1064 = vmatpush1.bf16.msra.mxu0 %v820
    %1065 = vmatprep.subr.bf16.mxu0 %v825
    %1066 = vmatpush1.bf16.msra.mxu0 %v824
    %1067 = vmatprep.subr.bf16.mxu0 0
    %1068 = vmatpush1.bf16.msra.mxu0 0
    %1069 = vmatprep.subr.bf16.mxu0 0
    %1070 = vmatpush1.bf16.msra.mxu0 0
    %1071 = vmatprep.subr.bf16.mxu0 0
    %1072 = vmatpush1.bf16.msra.mxu0 0
    %1073 = vmatprep.subr.bf16.mxu0 0
    %1074 = vmatpush1.bf16.msra.mxu0 0
    %1075 = vmatprep.subr.bf16.mxu0 0
    %1076 = vmatpush1.bf16.msra.mxu0 0
    %1077 = vmatprep.subr.bf16.mxu0 0
    %1078 = vmatpush1.bf16.msra.mxu0 0
    %1079 = vmatprep.subr.bf16.mxu0 0
    %1080 = vmatpush1.bf16.msra.mxu0 0
    %1081 = vmatprep.subr.bf16.mxu0 0
    %1082 = vmatpush1.bf16.msra.mxu0 0
    %1083 = vmatprep.mubr.bf16.mxu0 0
    %1084 = vmatmul.mubr.bf16.gmra.mrb[0].mxu0 %v323
    %v1085 = vpop.f32.mrb[0].mxu0
    %v1086 = vadd.f32 %v1043, %v1085
    %v1087 = vpop.f32.mrb[0].mxu0
    %v1088 = vadd.f32 %v1045, %v1087
    %v1089 = vpop.f32.mrb[0].mxu0
    %v1090 = vadd.f32 %v1047, %v1089
    %v1091 = vpop.f32.mrb[0].mxu0
    %v1092 = vadd.f32 %v1049, %v1091
    %1093 = vdwg.mxu0
    %v1094 = vpack.c.bf16 %v240, %v236
    %v1095 = vpack.c.bf16 %v241, %v237
    %v1096 = vpack.c.bf16 %v242, %v238
    %v1097 = vpack.c.bf16 %v243, %v239
    %v1098 = vld [vmem:[%s8] sm:$0xff]
    %v1099 = vld [vmem:[%s8 + $0x8] sm:$0xff]
    %v1100 = vld [vmem:[%s8 + $0x10] sm:$0xff]
    %v1101 = vld [vmem:[%s8 + $0x18] sm:$0xff]
    %v1102 = vld [vmem:[%s8 + $0x20] sm:$0xff]
    %v1103 = vld [vmem:[%s8 + $0x28] sm:$0xff]
    %v1104 = vld [vmem:[%s8 + $0x30] sm:$0xff]
    %v1105 = vld [vmem:[%s8 + $0x38] sm:$0xff]
    %v1106 = vld [vmem:[%s8 + $0x40] sm:$0xff]
    %v1107 = vld [vmem:[%s8 + $0x48] sm:$0xff]
    %v1108 = vld [vmem:[%s8 + $0x50] sm:$0xff]
    %v1109 = vld [vmem:[%s8 + $0x58] sm:$0xff]
    %v1110 = vld [vmem:[%s8 + $0x60] sm:$0xff]
    %v1111 = vld [vmem:[%s8 + $0x68] sm:$0xff]
    %v1112 = vld [vmem:[%s8 + $0x70] sm:$0xff]
    %v1113 = vld [vmem:[%s8 + $0x78] sm:$0xff]
    %v1114 = vld [vmem:[%s8 + $0x80] sm:$0xff]
    %v1115 = vld [vmem:[%s8 + $0x88] sm:$0xff]
    %v1116 = vld [vmem:[%s8 + $0x90] sm:$0xff]
    %v1117 = vld [vmem:[%s8 + $0x98] sm:$0xff]
    %v1118 = vld [vmem:[%s8 + $0xa0] sm:$0xff]
    %v1119 = vld [vmem:[%s8 + $0xa8] sm:$0xff]
    %v1120 = vld [vmem:[%s8 + $0xb0] sm:$0xff]
    %v1121 = vld [vmem:[%s8 + $0xb8] sm:$0xff]
    %v1122 = vld [vmem:[%s8 + $0xc0] sm:$0xff]
    %v1123 = vld [vmem:[%s8 + $0xc8] sm:$0xff]
    %v1124 = vld [vmem:[%s8 + $0xd0] sm:$0xff]
    %v1125 = vld [vmem:[%s8 + $0xd8] sm:$0xff]
    %v1126 = vld [vmem:[%s8 + $0xe0] sm:$0xff]
    %v1127 = vld [vmem:[%s8 + $0xe8] sm:$0xff]
    %v1128 = vld [vmem:[%s8 + $0xf0] sm:$0xff]
    %v1129 = vld [vmem:[%s8 + $0xf8] sm:$0xff]
    %v1130 = vld [vmem:[%s8 + $0x100] sm:$0xff]
    %v1131 = vld [vmem:[%s8 + $0x108] sm:$0xff]
    %v1132 = vld [vmem:[%s8 + $0x110] sm:$0xff]
    %v1133 = vld [vmem:[%s8 + $0x118] sm:$0xff]
    %v1134 = vld [vmem:[%s8 + $0x120] sm:$0xff]
    %v1135 = vld [vmem:[%s8 + $0x128] sm:$0xff]
    %v1136 = vld [vmem:[%s8 + $0x130] sm:$0xff]
    %v1137 = vld [vmem:[%s8 + $0x138] sm:$0xff]
    %v1138 = vld [vmem:[%s8 + $0x140] sm:$0xff]
    %v1139 = vld [vmem:[%s8 + $0x148] sm:$0xff]
    %v1140 = vld [vmem:[%s8 + $0x150] sm:$0xff]
    %v1141 = vld [vmem:[%s8 + $0x158] sm:$0xff]
    %v1142 = vld [vmem:[%s8 + $0x160] sm:$0xff]
    %v1143 = vld [vmem:[%s8 + $0x168] sm:$0xff]
    %v1144 = vld [vmem:[%s8 + $0x170] sm:$0xff]
    %v1145 = vld [vmem:[%s8 + $0x178] sm:$0xff]
    %v1146 = vld [vmem:[%s8 + $0x180] sm:$0xff]
    %v1147 = vld [vmem:[%s8 + $0x188] sm:$0xff]
    %v1148 = vld [vmem:[%s8 + $0x190] sm:$0xff]
    %v1149 = vld [vmem:[%s8 + $0x198] sm:$0xff]
    %v1150 = vld [vmem:[%s8 + $0x1a0] sm:$0xff]
    %v1151 = vld [vmem:[%s8 + $0x1a8] sm:$0xff]
    %v1152 = vld [vmem:[%s8 + $0x1b0] sm:$0xff]
    %v1153 = vld [vmem:[%s8 + $0x1b8] sm:$0xff]
    %v1154 = vld [vmem:[%s8 + $0x1c0] sm:$0xff]
    %v1155 = vld [vmem:[%s8 + $0x1c8] sm:$0xff]
    %v1156 = vld [vmem:[%s8 + $0x1d0] sm:$0xff]
    %v1157 = vld [vmem:[%s8 + $0x1d8] sm:$0xff]
    %v1158 = vld [vmem:[%s8 + $0x1e0] sm:$0xff]
    %v1159 = vld [vmem:[%s8 + $0x1e8] sm:$0xff]
    %v1160 = vld [vmem:[%s8 + $0x1f0] sm:$0xff]
    %v1161 = vld [vmem:[%s8 + $0x1f8] sm:$0xff]
    %v1162 = vld [vmem:[%s8 + $0x200] sm:$0xff]
    %v1163 = vld [vmem:[%s8 + $0x208] sm:$0xff]
    %v1164 = vld [vmem:[%s8 + $0x210] sm:$0xff]
    %v1165 = vld [vmem:[%s8 + $0x218] sm:$0xff]
    %v1166 = vld [vmem:[%s8 + $0x220] sm:$0xff]
    %v1167 = vld [vmem:[%s8 + $0x228] sm:$0xff]
    %v1168 = vld [vmem:[%s8 + $0x230] sm:$0xff]
    %v1169 = vld [vmem:[%s8 + $0x238] sm:$0xff]
    %v1170 = vld [vmem:[%s8 + $0x240] sm:$0xff]
    %v1171 = vld [vmem:[%s8 + $0x248] sm:$0xff]
    %v1172 = vld [vmem:[%s8 + $0x250] sm:$0xff]
    %v1173 = vld [vmem:[%s8 + $0x258] sm:$0xff]
    %v1174 = vld [vmem:[%s8 + $0x260] sm:$0xff]
    %v1175 = vld [vmem:[%s8 + $0x268] sm:$0xff]
    %v1176 = vld [vmem:[%s8 + $0x270] sm:$0xff]
    %v1177 = vld [vmem:[%s8 + $0x278] sm:$0xff]
    %v1178 = vld [vmem:[%s8 + $0x280] sm:$0xff]
    %v1179 = vld [vmem:[%s8 + $0x288] sm:$0xff]
    %v1180 = vld [vmem:[%s8 + $0x290] sm:$0xff]
    %v1181 = vld [vmem:[%s8 + $0x298] sm:$0xff]
    %v1182 = vld [vmem:[%s8 + $0x2a0] sm:$0xff]
    %v1183 = vld [vmem:[%s8 + $0x2a8] sm:$0xff]
    %v1184 = vld [vmem:[%s8 + $0x2b0] sm:$0xff]
    %v1185 = vld [vmem:[%s8 + $0x2b8] sm:$0xff]
    %v1186 = vld [vmem:[%s8 + $0x2c0] sm:$0xff]
    %v1187 = vld [vmem:[%s8 + $0x2c8] sm:$0xff]
    %v1188 = vld [vmem:[%s8 + $0x2d0] sm:$0xff]
    %v1189 = vld [vmem:[%s8 + $0x2d8] sm:$0xff]
    %v1190 = vld [vmem:[%s8 + $0x2e0] sm:$0xff]
    %v1191 = vld [vmem:[%s8 + $0x2e8] sm:$0xff]
    %v1192 = vld [vmem:[%s8 + $0x2f0] sm:$0xff]
    %v1193 = vld [vmem:[%s8 + $0x2f8] sm:$0xff]
    %v1194 = vld [vmem:[%s8 + $0x300] sm:$0xff]
    %v1195 = vld [vmem:[%s8 + $0x308] sm:$0xff]
    %v1196 = vld [vmem:[%s8 + $0x310] sm:$0xff]
    %v1197 = vld [vmem:[%s8 + $0x318] sm:$0xff]
    %v1198 = vld [vmem:[%s8 + $0x320] sm:$0xff]
    %v1199 = vld [vmem:[%s8 + $0x328] sm:$0xff]
    %v1200 = vld [vmem:[%s8 + $0x330] sm:$0xff]
    %v1201 = vld [vmem:[%s8 + $0x338] sm:$0xff]
    %v1202 = vld [vmem:[%s8 + $0x340] sm:$0xff]
    %v1203 = vld [vmem:[%s8 + $0x348] sm:$0xff]
    %v1204 = vld [vmem:[%s8 + $0x350] sm:$0xff]
    %v1205 = vld [vmem:[%s8 + $0x358] sm:$0xff]
    %v1206 = vld [vmem:[%s8 + $0x360] sm:$0xff]
    %v1207 = vld [vmem:[%s8 + $0x368] sm:$0xff]
    %v1208 = vld [vmem:[%s8 + $0x370] sm:$0xff]
    %v1209 = vld [vmem:[%s8 + $0x378] sm:$0xff]
    %v1210 = vld [vmem:[%s8 + $0x380] sm:$0xff]
    %v1211 = vld [vmem:[%s8 + $0x388] sm:$0xff]
    %v1212 = vld [vmem:[%s8 + $0x390] sm:$0xff]
    %v1213 = vld [vmem:[%s8 + $0x398] sm:$0xff]
    %v1214 = vld [vmem:[%s8 + $0x3a0] sm:$0xff]
    %v1215 = vld [vmem:[%s8 + $0x3a8] sm:$0xff]
    %v1216 = vld [vmem:[%s8 + $0x3b0] sm:$0xff]
    %v1217 = vld [vmem:[%s8 + $0x3b8] sm:$0xff]
    %v1218 = vld [vmem:[%s8 + $0x3c0] sm:$0xff]
    %v1219 = vld [vmem:[%s8 + $0x3c8] sm:$0xff]
    %v1220 = vld [vmem:[%s8 + $0x3d0] sm:$0xff]
    %v1221 = vld [vmem:[%s8 + $0x3d8] sm:$0xff]
    %v1222 = vld [vmem:[%s8 + $0x3e0] sm:$0xff]
    %v1223 = vld [vmem:[%s8 + $0x3e8] sm:$0xff]
    %v1224 = vld [vmem:[%s8 + $0x3f0] sm:$0xff]
    %v1225 = vld [vmem:[%s8 + $0x3f8] sm:$0xff]
    %v1226 = vpack.c.bf16 %v1004, %v1000
    %v1227 = vpack.c.bf16 %v1006, %v1002
    %v1228 = vpack.c.bf16 %v1090, %v1086
    %v1229 = vpack.c.bf16 %v1092, %v1088
    %v1230 = vld [vmem:[%s8 + $0x400] sm:$0xff]
    %v1231 = vld [vmem:[%s8 + $0x408] sm:$0xff]
    %v1232 = vld [vmem:[%s8 + $0x410] sm:$0xff]
    %v1233 = vld [vmem:[%s8 + $0x418] sm:$0xff]
    %v1234 = vld [vmem:[%s8 + $0x420] sm:$0xff]
    %v1235 = vld [vmem:[%s8 + $0x428] sm:$0xff]
    %v1236 = vld [vmem:[%s8 + $0x430] sm:$0xff]
    %v1237 = vld [vmem:[%s8 + $0x438] sm:$0xff]
    %v1238 = vld [vmem:[%s8 + $0x440] sm:$0xff]
    %v1239 = vld [vmem:[%s8 + $0x448] sm:$0xff]
    %v1240 = vld [vmem:[%s8 + $0x450] sm:$0xff]
    %v1241 = vld [vmem:[%s8 + $0x458] sm:$0xff]
    %v1242 = vld [vmem:[%s8 + $0x460] sm:$0xff]
    %v1243 = vld [vmem:[%s8 + $0x468] sm:$0xff]
    %v1244 = vld [vmem:[%s8 + $0x470] sm:$0xff]
    %v1245 = vld [vmem:[%s8 + $0x478] sm:$0xff]
    %v1246 = vld [vmem:[%s8 + $0x480] sm:$0xff]
    %v1247 = vld [vmem:[%s8 + $0x488] sm:$0xff]
    %v1248 = vld [vmem:[%s8 + $0x490] sm:$0xff]
    %v1249 = vld [vmem:[%s8 + $0x498] sm:$0xff]
    %v1250 = vld [vmem:[%s8 + $0x4a0] sm:$0xff]
    %v1251 = vld [vmem:[%s8 + $0x4a8] sm:$0xff]
    %v1252 = vld [vmem:[%s8 + $0x4b0] sm:$0xff]
    %v1253 = vld [vmem:[%s8 + $0x4b8] sm:$0xff]
    %v1254 = vld [vmem:[%s8 + $0x4c0] sm:$0xff]
    %v1255 = vld [vmem:[%s8 + $0x4c8] sm:$0xff]
    %v1256 = vld [vmem:[%s8 + $0x4d0] sm:$0xff]
    %v1257 = vld [vmem:[%s8 + $0x4d8] sm:$0xff]
    %v1258 = vld [vmem:[%s8 + $0x4e0] sm:$0xff]
    %v1259 = vld [vmem:[%s8 + $0x4e8] sm:$0xff]
    %v1260 = vld [vmem:[%s8 + $0x4f0] sm:$0xff]
    %v1261 = vld [vmem:[%s8 + $0x4f8] sm:$0xff]
    %v1262 = vld [vmem:[%s8 + $0x500] sm:$0xff]
    %v1263 = vld [vmem:[%s8 + $0x508] sm:$0xff]
    %v1264 = vld [vmem:[%s8 + $0x510] sm:$0xff]
    %v1265 = vld [vmem:[%s8 + $0x518] sm:$0xff]
    %v1266 = vld [vmem:[%s8 + $0x520] sm:$0xff]
    %v1267 = vld [vmem:[%s8 + $0x528] sm:$0xff]
    %v1268 = vld [vmem:[%s8 + $0x530] sm:$0xff]
    %v1269 = vld [vmem:[%s8 + $0x538] sm:$0xff]
    %v1270 = vld [vmem:[%s8 + $0x540] sm:$0xff]
    %v1271 = vld [vmem:[%s8 + $0x548] sm:$0xff]
    %v1272 = vld [vmem:[%s8 + $0x550] sm:$0xff]
    %v1273 = vld [vmem:[%s8 + $0x558] sm:$0xff]
    %v1274 = vld [vmem:[%s8 + $0x560] sm:$0xff]
    %v1275 = vld [vmem:[%s8 + $0x568] sm:$0xff]
    %v1276 = vld [vmem:[%s8 + $0x570] sm:$0xff]
    %v1277 = vld [vmem:[%s8 + $0x578] sm:$0xff]
    %v1278 = vld [vmem:[%s8 + $0x580] sm:$0xff]
    %v1279 = vld [vmem:[%s8 + $0x588] sm:$0xff]
    %v1280 = vld [vmem:[%s8 + $0x590] sm:$0xff]
    %v1281 = vld [vmem:[%s8 + $0x598] sm:$0xff]
    %v1282 = vld [vmem:[%s8 + $0x5a0] sm:$0xff]
    %v1283 = vld [vmem:[%s8 + $0x5a8] sm:$0xff]
    %v1284 = vld [vmem:[%s8 + $0x5b0] sm:$0xff]
    %v1285 = vld [vmem:[%s8 + $0x5b8] sm:$0xff]
    %v1286 = vld [vmem:[%s8 + $0x5c0] sm:$0xff]
    %v1287 = vld [vmem:[%s8 + $0x5c8] sm:$0xff]
    %v1288 = vld [vmem:[%s8 + $0x5d0] sm:$0xff]
    %v1289 = vld [vmem:[%s8 + $0x5d8] sm:$0xff]
    %v1290 = vld [vmem:[%s8 + $0x5e0] sm:$0xff]
    %v1291 = vld [vmem:[%s8 + $0x5e8] sm:$0xff]
    %v1292 = vld [vmem:[%s8 + $0x5f0] sm:$0xff]
    %v1293 = vld [vmem:[%s8 + $0x5f8] sm:$0xff]
    %v1294 = vld [vmem:[%s8 + $0x600] sm:$0xff]
    %v1295 = vld [vmem:[%s8 + $0x608] sm:$0xff]
    %v1296 = vld [vmem:[%s8 + $0x610] sm:$0xff]
    %v1297 = vld [vmem:[%s8 + $0x618] sm:$0xff]
    %v1298 = vld [vmem:[%s8 + $0x620] sm:$0xff]
    %v1299 = vld [vmem:[%s8 + $0x628] sm:$0xff]
    %v1300 = vld [vmem:[%s8 + $0x630] sm:$0xff]
    %v1301 = vld [vmem:[%s8 + $0x638] sm:$0xff]
    %v1302 = vld [vmem:[%s8 + $0x640] sm:$0xff]
    %v1303 = vld [vmem:[%s8 + $0x648] sm:$0xff]
    %v1304 = vld [vmem:[%s8 + $0x650] sm:$0xff]
    %v1305 = vld [vmem:[%s8 + $0x658] sm:$0xff]
    %v1306 = vld [vmem:[%s8 + $0x660] sm:$0xff]
    %v1307 = vld [vmem:[%s8 + $0x668] sm:$0xff]
    %v1308 = vld [vmem:[%s8 + $0x670] sm:$0xff]
    %v1309 = vld [vmem:[%s8 + $0x678] sm:$0xff]
    %v1310 = vld [vmem:[%s8 + $0x680] sm:$0xff]
    %v1311 = vld [vmem:[%s8 + $0x688] sm:$0xff]
    %v1312 = vld [vmem:[%s8 + $0x690] sm:$0xff]
    %v1313 = vld [vmem:[%s8 + $0x698] sm:$0xff]
    %v1314 = vld [vmem:[%s8 + $0x6a0] sm:$0xff]
    %v1315 = vld [vmem:[%s8 + $0x6a8] sm:$0xff]
    %v1316 = vld [vmem:[%s8 + $0x6b0] sm:$0xff]
    %v1317 = vld [vmem:[%s8 + $0x6b8] sm:$0xff]
    %v1318 = vld [vmem:[%s8 + $0x6c0] sm:$0xff]
    %v1319 = vld [vmem:[%s8 + $0x6c8] sm:$0xff]
    %v1320 = vld [vmem:[%s8 + $0x6d0] sm:$0xff]
    %v1321 = vld [vmem:[%s8 + $0x6d8] sm:$0xff]
    %v1322 = vld [vmem:[%s8 + $0x6e0] sm:$0xff]
    %v1323 = vld [vmem:[%s8 + $0x6e8] sm:$0xff]
    %v1324 = vld [vmem:[%s8 + $0x6f0] sm:$0xff]
    %v1325 = vld [vmem:[%s8 + $0x6f8] sm:$0xff]
    %v1326 = vld [vmem:[%s8 + $0x700] sm:$0xff]
    %v1327 = vld [vmem:[%s8 + $0x708] sm:$0xff]
    %v1328 = vld [vmem:[%s8 + $0x710] sm:$0xff]
    %v1329 = vld [vmem:[%s8 + $0x718] sm:$0xff]
    %v1330 = vld [vmem:[%s8 + $0x720] sm:$0xff]
    %v1331 = vld [vmem:[%s8 + $0x728] sm:$0xff]
    %v1332 = vld [vmem:[%s8 + $0x730] sm:$0xff]
    %v1333 = vld [vmem:[%s8 + $0x738] sm:$0xff]
    %v1334 = vld [vmem:[%s8 + $0x740] sm:$0xff]
    %v1335 = vld [vmem:[%s8 + $0x748] sm:$0xff]
    %v1336 = vld [vmem:[%s8 + $0x750] sm:$0xff]
    %v1337 = vld [vmem:[%s8 + $0x758] sm:$0xff]
    %v1338 = vld [vmem:[%s8 + $0x760] sm:$0xff]
    %v1339 = vld [vmem:[%s8 + $0x768] sm:$0xff]
    %v1340 = vld [vmem:[%s8 + $0x770] sm:$0xff]
    %v1341 = vld [vmem:[%s8 + $0x778] sm:$0xff]
    %v1342 = vld [vmem:[%s8 + $0x780] sm:$0xff]
    %v1343 = vld [vmem:[%s8 + $0x788] sm:$0xff]
    %v1344 = vld [vmem:[%s8 + $0x790] sm:$0xff]
    %v1345 = vld [vmem:[%s8 + $0x798] sm:$0xff]
    %v1346 = vld [vmem:[%s8 + $0x7a0] sm:$0xff]
    %v1347 = vld [vmem:[%s8 + $0x7a8] sm:$0xff]
    %v1348 = vld [vmem:[%s8 + $0x7b0] sm:$0xff]
    %v1349 = vld [vmem:[%s8 + $0x7b8] sm:$0xff]
    %v1350 = vld [vmem:[%s8 + $0x7c0] sm:$0xff]
    %v1351 = vld [vmem:[%s8 + $0x7c8] sm:$0xff]
    %v1352 = vld [vmem:[%s8 + $0x7d0] sm:$0xff]
    %v1353 = vld [vmem:[%s8 + $0x7d8] sm:$0xff]
    %v1354 = vld [vmem:[%s8 + $0x7e0] sm:$0xff]
    %v1355 = vld [vmem:[%s8 + $0x7e8] sm:$0xff]
    %v1356 = vld [vmem:[%s8 + $0x7f0] sm:$0xff]
    %v1357 = vld [vmem:[%s8 + $0x7f8] sm:$0xff]
    %v1486 = vunpack.c.l.b16 %v1230
    %v1487 = vunpack.c.h.b16 %v1230
    %v1488 = vunpack.c.l.b16 %v1231
    %v1489 = vunpack.c.h.b16 %v1231
    %v1490 = vunpack.c.l.b16 %v1232
    %v1491 = vunpack.c.h.b16 %v1232
    %v1492 = vunpack.c.l.b16 %v1233
    %v1493 = vunpack.c.h.b16 %v1233
    %v1494 = vunpack.c.l.b16 %v1234
    %v1495 = vunpack.c.h.b16 %v1234
    %v1496 = vunpack.c.l.b16 %v1235
    %v1497 = vunpack.c.h.b16 %v1235
    %v1498 = vunpack.c.l.b16 %v1236
    %v1499 = vunpack.c.h.b16 %v1236
    %v1500 = vunpack.c.l.b16 %v1237
    %v1501 = vunpack.c.h.b16 %v1237
    %v1502 = vunpack.c.l.b16 %v1238
    %v1503 = vunpack.c.h.b16 %v1238
    %v1504 = vunpack.c.l.b16 %v1239
    %v1505 = vunpack.c.h.b16 %v1239
    %v1506 = vunpack.c.l.b16 %v1240
    %v1507 = vunpack.c.h.b16 %v1240
    %v1508 = vunpack.c.l.b16 %v1241
    %v1509 = vunpack.c.h.b16 %v1241
    %v1510 = vunpack.c.l.b16 %v1242
    %v1511 = vunpack.c.h.b16 %v1242
    %v1512 = vunpack.c.l.b16 %v1243
    %v1513 = vunpack.c.h.b16 %v1243
    %v1514 = vunpack.c.l.b16 %v1244
    %v1515 = vunpack.c.h.b16 %v1244
    %v1516 = vunpack.c.l.b16 %v1245
    %v1517 = vunpack.c.h.b16 %v1245
    %v1518 = vunpack.c.l.b16 %v1246
    %v1519 = vunpack.c.h.b16 %v1246
    %v1520 = vunpack.c.l.b16 %v1247
    %v1521 = vunpack.c.h.b16 %v1247
    %v1522 = vunpack.c.l.b16 %v1248
    %v1523 = vunpack.c.h.b16 %v1248
    %v1524 = vunpack.c.l.b16 %v1249
    %v1525 = vunpack.c.h.b16 %v1249
    %v1526 = vunpack.c.l.b16 %v1250
    %v1527 = vunpack.c.h.b16 %v1250
    %v1528 = vunpack.c.l.b16 %v1251
    %v1529 = vunpack.c.h.b16 %v1251
    %v1530 = vunpack.c.l.b16 %v1252
    %v1531 = vunpack.c.h.b16 %v1252
    %v1532 = vunpack.c.l.b16 %v1253
    %v1533 = vunpack.c.h.b16 %v1253
    %v1534 = vunpack.c.l.b16 %v1254
    %v1535 = vunpack.c.h.b16 %v1254
    %v1536 = vunpack.c.l.b16 %v1255
    %v1537 = vunpack.c.h.b16 %v1255
    %v1538 = vunpack.c.l.b16 %v1256
    %v1539 = vunpack.c.h.b16 %v1256
    %v1540 = vunpack.c.l.b16 %v1257
    %v1541 = vunpack.c.h.b16 %v1257
    %v1542 = vunpack.c.l.b16 %v1258
    %v1543 = vunpack.c.h.b16 %v1258
    %v1544 = vunpack.c.l.b16 %v1259
    %v1545 = vunpack.c.h.b16 %v1259
    %v1546 = vunpack.c.l.b16 %v1260
    %v1547 = vunpack.c.h.b16 %v1260
    %v1548 = vunpack.c.l.b16 %v1261
    %v1549 = vunpack.c.h.b16 %v1261
    %v1550 = vunpack.c.l.b16 %v1262
    %v1551 = vunpack.c.h.b16 %v1262
    %v1552 = vunpack.c.l.b16 %v1263
    %v1553 = vunpack.c.h.b16 %v1263
    %v1554 = vunpack.c.l.b16 %v1264
    %v1555 = vunpack.c.h.b16 %v1264
    %v1556 = vunpack.c.l.b16 %v1265
    %v1557 = vunpack.c.h.b16 %v1265
    %v1558 = vunpack.c.l.b16 %v1266
    %v1559 = vunpack.c.h.b16 %v1266
    %v1560 = vunpack.c.l.b16 %v1267
    %v1561 = vunpack.c.h.b16 %v1267
    %v1562 = vunpack.c.l.b16 %v1268
    %v1563 = vunpack.c.h.b16 %v1268
    %v1564 = vunpack.c.l.b16 %v1269
    %v1565 = vunpack.c.h.b16 %v1269
    %v1566 = vunpack.c.l.b16 %v1270
    %v1567 = vunpack.c.h.b16 %v1270
    %v1568 = vunpack.c.l.b16 %v1271
    %v1569 = vunpack.c.h.b16 %v1271
    %v1570 = vunpack.c.l.b16 %v1272
    %v1571 = vunpack.c.h.b16 %v1272
    %v1572 = vunpack.c.l.b16 %v1273
    %v1573 = vunpack.c.h.b16 %v1273
    %v1574 = vunpack.c.l.b16 %v1274
    %v1575 = vunpack.c.h.b16 %v1274
    %v1576 = vunpack.c.l.b16 %v1275
    %v1577 = vunpack.c.h.b16 %v1275
    %v1578 = vunpack.c.l.b16 %v1276
    %v1579 = vunpack.c.h.b16 %v1276
    %v1580 = vunpack.c.l.b16 %v1277
    %v1581 = vunpack.c.h.b16 %v1277
    %v1582 = vunpack.c.l.b16 %v1278
    %v1583 = vunpack.c.h.b16 %v1278
    %v1584 = vunpack.c.l.b16 %v1279
    %v1585 = vunpack.c.h.b16 %v1279
    %v1586 = vunpack.c.l.b16 %v1280
    %v1587 = vunpack.c.h.b16 %v1280
    %v1588 = vunpack.c.l.b16 %v1281
    %v1589 = vunpack.c.h.b16 %v1281
    %v1590 = vunpack.c.l.b16 %v1282
    %v1591 = vunpack.c.h.b16 %v1282
    %v1592 = vunpack.c.l.b16 %v1283
    %v1593 = vunpack.c.h.b16 %v1283
    %v1594 = vunpack.c.l.b16 %v1284
    %v1595 = vunpack.c.h.b16 %v1284
    %v1596 = vunpack.c.l.b16 %v1285
    %v1597 = vunpack.c.h.b16 %v1285
    %v1598 = vunpack.c.l.b16 %v1286
    %v1599 = vunpack.c.h.b16 %v1286
    %v1600 = vunpack.c.l.b16 %v1287
    %v1601 = vunpack.c.h.b16 %v1287
    %v1602 = vunpack.c.l.b16 %v1288
    %v1603 = vunpack.c.h.b16 %v1288
    %v1604 = vunpack.c.l.b16 %v1289
    %v1605 = vunpack.c.h.b16 %v1289
    %v1606 = vunpack.c.l.b16 %v1290
    %v1607 = vunpack.c.h.b16 %v1290
    %v1608 = vunpack.c.l.b16 %v1291
    %v1609 = vunpack.c.h.b16 %v1291
    %v1610 = vunpack.c.l.b16 %v1292
    %v1611 = vunpack.c.h.b16 %v1292
    %v1612 = vunpack.c.l.b16 %v1293
    %v1613 = vunpack.c.h.b16 %v1293
    %v1614 = vunpack.c.l.b16 %v1294
    %v1615 = vunpack.c.h.b16 %v1294
    %v1616 = vunpack.c.l.b16 %v1295
    %v1617 = vunpack.c.h.b16 %v1295
    %v1618 = vunpack.c.l.b16 %v1296
    %v1619 = vunpack.c.h.b16 %v1296
    %v1620 = vunpack.c.l.b16 %v1297
    %v1621 = vunpack.c.h.b16 %v1297
    %v1622 = vunpack.c.l.b16 %v1298
    %v1623 = vunpack.c.h.b16 %v1298
    %v1624 = vunpack.c.l.b16 %v1299
    %v1625 = vunpack.c.h.b16 %v1299
    %v1626 = vunpack.c.l.b16 %v1300
    %v1627 = vunpack.c.h.b16 %v1300
    %v1628 = vunpack.c.l.b16 %v1301
    %v1629 = vunpack.c.h.b16 %v1301
    %v1630 = vunpack.c.l.b16 %v1302
    %v1631 = vunpack.c.h.b16 %v1302
    %v1632 = vunpack.c.l.b16 %v1303
    %v1633 = vunpack.c.h.b16 %v1303
    %v1634 = vunpack.c.l.b16 %v1304
    %v1635 = vunpack.c.h.b16 %v1304
    %v1636 = vunpack.c.l.b16 %v1305
    %v1637 = vunpack.c.h.b16 %v1305
    %v1638 = vunpack.c.l.b16 %v1306
    %v1639 = vunpack.c.h.b16 %v1306
    %v1640 = vunpack.c.l.b16 %v1307
    %v1641 = vunpack.c.h.b16 %v1307
    %v1642 = vunpack.c.l.b16 %v1308
    %v1643 = vunpack.c.h.b16 %v1308
    %v1644 = vunpack.c.l.b16 %v1309
    %v1645 = vunpack.c.h.b16 %v1309
    %v1646 = vunpack.c.l.b16 %v1310
    %v1647 = vunpack.c.h.b16 %v1310
    %v1648 = vunpack.c.l.b16 %v1311
    %v1649 = vunpack.c.h.b16 %v1311
    %v1650 = vunpack.c.l.b16 %v1312
    %v1651 = vunpack.c.h.b16 %v1312
    %v1652 = vunpack.c.l.b16 %v1313
    %v1653 = vunpack.c.h.b16 %v1313
    %v1654 = vunpack.c.l.b16 %v1314
    %v1655 = vunpack.c.h.b16 %v1314
    %v1656 = vunpack.c.l.b16 %v1315
    %v1657 = vunpack.c.h.b16 %v1315
    %v1658 = vunpack.c.l.b16 %v1316
    %v1659 = vunpack.c.h.b16 %v1316
    %v1660 = vunpack.c.l.b16 %v1317
    %v1661 = vunpack.c.h.b16 %v1317
    %v1662 = vunpack.c.l.b16 %v1318
    %v1663 = vunpack.c.h.b16 %v1318
    %v1664 = vunpack.c.l.b16 %v1319
    %v1665 = vunpack.c.h.b16 %v1319
    %v1666 = vunpack.c.l.b16 %v1320
    %v1667 = vunpack.c.h.b16 %v1320
    %v1668 = vunpack.c.l.b16 %v1321
    %v1669 = vunpack.c.h.b16 %v1321
    %v1670 = vunpack.c.l.b16 %v1322
    %v1671 = vunpack.c.h.b16 %v1322
    %v1672 = vunpack.c.l.b16 %v1323
    %v1673 = vunpack.c.h.b16 %v1323
    %v1674 = vunpack.c.l.b16 %v1324
    %v1675 = vunpack.c.h.b16 %v1324
    %v1676 = vunpack.c.l.b16 %v1325
    %v1677 = vunpack.c.h.b16 %v1325
    %v1678 = vunpack.c.l.b16 %v1326
    %v1679 = vunpack.c.h.b16 %v1326
    %v1680 = vunpack.c.l.b16 %v1327
    %v1681 = vunpack.c.h.b16 %v1327
    %v1682 = vunpack.c.l.b16 %v1328
    %v1683 = vunpack.c.h.b16 %v1328
    %v1684 = vunpack.c.l.b16 %v1329
    %v1685 = vunpack.c.h.b16 %v1329
    %v1686 = vunpack.c.l.b16 %v1330
    %v1687 = vunpack.c.h.b16 %v1330
    %v1688 = vunpack.c.l.b16 %v1331
    %v1689 = vunpack.c.h.b16 %v1331
    %v1690 = vunpack.c.l.b16 %v1332
    %v1691 = vunpack.c.h.b16 %v1332
    %v1692 = vunpack.c.l.b16 %v1333
    %v1693 = vunpack.c.h.b16 %v1333
    %v1694 = vunpack.c.l.b16 %v1334
    %v1695 = vunpack.c.h.b16 %v1334
    %v1696 = vunpack.c.l.b16 %v1335
    %v1697 = vunpack.c.h.b16 %v1335
    %v1698 = vunpack.c.l.b16 %v1336
    %v1699 = vunpack.c.h.b16 %v1336
    %v1700 = vunpack.c.l.b16 %v1337
    %v1701 = vunpack.c.h.b16 %v1337
    %v1702 = vunpack.c.l.b16 %v1338
    %v1703 = vunpack.c.h.b16 %v1338
    %v1704 = vunpack.c.l.b16 %v1339
    %v1705 = vunpack.c.h.b16 %v1339
    %v1706 = vunpack.c.l.b16 %v1340
    %v1707 = vunpack.c.h.b16 %v1340
    %v1708 = vunpack.c.l.b16 %v1341
    %v1709 = vunpack.c.h.b16 %v1341
    %v1710 = vunpack.c.l.b16 %v1342
    %v1711 = vunpack.c.h.b16 %v1342
    %v1712 = vunpack.c.l.b16 %v1343
    %v1713 = vunpack.c.h.b16 %v1343
    %v1714 = vunpack.c.l.b16 %v1344
    %v1715 = vunpack.c.h.b16 %v1344
    %v1716 = vunpack.c.l.b16 %v1345
    %v1717 = vunpack.c.h.b16 %v1345
    %v1718 = vunpack.c.l.b16 %v1346
    %v1719 = vunpack.c.h.b16 %v1346
    %v1720 = vunpack.c.l.b16 %v1347
    %v1721 = vunpack.c.h.b16 %v1347
    %v1722 = vunpack.c.l.b16 %v1348
    %v1723 = vunpack.c.h.b16 %v1348
    %v1724 = vunpack.c.l.b16 %v1349
    %v1725 = vunpack.c.h.b16 %v1349
    %v1726 = vunpack.c.l.b16 %v1350
    %v1727 = vunpack.c.h.b16 %v1350
    %v1728 = vunpack.c.l.b16 %v1351
    %v1729 = vunpack.c.h.b16 %v1351
    %v1730 = vunpack.c.l.b16 %v1352
    %v1731 = vunpack.c.h.b16 %v1352
    %v1732 = vunpack.c.l.b16 %v1353
    %v1733 = vunpack.c.h.b16 %v1353
    %v1734 = vunpack.c.l.b16 %v1354
    %v1735 = vunpack.c.h.b16 %v1354
    %v1736 = vunpack.c.l.b16 %v1355
    %v1737 = vunpack.c.h.b16 %v1355
    %v1738 = vunpack.c.l.b16 %v1356
    %v1739 = vunpack.c.h.b16 %v1356
    %v1740 = vunpack.c.l.b16 %v1357
    %v1741 = vunpack.c.h.b16 %v1357
    %v1742 = vpack.c.b16 %v1490, %v1486
    %v1743 = vpack.c.b16 %v1491, %v1487
    %v1744 = vpack.c.b16 %v1492, %v1488
    %v1745 = vpack.c.b16 %v1493, %v1489
    %v1746 = vpack.c.b16 %v1498, %v1494
    %v1747 = vpack.c.b16 %v1499, %v1495
    %v1748 = vpack.c.b16 %v1500, %v1496
    %v1749 = vpack.c.b16 %v1501, %v1497
    %v1750 = vpack.c.b16 %v1506, %v1502
    %v1751 = vpack.c.b16 %v1507, %v1503
    %v1752 = vpack.c.b16 %v1508, %v1504
    %v1753 = vpack.c.b16 %v1509, %v1505
    %v1754 = vpack.c.b16 %v1514, %v1510
    %v1755 = vpack.c.b16 %v1515, %v1511
    %v1756 = vpack.c.b16 %v1516, %v1512
    %v1757 = vpack.c.b16 %v1517, %v1513
    %v1758 = vpack.c.b16 %v1522, %v1518
    %v1759 = vpack.c.b16 %v1523, %v1519
    %v1760 = vpack.c.b16 %v1524, %v1520
    %v1761 = vpack.c.b16 %v1525, %v1521
    %v1762 = vpack.c.b16 %v1530, %v1526
    %v1763 = vpack.c.b16 %v1531, %v1527
    %v1764 = vpack.c.b16 %v1532, %v1528
    %v1765 = vpack.c.b16 %v1533, %v1529
    %v1766 = vpack.c.b16 %v1538, %v1534
    %v1767 = vpack.c.b16 %v1539, %v1535
    %v1768 = vpack.c.b16 %v1540, %v1536
    %v1769 = vpack.c.b16 %v1541, %v1537
    %v1770 = vpack.c.b16 %v1546, %v1542
    %v1771 = vpack.c.b16 %v1547, %v1543
    %v1772 = vpack.c.b16 %v1548, %v1544
    %v1773 = vpack.c.b16 %v1549, %v1545
    %v1774 = vpack.c.b16 %v1554, %v1550
    %v1775 = vpack.c.b16 %v1555, %v1551
    %v1776 = vpack.c.b16 %v1556, %v1552
    %v1777 = vpack.c.b16 %v1557, %v1553
    %v1778 = vpack.c.b16 %v1562, %v1558
    %v1779 = vpack.c.b16 %v1563, %v1559
    %v1780 = vpack.c.b16 %v1564, %v1560
    %v1781 = vpack.c.b16 %v1565, %v1561
    %v1782 = vpack.c.b16 %v1570, %v1566
    %v1783 = vpack.c.b16 %v1571, %v1567
    %v1784 = vpack.c.b16 %v1572, %v1568
    %v1785 = vpack.c.b16 %v1573, %v1569
    %v1786 = vpack.c.b16 %v1578, %v1574
    %v1787 = vpack.c.b16 %v1579, %v1575
    %v1788 = vpack.c.b16 %v1580, %v1576
    %v1789 = vpack.c.b16 %v1581, %v1577
    %v1790 = vpack.c.b16 %v1586, %v1582
    %v1791 = vpack.c.b16 %v1587, %v1583
    %v1792 = vpack.c.b16 %v1588, %v1584
    %v1793 = vpack.c.b16 %v1589, %v1585
    %v1794 = vpack.c.b16 %v1594, %v1590
    %v1795 = vpack.c.b16 %v1595, %v1591
    %v1796 = vpack.c.b16 %v1596, %v1592
    %v1797 = vpack.c.b16 %v1597, %v1593
    %v1798 = vpack.c.b16 %v1602, %v1598
    %v1799 = vpack.c.b16 %v1603, %v1599
    %v1800 = vpack.c.b16 %v1604, %v1600
    %v1801 = vpack.c.b16 %v1605, %v1601
    %v1802 = vpack.c.b16 %v1610, %v1606
    %v1803 = vpack.c.b16 %v1611, %v1607
    %v1804 = vpack.c.b16 %v1612, %v1608
    %v1805 = vpack.c.b16 %v1613, %v1609
    %v1806 = vpack.c.b16 %v1618, %v1614
    %v1807 = vpack.c.b16 %v1619, %v1615
    %v1808 = vpack.c.b16 %v1620, %v1616
    %v1809 = vpack.c.b16 %v1621, %v1617
    %v1810 = vpack.c.b16 %v1626, %v1622
    %v1811 = vpack.c.b16 %v1627, %v1623
    %v1812 = vpack.c.b16 %v1628, %v1624
    %v1813 = vpack.c.b16 %v1629, %v1625
    %v1814 = vpack.c.b16 %v1634, %v1630
    %v1815 = vpack.c.b16 %v1635, %v1631
    %v1816 = vpack.c.b16 %v1636, %v1632
    %v1817 = vpack.c.b16 %v1637, %v1633
    %v1818 = vpack.c.b16 %v1642, %v1638
    %v1819 = vpack.c.b16 %v1643, %v1639
    %v1820 = vpack.c.b16 %v1644, %v1640
    %v1821 = vpack.c.b16 %v1645, %v1641
    %v1822 = vpack.c.b16 %v1650, %v1646
    %v1823 = vpack.c.b16 %v1651, %v1647
    %v1824 = vpack.c.b16 %v1652, %v1648
    %v1825 = vpack.c.b16 %v1653, %v1649
    %v1826 = vpack.c.b16 %v1658, %v1654
    %v1827 = vpack.c.b16 %v1659, %v1655
    %v1828 = vpack.c.b16 %v1660, %v1656
    %v1829 = vpack.c.b16 %v1661, %v1657
    %v1830 = vpack.c.b16 %v1666, %v1662
    %v1831 = vpack.c.b16 %v1667, %v1663
    %v1832 = vpack.c.b16 %v1668, %v1664
    %v1833 = vpack.c.b16 %v1669, %v1665
    %v1834 = vpack.c.b16 %v1674, %v1670
    %v1835 = vpack.c.b16 %v1675, %v1671
    %v1836 = vpack.c.b16 %v1676, %v1672
    %v1837 = vpack.c.b16 %v1677, %v1673
    %v1838 = vpack.c.b16 %v1682, %v1678
    %v1839 = vpack.c.b16 %v1683, %v1679
    %v1840 = vpack.c.b16 %v1684, %v1680
    %v1841 = vpack.c.b16 %v1685, %v1681
    %v1842 = vpack.c.b16 %v1690, %v1686
    %v1843 = vpack.c.b16 %v1691, %v1687
    %v1844 = vpack.c.b16 %v1692, %v1688
    %v1845 = vpack.c.b16 %v1693, %v1689
    %v1846 = vpack.c.b16 %v1698, %v1694
    %v1847 = vpack.c.b16 %v1699, %v1695
    %v1848 = vpack.c.b16 %v1700, %v1696
    %v1849 = vpack.c.b16 %v1701, %v1697
    %v1850 = vpack.c.b16 %v1706, %v1702
    %v1851 = vpack.c.b16 %v1707, %v1703
    %v1852 = vpack.c.b16 %v1708, %v1704
    %v1853 = vpack.c.b16 %v1709, %v1705
    %v1854 = vpack.c.b16 %v1714, %v1710
    %v1855 = vpack.c.b16 %v1715, %v1711
    %v1856 = vpack.c.b16 %v1716, %v1712
    %v1857 = vpack.c.b16 %v1717, %v1713
    %v1858 = vpack.c.b16 %v1722, %v1718
    %v1859 = vpack.c.b16 %v1723, %v1719
    %v1860 = vpack.c.b16 %v1724, %v1720
    %v1861 = vpack.c.b16 %v1725, %v1721
    %v1862 = vpack.c.b16 %v1730, %v1726
    %v1863 = vpack.c.b16 %v1731, %v1727
    %v1864 = vpack.c.b16 %v1732, %v1728
    %v1865 = vpack.c.b16 %v1733, %v1729
    %v1866 = vpack.c.b16 %v1738, %v1734
    %v1867 = vpack.c.b16 %v1739, %v1735
    %v1868 = vpack.c.b16 %v1740, %v1736
    %v1869 = vpack.c.b16 %v1741, %v1737
    %1998 = vmatprep.subr.bf16.mxu0 %v1743
    %1999 = vmatpush1.bf16.msra.mxu0 %v1742
    %2000 = vmatprep.subr.bf16.mxu0 %v1747
    %2001 = vmatpush1.bf16.msra.mxu0 %v1746
    %2002 = vmatprep.subr.bf16.mxu0 %v1751
    %2003 = vmatpush1.bf16.msra.mxu0 %v1750
    %2004 = vmatprep.subr.bf16.mxu0 %v1755
    %2005 = vmatpush1.bf16.msra.mxu0 %v1754
    %2006 = vmatprep.subr.bf16.mxu0 %v1759
    %2007 = vmatpush1.bf16.msra.mxu0 %v1758
    %2008 = vmatprep.subr.bf16.mxu0 %v1763
    %2009 = vmatpush1.bf16.msra.mxu0 %v1762
    %2010 = vmatprep.subr.bf16.mxu0 %v1767
    %2011 = vmatpush1.bf16.msra.mxu0 %v1766
    %2012 = vmatprep.subr.bf16.mxu0 %v1771
    %2013 = vmatpush1.bf16.msra.mxu0 %v1770
    %2014 = vmatprep.subr.bf16.mxu0 %v1775
    %2015 = vmatpush1.bf16.msra.mxu0 %v1774
    %2016 = vmatprep.subr.bf16.mxu0 %v1779
    %2017 = vmatpush1.bf16.msra.mxu0 %v1778
    %2018 = vmatprep.subr.bf16.mxu0 %v1783
    %2019 = vmatpush1.bf16.msra.mxu0 %v1782
    %2020 = vmatprep.subr.bf16.mxu0 %v1787
    %2021 = vmatpush1.bf16.msra.mxu0 %v1786
    %2022 = vmatprep.subr.bf16.mxu0 %v1791
    %2023 = vmatpush1.bf16.msra.mxu0 %v1790
    %2024 = vmatprep.subr.bf16.mxu0 %v1795
    %2025 = vmatpush1.bf16.msra.mxu0 %v1794
    %2026 = vmatprep.subr.bf16.mxu0 %v1799
    %2027 = vmatpush1.bf16.msra.mxu0 %v1798
    %2028 = vmatprep.subr.bf16.mxu0 %v1803
    %2029 = vmatpush1.bf16.msra.mxu0 %v1802
    %2030 = vmatprep.mubr.bf16.mxu0 %v1227
    %2031 = vmatmul.mubr.bf16.gmra.mrb[0].mxu0 %v1226
    %v2032 = vpop.f32.mrb[0].mxu0
    %v2033 = vadd.f32 0.0, %v2032
    %v2034 = vpop.f32.mrb[0].mxu0
    %v2035 = vadd.f32 0.0, %v2034
    %v2036 = vpop.f32.mrb[0].mxu0
    %v2037 = vadd.f32 0.0, %v2036
    %v2038 = vpop.f32.mrb[0].mxu0
    %v2039 = vadd.f32 0.0, %v2038
    %2040 = vdwg.mxu0
    %2041 = vmatprep.subr.bf16.mxu0 %v1807
    %2042 = vmatpush1.bf16.msra.mxu0 %v1806
    %2043 = vmatprep.subr.bf16.mxu0 %v1811
    %2044 = vmatpush1.bf16.msra.mxu0 %v1810
    %2045 = vmatprep.subr.bf16.mxu0 %v1815
    %2046 = vmatpush1.bf16.msra.mxu0 %v1814
    %2047 = vmatprep.subr.bf16.mxu0 %v1819
    %2048 = vmatpush1.bf16.msra.mxu0 %v1818
    %2049 = vmatprep.subr.bf16.mxu0 %v1823
    %2050 = vmatpush1.bf16.msra.mxu0 %v1822
    %2051 = vmatprep.subr.bf16.mxu0 %v1827
    %2052 = vmatpush1.bf16.msra.mxu0 %v1826
    %2053 = vmatprep.subr.bf16.mxu0 %v1831
    %2054 = vmatpush1.bf16.msra.mxu0 %v1830
    %2055 = vmatprep.subr.bf16.mxu0 %v1835
    %2056 = vmatpush1.bf16.msra.mxu0 %v1834
    %2057 = vmatprep.subr.bf16.mxu0 %v1839
    %2058 = vmatpush1.bf16.msra.mxu0 %v1838
    %2059 = vmatprep.subr.bf16.mxu0 %v1843
    %2060 = vmatpush1.bf16.msra.mxu0 %v1842
    %2061 = vmatprep.subr.bf16.mxu0 %v1847
    %2062 = vmatpush1.bf16.msra.mxu0 %v1846
    %2063 = vmatprep.subr.bf16.mxu0 %v1851
    %2064 = vmatpush1.bf16.msra.mxu0 %v1850
    %2065 = vmatprep.subr.bf16.mxu0 %v1855
    %2066 = vmatpush1.bf16.msra.mxu0 %v1854
    %2067 = vmatprep.subr.bf16.mxu0 %v1859
    %2068 = vmatpush1.bf16.msra.mxu0 %v1858
    %2069 = vmatprep.subr.bf16.mxu0 %v1863
    %2070 = vmatpush1.bf16.msra.mxu0 %v1862
    %2071 = vmatprep.subr.bf16.mxu0 %v1867
    %2072 = vmatpush1.bf16.msra.mxu0 %v1866
    %2073 = vmatprep.mubr.bf16.mxu0 %v1229
    %2074 = vmatmul.mubr.bf16.gmra.mrb[0].mxu0 %v1228
    %v2075 = vpop.f32.mrb[0].mxu0
    %v2076 = vadd.f32 %v2033, %v2075
    %v2077 = vpop.f32.mrb[0].mxu0
    %v2078 = vadd.f32 %v2035, %v2077
    %v2079 = vpop.f32.mrb[0].mxu0
    %v2080 = vadd.f32 %v2037, %v2079
    %v2081 = vpop.f32.mrb[0].mxu0
    %v2082 = vadd.f32 %v2039, %v2081
    %2083 = vdwg.mxu0
    %2084 = vmatprep.subr.bf16.mxu0 %v1745
    %2085 = vmatpush1.bf16.msra.mxu0 %v1744
    %2086 = vmatprep.subr.bf16.mxu0 %v1749
    %2087 = vmatpush1.bf16.msra.mxu0 %v1748
    %2088 = vmatprep.subr.bf16.mxu0 %v1753
    %2089 = vmatpush1.bf16.msra.mxu0 %v1752
    %2090 = vmatprep.subr.bf16.mxu0 %v1757
    %2091 = vmatpush1.bf16.msra.mxu0 %v1756
    %2092 = vmatprep.subr.bf16.mxu0 %v1761
    %2093 = vmatpush1.bf16.msra.mxu0 %v1760
    %2094 = vmatprep.subr.bf16.mxu0 %v1765
    %2095 = vmatpush1.bf16.msra.mxu0 %v1764
    %2096 = vmatprep.subr.bf16.mxu0 %v1769
    %2097 = vmatpush1.bf16.msra.mxu0 %v1768
    %2098 = vmatprep.subr.bf16.mxu0 %v1773
    %2099 = vmatpush1.bf16.msra.mxu0 %v1772
    %2100 = vmatprep.subr.bf16.mxu0 %v1777
    %2101 = vmatpush1.bf16.msra.mxu0 %v1776
    %2102 = vmatprep.subr.bf16.mxu0 %v1781
    %2103 = vmatpush1.bf16.msra.mxu0 %v1780
    %2104 = vmatprep.subr.bf16.mxu0 %v1785
    %2105 = vmatpush1.bf16.msra.mxu0 %v1784
    %2106 = vmatprep.subr.bf16.mxu0 %v1789
    %2107 = vmatpush1.bf16.msra.mxu0 %v1788
    %2108 = vmatprep.subr.bf16.mxu0 %v1793
    %2109 = vmatpush1.bf16.msra.mxu0 %v1792
    %2110 = vmatprep.subr.bf16.mxu0 %v1797
    %2111 = vmatpush1.bf16.msra.mxu0 %v1796
    %2112 = vmatprep.subr.bf16.mxu0 %v1801
    %2113 = vmatpush1.bf16.msra.mxu0 %v1800
    %2114 = vmatprep.subr.bf16.mxu0 %v1805
    %2115 = vmatpush1.bf16.msra.mxu0 %v1804
    %2116 = vmatprep.mubr.bf16.mxu0 %v1227
    %2117 = vmatmul.mubr.bf16.gmra.mrb[0].mxu0 %v1226
    %v2118 = vpop.f32.mrb[0].mxu0
    %v2119 = vadd.f32 0.0, %v2118
    %v2120 = vpop.f32.mrb[0].mxu0
    %v2121 = vadd.f32 0.0, %v2120
    %v2122 = vpop.f32.mrb[0].mxu0
    %v2123 = vadd.f32 0.0, %v2122
    %v2124 = vpop.f32.mrb[0].mxu0
    %v2125 = vadd.f32 0.0, %v2124
    %2126 = vdwg.mxu0
    %2127 = vmatprep.subr.bf16.mxu0 %v1809
    %2128 = vmatpush1.bf16.msra.mxu0 %v1808
    %2129 = vmatprep.subr.bf16.mxu0 %v1813
    %2130 = vmatpush1.bf16.msra.mxu0 %v1812
    %2131 = vmatprep.subr.bf16.mxu0 %v1817
    %2132 = vmatpush1.bf16.msra.mxu0 %v1816
    %2133 = vmatprep.subr.bf16.mxu0 %v1821
    %2134 = vmatpush1.bf16.msra.mxu0 %v1820
    %2135 = vmatprep.subr.bf16.mxu0 %v1825
    %2136 = vmatpush1.bf16.msra.mxu0 %v1824
    %2137 = vmatprep.subr.bf16.mxu0 %v1829
    %2138 = vmatpush1.bf16.msra.mxu0 %v1828
    %2139 = vmatprep.subr.bf16.mxu0 %v1833
    %2140 = vmatpush1.bf16.msra.mxu0 %v1832
    %2141 = vmatprep.subr.bf16.mxu0 %v1837
    %2142 = vmatpush1.bf16.msra.mxu0 %v1836
    %2143 = vmatprep.subr.bf16.mxu0 %v1841
    %2144 = vmatpush1.bf16.msra.mxu0 %v1840
    %2145 = vmatprep.subr.bf16.mxu0 %v1845
    %2146 = vmatpush1.bf16.msra.mxu0 %v1844
    %2147 = vmatprep.subr.bf16.mxu0 %v1849
    %2148 = vmatpush1.bf16.msra.mxu0 %v1848
    %2149 = vmatprep.subr.bf16.mxu0 %v1853
    %2150 = vmatpush1.bf16.msra.mxu0 %v1852
    %2151 = vmatprep.subr.bf16.mxu0 %v1857
    %2152 = vmatpush1.bf16.msra.mxu0 %v1856
    %2153 = vmatprep.subr.bf16.mxu0 %v1861
    %2154 = vmatpush1.bf16.msra.mxu0 %v1860
    %2155 = vmatprep.subr.bf16.mxu0 %v1865
    %2156 = vmatpush1.bf16.msra.mxu0 %v1864
    %2157 = vmatprep.subr.bf16.mxu0 %v1869
    %2158 = vmatpush1.bf16.msra.mxu0 %v1868
    %2159 = vmatprep.mubr.bf16.mxu0 %v1229
    %2160 = vmatmul.mubr.bf16.gmra.mrb[0].mxu0 %v1228
    %v2161 = vpop.f32.mrb[0].mxu0
    %v2162 = vadd.f32 %v2119, %v2161
    %v2163 = vpop.f32.mrb[0].mxu0
    %v2164 = vadd.f32 %v2121, %v2163
    %v2165 = vpop.f32.mrb[0].mxu0
    %v2166 = vadd.f32 %v2123, %v2165
    %v2167 = vpop.f32.mrb[0].mxu0
    %v2168 = vadd.f32 %v2125, %v2167
    %2169 = vdwg.mxu0
    %v2298 = vunpack.c.l.b16 %v1098
    %v2299 = vunpack.c.h.b16 %v1098
    %v2300 = vunpack.c.l.b16 %v1099
    %v2301 = vunpack.c.h.b16 %v1099
    %v2302 = vunpack.c.l.b16 %v1100
    %v2303 = vunpack.c.h.b16 %v1100
    %v2304 = vunpack.c.l.b16 %v1101
    %v2305 = vunpack.c.h.b16 %v1101
    %v2306 = vunpack.c.l.b16 %v1102
    %v2307 = vunpack.c.h.b16 %v1102
    %v2308 = vunpack.c.l.b16 %v1103
    %v2309 = vunpack.c.h.b16 %v1103
    %v2310 = vunpack.c.l.b16 %v1104
    %v2311 = vunpack.c.h.b16 %v1104
    %v2312 = vunpack.c.l.b16 %v1105
    %v2313 = vunpack.c.h.b16 %v1105
    %v2314 = vunpack.c.l.b16 %v1106
    %v2315 = vunpack.c.h.b16 %v1106
    %v2316 = vunpack.c.l.b16 %v1107
    %v2317 = vunpack.c.h.b16 %v1107
    %v2318 = vunpack.c.l.b16 %v1108
    %v2319 = vunpack.c.h.b16 %v1108
    %v2320 = vunpack.c.l.b16 %v1109
    %v2321 = vunpack.c.h.b16 %v1109
    %v2322 = vunpack.c.l.b16 %v1110
    %v2323 = vunpack.c.h.b16 %v1110
    %v2324 = vunpack.c.l.b16 %v1111
    %v2325 = vunpack.c.h.b16 %v1111
    %v2326 = vunpack.c.l.b16 %v1112
    %v2327 = vunpack.c.h.b16 %v1112
    %v2328 = vunpack.c.l.b16 %v1113
    %v2329 = vunpack.c.h.b16 %v1113
    %v2330 = vunpack.c.l.b16 %v1114
    %v2331 = vunpack.c.h.b16 %v1114
    %v2332 = vunpack.c.l.b16 %v1115
    %v2333 = vunpack.c.h.b16 %v1115
    %v2334 = vunpack.c.l.b16 %v1116
    %v2335 = vunpack.c.h.b16 %v1116
    %v2336 = vunpack.c.l.b16 %v1117
    %v2337 = vunpack.c.h.b16 %v1117
    %v2338 = vunpack.c.l.b16 %v1118
    %v2339 = vunpack.c.h.b16 %v1118
    %v2340 = vunpack.c.l.b16 %v1119
    %v2341 = vunpack.c.h.b16 %v1119
    %v2342 = vunpack.c.l.b16 %v1120
    %v2343 = vunpack.c.h.b16 %v1120
    %v2344 = vunpack.c.l.b16 %v1121
    %v2345 = vunpack.c.h.b16 %v1121
    %v2346 = vunpack.c.l.b16 %v1122
    %v2347 = vunpack.c.h.b16 %v1122
    %v2348 = vunpack.c.l.b16 %v1123
    %v2349 = vunpack.c.h.b16 %v1123
    %v2350 = vunpack.c.l.b16 %v1124
    %v2351 = vunpack.c.h.b16 %v1124
    %v2352 = vunpack.c.l.b16 %v1125
    %v2353 = vunpack.c.h.b16 %v1125
    %v2354 = vunpack.c.l.b16 %v1126
    %v2355 = vunpack.c.h.b16 %v1126
    %v2356 = vunpack.c.l.b16 %v1127
    %v2357 = vunpack.c.h.b16 %v1127
    %v2358 = vunpack.c.l.b16 %v1128
    %v2359 = vunpack.c.h.b16 %v1128
    %v2360 = vunpack.c.l.b16 %v1129
    %v2361 = vunpack.c.h.b16 %v1129
    %v2362 = vunpack.c.l.b16 %v1130
    %v2363 = vunpack.c.h.b16 %v1130
    %v2364 = vunpack.c.l.b16 %v1131
    %v2365 = vunpack.c.h.b16 %v1131
    %v2366 = vunpack.c.l.b16 %v1132
    %v2367 = vunpack.c.h.b16 %v1132
    %v2368 = vunpack.c.l.b16 %v1133
    %v2369 = vunpack.c.h.b16 %v1133
    %v2370 = vunpack.c.l.b16 %v1134
    %v2371 = vunpack.c.h.b16 %v1134
    %v2372 = vunpack.c.l.b16 %v1135
    %v2373 = vunpack.c.h.b16 %v1135
    %v2374 = vunpack.c.l.b16 %v1136
    %v2375 = vunpack.c.h.b16 %v1136
    %v2376 = vunpack.c.l.b16 %v1137
    %v2377 = vunpack.c.h.b16 %v1137
    %v2378 = vunpack.c.l.b16 %v1138
    %v2379 = vunpack.c.h.b16 %v1138
    %v2380 = vunpack.c.l.b16 %v1139
    %v2381 = vunpack.c.h.b16 %v1139
    %v2382 = vunpack.c.l.b16 %v1140
    %v2383 = vunpack.c.h.b16 %v1140
    %v2384 = vunpack.c.l.b16 %v1141
    %v2385 = vunpack.c.h.b16 %v1141
    %v2386 = vunpack.c.l.b16 %v1142
    %v2387 = vunpack.c.h.b16 %v1142
    %v2388 = vunpack.c.l.b16 %v1143
    %v2389 = vunpack.c.h.b16 %v1143
    %v2390 = vunpack.c.l.b16 %v1144
    %v2391 = vunpack.c.h.b16 %v1144
    %v2392 = vunpack.c.l.b16 %v1145
    %v2393 = vunpack.c.h.b16 %v1145
    %v2394 = vunpack.c.l.b16 %v1146
    %v2395 = vunpack.c.h.b16 %v1146
    %v2396 = vunpack.c.l.b16 %v1147
    %v2397 = vunpack.c.h.b16 %v1147
    %v2398 = vunpack.c.l.b16 %v1148
    %v2399 = vunpack.c.h.b16 %v1148
    %v2400 = vunpack.c.l.b16 %v1149
    %v2401 = vunpack.c.h.b16 %v1149
    %v2402 = vunpack.c.l.b16 %v1150
    %v2403 = vunpack.c.h.b16 %v1150
    %v2404 = vunpack.c.l.b16 %v1151
    %v2405 = vunpack.c.h.b16 %v1151
    %v2406 = vunpack.c.l.b16 %v1152
    %v2407 = vunpack.c.h.b16 %v1152
    %v2408 = vunpack.c.l.b16 %v1153
    %v2409 = vunpack.c.h.b16 %v1153
    %v2410 = vunpack.c.l.b16 %v1154
    %v2411 = vunpack.c.h.b16 %v1154
    %v2412 = vunpack.c.l.b16 %v1155
    %v2413 = vunpack.c.h.b16 %v1155
    %v2414 = vunpack.c.l.b16 %v1156
    %v2415 = vunpack.c.h.b16 %v1156
    %v2416 = vunpack.c.l.b16 %v1157
    %v2417 = vunpack.c.h.b16 %v1157
    %v2418 = vunpack.c.l.b16 %v1158
    %v2419 = vunpack.c.h.b16 %v1158
    %v2420 = vunpack.c.l.b16 %v1159
    %v2421 = vunpack.c.h.b16 %v1159
    %v2422 = vunpack.c.l.b16 %v1160
    %v2423 = vunpack.c.h.b16 %v1160
    %v2424 = vunpack.c.l.b16 %v1161
    %v2425 = vunpack.c.h.b16 %v1161
    %v2426 = vunpack.c.l.b16 %v1162
    %v2427 = vunpack.c.h.b16 %v1162
    %v2428 = vunpack.c.l.b16 %v1163
    %v2429 = vunpack.c.h.b16 %v1163
    %v2430 = vunpack.c.l.b16 %v1164
    %v2431 = vunpack.c.h.b16 %v1164
    %v2432 = vunpack.c.l.b16 %v1165
    %v2433 = vunpack.c.h.b16 %v1165
    %v2434 = vunpack.c.l.b16 %v1166
    %v2435 = vunpack.c.h.b16 %v1166
    %v2436 = vunpack.c.l.b16 %v1167
    %v2437 = vunpack.c.h.b16 %v1167
    %v2438 = vunpack.c.l.b16 %v1168
    %v2439 = vunpack.c.h.b16 %v1168
    %v2440 = vunpack.c.l.b16 %v1169
    %v2441 = vunpack.c.h.b16 %v1169
    %v2442 = vunpack.c.l.b16 %v1170
    %v2443 = vunpack.c.h.b16 %v1170
    %v2444 = vunpack.c.l.b16 %v1171
    %v2445 = vunpack.c.h.b16 %v1171
    %v2446 = vunpack.c.l.b16 %v1172
    %v2447 = vunpack.c.h.b16 %v1172
    %v2448 = vunpack.c.l.b16 %v1173
    %v2449 = vunpack.c.h.b16 %v1173
    %v2450 = vunpack.c.l.b16 %v1174
    %v2451 = vunpack.c.h.b16 %v1174
    %v2452 = vunpack.c.l.b16 %v1175
    %v2453 = vunpack.c.h.b16 %v1175
    %v2454 = vunpack.c.l.b16 %v1176
    %v2455 = vunpack.c.h.b16 %v1176
    %v2456 = vunpack.c.l.b16 %v1177
    %v2457 = vunpack.c.h.b16 %v1177
    %v2458 = vunpack.c.l.b16 %v1178
    %v2459 = vunpack.c.h.b16 %v1178
    %v2460 = vunpack.c.l.b16 %v1179
    %v2461 = vunpack.c.h.b16 %v1179
    %v2462 = vunpack.c.l.b16 %v1180
    %v2463 = vunpack.c.h.b16 %v1180
    %v2464 = vunpack.c.l.b16 %v1181
    %v2465 = vunpack.c.h.b16 %v1181
    %v2466 = vunpack.c.l.b16 %v1182
    %v2467 = vunpack.c.h.b16 %v1182
    %v2468 = vunpack.c.l.b16 %v1183
    %v2469 = vunpack.c.h.b16 %v1183
    %v2470 = vunpack.c.l.b16 %v1184
    %v2471 = vunpack.c.h.b16 %v1184
    %v2472 = vunpack.c.l.b16 %v1185
    %v2473 = vunpack.c.h.b16 %v1185
    %v2474 = vunpack.c.l.b16 %v1186
    %v2475 = vunpack.c.h.b16 %v1186
    %v2476 = vunpack.c.l.b16 %v1187
    %v2477 = vunpack.c.h.b16 %v1187
    %v2478 = vunpack.c.l.b16 %v1188
    %v2479 = vunpack.c.h.b16 %v1188
    %v2480 = vunpack.c.l.b16 %v1189
    %v2481 = vunpack.c.h.b16 %v1189
    %v2482 = vunpack.c.l.b16 %v1190
    %v2483 = vunpack.c.h.b16 %v1190
    %v2484 = vunpack.c.l.b16 %v1191
    %v2485 = vunpack.c.h.b16 %v1191
    %v2486 = vunpack.c.l.b16 %v1192
    %v2487 = vunpack.c.h.b16 %v1192
    %v2488 = vunpack.c.l.b16 %v1193
    %v2489 = vunpack.c.h.b16 %v1193
    %v2490 = vunpack.c.l.b16 %v1194
    %v2491 = vunpack.c.h.b16 %v1194
    %v2492 = vunpack.c.l.b16 %v1195
    %v2493 = vunpack.c.h.b16 %v1195
    %v2494 = vunpack.c.l.b16 %v1196
    %v2495 = vunpack.c.h.b16 %v1196
    %v2496 = vunpack.c.l.b16 %v1197
    %v2497 = vunpack.c.h.b16 %v1197
    %v2498 = vunpack.c.l.b16 %v1198
    %v2499 = vunpack.c.h.b16 %v1198
    %v2500 = vunpack.c.l.b16 %v1199
    %v2501 = vunpack.c.h.b16 %v1199
    %v2502 = vunpack.c.l.b16 %v1200
    %v2503 = vunpack.c.h.b16 %v1200
    %v2504 = vunpack.c.l.b16 %v1201
    %v2505 = vunpack.c.h.b16 %v1201
    %v2506 = vunpack.c.l.b16 %v1202
    %v2507 = vunpack.c.h.b16 %v1202
    %v2508 = vunpack.c.l.b16 %v1203
    %v2509 = vunpack.c.h.b16 %v1203
    %v2510 = vunpack.c.l.b16 %v1204
    %v2511 = vunpack.c.h.b16 %v1204
    %v2512 = vunpack.c.l.b16 %v1205
    %v2513 = vunpack.c.h.b16 %v1205
    %v2514 = vunpack.c.l.b16 %v1206
    %v2515 = vunpack.c.h.b16 %v1206
    %v2516 = vunpack.c.l.b16 %v1207
    %v2517 = vunpack.c.h.b16 %v1207
    %v2518 = vunpack.c.l.b16 %v1208
    %v2519 = vunpack.c.h.b16 %v1208
    %v2520 = vunpack.c.l.b16 %v1209
    %v2521 = vunpack.c.h.b16 %v1209
    %v2522 = vunpack.c.l.b16 %v1210
    %v2523 = vunpack.c.h.b16 %v1210
    %v2524 = vunpack.c.l.b16 %v1211
    %v2525 = vunpack.c.h.b16 %v1211
    %v2526 = vunpack.c.l.b16 %v1212
    %v2527 = vunpack.c.h.b16 %v1212
    %v2528 = vunpack.c.l.b16 %v1213
    %v2529 = vunpack.c.h.b16 %v1213
    %v2530 = vunpack.c.l.b16 %v1214
    %v2531 = vunpack.c.h.b16 %v1214
    %v2532 = vunpack.c.l.b16 %v1215
    %v2533 = vunpack.c.h.b16 %v1215
    %v2534 = vunpack.c.l.b16 %v1216
    %v2535 = vunpack.c.h.b16 %v1216
    %v2536 = vunpack.c.l.b16 %v1217
    %v2537 = vunpack.c.h.b16 %v1217
    %v2538 = vunpack.c.l.b16 %v1218
    %v2539 = vunpack.c.h.b16 %v1218
    %v2540 = vunpack.c.l.b16 %v1219
    %v2541 = vunpack.c.h.b16 %v1219
    %v2542 = vunpack.c.l.b16 %v1220
    %v2543 = vunpack.c.h.b16 %v1220
    %v2544 = vunpack.c.l.b16 %v1221
    %v2545 = vunpack.c.h.b16 %v1221
    %v2546 = vunpack.c.l.b16 %v1222
    %v2547 = vunpack.c.h.b16 %v1222
    %v2548 = vunpack.c.l.b16 %v1223
    %v2549 = vunpack.c.h.b16 %v1223
    %v2550 = vunpack.c.l.b16 %v1224
    %v2551 = vunpack.c.h.b16 %v1224
    %v2552 = vunpack.c.l.b16 %v1225
    %v2553 = vunpack.c.h.b16 %v1225
    %v2554 = vpack.c.b16 %v2302, %v2298
    %v2555 = vpack.c.b16 %v2303, %v2299
    %v2556 = vpack.c.b16 %v2304, %v2300
    %v2557 = vpack.c.b16 %v2305, %v2301
    %v2558 = vpack.c.b16 %v2310, %v2306
    %v2559 = vpack.c.b16 %v2311, %v2307
    %v2560 = vpack.c.b16 %v2312, %v2308
    %v2561 = vpack.c.b16 %v2313, %v2309
    %v2562 = vpack.c.b16 %v2318, %v2314
    %v2563 = vpack.c.b16 %v2319, %v2315
    %v2564 = vpack.c.b16 %v2320, %v2316
    %v2565 = vpack.c.b16 %v2321, %v2317
    %v2566 = vpack.c.b16 %v2326, %v2322
    %v2567 = vpack.c.b16 %v2327, %v2323
    %v2568 = vpack.c.b16 %v2328, %v2324
    %v2569 = vpack.c.b16 %v2329, %v2325
    %v2570 = vpack.c.b16 %v2334, %v2330
    %v2571 = vpack.c.b16 %v2335, %v2331
    %v2572 = vpack.c.b16 %v2336, %v2332
    %v2573 = vpack.c.b16 %v2337, %v2333
    %v2574 = vpack.c.b16 %v2342, %v2338
    %v2575 = vpack.c.b16 %v2343, %v2339
    %v2576 = vpack.c.b16 %v2344, %v2340
    %v2577 = vpack.c.b16 %v2345, %v2341
    %v2578 = vpack.c.b16 %v2350, %v2346
    %v2579 = vpack.c.b16 %v2351, %v2347
    %v2580 = vpack.c.b16 %v2352, %v2348
    %v2581 = vpack.c.b16 %v2353, %v2349
    %v2582 = vpack.c.b16 %v2358, %v2354
    %v2583 = vpack.c.b16 %v2359, %v2355
    %v2584 = vpack.c.b16 %v2360, %v2356
    %v2585 = vpack.c.b16 %v2361, %v2357
    %v2586 = vpack.c.b16 %v2366, %v2362
    %v2587 = vpack.c.b16 %v2367, %v2363
    %v2588 = vpack.c.b16 %v2368, %v2364
    %v2589 = vpack.c.b16 %v2369, %v2365
    %v2590 = vpack.c.b16 %v2374, %v2370
    %v2591 = vpack.c.b16 %v2375, %v2371
    %v2592 = vpack.c.b16 %v2376, %v2372
    %v2593 = vpack.c.b16 %v2377, %v2373
    %v2594 = vpack.c.b16 %v2382, %v2378
    %v2595 = vpack.c.b16 %v2383, %v2379
    %v2596 = vpack.c.b16 %v2384, %v2380
    %v2597 = vpack.c.b16 %v2385, %v2381
    %v2598 = vpack.c.b16 %v2390, %v2386
    %v2599 = vpack.c.b16 %v2391, %v2387
    %v2600 = vpack.c.b16 %v2392, %v2388
    %v2601 = vpack.c.b16 %v2393, %v2389
    %v2602 = vpack.c.b16 %v2398, %v2394
    %v2603 = vpack.c.b16 %v2399, %v2395
    %v2604 = vpack.c.b16 %v2400, %v2396
    %v2605 = vpack.c.b16 %v2401, %v2397
    %v2606 = vpack.c.b16 %v2406, %v2402
    %v2607 = vpack.c.b16 %v2407, %v2403
    %v2608 = vpack.c.b16 %v2408, %v2404
    %v2609 = vpack.c.b16 %v2409, %v2405
    %v2610 = vpack.c.b16 %v2414, %v2410
    %v2611 = vpack.c.b16 %v2415, %v2411
    %v2612 = vpack.c.b16 %v2416, %v2412
    %v2613 = vpack.c.b16 %v2417, %v2413
    %v2614 = vpack.c.b16 %v2422, %v2418
    %v2615 = vpack.c.b16 %v2423, %v2419
    %v2616 = vpack.c.b16 %v2424, %v2420
    %v2617 = vpack.c.b16 %v2425, %v2421
    %v2618 = vpack.c.b16 %v2430, %v2426
    %v2619 = vpack.c.b16 %v2431, %v2427
    %v2620 = vpack.c.b16 %v2432, %v2428
    %v2621 = vpack.c.b16 %v2433, %v2429
    %v2622 = vpack.c.b16 %v2438, %v2434
    %v2623 = vpack.c.b16 %v2439, %v2435
    %v2624 = vpack.c.b16 %v2440, %v2436
    %v2625 = vpack.c.b16 %v2441, %v2437
    %v2626 = vpack.c.b16 %v2446, %v2442
    %v2627 = vpack.c.b16 %v2447, %v2443
    %v2628 = vpack.c.b16 %v2448, %v2444
    %v2629 = vpack.c.b16 %v2449, %v2445
    %v2630 = vpack.c.b16 %v2454, %v2450
    %v2631 = vpack.c.b16 %v2455, %v2451
    %v2632 = vpack.c.b16 %v2456, %v2452
    %v2633 = vpack.c.b16 %v2457, %v2453
    %v2634 = vpack.c.b16 %v2462, %v2458
    %v2635 = vpack.c.b16 %v2463, %v2459
    %v2636 = vpack.c.b16 %v2464, %v2460
    %v2637 = vpack.c.b16 %v2465, %v2461
    %v2638 = vpack.c.b16 %v2470, %v2466
    %v2639 = vpack.c.b16 %v2471, %v2467
    %v2640 = vpack.c.b16 %v2472, %v2468
    %v2641 = vpack.c.b16 %v2473, %v2469
    %v2642 = vpack.c.b16 %v2478, %v2474
    %v2643 = vpack.c.b16 %v2479, %v2475
    %v2644 = vpack.c.b16 %v2480, %v2476
    %v2645 = vpack.c.b16 %v2481, %v2477
    %v2646 = vpack.c.b16 %v2486, %v2482
    %v2647 = vpack.c.b16 %v2487, %v2483
    %v2648 = vpack.c.b16 %v2488, %v2484
    %v2649 = vpack.c.b16 %v2489, %v2485
    %v2650 = vpack.c.b16 %v2494, %v2490
    %v2651 = vpack.c.b16 %v2495, %v2491
    %v2652 = vpack.c.b16 %v2496, %v2492
    %v2653 = vpack.c.b16 %v2497, %v2493
    %v2654 = vpack.c.b16 %v2502, %v2498
    %v2655 = vpack.c.b16 %v2503, %v2499
    %v2656 = vpack.c.b16 %v2504, %v2500
    %v2657 = vpack.c.b16 %v2505, %v2501
    %v2658 = vpack.c.b16 %v2510, %v2506
    %v2659 = vpack.c.b16 %v2511, %v2507
    %v2660 = vpack.c.b16 %v2512, %v2508
    %v2661 = vpack.c.b16 %v2513, %v2509
    %v2662 = vpack.c.b16 %v2518, %v2514
    %v2663 = vpack.c.b16 %v2519, %v2515
    %v2664 = vpack.c.b16 %v2520, %v2516
    %v2665 = vpack.c.b16 %v2521, %v2517
    %v2666 = vpack.c.b16 %v2526, %v2522
    %v2667 = vpack.c.b16 %v2527, %v2523
    %v2668 = vpack.c.b16 %v2528, %v2524
    %v2669 = vpack.c.b16 %v2529, %v2525
    %v2670 = vpack.c.b16 %v2534, %v2530
    %v2671 = vpack.c.b16 %v2535, %v2531
    %v2672 = vpack.c.b16 %v2536, %v2532
    %v2673 = vpack.c.b16 %v2537, %v2533
    %v2674 = vpack.c.b16 %v2542, %v2538
    %v2675 = vpack.c.b16 %v2543, %v2539
    %v2676 = vpack.c.b16 %v2544, %v2540
    %v2677 = vpack.c.b16 %v2545, %v2541
    %v2678 = vpack.c.b16 %v2550, %v2546
    %v2679 = vpack.c.b16 %v2551, %v2547
    %v2680 = vpack.c.b16 %v2552, %v2548
    %v2681 = vpack.c.b16 %v2553, %v2549
    %2810 = vmatprep.subr.bf16.mxu0 %v2555
    %2811 = vmatpush1.bf16.msra.mxu0 %v2554
    %2812 = vmatprep.subr.bf16.mxu0 %v2559
    %2813 = vmatpush1.bf16.msra.mxu0 %v2558
    %2814 = vmatprep.subr.bf16.mxu0 %v2563
    %2815 = vmatpush1.bf16.msra.mxu0 %v2562
    %2816 = vmatprep.subr.bf16.mxu0 %v2567
    %2817 = vmatpush1.bf16.msra.mxu0 %v2566
    %2818 = vmatprep.subr.bf16.mxu0 %v2571
    %2819 = vmatpush1.bf16.msra.mxu0 %v2570
    %2820 = vmatprep.subr.bf16.mxu0 %v2575
    %2821 = vmatpush1.bf16.msra.mxu0 %v2574
    %2822 = vmatprep.subr.bf16.mxu0 %v2579
    %2823 = vmatpush1.bf16.msra.mxu0 %v2578
    %2824 = vmatprep.subr.bf16.mxu0 %v2583
    %2825 = vmatpush1.bf16.msra.mxu0 %v2582
    %2826 = vmatprep.subr.bf16.mxu0 %v2587
    %2827 = vmatpush1.bf16.msra.mxu0 %v2586
    %2828 = vmatprep.subr.bf16.mxu0 %v2591
    %2829 = vmatpush1.bf16.msra.mxu0 %v2590
    %2830 = vmatprep.subr.bf16.mxu0 %v2595
    %2831 = vmatpush1.bf16.msra.mxu0 %v2594
    %2832 = vmatprep.subr.bf16.mxu0 %v2599
    %2833 = vmatpush1.bf16.msra.mxu0 %v2598
    %2834 = vmatprep.subr.bf16.mxu0 %v2603
    %2835 = vmatpush1.bf16.msra.mxu0 %v2602
    %2836 = vmatprep.subr.bf16.mxu0 %v2607
    %2837 = vmatpush1.bf16.msra.mxu0 %v2606
    %2838 = vmatprep.subr.bf16.mxu0 %v2611
    %2839 = vmatpush1.bf16.msra.mxu0 %v2610
    %2840 = vmatprep.subr.bf16.mxu0 %v2615
    %2841 = vmatpush1.bf16.msra.mxu0 %v2614
    %2842 = vmatprep.mubr.bf16.mxu0 %v1095
    %2843 = vmatmul.mubr.bf16.gmra.mrb[0].mxu0 %v1094
    %v2844 = vpop.f32.mrb[0].mxu0
    %v2845 = vadd.f32 %v2076, %v2844
    %v2846 = vpop.f32.mrb[0].mxu0
    %v2847 = vadd.f32 %v2078, %v2846
    %v2848 = vpop.f32.mrb[0].mxu0
    %v2849 = vadd.f32 %v2080, %v2848
    %v2850 = vpop.f32.mrb[0].mxu0
    %v2851 = vadd.f32 %v2082, %v2850
    %2852 = vdwg.mxu0
    %2853 = vmatprep.subr.bf16.mxu0 %v2619
    %2854 = vmatpush1.bf16.msra.mxu0 %v2618
    %2855 = vmatprep.subr.bf16.mxu0 %v2623
    %2856 = vmatpush1.bf16.msra.mxu0 %v2622
    %2857 = vmatprep.subr.bf16.mxu0 %v2627
    %2858 = vmatpush1.bf16.msra.mxu0 %v2626
    %2859 = vmatprep.subr.bf16.mxu0 %v2631
    %2860 = vmatpush1.bf16.msra.mxu0 %v2630
    %2861 = vmatprep.subr.bf16.mxu0 %v2635
    %2862 = vmatpush1.bf16.msra.mxu0 %v2634
    %2863 = vmatprep.subr.bf16.mxu0 %v2639
    %2864 = vmatpush1.bf16.msra.mxu0 %v2638
    %2865 = vmatprep.subr.bf16.mxu0 %v2643
    %2866 = vmatpush1.bf16.msra.mxu0 %v2642
    %2867 = vmatprep.subr.bf16.mxu0 %v2647
    %2868 = vmatpush1.bf16.msra.mxu0 %v2646
    %2869 = vmatprep.subr.bf16.mxu0 %v2651
    %2870 = vmatpush1.bf16.msra.mxu0 %v2650
    %2871 = vmatprep.subr.bf16.mxu0 %v2655
    %2872 = vmatpush1.bf16.msra.mxu0 %v2654
    %2873 = vmatprep.subr.bf16.mxu0 %v2659
    %2874 = vmatpush1.bf16.msra.mxu0 %v2658
    %2875 = vmatprep.subr.bf16.mxu0 %v2663
    %2876 = vmatpush1.bf16.msra.mxu0 %v2662
    %2877 = vmatprep.subr.bf16.mxu0 %v2667
    %2878 = vmatpush1.bf16.msra.mxu0 %v2666
    %2879 = vmatprep.subr.bf16.mxu0 %v2671
    %2880 = vmatpush1.bf16.msra.mxu0 %v2670
    %2881 = vmatprep.subr.bf16.mxu0 %v2675
    %2882 = vmatpush1.bf16.msra.mxu0 %v2674
    %2883 = vmatprep.subr.bf16.mxu0 %v2679
    %2884 = vmatpush1.bf16.msra.mxu0 %v2678
    %2885 = vmatprep.mubr.bf16.mxu0 %v1097
    %2886 = vmatmul.mubr.bf16.gmra.mrb[0].mxu0 %v1096
    %v2887 = vpop.f32.mrb[0].mxu0
    %v2888 = vadd.f32 %v2845, %v2887
    %v2889 = vpop.f32.mrb[0].mxu0
    %v2890 = vadd.f32 %v2847, %v2889
    %v2891 = vpop.f32.mrb[0].mxu0
    %v2892 = vadd.f32 %v2849, %v2891
    %v2893 = vpop.f32.mrb[0].mxu0
    %v2894 = vadd.f32 %v2851, %v2893
    %2895 = vdwg.mxu0
    %2896 = vmatprep.subr.bf16.mxu0 %v2557
    %2897 = vmatpush1.bf16.msra.mxu0 %v2556
    %2898 = vmatprep.subr.bf16.mxu0 %v2561
    %2899 = vmatpush1.bf16.msra.mxu0 %v2560
    %2900 = vmatprep.subr.bf16.mxu0 %v2565
    %2901 = vmatpush1.bf16.msra.mxu0 %v2564
    %2902 = vmatprep.subr.bf16.mxu0 %v2569
    %2903 = vmatpush1.bf16.msra.mxu0 %v2568
    %2904 = vmatprep.subr.bf16.mxu0 %v2573
    %2905 = vmatpush1.bf16.msra.mxu0 %v2572
    %2906 = vmatprep.subr.bf16.mxu0 %v2577
    %2907 = vmatpush1.bf16.msra.mxu0 %v2576
    %2908 = vmatprep.subr.bf16.mxu0 %v2581
    %2909 = vmatpush1.bf16.msra.mxu0 %v2580
    %2910 = vmatprep.subr.bf16.mxu0 %v2585
    %2911 = vmatpush1.bf16.msra.mxu0 %v2584
    %2912 = vmatprep.subr.bf16.mxu0 %v2589
    %2913 = vmatpush1.bf16.msra.mxu0 %v2588
    %2914 = vmatprep.subr.bf16.mxu0 %v2593
    %2915 = vmatpush1.bf16.msra.mxu0 %v2592
    %2916 = vmatprep.subr.bf16.mxu0 %v2597
    %2917 = vmatpush1.bf16.msra.mxu0 %v2596
    %2918 = vmatprep.subr.bf16.mxu0 %v2601
    %2919 = vmatpush1.bf16.msra.mxu0 %v2600
    %2920 = vmatprep.subr.bf16.mxu0 %v2605
    %2921 = vmatpush1.bf16.msra.mxu0 %v2604
    %2922 = vmatprep.subr.bf16.mxu0 %v2609
    %2923 = vmatpush1.bf16.msra.mxu0 %v2608
    %2924 = vmatprep.subr.bf16.mxu0 %v2613
    %2925 = vmatpush1.bf16.msra.mxu0 %v2612
    %2926 = vmatprep.subr.bf16.mxu0 %v2617
    %2927 = vmatpush1.bf16.msra.mxu0 %v2616
    %2928 = vmatprep.mubr.bf16.mxu0 %v1095
    %2929 = vmatmul.mubr.bf16.gmra.mrb[0].mxu0 %v1094
    %v2930 = vpop.f32.mrb[0].mxu0
    %v2931 = vadd.f32 %v2162, %v2930
    %v2932 = vpop.f32.mrb[0].mxu0
    %v2933 = vadd.f32 %v2164, %v2932
    %v2934 = vpop.f32.mrb[0].mxu0
    %v2935 = vadd.f32 %v2166, %v2934
    %v2936 = vpop.f32.mrb[0].mxu0
    %v2937 = vadd.f32 %v2168, %v2936
    %2938 = vdwg.mxu0
    %2939 = vmatprep.subr.bf16.mxu0 %v2621
    %2940 = vmatpush1.bf16.msra.mxu0 %v2620
    %2941 = vmatprep.subr.bf16.mxu0 %v2625
    %2942 = vmatpush1.bf16.msra.mxu0 %v2624
    %2943 = vmatprep.subr.bf16.mxu0 %v2629
    %2944 = vmatpush1.bf16.msra.mxu0 %v2628
    %2945 = vmatprep.subr.bf16.mxu0 %v2633
    %2946 = vmatpush1.bf16.msra.mxu0 %v2632
    %2947 = vmatprep.subr.bf16.mxu0 %v2637
    %2948 = vmatpush1.bf16.msra.mxu0 %v2636
    %2949 = vmatprep.subr.bf16.mxu0 %v2641
    %2950 = vmatpush1.bf16.msra.mxu0 %v2640
    %2951 = vmatprep.subr.bf16.mxu0 %v2645
    %2952 = vmatpush1.bf16.msra.mxu0 %v2644
    %2953 = vmatprep.subr.bf16.mxu0 %v2649
    %2954 = vmatpush1.bf16.msra.mxu0 %v2648
    %2955 = vmatprep.subr.bf16.mxu0 %v2653
    %2956 = vmatpush1.bf16.msra.mxu0 %v2652
    %2957 = vmatprep.subr.bf16.mxu0 %v2657
    %2958 = vmatpush1.bf16.msra.mxu0 %v2656
    %2959 = vmatprep.subr.bf16.mxu0 %v2661
    %2960 = vmatpush1.bf16.msra.mxu0 %v2660
    %2961 = vmatprep.subr.bf16.mxu0 %v2665
    %2962 = vmatpush1.bf16.msra.mxu0 %v2664
    %2963 = vmatprep.subr.bf16.mxu0 %v2669
    %2964 = vmatpush1.bf16.msra.mxu0 %v2668
    %2965 = vmatprep.subr.bf16.mxu0 %v2673
    %2966 = vmatpush1.bf16.msra.mxu0 %v2672
    %2967 = vmatprep.subr.bf16.mxu0 %v2677
    %2968 = vmatpush1.bf16.msra.mxu0 %v2676
    %2969 = vmatprep.subr.bf16.mxu0 %v2681
    %2970 = vmatpush1.bf16.msra.mxu0 %v2680
    %2971 = vmatprep.mubr.bf16.mxu0 %v1097
    %2972 = vmatmul.mubr.bf16.gmra.mrb[0].mxu0 %v1096
    %v2973 = vpop.f32.mrb[0].mxu0
    %v2974 = vadd.f32 %v2931, %v2973
    %v2975 = vpop.f32.mrb[0].mxu0
    %v2976 = vadd.f32 %v2933, %v2975
    %v2977 = vpop.f32.mrb[0].mxu0
    %v2978 = vadd.f32 %v2935, %v2977
    %v2979 = vpop.f32.mrb[0].mxu0
    %v2980 = vadd.f32 %v2937, %v2979
    %2981 = vdwg.mxu0
    %v2982 = vld [vmem:[%s9] sm:$0xf]
    %v2984 = vlaneseq
    %v2985 = vshrl.u32 %v2984, 7
    %v2986 = vsub.s32 0, %v2985
    %v2987 = vrot.slane %v2982, %v2986
    %v2988 = vlaneseq
    %v2989 = vshrl.u32 %v2988, 7
    %v2990 = vsub.s32 1, %v2989
    %v2991 = vrot.slane %v2982, %v2990
    %v2992 = vlaneseq
    %v2993 = vshrl.u32 %v2992, 7
    %v2994 = vsub.s32 2, %v2993
    %v2995 = vrot.slane %v2982, %v2994
    %v2996 = vlaneseq
    %v2997 = vshrl.u32 %v2996, 7
    %v2998 = vsub.s32 3, %v2997
    %v2999 = vrot.slane %v2982, %v2998
    %v3004 = vadd.f32 %v2888, %v2987
    %v3005 = vadd.f32 %v2890, %v2991
    %v3006 = vadd.f32 %v2974, %v2995
    %v3007 = vadd.f32 %v2976, %v2999
    %v3008 = vadd.f32 %v2892, %v2987
    %v3009 = vadd.f32 %v2894, %v2991
    %v3010 = vadd.f32 %v2978, %v2995
    %v3011 = vadd.f32 %v2980, %v2999
    %3012 = vst [vmem:[#allocation14] sm:$0xff] %v3004
    %3013 = vst [vmem:[#allocation14 + $0x8] sm:$0xff] %v3005
    %3014 = vst [vmem:[#allocation14 + $0x10] sm:$0xff] %v3006
    %3015 = vst [vmem:[#allocation14 + $0x18] sm:$0xff] %v3007
    %3016 = vst [vmem:[#allocation14 + $0x20] sm:$0xff] %v3008
    %3017 = vst [vmem:[#allocation14 + $0x28] sm:$0xff] %v3009
    %3018 = vst [vmem:[#allocation14 + $0x30] sm:$0xff] %v3010
    %3019 = vst [vmem:[#allocation14 + $0x38] sm:$0xff] %v3011
    %v3020 = vld [vmem:[%s4] sm:$0x7]
    %v3021 = vld [vmem:[%s5] sm:$0x7]
    %v3022 = vld [vmem:[%s2] sm:$0xff]
    %v3023 = vld [vmem:[%s2 + $0x8] sm:$0xff]
    %v3024 = vld [vmem:[%s2 + $0x10] sm:$0xff]
    %v3025 = vld [vmem:[%s2 + $0x18] sm:$0xff]
    %v3026 = vld [vmem:[%s2 + $0x20] sm:$0xff]
    %v3027 = vld [vmem:[%s2 + $0x28] sm:$0xff]
    %v3028 = vld [vmem:[%s2 + $0x30] sm:$0xff]
    %v3029 = vld [vmem:[%s2 + $0x38] sm:$0xff]
    %v3030 = vld [vmem:[%s2 + $0x40] sm:$0xff]
    %v3031 = vld [vmem:[%s2 + $0x48] sm:$0xff]
    %v3032 = vld [vmem:[%s2 + $0x50] sm:$0xff]
    %v3033 = vld [vmem:[%s2 + $0x58] sm:$0xff]
    %v3034 = vld [vmem:[%s2 + $0x60] sm:$0xff]
    %v3035 = vld [vmem:[%s2 + $0x68] sm:$0xff]
    %v3036 = vld [vmem:[%s2 + $0x70] sm:$0xff]
    %v3037 = vld [vmem:[%s2 + $0x78] sm:$0xff]
    %v3038 = vld [vmem:[%s2 + $0x80] sm:$0xff]
    %v3039 = vld [vmem:[%s2 + $0x88] sm:$0xff]
    %v3040 = vld [vmem:[%s2 + $0x90] sm:$0xff]
    %v3041 = vld [vmem:[%s2 + $0x98] sm:$0xff]
    %v3042 = vld [vmem:[%s2 + $0xa0] sm:$0xff]
    %v3043 = vld [vmem:[%s2 + $0xa8] sm:$0xff]
    %v3044 = vld [vmem:[%s2 + $0xb0] sm:$0xff]
    %v3045 = vld [vmem:[%s2 + $0xb8] sm:$0xff]
    %v3046 = vld [vmem:[%s2 + $0xc0] sm:$0xff]
    %v3047 = vld [vmem:[%s2 + $0xc8] sm:$0xff]
    %v3048 = vld [vmem:[%s2 + $0xd0] sm:$0xff]
    %v3049 = vld [vmem:[%s2 + $0xd8] sm:$0xff]
    %v3050 = vld [vmem:[%s2 + $0xe0] sm:$0xff]
    %v3051 = vld [vmem:[%s2 + $0xe8] sm:$0xff]
    %v3082 = vunpack.c.l.b16 %v3022
    %v3083 = vunpack.c.h.b16 %v3022
    %v3084 = vunpack.c.l.b16 %v3023
    %v3085 = vunpack.c.h.b16 %v3023
    %v3086 = vunpack.c.l.b16 %v3024
    %v3087 = vunpack.c.h.b16 %v3024
    %v3088 = vunpack.c.l.b16 %v3025
    %v3089 = vunpack.c.h.b16 %v3025
    %v3090 = vunpack.c.l.b16 %v3026
    %v3091 = vunpack.c.h.b16 %v3026
    %v3092 = vunpack.c.l.b16 %v3027
    %v3093 = vunpack.c.h.b16 %v3027
    %v3094 = vunpack.c.l.b16 %v3028
    %v3095 = vunpack.c.h.b16 %v3028
    %v3096 = vunpack.c.l.b16 %v3029
    %v3097 = vunpack.c.h.b16 %v3029
    %v3098 = vunpack.c.l.b16 %v3030
    %v3099 = vunpack.c.h.b16 %v3030
    %v3100 = vunpack.c.l.b16 %v3031
    %v3101 = vunpack.c.h.b16 %v3031
    %v3102 = vunpack.c.l.b16 %v3032
    %v3103 = vunpack.c.h.b16 %v3032
    %v3104 = vunpack.c.l.b16 %v3033
    %v3105 = vunpack.c.h.b16 %v3033
    %v3106 = vunpack.c.l.b16 %v3034
    %v3107 = vunpack.c.h.b16 %v3034
    %v3108 = vunpack.c.l.b16 %v3035
    %v3109 = vunpack.c.h.b16 %v3035
    %v3110 = vunpack.c.l.b16 %v3036
    %v3111 = vunpack.c.h.b16 %v3036
    %v3112 = vunpack.c.l.b16 %v3037
    %v3113 = vunpack.c.h.b16 %v3037
    %v3114 = vunpack.c.l.b16 %v3038
    %v3115 = vunpack.c.h.b16 %v3038
    %v3116 = vunpack.c.l.b16 %v3039
    %v3117 = vunpack.c.h.b16 %v3039
    %v3118 = vunpack.c.l.b16 %v3040
    %v3119 = vunpack.c.h.b16 %v3040
    %v3120 = vunpack.c.l.b16 %v3041
    %v3121 = vunpack.c.h.b16 %v3041
    %v3122 = vunpack.c.l.b16 %v3042
    %v3123 = vunpack.c.h.b16 %v3042
    %v3124 = vunpack.c.l.b16 %v3043
    %v3125 = vunpack.c.h.b16 %v3043
    %v3126 = vunpack.c.l.b16 %v3044
    %v3127 = vunpack.c.h.b16 %v3044
    %v3128 = vunpack.c.l.b16 %v3045
    %v3129 = vunpack.c.h.b16 %v3045
    %v3130 = vunpack.c.l.b16 %v3046
    %v3131 = vunpack.c.h.b16 %v3046
    %v3132 = vunpack.c.l.b16 %v3047
    %v3133 = vunpack.c.h.b16 %v3047
    %v3134 = vunpack.c.l.b16 %v3048
    %v3135 = vunpack.c.h.b16 %v3048
    %v3136 = vunpack.c.l.b16 %v3049
    %v3137 = vunpack.c.h.b16 %v3049
    %v3138 = vunpack.c.l.b16 %v3050
    %v3139 = vunpack.c.h.b16 %v3050
    %v3140 = vunpack.c.l.b16 %v3051
    %v3141 = vunpack.c.h.b16 %v3051
    %v3142 = vpack.c.b16 %v3094, %v3082
    %v3143 = vpack.c.b16 %v3095, %v3083
    %v3144 = vpack.c.b16 %v3096, %v3084
    %v3145 = vpack.c.b16 %v3097, %v3085
    %v3146 = vpack.c.b16 %v3098, %v3086
    %v3147 = vpack.c.b16 %v3099, %v3087
    %v3148 = vpack.c.b16 %v3100, %v3088
    %v3149 = vpack.c.b16 %v3101, %v3089
    %v3150 = vpack.c.b16 %v3102, %v3090
    %v3151 = vpack.c.b16 %v3103, %v3091
    %v3152 = vpack.c.b16 %v3104, %v3092
    %v3153 = vpack.c.b16 %v3105, %v3093
    %v3154 = vpack.c.b16 %v3118, %v3106
    %v3155 = vpack.c.b16 %v3119, %v3107
    %v3156 = vpack.c.b16 %v3120, %v3108
    %v3157 = vpack.c.b16 %v3121, %v3109
    %v3158 = vpack.c.b16 %v3122, %v3110
    %v3159 = vpack.c.b16 %v3123, %v3111
    %v3160 = vpack.c.b16 %v3124, %v3112
    %v3161 = vpack.c.b16 %v3125, %v3113
    %v3162 = vpack.c.b16 %v3126, %v3114
    %v3163 = vpack.c.b16 %v3127, %v3115
    %v3164 = vpack.c.b16 %v3128, %v3116
    %v3165 = vpack.c.b16 %v3129, %v3117
    %v3166 = vpack.c.b16 %v3130, %v3130
    %v3167 = vpack.c.b16 %v3131, %v3131
    %v3168 = vpack.c.b16 %v3132, %v3132
    %v3169 = vpack.c.b16 %v3133, %v3133
    %v3170 = vpack.c.b16 %v3134, %v3134
    %v3171 = vpack.c.b16 %v3135, %v3135
    %v3172 = vpack.c.b16 %v3136, %v3136
    %v3173 = vpack.c.b16 %v3137, %v3137
    %v3174 = vpack.c.b16 %v3138, %v3138
    %v3175 = vpack.c.b16 %v3139, %v3139
    %v3176 = vpack.c.b16 %v3140, %v3140
    %v3177 = vpack.c.b16 %v3141, %v3141
    %vm3202 = vcmask 326656
    %v3204 = vsel %vm3202, %v3020, 0
    %vm3206 = vcmask 1043456
    %v3208 = vsel %vm3206, %v3166, 0
    %v3211 = vsel %vm3206, %v3167, 0
    %v3214 = vsel %vm3206, %v3168, 0
    %v3217 = vsel %vm3206, %v3169, 0
    %v3220 = vsel %vm3206, %v3170, 0
    %v3223 = vsel %vm3206, %v3171, 0
    %v3226 = vsel %vm3206, %v3172, 0
    %v3229 = vsel %vm3206, %v3173, 0
    %v3232 = vsel %vm3206, %v3174, 0
    %v3235 = vsel %vm3206, %v3175, 0
    %v3238 = vsel %vm3206, %v3176, 0
    %v3241 = vsel %vm3206, %v3177, 0
    %3243 = vmatprep.subr.bf16.mxu0 %v3143
    %3244 = vmatpush1.bf16.msra.mxu0 %v3142
    %3245 = vmatprep.subr.bf16.mxu0 %v3155
    %3246 = vmatpush1.bf16.msra.mxu0 %v3154
    %3247 = vmatprep.subr.bf16.mxu0 %v3211
    %3248 = vmatpush1.bf16.msra.mxu0 %v3208
    %3249 = vmatprep.subr.bf16.mxu0 0
    %3250 = vmatpush1.bf16.msra.mxu0 0
    %3251 = vmatprep.subr.bf16.mxu0 0
    %3252 = vmatpush1.bf16.msra.mxu0 0
    %3253 = vmatprep.subr.bf16.mxu0 0
    %3254 = vmatpush1.bf16.msra.mxu0 0
    %3255 = vmatprep.subr.bf16.mxu0 0
    %3256 = vmatpush1.bf16.msra.mxu0 0
    %3257 = vmatprep.subr.bf16.mxu0 0
    %3258 = vmatpush1.bf16.msra.mxu0 0
    %3259 = vmatprep.subr.bf16.mxu0 0
    %3260 = vmatpush1.bf16.msra.mxu0 0
    %3261 = vmatprep.subr.bf16.mxu0 0
    %3262 = vmatpush1.bf16.msra.mxu0 0
    %3263 = vmatprep.subr.bf16.mxu0 0
    %3264 = vmatpush1.bf16.msra.mxu0 0
    %3265 = vmatprep.subr.bf16.mxu0 0
    %3266 = vmatpush1.bf16.msra.mxu0 0
    %3267 = vmatprep.subr.bf16.mxu0 0
    %3268 = vmatpush1.bf16.msra.mxu0 0
    %3269 = vmatprep.subr.bf16.mxu0 0
    %3270 = vmatpush1.bf16.msra.mxu0 0
    %3271 = vmatprep.subr.bf16.mxu0 0
    %3272 = vmatpush1.bf16.msra.mxu0 0
    %3273 = vmatprep.subr.bf16.mxu0 0
    %3274 = vmatpush1.bf16.msra.mxu0 0
    %3275 = vmatprep.mubr.bf16.mxu0 0
    %3276 = vmatmul.mubr.bf16.gmra.mrb[0].mxu0 %v3204
    %v3277 = vpop.f32.mrb[0].mxu0
    %v3278 = vadd.f32 0.0, %v3277
    %v3279 = vpop.f32.mrb[0].mxu0
    %v3280 = vadd.f32 0.0, %v3279
    %v3281 = vpop.f32.mrb[0].mxu0
    %v3282 = vpop.f32.mrb[0].mxu0
    %3283 = vdwg.mxu0
    %3284 = vmatprep.subr.bf16.mxu0 %v3145
    %3285 = vmatpush1.bf16.msra.mxu0 %v3144
    %3286 = vmatprep.subr.bf16.mxu0 %v3157
    %3287 = vmatpush1.bf16.msra.mxu0 %v3156
    %3288 = vmatprep.subr.bf16.mxu0 %v3217
    %3289 = vmatpush1.bf16.msra.mxu0 %v3214
    %3290 = vmatprep.subr.bf16.mxu0 0
    %3291 = vmatpush1.bf16.msra.mxu0 0
    %3292 = vmatprep.subr.bf16.mxu0 0
    %3293 = vmatpush1.bf16.msra.mxu0 0
    %3294 = vmatprep.subr.bf16.mxu0 0
    %3295 = vmatpush1.bf16.msra.mxu0 0
    %3296 = vmatprep.subr.bf16.mxu0 0
    %3297 = vmatpush1.bf16.msra.mxu0 0
    %3298 = vmatprep.subr.bf16.mxu0 0
    %3299 = vmatpush1.bf16.msra.mxu0 0
    %3300 = vmatprep.subr.bf16.mxu0 0
    %3301 = vmatpush1.bf16.msra.mxu0 0
    %3302 = vmatprep.subr.bf16.mxu0 0
    %3303 = vmatpush1.bf16.msra.mxu0 0
    %3304 = vmatprep.subr.bf16.mxu0 0
    %3305 = vmatpush1.bf16.msra.mxu0 0
    %3306 = vmatprep.subr.bf16.mxu0 0
    %3307 = vmatpush1.bf16.msra.mxu0 0
    %3308 = vmatprep.subr.bf16.mxu0 0
    %3309 = vmatpush1.bf16.msra.mxu0 0
    %3310 = vmatprep.subr.bf16.mxu0 0
    %3311 = vmatpush1.bf16.msra.mxu0 0
    %3312 = vmatprep.subr.bf16.mxu0 0
    %3313 = vmatpush1.bf16.msra.mxu0 0
    %3314 = vmatprep.subr.bf16.mxu0 0
    %3315 = vmatpush1.bf16.msra.mxu0 0
    %3316 = vmatprep.mubr.bf16.mxu0 0
    %3317 = vmatmul.mubr.bf16.gmra.mrb[0].mxu0 %v3204
    %v3318 = vpop.f32.mrb[0].mxu0
    %v3319 = vadd.f32 0.0, %v3318
    %v3320 = vpop.f32.mrb[0].mxu0
    %v3321 = vadd.f32 0.0, %v3320
    %v3322 = vpop.f32.mrb[0].mxu0
    %v3323 = vpop.f32.mrb[0].mxu0
    %3324 = vdwg.mxu0
    %3325 = vmatprep.subr.bf16.mxu0 %v3147
    %3326 = vmatpush1.bf16.msra.mxu0 %v3146
    %3327 = vmatprep.subr.bf16.mxu0 %v3159
    %3328 = vmatpush1.bf16.msra.mxu0 %v3158
    %3329 = vmatprep.subr.bf16.mxu0 %v3223
    %3330 = vmatpush1.bf16.msra.mxu0 %v3220
    %3331 = vmatprep.subr.bf16.mxu0 0
    %3332 = vmatpush1.bf16.msra.mxu0 0
    %3333 = vmatprep.subr.bf16.mxu0 0
    %3334 = vmatpush1.bf16.msra.mxu0 0
    %3335 = vmatprep.subr.bf16.mxu0 0
    %3336 = vmatpush1.bf16.msra.mxu0 0
    %3337 = vmatprep.subr.bf16.mxu0 0
    %3338 = vmatpush1.bf16.msra.mxu0 0
    %3339 = vmatprep.subr.bf16.mxu0 0
    %3340 = vmatpush1.bf16.msra.mxu0 0
    %3341 = vmatprep.subr.bf16.mxu0 0
    %3342 = vmatpush1.bf16.msra.mxu0 0
    %3343 = vmatprep.subr.bf16.mxu0 0
    %3344 = vmatpush1.bf16.msra.mxu0 0
    %3345 = vmatprep.subr.bf16.mxu0 0
    %3346 = vmatpush1.bf16.msra.mxu0 0
    %3347 = vmatprep.subr.bf16.mxu0 0
    %3348 = vmatpush1.bf16.msra.mxu0 0
    %3349 = vmatprep.subr.bf16.mxu0 0
    %3350 = vmatpush1.bf16.msra.mxu0 0
    %3351 = vmatprep.subr.bf16.mxu0 0
    %3352 = vmatpush1.bf16.msra.mxu0 0
    %3353 = vmatprep.subr.bf16.mxu0 0
    %3354 = vmatpush1.bf16.msra.mxu0 0
    %3355 = vmatprep.subr.bf16.mxu0 0
    %3356 = vmatpush1.bf16.msra.mxu0 0
    %3357 = vmatprep.mubr.bf16.mxu0 0
    %3358 = vmatmul.mubr.bf16.gmra.mrb[0].mxu0 %v3204
    %v3359 = vpop.f32.mrb[0].mxu0
    %v3360 = vadd.f32 0.0, %v3359
    %v3361 = vpop.f32.mrb[0].mxu0
    %v3362 = vadd.f32 0.0, %v3361
    %v3363 = vpop.f32.mrb[0].mxu0
    %v3364 = vpop.f32.mrb[0].mxu0
    %3365 = vdwg.mxu0
    %3366 = vmatprep.subr.bf16.mxu0 %v3149
    %3367 = vmatpush1.bf16.msra.mxu0 %v3148
    %3368 = vmatprep.subr.bf16.mxu0 %v3161
    %3369 = vmatpush1.bf16.msra.mxu0 %v3160
    %3370 = vmatprep.subr.bf16.mxu0 %v3229
    %3371 = vmatpush1.bf16.msra.mxu0 %v3226
    %3372 = vmatprep.subr.bf16.mxu0 0
    %3373 = vmatpush1.bf16.msra.mxu0 0
    %3374 = vmatprep.subr.bf16.mxu0 0
    %3375 = vmatpush1.bf16.msra.mxu0 0
    %3376 = vmatprep.subr.bf16.mxu0 0
    %3377 = vmatpush1.bf16.msra.mxu0 0
    %3378 = vmatprep.subr.bf16.mxu0 0
    %3379 = vmatpush1.bf16.msra.mxu0 0
    %3380 = vmatprep.subr.bf16.mxu0 0
    %3381 = vmatpush1.bf16.msra.mxu0 0
    %3382 = vmatprep.subr.bf16.mxu0 0
    %3383 = vmatpush1.bf16.msra.mxu0 0
    %3384 = vmatprep.subr.bf16.mxu0 0
    %3385 = vmatpush1.bf16.msra.mxu0 0
    %3386 = vmatprep.subr.bf16.mxu0 0
    %3387 = vmatpush1.bf16.msra.mxu0 0
    %3388 = vmatprep.subr.bf16.mxu0 0
    %3389 = vmatpush1.bf16.msra.mxu0 0
    %3390 = vmatprep.subr.bf16.mxu0 0
    %3391 = vmatpush1.bf16.msra.mxu0 0
    %3392 = vmatprep.subr.bf16.mxu0 0
    %3393 = vmatpush1.bf16.msra.mxu0 0
    %3394 = vmatprep.subr.bf16.mxu0 0
    %3395 = vmatpush1.bf16.msra.mxu0 0
    %3396 = vmatprep.subr.bf16.mxu0 0
    %3397 = vmatpush1.bf16.msra.mxu0 0
    %3398 = vmatprep.mubr.bf16.mxu0 0
    %3399 = vmatmul.mubr.bf16.gmra.mrb[0].mxu0 %v3204
    %v3400 = vpop.f32.mrb[0].mxu0
    %v3401 = vadd.f32 0.0, %v3400
    %v3402 = vpop.f32.mrb[0].mxu0
    %v3403 = vadd.f32 0.0, %v3402
    %v3404 = vpop.f32.mrb[0].mxu0
    %v3405 = vpop.f32.mrb[0].mxu0
    %3406 = vdwg.mxu0
    %3407 = vmatprep.subr.bf16.mxu0 %v3151
    %3408 = vmatpush1.bf16.msra.mxu0 %v3150
    %3409 = vmatprep.subr.bf16.mxu0 %v3163
    %3410 = vmatpush1.bf16.msra.mxu0 %v3162
    %3411 = vmatprep.subr.bf16.mxu0 %v3235
    %3412 = vmatpush1.bf16.msra.mxu0 %v3232
    %3413 = vmatprep.subr.bf16.mxu0 0
    %3414 = vmatpush1.bf16.msra.mxu0 0
    %3415 = vmatprep.subr.bf16.mxu0 0
    %3416 = vmatpush1.bf16.msra.mxu0 0
    %3417 = vmatprep.subr.bf16.mxu0 0
    %3418 = vmatpush1.bf16.msra.mxu0 0
    %3419 = vmatprep.subr.bf16.mxu0 0
    %3420 = vmatpush1.bf16.msra.mxu0 0
    %3421 = vmatprep.subr.bf16.mxu0 0
    %3422 = vmatpush1.bf16.msra.mxu0 0
    %3423 = vmatprep.subr.bf16.mxu0 0
    %3424 = vmatpush1.bf16.msra.mxu0 0
    %3425 = vmatprep.subr.bf16.mxu0 0
    %3426 = vmatpush1.bf16.msra.mxu0 0
    %3427 = vmatprep.subr.bf16.mxu0 0
    %3428 = vmatpush1.bf16.msra.mxu0 0
    %3429 = vmatprep.subr.bf16.mxu0 0
    %3430 = vmatpush1.bf16.msra.mxu0 0
    %3431 = vmatprep.subr.bf16.mxu0 0
    %3432 = vmatpush1.bf16.msra.mxu0 0
    %3433 = vmatprep.subr.bf16.mxu0 0
    %3434 = vmatpush1.bf16.msra.mxu0 0
    %3435 = vmatprep.subr.bf16.mxu0 0
    %3436 = vmatpush1.bf16.msra.mxu0 0
    %3437 = vmatprep.subr.bf16.mxu0 0
    %3438 = vmatpush1.bf16.msra.mxu0 0
    %3439 = vmatprep.mubr.bf16.mxu0 0
    %3440 = vmatmul.mubr.bf16.gmra.mrb[0].mxu0 %v3204
    %v3441 = vpop.f32.mrb[0].mxu0
    %v3442 = vadd.f32 0.0, %v3441
    %v3443 = vpop.f32.mrb[0].mxu0
    %v3444 = vadd.f32 0.0, %v3443
    %v3445 = vpop.f32.mrb[0].mxu0
    %v3446 = vpop.f32.mrb[0].mxu0
    %3447 = vdwg.mxu0
    %3448 = vmatprep.subr.bf16.mxu0 %v3153
    %3449 = vmatpush1.bf16.msra.mxu0 %v3152
    %3450 = vmatprep.subr.bf16.mxu0 %v3165
    %3451 = vmatpush1.bf16.msra.mxu0 %v3164
    %3452 = vmatprep.subr.bf16.mxu0 %v3241
    %3453 = vmatpush1.bf16.msra.mxu0 %v3238
    %3454 = vmatprep.subr.bf16.mxu0 0
    %3455 = vmatpush1.bf16.msra.mxu0 0
    %3456 = vmatprep.subr.bf16.mxu0 0
    %3457 = vmatpush1.bf16.msra.mxu0 0
    %3458 = vmatprep.subr.bf16.mxu0 0
    %3459 = vmatpush1.bf16.msra.mxu0 0
    %3460 = vmatprep.subr.bf16.mxu0 0
    %3461 = vmatpush1.bf16.msra.mxu0 0
    %3462 = vmatprep.subr.bf16.mxu0 0
    %3463 = vmatpush1.bf16.msra.mxu0 0
    %3464 = vmatprep.subr.bf16.mxu0 0
    %3465 = vmatpush1.bf16.msra.mxu0 0
    %3466 = vmatprep.subr.bf16.mxu0 0
    %3467 = vmatpush1.bf16.msra.mxu0 0
    %3468 = vmatprep.subr.bf16.mxu0 0
    %3469 = vmatpush1.bf16.msra.mxu0 0
    %3470 = vmatprep.subr.bf16.mxu0 0
    %3471 = vmatpush1.bf16.msra.mxu0 0
    %3472 = vmatprep.subr.bf16.mxu0 0
    %3473 = vmatpush1.bf16.msra.mxu0 0
    %3474 = vmatprep.subr.bf16.mxu0 0
    %3475 = vmatpush1.bf16.msra.mxu0 0
    %3476 = vmatprep.subr.bf16.mxu0 0
    %3477 = vmatpush1.bf16.msra.mxu0 0
    %3478 = vmatprep.subr.bf16.mxu0 0
    %3479 = vmatpush1.bf16.msra.mxu0 0
    %3480 = vmatprep.mubr.bf16.mxu0 0
    %3481 = vmatmul.mubr.bf16.gmra.mrb[0].mxu0 %v3204
    %v3482 = vpop.f32.mrb[0].mxu0
    %v3483 = vadd.f32 0.0, %v3482
    %v3484 = vpop.f32.mrb[0].mxu0
    %v3485 = vadd.f32 0.0, %v3484
    %v3486 = vpop.f32.mrb[0].mxu0
    %v3487 = vpop.f32.mrb[0].mxu0
    %3488 = vdwg.mxu0
    %v3489 = vpack.c.bf16 %v3278, %v3278
    %v3490 = vpack.c.bf16 %v3280, %v3280
    %v3491 = vpack.c.bf16 %v3319, %v3319
    %v3492 = vpack.c.bf16 %v3321, %v3321
    %v3493 = vpack.c.bf16 %v3360, %v3360
    %v3494 = vpack.c.bf16 %v3362, %v3362
    %v3495 = vpack.c.bf16 %v3401, %v3401
    %v3496 = vpack.c.bf16 %v3403, %v3403
    %v3497 = vpack.c.bf16 %v3442, %v3442
    %v3498 = vpack.c.bf16 %v3444, %v3444
    %v3499 = vpack.c.bf16 %v3483, %v3483
    %v3500 = vpack.c.bf16 %v3485, %v3485
    %v3501 = vld [vmem:[%s3] sm:$0xff]
    %v3502 = vld [vmem:[%s3 + $0x8] sm:$0xff]
    %v3503 = vld [vmem:[%s3 + $0x10] sm:$0xff]
    %v3504 = vld [vmem:[%s3 + $0x18] sm:$0xff]
    %v3505 = vld [vmem:[%s3 + $0x20] sm:$0xff]
    %v3506 = vld [vmem:[%s3 + $0x28] sm:$0xff]
    %v3507 = vld [vmem:[%s3 + $0x30] sm:$0xff]
    %v3508 = vld [vmem:[%s3 + $0x38] sm:$0xff]
    %v3509 = vld [vmem:[%s3 + $0x40] sm:$0x33]
    %v3510 = vld [vmem:[%s3 + $0x48] sm:$0x33]
    %v3521 = vunpack.c.l.b16 %v3501
    %v3522 = vunpack.c.h.b16 %v3501
    %v3523 = vunpack.c.l.b16 %v3502
    %v3524 = vunpack.c.h.b16 %v3502
    %v3525 = vunpack.c.l.b16 %v3503
    %v3526 = vunpack.c.h.b16 %v3503
    %v3527 = vunpack.c.l.b16 %v3504
    %v3528 = vunpack.c.h.b16 %v3504
    %v3529 = vunpack.c.l.b16 %v3505
    %v3530 = vunpack.c.h.b16 %v3505
    %v3531 = vunpack.c.l.b16 %v3506
    %v3532 = vunpack.c.h.b16 %v3506
    %v3533 = vunpack.c.l.b16 %v3507
    %v3534 = vunpack.c.h.b16 %v3507
    %v3535 = vunpack.c.l.b16 %v3508
    %v3536 = vunpack.c.h.b16 %v3508
    %v3537 = vunpack.c.l.b16 %v3509
    %v3538 = vunpack.c.h.b16 %v3509
    %v3539 = vunpack.c.l.b16 %v3510
    %v3540 = vunpack.c.h.b16 %v3510
    %v3541 = vpack.c.b16 %v3525, %v3521
    %v3542 = vpack.c.b16 %v3526, %v3522
    %v3543 = vpack.c.b16 %v3527, %v3523
    %v3544 = vpack.c.b16 %v3528, %v3524
    %v3545 = vpack.c.b16 %v3533, %v3529
    %v3546 = vpack.c.b16 %v3534, %v3530
    %v3547 = vpack.c.b16 %v3535, %v3531
    %v3548 = vpack.c.b16 %v3536, %v3532
    %v3549 = vpack.c.b16 %v3537, %v3537
    %v3550 = vpack.c.b16 %v3538, %v3538
    %v3551 = vpack.c.b16 %v3539, %v3539
    %v3552 = vpack.c.b16 %v3540, %v3540
    %vm3561 = vcmask 293888
    %v3563 = vsel %vm3561, %v3021, 0
    %vm3565 = vcmask 1041408
    %v3567 = vsel %vm3565, %v3549, 0
    %v3570 = vsel %vm3565, %v3550, 0
    %v3573 = vsel %vm3565, %v3551, 0
    %v3576 = vsel %vm3565, %v3552, 0
    %3578 = vmatprep.subr.bf16.mxu0 %v3542
    %3579 = vmatpush1.bf16.msra.mxu0 %v3541
    %3580 = vmatprep.subr.bf16.mxu0 %v3546
    %3581 = vmatpush1.bf16.msra.mxu0 %v3545
    %3582 = vmatprep.subr.bf16.mxu0 %v3570
    %3583 = vmatpush1.bf16.msra.mxu0 %v3567
    %3584 = vmatprep.subr.bf16.mxu0 0
    %3585 = vmatpush1.bf16.msra.mxu0 0
    %3586 = vmatprep.subr.bf16.mxu0 0
    %3587 = vmatpush1.bf16.msra.mxu0 0
    %3588 = vmatprep.subr.bf16.mxu0 0
    %3589 = vmatpush1.bf16.msra.mxu0 0
    %3590 = vmatprep.subr.bf16.mxu0 0
    %3591 = vmatpush1.bf16.msra.mxu0 0
    %3592 = vmatprep.subr.bf16.mxu0 0
    %3593 = vmatpush1.bf16.msra.mxu0 0
    %3594 = vmatprep.subr.bf16.mxu0 0
    %3595 = vmatpush1.bf16.msra.mxu0 0
    %3596 = vmatprep.subr.bf16.mxu0 0
    %3597 = vmatpush1.bf16.msra.mxu0 0
    %3598 = vmatprep.subr.bf16.mxu0 0
    %3599 = vmatpush1.bf16.msra.mxu0 0
    %3600 = vmatprep.subr.bf16.mxu0 0
    %3601 = vmatpush1.bf16.msra.mxu0 0
    %3602 = vmatprep.subr.bf16.mxu0 0
    %3603 = vmatpush1.bf16.msra.mxu0 0
    %3604 = vmatprep.subr.bf16.mxu0 0
    %3605 = vmatpush1.bf16.msra.mxu0 0
    %3606 = vmatprep.subr.bf16.mxu0 0
    %3607 = vmatpush1.bf16.msra.mxu0 0
    %3608 = vmatprep.subr.bf16.mxu0 0
    %3609 = vmatpush1.bf16.msra.mxu0 0
    %3610 = vmatprep.mubr.bf16.mxu0 0
    %3611 = vmatmul.mubr.bf16.gmra.mrb[0].mxu0 %v3563
    %v3612 = vpop.f32.mrb[0].mxu0
    %v3613 = vadd.f32 0.0, %v3612
    %v3614 = vpop.f32.mrb[0].mxu0
    %v3615 = vadd.f32 0.0, %v3614
    %v3616 = vpop.f32.mrb[0].mxu0
    %v3617 = vpop.f32.mrb[0].mxu0
    %3618 = vdwg.mxu0
    %3619 = vmatprep.subr.bf16.mxu0 %v3544
    %3620 = vmatpush1.bf16.msra.mxu0 %v3543
    %3621 = vmatprep.subr.bf16.mxu0 %v3548
    %3622 = vmatpush1.bf16.msra.mxu0 %v3547
    %3623 = vmatprep.subr.bf16.mxu0 %v3576
    %3624 = vmatpush1.bf16.msra.mxu0 %v3573
    %3625 = vmatprep.subr.bf16.mxu0 0
    %3626 = vmatpush1.bf16.msra.mxu0 0
    %3627 = vmatprep.subr.bf16.mxu0 0
    %3628 = vmatpush1.bf16.msra.mxu0 0
    %3629 = vmatprep.subr.bf16.mxu0 0
    %3630 = vmatpush1.bf16.msra.mxu0 0
    %3631 = vmatprep.subr.bf16.mxu0 0
    %3632 = vmatpush1.bf16.msra.mxu0 0
    %3633 = vmatprep.subr.bf16.mxu0 0
    %3634 = vmatpush1.bf16.msra.mxu0 0
    %3635 = vmatprep.subr.bf16.mxu0 0
    %3636 = vmatpush1.bf16.msra.mxu0 0
    %3637 = vmatprep.subr.bf16.mxu0 0
    %3638 = vmatpush1.bf16.msra.mxu0 0
    %3639 = vmatprep.subr.bf16.mxu0 0
    %3640 = vmatpush1.bf16.msra.mxu0 0
    %3641 = vmatprep.subr.bf16.mxu0 0
    %3642 = vmatpush1.bf16.msra.mxu0 0
    %3643 = vmatprep.subr.bf16.mxu0 0
    %3644 = vmatpush1.bf16.msra.mxu0 0
    %3645 = vmatprep.subr.bf16.mxu0 0
    %3646 = vmatpush1.bf16.msra.mxu0 0
    %3647 = vmatprep.subr.bf16.mxu0 0
    %3648 = vmatpush1.bf16.msra.mxu0 0
    %3649 = vmatprep.subr.bf16.mxu0 0
    %3650 = vmatpush1.bf16.msra.mxu0 0
    %3651 = vmatprep.mubr.bf16.mxu0 0
    %3652 = vmatmul.mubr.bf16.gmra.mrb[0].mxu0 %v3563
    %v3653 = vpop.f32.mrb[0].mxu0
    %v3654 = vadd.f32 0.0, %v3653
    %v3655 = vpop.f32.mrb[0].mxu0
    %v3656 = vadd.f32 0.0, %v3655
    %v3657 = vpop.f32.mrb[0].mxu0
    %v3658 = vpop.f32.mrb[0].mxu0
    %3659 = vdwg.mxu0
    %v3660 = vpack.c.bf16 %v3613, %v3613
    %v3661 = vpack.c.bf16 %v3615, %v3615
    %v3662 = vpack.c.bf16 %v3654, %v3654
    %v3663 = vpack.c.bf16 %v3656, %v3656
    %s3664 = scalar_lea.vmem %s2, 240
    %v3665 = vld [vmem:[%s3664] sm:$0xff]
    %v3666 = vld [vmem:[%s3664 + $0x8] sm:$0xff]
    %v3667 = vld [vmem:[%s3664 + $0x10] sm:$0xff]
    %v3668 = vld [vmem:[%s3664 + $0x18] sm:$0xff]
    %v3669 = vld [vmem:[%s3664 + $0x20] sm:$0xff]
    %v3670 = vld [vmem:[%s3664 + $0x28] sm:$0xff]
    %v3671 = vld [vmem:[%s3664 + $0x30] sm:$0xff]
    %v3672 = vld [vmem:[%s3664 + $0x38] sm:$0xff]
    %v3673 = vld [vmem:[%s3664 + $0x40] sm:$0xff]
    %v3674 = vld [vmem:[%s3664 + $0x48] sm:$0xff]
    %v3675 = vld [vmem:[%s3664 + $0x50] sm:$0xff]
    %v3676 = vld [vmem:[%s3664 + $0x58] sm:$0xff]
    %v3677 = vld [vmem:[%s3664 + $0x60] sm:$0xff]
    %v3678 = vld [vmem:[%s3664 + $0x68] sm:$0xff]
    %v3679 = vld [vmem:[%s3664 + $0x70] sm:$0xff]
    %v3680 = vld [vmem:[%s3664 + $0x78] sm:$0xff]
    %v3681 = vld [vmem:[%s3664 + $0x80] sm:$0xff]
    %v3682 = vld [vmem:[%s3664 + $0x88] sm:$0xff]
    %v3683 = vld [vmem:[%s3664 + $0x90] sm:$0xff]
    %v3684 = vld [vmem:[%s3664 + $0x98] sm:$0xff]
    %v3685 = vld [vmem:[%s3664 + $0xa0] sm:$0xff]
    %v3686 = vld [vmem:[%s3664 + $0xa8] sm:$0xff]
    %v3687 = vld [vmem:[%s3664 + $0xb0] sm:$0xff]
    %v3688 = vld [vmem:[%s3664 + $0xb8] sm:$0xff]
    %v3689 = vld [vmem:[%s3664 + $0xc0] sm:$0xff]
    %v3690 = vld [vmem:[%s3664 + $0xc8] sm:$0xff]
    %v3691 = vld [vmem:[%s3664 + $0xd0] sm:$0xff]
    %v3692 = vld [vmem:[%s3664 + $0xd8] sm:$0xff]
    %v3693 = vld [vmem:[%s3664 + $0xe0] sm:$0xff]
    %v3694 = vld [vmem:[%s3664 + $0xe8] sm:$0xff]
    %v3725 = vunpack.c.l.b16 %v3665
    %v3726 = vunpack.c.h.b16 %v3665
    %v3727 = vunpack.c.l.b16 %v3666
    %v3728 = vunpack.c.h.b16 %v3666
    %v3729 = vunpack.c.l.b16 %v3667
    %v3730 = vunpack.c.h.b16 %v3667
    %v3731 = vunpack.c.l.b16 %v3668
    %v3732 = vunpack.c.h.b16 %v3668
    %v3733 = vunpack.c.l.b16 %v3669
    %v3734 = vunpack.c.h.b16 %v3669
    %v3735 = vunpack.c.l.b16 %v3670
    %v3736 = vunpack.c.h.b16 %v3670
    %v3737 = vunpack.c.l.b16 %v3671
    %v3738 = vunpack.c.h.b16 %v3671
    %v3739 = vunpack.c.l.b16 %v3672
    %v3740 = vunpack.c.h.b16 %v3672
    %v3741 = vunpack.c.l.b16 %v3673
    %v3742 = vunpack.c.h.b16 %v3673
    %v3743 = vunpack.c.l.b16 %v3674
    %v3744 = vunpack.c.h.b16 %v3674
    %v3745 = vunpack.c.l.b16 %v3675
    %v3746 = vunpack.c.h.b16 %v3675
    %v3747 = vunpack.c.l.b16 %v3676
    %v3748 = vunpack.c.h.b16 %v3676
    %v3749 = vunpack.c.l.b16 %v3677
    %v3750 = vunpack.c.h.b16 %v3677
    %v3751 = vunpack.c.l.b16 %v3678
    %v3752 = vunpack.c.h.b16 %v3678
    %v3753 = vunpack.c.l.b16 %v3679
    %v3754 = vunpack.c.h.b16 %v3679
    %v3755 = vunpack.c.l.b16 %v3680
    %v3756 = vunpack.c.h.b16 %v3680
    %v3757 = vunpack.c.l.b16 %v3681
    %v3758 = vunpack.c.h.b16 %v3681
    %v3759 = vunpack.c.l.b16 %v3682
    %v3760 = vunpack.c.h.b16 %v3682
    %v3761 = vunpack.c.l.b16 %v3683
    %v3762 = vunpack.c.h.b16 %v3683
    %v3763 = vunpack.c.l.b16 %v3684
    %v3764 = vunpack.c.h.b16 %v3684
    %v3765 = vunpack.c.l.b16 %v3685
    %v3766 = vunpack.c.h.b16 %v3685
    %v3767 = vunpack.c.l.b16 %v3686
    %v3768 = vunpack.c.h.b16 %v3686
    %v3769 = vunpack.c.l.b16 %v3687
    %v3770 = vunpack.c.h.b16 %v3687
    %v3771 = vunpack.c.l.b16 %v3688
    %v3772 = vunpack.c.h.b16 %v3688
    %v3773 = vunpack.c.l.b16 %v3689
    %v3774 = vunpack.c.h.b16 %v3689
    %v3775 = vunpack.c.l.b16 %v3690
    %v3776 = vunpack.c.h.b16 %v3690
    %v3777 = vunpack.c.l.b16 %v3691
    %v3778 = vunpack.c.h.b16 %v3691
    %v3779 = vunpack.c.l.b16 %v3692
    %v3780 = vunpack.c.h.b16 %v3692
    %v3781 = vunpack.c.l.b16 %v3693
    %v3782 = vunpack.c.h.b16 %v3693
    %v3783 = vunpack.c.l.b16 %v3694
    %v3784 = vunpack.c.h.b16 %v3694
    %v3785 = vpack.c.b16 %v3737, %v3725
    %v3786 = vpack.c.b16 %v3738, %v3726
    %v3787 = vpack.c.b16 %v3739, %v3727
    %v3788 = vpack.c.b16 %v3740, %v3728
    %v3789 = vpack.c.b16 %v3741, %v3729
    %v3790 = vpack.c.b16 %v3742, %v3730
    %v3791 = vpack.c.b16 %v3743, %v3731
    %v3792 = vpack.c.b16 %v3744, %v3732
    %v3793 = vpack.c.b16 %v3745, %v3733
    %v3794 = vpack.c.b16 %v3746, %v3734
    %v3795 = vpack.c.b16 %v3747, %v3735
    %v3796 = vpack.c.b16 %v3748, %v3736
    %v3797 = vpack.c.b16 %v3761, %v3749
    %v3798 = vpack.c.b16 %v3762, %v3750
    %v3799 = vpack.c.b16 %v3763, %v3751
    %v3800 = vpack.c.b16 %v3764, %v3752
    %v3801 = vpack.c.b16 %v3765, %v3753
    %v3802 = vpack.c.b16 %v3766, %v3754
    %v3803 = vpack.c.b16 %v3767, %v3755
    %v3804 = vpack.c.b16 %v3768, %v3756
    %v3805 = vpack.c.b16 %v3769, %v3757
    %v3806 = vpack.c.b16 %v3770, %v3758
    %v3807 = vpack.c.b16 %v3771, %v3759
    %v3808 = vpack.c.b16 %v3772, %v3760
    %v3809 = vpack.c.b16 %v3773, %v3773
    %v3810 = vpack.c.b16 %v3774, %v3774
    %v3811 = vpack.c.b16 %v3775, %v3775
    %v3812 = vpack.c.b16 %v3776, %v3776
    %v3813 = vpack.c.b16 %v3777, %v3777
    %v3814 = vpack.c.b16 %v3778, %v3778
    %v3815 = vpack.c.b16 %v3779, %v3779
    %v3816 = vpack.c.b16 %v3780, %v3780
    %v3817 = vpack.c.b16 %v3781, %v3781
    %v3818 = vpack.c.b16 %v3782, %v3782
    %v3819 = vpack.c.b16 %v3783, %v3783
    %v3820 = vpack.c.b16 %v3784, %v3784
    %v3846 = vsel %vm3206, %v3809, 0
    %v3849 = vsel %vm3206, %v3810, 0
    %v3852 = vsel %vm3206, %v3811, 0
    %v3855 = vsel %vm3206, %v3812, 0
    %v3858 = vsel %vm3206, %v3813, 0
    %v3861 = vsel %vm3206, %v3814, 0
    %v3864 = vsel %vm3206, %v3815, 0
    %v3867 = vsel %vm3206, %v3816, 0
    %v3870 = vsel %vm3206, %v3817, 0
    %v3873 = vsel %vm3206, %v3818, 0
    %v3876 = vsel %vm3206, %v3819, 0
    %v3879 = vsel %vm3206, %v3820, 0
    %3881 = vmatprep.subr.bf16.mxu0 %v3786
    %3882 = vmatpush1.bf16.msra.mxu0 %v3785
    %3883 = vmatprep.subr.bf16.mxu0 %v3798
    %3884 = vmatpush1.bf16.msra.mxu0 %v3797
    %3885 = vmatprep.subr.bf16.mxu0 %v3849
    %3886 = vmatpush1.bf16.msra.mxu0 %v3846
    %3887 = vmatprep.subr.bf16.mxu0 0
    %3888 = vmatpush1.bf16.msra.mxu0 0
    %3889 = vmatprep.subr.bf16.mxu0 0
    %3890 = vmatpush1.bf16.msra.mxu0 0
    %3891 = vmatprep.subr.bf16.mxu0 0
    %3892 = vmatpush1.bf16.msra.mxu0 0
    %3893 = vmatprep.subr.bf16.mxu0 0
    %3894 = vmatpush1.bf16.msra.mxu0 0
    %3895 = vmatprep.subr.bf16.mxu0 0
    %3896 = vmatpush1.bf16.msra.mxu0 0
    %3897 = vmatprep.subr.bf16.mxu0 0
    %3898 = vmatpush1.bf16.msra.mxu0 0
    %3899 = vmatprep.subr.bf16.mxu0 0
    %3900 = vmatpush1.bf16.msra.mxu0 0
    %3901 = vmatprep.subr.bf16.mxu0 0
    %3902 = vmatpush1.bf16.msra.mxu0 0
    %3903 = vmatprep.subr.bf16.mxu0 0
    %3904 = vmatpush1.bf16.msra.mxu0 0
    %3905 = vmatprep.subr.bf16.mxu0 0
    %3906 = vmatpush1.bf16.msra.mxu0 0
    %3907 = vmatprep.subr.bf16.mxu0 0
    %3908 = vmatpush1.bf16.msra.mxu0 0
    %3909 = vmatprep.subr.bf16.mxu0 0
    %3910 = vmatpush1.bf16.msra.mxu0 0
    %3911 = vmatprep.subr.bf16.mxu0 0
    %3912 = vmatpush1.bf16.msra.mxu0 0
    %3913 = vmatprep.mubr.bf16.mxu0 0
    %3914 = vmatmul.mubr.bf16.gmra.mrb[0].mxu0 %v3204
    %v3915 = vpop.f32.mrb[0].mxu0
    %v3916 = vadd.f32 0.0, %v3915
    %v3917 = vpop.f32.mrb[0].mxu0
    %v3918 = vadd.f32 0.0, %v3917
    %v3919 = vpop.f32.mrb[0].mxu0
    %v3920 = vpop.f32.mrb[0].mxu0
    %3921 = vdwg.mxu0
    %3922 = vmatprep.subr.bf16.mxu0 %v3788
    %3923 = vmatpush1.bf16.msra.mxu0 %v3787
    %3924 = vmatprep.subr.bf16.mxu0 %v3800
    %3925 = vmatpush1.bf16.msra.mxu0 %v3799
    %3926 = vmatprep.subr.bf16.mxu0 %v3855
    %3927 = vmatpush1.bf16.msra.mxu0 %v3852
    %3928 = vmatprep.subr.bf16.mxu0 0
    %3929 = vmatpush1.bf16.msra.mxu0 0
    %3930 = vmatprep.subr.bf16.mxu0 0
    %3931 = vmatpush1.bf16.msra.mxu0 0
    %3932 = vmatprep.subr.bf16.mxu0 0
    %3933 = vmatpush1.bf16.msra.mxu0 0
    %3934 = vmatprep.subr.bf16.mxu0 0
    %3935 = vmatpush1.bf16.msra.mxu0 0
    %3936 = vmatprep.subr.bf16.mxu0 0
    %3937 = vmatpush1.bf16.msra.mxu0 0
    %3938 = vmatprep.subr.bf16.mxu0 0
    %3939 = vmatpush1.bf16.msra.mxu0 0
    %3940 = vmatprep.subr.bf16.mxu0 0
    %3941 = vmatpush1.bf16.msra.mxu0 0
    %3942 = vmatprep.subr.bf16.mxu0 0
    %3943 = vmatpush1.bf16.msra.mxu0 0
    %3944 = vmatprep.subr.bf16.mxu0 0
    %3945 = vmatpush1.bf16.msra.mxu0 0
    %3946 = vmatprep.subr.bf16.mxu0 0
    %3947 = vmatpush1.bf16.msra.mxu0 0
    %3948 = vmatprep.subr.bf16.mxu0 0
    %3949 = vmatpush1.bf16.msra.mxu0 0
    %3950 = vmatprep.subr.bf16.mxu0 0
    %3951 = vmatpush1.bf16.msra.mxu0 0
    %3952 = vmatprep.subr.bf16.mxu0 0
    %3953 = vmatpush1.bf16.msra.mxu0 0
    %3954 = vmatprep.mubr.bf16.mxu0 0
    %3955 = vmatmul.mubr.bf16.gmra.mrb[0].mxu0 %v3204
    %v3956 = vpop.f32.mrb[0].mxu0
    %v3957 = vadd.f32 0.0, %v3956
    %v3958 = vpop.f32.mrb[0].mxu0
    %v3959 = vadd.f32 0.0, %v3958
    %v3960 = vpop.f32.mrb[0].mxu0
    %v3961 = vpop.f32.mrb[0].mxu0
    %3962 = vdwg.mxu0
    %3963 = vmatprep.subr.bf16.mxu0 %v3790
    %3964 = vmatpush1.bf16.msra.mxu0 %v3789
    %3965 = vmatprep.subr.bf16.mxu0 %v3802
    %3966 = vmatpush1.bf16.msra.mxu0 %v3801
    %3967 = vmatprep.subr.bf16.mxu0 %v3861
    %3968 = vmatpush1.bf16.msra.mxu0 %v3858
    %3969 = vmatprep.subr.bf16.mxu0 0
    %3970 = vmatpush1.bf16.msra.mxu0 0
    %3971 = vmatprep.subr.bf16.mxu0 0
    %3972 = vmatpush1.bf16.msra.mxu0 0
    %3973 = vmatprep.subr.bf16.mxu0 0
    %3974 = vmatpush1.bf16.msra.mxu0 0
    %3975 = vmatprep.subr.bf16.mxu0 0
    %3976 = vmatpush1.bf16.msra.mxu0 0
    %3977 = vmatprep.subr.bf16.mxu0 0
    %3978 = vmatpush1.bf16.msra.mxu0 0
    %3979 = vmatprep.subr.bf16.mxu0 0
    %3980 = vmatpush1.bf16.msra.mxu0 0
    %3981 = vmatprep.subr.bf16.mxu0 0
    %3982 = vmatpush1.bf16.msra.mxu0 0
    %3983 = vmatprep.subr.bf16.mxu0 0
    %3984 = vmatpush1.bf16.msra.mxu0 0
    %3985 = vmatprep.subr.bf16.mxu0 0
    %3986 = vmatpush1.bf16.msra.mxu0 0
    %3987 = vmatprep.subr.bf16.mxu0 0
    %3988 = vmatpush1.bf16.msra.mxu0 0
    %3989 = vmatprep.subr.bf16.mxu0 0
    %3990 = vmatpush1.bf16.msra.mxu0 0
    %3991 = vmatprep.subr.bf16.mxu0 0
    %3992 = vmatpush1.bf16.msra.mxu0 0
    %3993 = vmatprep.subr.bf16.mxu0 0
    %3994 = vmatpush1.bf16.msra.mxu0 0
    %3995 = vmatprep.mubr.bf16.mxu0 0
    %3996 = vmatmul.mubr.bf16.gmra.mrb[0].mxu0 %v3204
    %v3997 = vpop.f32.mrb[0].mxu0
    %v3998 = vadd.f32 0.0, %v3997
    %v3999 = vpop.f32.mrb[0].mxu0
    %v4000 = vadd.f32 0.0, %v3999
    %v4001 = vpop.f32.mrb[0].mxu0
    %v4002 = vpop.f32.mrb[0].mxu0
    %4003 = vdwg.mxu0
    %4004 = vmatprep.subr.bf16.mxu0 %v3792
    %4005 = vmatpush1.bf16.msra.mxu0 %v3791
    %4006 = vmatprep.subr.bf16.mxu0 %v3804
    %4007 = vmatpush1.bf16.msra.mxu0 %v3803
    %4008 = vmatprep.subr.bf16.mxu0 %v3867
    %4009 = vmatpush1.bf16.msra.mxu0 %v3864
    %4010 = vmatprep.subr.bf16.mxu0 0
    %4011 = vmatpush1.bf16.msra.mxu0 0
    %4012 = vmatprep.subr.bf16.mxu0 0
    %4013 = vmatpush1.bf16.msra.mxu0 0
    %4014 = vmatprep.subr.bf16.mxu0 0
    %4015 = vmatpush1.bf16.msra.mxu0 0
    %4016 = vmatprep.subr.bf16.mxu0 0
    %4017 = vmatpush1.bf16.msra.mxu0 0
    %4018 = vmatprep.subr.bf16.mxu0 0
    %4019 = vmatpush1.bf16.msra.mxu0 0
    %4020 = vmatprep.subr.bf16.mxu0 0
    %4021 = vmatpush1.bf16.msra.mxu0 0
    %4022 = vmatprep.subr.bf16.mxu0 0
    %4023 = vmatpush1.bf16.msra.mxu0 0
    %4024 = vmatprep.subr.bf16.mxu0 0
    %4025 = vmatpush1.bf16.msra.mxu0 0
    %4026 = vmatprep.subr.bf16.mxu0 0
    %4027 = vmatpush1.bf16.msra.mxu0 0
    %4028 = vmatprep.subr.bf16.mxu0 0
    %4029 = vmatpush1.bf16.msra.mxu0 0
    %4030 = vmatprep.subr.bf16.mxu0 0
    %4031 = vmatpush1.bf16.msra.mxu0 0
    %4032 = vmatprep.subr.bf16.mxu0 0
    %4033 = vmatpush1.bf16.msra.mxu0 0
    %4034 = vmatprep.subr.bf16.mxu0 0
    %4035 = vmatpush1.bf16.msra.mxu0 0
    %4036 = vmatprep.mubr.bf16.mxu0 0
    %4037 = vmatmul.mubr.bf16.gmra.mrb[0].mxu0 %v3204
    %v4038 = vpop.f32.mrb[0].mxu0
    %v4039 = vadd.f32 0.0, %v4038
    %v4040 = vpop.f32.mrb[0].mxu0
    %v4041 = vadd.f32 0.0, %v4040
    %v4042 = vpop.f32.mrb[0].mxu0
    %v4043 = vpop.f32.mrb[0].mxu0
    %4044 = vdwg.mxu0
    %4045 = vmatprep.subr.bf16.mxu0 %v3794
    %4046 = vmatpush1.bf16.msra.mxu0 %v3793
    %4047 = vmatprep.subr.bf16.mxu0 %v3806
    %4048 = vmatpush1.bf16.msra.mxu0 %v3805
    %4049 = vmatprep.subr.bf16.mxu0 %v3873
    %4050 = vmatpush1.bf16.msra.mxu0 %v3870
    %4051 = vmatprep.subr.bf16.mxu0 0
    %4052 = vmatpush1.bf16.msra.mxu0 0
    %4053 = vmatprep.subr.bf16.mxu0 0
    %4054 = vmatpush1.bf16.msra.mxu0 0
    %4055 = vmatprep.subr.bf16.mxu0 0
    %4056 = vmatpush1.bf16.msra.mxu0 0
    %4057 = vmatprep.subr.bf16.mxu0 0
    %4058 = vmatpush1.bf16.msra.mxu0 0
    %4059 = vmatprep.subr.bf16.mxu0 0
    %4060 = vmatpush1.bf16.msra.mxu0 0
    %4061 = vmatprep.subr.bf16.mxu0 0
    %4062 = vmatpush1.bf16.msra.mxu0 0
    %4063 = vmatprep.subr.bf16.mxu0 0
    %4064 = vmatpush1.bf16.msra.mxu0 0
    %4065 = vmatprep.subr.bf16.mxu0 0
    %4066 = vmatpush1.bf16.msra.mxu0 0
    %4067 = vmatprep.subr.bf16.mxu0 0
    %4068 = vmatpush1.bf16.msra.mxu0 0
    %4069 = vmatprep.subr.bf16.mxu0 0
    %4070 = vmatpush1.bf16.msra.mxu0 0
    %4071 = vmatprep.subr.bf16.mxu0 0
    %4072 = vmatpush1.bf16.msra.mxu0 0
    %4073 = vmatprep.subr.bf16.mxu0 0
    %4074 = vmatpush1.bf16.msra.mxu0 0
    %4075 = vmatprep.subr.bf16.mxu0 0
    %4076 = vmatpush1.bf16.msra.mxu0 0
    %4077 = vmatprep.mubr.bf16.mxu0 0
    %4078 = vmatmul.mubr.bf16.gmra.mrb[0].mxu0 %v3204
    %v4079 = vpop.f32.mrb[0].mxu0
    %v4080 = vadd.f32 0.0, %v4079
    %v4081 = vpop.f32.mrb[0].mxu0
    %v4082 = vadd.f32 0.0, %v4081
    %v4083 = vpop.f32.mrb[0].mxu0
    %v4084 = vpop.f32.mrb[0].mxu0
    %4085 = vdwg.mxu0
    %4086 = vmatprep.subr.bf16.mxu0 %v3796
    %4087 = vmatpush1.bf16.msra.mxu0 %v3795
    %4088 = vmatprep.subr.bf16.mxu0 %v3808
    %4089 = vmatpush1.bf16.msra.mxu0 %v3807
    %4090 = vmatprep.subr.bf16.mxu0 %v3879
    %4091 = vmatpush1.bf16.msra.mxu0 %v3876
    %4092 = vmatprep.subr.bf16.mxu0 0
    %4093 = vmatpush1.bf16.msra.mxu0 0
    %4094 = vmatprep.subr.bf16.mxu0 0
    %4095 = vmatpush1.bf16.msra.mxu0 0
    %4096 = vmatprep.subr.bf16.mxu0 0
    %4097 = vmatpush1.bf16.msra.mxu0 0
    %4098 = vmatprep.subr.bf16.mxu0 0
    %4099 = vmatpush1.bf16.msra.mxu0 0
    %4100 = vmatprep.subr.bf16.mxu0 0
    %4101 = vmatpush1.bf16.msra.mxu0 0
    %4102 = vmatprep.subr.bf16.mxu0 0
    %4103 = vmatpush1.bf16.msra.mxu0 0
    %4104 = vmatprep.subr.bf16.mxu0 0
    %4105 = vmatpush1.bf16.msra.mxu0 0
    %4106 = vmatprep.subr.bf16.mxu0 0
    %4107 = vmatpush1.bf16.msra.mxu0 0
    %4108 = vmatprep.subr.bf16.mxu0 0
    %4109 = vmatpush1.bf16.msra.mxu0 0
    %4110 = vmatprep.subr.bf16.mxu0 0
    %4111 = vmatpush1.bf16.msra.mxu0 0
    %4112 = vmatprep.subr.bf16.mxu0 0
    %4113 = vmatpush1.bf16.msra.mxu0 0
    %4114 = vmatprep.subr.bf16.mxu0 0
    %4115 = vmatpush1.bf16.msra.mxu0 0
    %4116 = vmatprep.subr.bf16.mxu0 0
    %4117 = vmatpush1.bf16.msra.mxu0 0
    %4118 = vmatprep.mubr.bf16.mxu0 0
    %4119 = vmatmul.mubr.bf16.gmra.mrb[0].mxu0 %v3204
    %v4120 = vpop.f32.mrb[0].mxu0
    %v4121 = vadd.f32 0.0, %v4120
    %v4122 = vpop.f32.mrb[0].mxu0
    %v4123 = vadd.f32 0.0, %v4122
    %v4124 = vpop.f32.mrb[0].mxu0
    %v4125 = vpop.f32.mrb[0].mxu0
    %4126 = vdwg.mxu0
    %v4127 = vpack.c.bf16 %v3916, %v3916
    %v4128 = vpack.c.bf16 %v3918, %v3918
    %v4129 = vpack.c.bf16 %v3957, %v3957
    %v4130 = vpack.c.bf16 %v3959, %v3959
    %v4131 = vpack.c.bf16 %v3998, %v3998
    %v4132 = vpack.c.bf16 %v4000, %v4000
    %v4133 = vpack.c.bf16 %v4039, %v4039
    %v4134 = vpack.c.bf16 %v4041, %v4041
    %v4135 = vpack.c.bf16 %v4080, %v4080
    %v4136 = vpack.c.bf16 %v4082, %v4082
    %v4137 = vpack.c.bf16 %v4121, %v4121
    %v4138 = vpack.c.bf16 %v4123, %v4123
    %s4139 = scalar_lea.vmem %s3, 80
    %v4140 = vld [vmem:[%s4139] sm:$0xff]
    %v4141 = vld [vmem:[%s4139 + $0x8] sm:$0xff]
    %v4142 = vld [vmem:[%s4139 + $0x10] sm:$0xff]
    %v4143 = vld [vmem:[%s4139 + $0x18] sm:$0xff]
    %v4144 = vld [vmem:[%s4139 + $0x20] sm:$0xff]
    %v4145 = vld [vmem:[%s4139 + $0x28] sm:$0xff]
    %v4146 = vld [vmem:[%s4139 + $0x30] sm:$0xff]
    %v4147 = vld [vmem:[%s4139 + $0x38] sm:$0xff]
    %v4148 = vld [vmem:[%s4139 + $0x40] sm:$0x33]
    %v4149 = vld [vmem:[%s4139 + $0x48] sm:$0x33]
    %v4160 = vunpack.c.l.b16 %v4140
    %v4161 = vunpack.c.h.b16 %v4140
    %v4162 = vunpack.c.l.b16 %v4141
    %v4163 = vunpack.c.h.b16 %v4141
    %v4164 = vunpack.c.l.b16 %v4142
    %v4165 = vunpack.c.h.b16 %v4142
    %v4166 = vunpack.c.l.b16 %v4143
    %v4167 = vunpack.c.h.b16 %v4143
    %v4168 = vunpack.c.l.b16 %v4144
    %v4169 = vunpack.c.h.b16 %v4144
    %v4170 = vunpack.c.l.b16 %v4145
    %v4171 = vunpack.c.h.b16 %v4145
    %v4172 = vunpack.c.l.b16 %v4146
    %v4173 = vunpack.c.h.b16 %v4146
    %v4174 = vunpack.c.l.b16 %v4147
    %v4175 = vunpack.c.h.b16 %v4147
    %v4176 = vunpack.c.l.b16 %v4148
    %v4177 = vunpack.c.h.b16 %v4148
    %v4178 = vunpack.c.l.b16 %v4149
    %v4179 = vunpack.c.h.b16 %v4149
    %v4180 = vpack.c.b16 %v4164, %v4160
    %v4181 = vpack.c.b16 %v4165, %v4161
    %v4182 = vpack.c.b16 %v4166, %v4162
    %v4183 = vpack.c.b16 %v4167, %v4163
    %v4184 = vpack.c.b16 %v4172, %v4168
    %v4185 = vpack.c.b16 %v4173, %v4169
    %v4186 = vpack.c.b16 %v4174, %v4170
    %v4187 = vpack.c.b16 %v4175, %v4171
    %v4188 = vpack.c.b16 %v4176, %v4176
    %v4189 = vpack.c.b16 %v4177, %v4177
    %v4190 = vpack.c.b16 %v4178, %v4178
    %v4191 = vpack.c.b16 %v4179, %v4179
    %v4201 = vsel %vm3565, %v4188, 0
    %v4204 = vsel %vm3565, %v4189, 0
    %v4207 = vsel %vm3565, %v4190, 0
    %v4210 = vsel %vm3565, %v4191, 0
    %4212 = vmatprep.subr.bf16.mxu0 %v4181
    %4213 = vmatpush1.bf16.msra.mxu0 %v4180
    %4214 = vmatprep.subr.bf16.mxu0 %v4185
    %4215 = vmatpush1.bf16.msra.mxu0 %v4184
    %4216 = vmatprep.subr.bf16.mxu0 %v4204
    %4217 = vmatpush1.bf16.msra.mxu0 %v4201
    %4218 = vmatprep.subr.bf16.mxu0 0
    %4219 = vmatpush1.bf16.msra.mxu0 0
    %4220 = vmatprep.subr.bf16.mxu0 0
    %4221 = vmatpush1.bf16.msra.mxu0 0
    %4222 = vmatprep.subr.bf16.mxu0 0
    %4223 = vmatpush1.bf16.msra.mxu0 0
    %4224 = vmatprep.subr.bf16.mxu0 0
    %4225 = vmatpush1.bf16.msra.mxu0 0
    %4226 = vmatprep.subr.bf16.mxu0 0
    %4227 = vmatpush1.bf16.msra.mxu0 0
    %4228 = vmatprep.subr.bf16.mxu0 0
    %4229 = vmatpush1.bf16.msra.mxu0 0
    %4230 = vmatprep.subr.bf16.mxu0 0
    %4231 = vmatpush1.bf16.msra.mxu0 0
    %4232 = vmatprep.subr.bf16.mxu0 0
    %4233 = vmatpush1.bf16.msra.mxu0 0
    %4234 = vmatprep.subr.bf16.mxu0 0
    %4235 = vmatpush1.bf16.msra.mxu0 0
    %4236 = vmatprep.subr.bf16.mxu0 0
    %4237 = vmatpush1.bf16.msra.mxu0 0
    %4238 = vmatprep.subr.bf16.mxu0 0
    %4239 = vmatpush1.bf16.msra.mxu0 0
    %4240 = vmatprep.subr.bf16.mxu0 0
    %4241 = vmatpush1.bf16.msra.mxu0 0
    %4242 = vmatprep.subr.bf16.mxu0 0
    %4243 = vmatpush1.bf16.msra.mxu0 0
    %4244 = vmatprep.mubr.bf16.mxu0 0
    %4245 = vmatmul.mubr.bf16.gmra.mrb[0].mxu0 %v3563
    %v4246 = vpop.f32.mrb[0].mxu0
    %v4247 = vadd.f32 0.0, %v4246
    %v4248 = vpop.f32.mrb[0].mxu0
    %v4249 = vadd.f32 0.0, %v4248
    %v4250 = vpop.f32.mrb[0].mxu0
    %v4251 = vpop.f32.mrb[0].mxu0
    %4252 = vdwg.mxu0
    %4253 = vmatprep.subr.bf16.mxu0 %v4183
    %4254 = vmatpush1.bf16.msra.mxu0 %v4182
    %4255 = vmatprep.subr.bf16.mxu0 %v4187
    %4256 = vmatpush1.bf16.msra.mxu0 %v4186
    %4257 = vmatprep.subr.bf16.mxu0 %v4210
    %4258 = vmatpush1.bf16.msra.mxu0 %v4207
    %4259 = vmatprep.subr.bf16.mxu0 0
    %4260 = vmatpush1.bf16.msra.mxu0 0
    %4261 = vmatprep.subr.bf16.mxu0 0
    %4262 = vmatpush1.bf16.msra.mxu0 0
    %4263 = vmatprep.subr.bf16.mxu0 0
    %4264 = vmatpush1.bf16.msra.mxu0 0
    %4265 = vmatprep.subr.bf16.mxu0 0
    %4266 = vmatpush1.bf16.msra.mxu0 0
    %4267 = vmatprep.subr.bf16.mxu0 0
    %4268 = vmatpush1.bf16.msra.mxu0 0
    %4269 = vmatprep.subr.bf16.mxu0 0
    %4270 = vmatpush1.bf16.msra.mxu0 0
    %4271 = vmatprep.subr.bf16.mxu0 0
    %4272 = vmatpush1.bf16.msra.mxu0 0
    %4273 = vmatprep.subr.bf16.mxu0 0
    %4274 = vmatpush1.bf16.msra.mxu0 0
    %4275 = vmatprep.subr.bf16.mxu0 0
    %4276 = vmatpush1.bf16.msra.mxu0 0
    %4277 = vmatprep.subr.bf16.mxu0 0
    %4278 = vmatpush1.bf16.msra.mxu0 0
    %4279 = vmatprep.subr.bf16.mxu0 0
    %4280 = vmatpush1.bf16.msra.mxu0 0
    %4281 = vmatprep.subr.bf16.mxu0 0
    %4282 = vmatpush1.bf16.msra.mxu0 0
    %4283 = vmatprep.subr.bf16.mxu0 0
    %4284 = vmatpush1.bf16.msra.mxu0 0
    %4285 = vmatprep.mubr.bf16.mxu0 0
    %4286 = vmatmul.mubr.bf16.gmra.mrb[0].mxu0 %v3563
    %v4287 = vpop.f32.mrb[0].mxu0
    %v4288 = vadd.f32 0.0, %v4287
    %v4289 = vpop.f32.mrb[0].mxu0
    %v4290 = vadd.f32 0.0, %v4289
    %v4291 = vpop.f32.mrb[0].mxu0
    %v4292 = vpop.f32.mrb[0].mxu0
    %4293 = vdwg.mxu0
    %v4294 = vpack.c.bf16 %v4247, %v4247
    %v4295 = vpack.c.bf16 %v4249, %v4249
    %v4296 = vpack.c.bf16 %v4288, %v4288
    %v4297 = vpack.c.bf16 %v4290, %v4290
    %v4310 = vrot.slane %v4127, 5
    %v4311 = vrot.slane %v4128, 5
    %v4312 = vrot.slane %v4129, 5
    %v4313 = vrot.slane %v4130, 5
    %v4314 = vrot.slane %v4131, 5
    %v4315 = vrot.slane %v4132, 5
    %v4316 = vrot.slane %v4133, 5
    %v4317 = vrot.slane %v4134, 5
    %v4318 = vrot.slane %v4135, 5
    %v4319 = vrot.slane %v4136, 5
    %v4320 = vrot.slane %v4137, 5
    %v4321 = vrot.slane %v4138, 5
    %vm4322 = vcmask 1042432
    %v4325 = vsel %vm4322, %v3489, %v4310
    %v4329 = vsel %vm4322, %v3490, %v4311
    %v4333 = vsel %vm4322, %v3491, %v4312
    %v4337 = vsel %vm4322, %v3492, %v4313
    %v4341 = vsel %vm4322, %v3493, %v4314
    %v4345 = vsel %vm4322, %v3494, %v4315
    %v4349 = vsel %vm4322, %v3495, %v4316
    %v4353 = vsel %vm4322, %v3496, %v4317
    %v4357 = vsel %vm4322, %v3497, %v4318
    %v4361 = vsel %vm4322, %v3498, %v4319
    %v4365 = vsel %vm4322, %v3499, %v4320
    %v4369 = vsel %vm4322, %v3500, %v4321
    %v4375 = vrot.slane %v4294, 5
    %v4376 = vrot.slane %v4295, 5
    %v4377 = vrot.slane %v4296, 5
    %v4378 = vrot.slane %v4297, 5
    %v4381 = vsel %vm4322, %v3660, %v4375
    %v4385 = vsel %vm4322, %v3661, %v4376
    %v4389 = vsel %vm4322, %v3662, %v4377
    %v4393 = vsel %vm4322, %v3663, %v4378
    %v4395 = vld [vmem:[%s10] sm:$0xff]
    %v4396 = vld [vmem:[%s10 + $0x8] sm:$0xff]
    %v4397 = vld [vmem:[%s10 + $0x10] sm:$0xff]
    %v4398 = vld [vmem:[%s10 + $0x18] sm:$0xff]
    %v4399 = vld [vmem:[%s10 + $0x20] sm:$0xff]
    %v4400 = vld [vmem:[%s10 + $0x28] sm:$0xff]
    %v4401 = vld [vmem:[%s10 + $0x30] sm:$0xff]
    %v4402 = vld [vmem:[%s10 + $0x38] sm:$0xff]
    %v4403 = vld [vmem:[%s10 + $0x40] sm:$0xff]
    %v4404 = vld [vmem:[%s10 + $0x48] sm:$0xff]
    %v4405 = vld [vmem:[%s10 + $0x50] sm:$0xff]
    %v4406 = vld [vmem:[%s10 + $0x58] sm:$0xff]
    %v4407 = vld [vmem:[%s10 + $0x60] sm:$0xff]
    %v4408 = vld [vmem:[%s10 + $0x68] sm:$0xff]
    %v4409 = vld [vmem:[%s10 + $0x70] sm:$0xff]
    %v4410 = vld [vmem:[%s10 + $0x78] sm:$0xff]
    %v4411 = vld [vmem:[%s10 + $0x80] sm:$0xff]
    %v4412 = vld [vmem:[%s10 + $0x88] sm:$0xff]
    %v4413 = vld [vmem:[%s10 + $0x90] sm:$0xff]
    %v4414 = vld [vmem:[%s10 + $0x98] sm:$0xff]
    %v4415 = vld [vmem:[%s10 + $0xa0] sm:$0xff]
    %v4416 = vld [vmem:[%s10 + $0xa8] sm:$0xff]
    %v4417 = vld [vmem:[%s10 + $0xb0] sm:$0xff]
    %v4418 = vld [vmem:[%s10 + $0xb8] sm:$0xff]
    %v4419 = vld [vmem:[%s10 + $0xc0] sm:$0xff]
    %v4420 = vld [vmem:[%s10 + $0xc8] sm:$0xff]
    %v4421 = vld [vmem:[%s10 + $0xd0] sm:$0xff]
    %v4422 = vld [vmem:[%s10 + $0xd8] sm:$0xff]
    %v4423 = vld [vmem:[%s10 + $0xe0] sm:$0xff]
    %v4424 = vld [vmem:[%s10 + $0xe8] sm:$0xff]
    %v4425 = vld [vmem:[%s10 + $0xf0] sm:$0xff]
    %v4426 = vld [vmem:[%s10 + $0xf8] sm:$0xff]
    %v4427 = vld [vmem:[%s10 + $0x100] sm:$0xff]
    %v4428 = vld [vmem:[%s10 + $0x108] sm:$0xff]
    %v4429 = vld [vmem:[%s10 + $0x110] sm:$0xff]
    %v4430 = vld [vmem:[%s10 + $0x118] sm:$0xff]
    %v4431 = vld [vmem:[%s10 + $0x120] sm:$0xff]
    %v4432 = vld [vmem:[%s10 + $0x128] sm:$0xff]
    %v4433 = vld [vmem:[%s10 + $0x130] sm:$0xff]
    %v4434 = vld [vmem:[%s10 + $0x138] sm:$0xff]
    %v4435 = vld [vmem:[%s10 + $0x140] sm:$0xff]
    %v4436 = vld [vmem:[%s10 + $0x148] sm:$0xff]
    %v4437 = vld [vmem:[%s10 + $0x150] sm:$0xff]
    %v4438 = vld [vmem:[%s10 + $0x158] sm:$0xff]
    %v4439 = vld [vmem:[%s10 + $0x160] sm:$0xff]
    %v4440 = vld [vmem:[%s10 + $0x168] sm:$0xff]
    %v4441 = vld [vmem:[%s10 + $0x170] sm:$0xff]
    %v4442 = vld [vmem:[%s10 + $0x178] sm:$0xff]
    %v4443 = vld [vmem:[%s10 + $0x180] sm:$0xff]
    %v4444 = vld [vmem:[%s10 + $0x188] sm:$0xff]
    %v4445 = vld [vmem:[%s10 + $0x190] sm:$0xff]
    %v4446 = vld [vmem:[%s10 + $0x198] sm:$0xff]
    %v4447 = vld [vmem:[%s10 + $0x1a0] sm:$0xff]
    %v4448 = vld [vmem:[%s10 + $0x1a8] sm:$0xff]
    %v4449 = vld [vmem:[%s10 + $0x1b0] sm:$0xff]
    %v4450 = vld [vmem:[%s10 + $0x1b8] sm:$0xff]
    %v4451 = vld [vmem:[%s10 + $0x1c0] sm:$0xff]
    %v4452 = vld [vmem:[%s10 + $0x1c8] sm:$0xff]
    %v4453 = vld [vmem:[%s10 + $0x1d0] sm:$0xff]
    %v4454 = vld [vmem:[%s10 + $0x1d8] sm:$0xff]
    %v4455 = vld [vmem:[%s10 + $0x1e0] sm:$0xff]
    %v4456 = vld [vmem:[%s10 + $0x1e8] sm:$0xff]
    %v4457 = vld [vmem:[%s10 + $0x1f0] sm:$0xff]
    %v4458 = vld [vmem:[%s10 + $0x1f8] sm:$0xff]
    %v4459 = vld [vmem:[%s10 + $0x200] sm:$0xff]
    %v4460 = vld [vmem:[%s10 + $0x208] sm:$0xff]
    %v4461 = vld [vmem:[%s10 + $0x210] sm:$0xff]
    %v4462 = vld [vmem:[%s10 + $0x218] sm:$0xff]
    %v4463 = vld [vmem:[%s10 + $0x220] sm:$0xff]
    %v4464 = vld [vmem:[%s10 + $0x228] sm:$0xff]
    %v4465 = vld [vmem:[%s10 + $0x230] sm:$0xff]
    %v4466 = vld [vmem:[%s10 + $0x238] sm:$0xff]
    %v4467 = vld [vmem:[%s10 + $0x240] sm:$0xff]
    %v4468 = vld [vmem:[%s10 + $0x248] sm:$0xff]
    %v4469 = vld [vmem:[%s10 + $0x250] sm:$0xff]
    %v4470 = vld [vmem:[%s10 + $0x258] sm:$0xff]
    %v4471 = vld [vmem:[%s10 + $0x260] sm:$0xff]
    %v4472 = vld [vmem:[%s10 + $0x268] sm:$0xff]
    %v4473 = vld [vmem:[%s10 + $0x270] sm:$0xff]
    %v4474 = vld [vmem:[%s10 + $0x278] sm:$0xff]
    %v4475 = vld [vmem:[%s10 + $0x280] sm:$0xff]
    %v4476 = vld [vmem:[%s10 + $0x288] sm:$0xff]
    %v4477 = vld [vmem:[%s10 + $0x290] sm:$0xff]
    %v4478 = vld [vmem:[%s10 + $0x298] sm:$0xff]
    %v4479 = vld [vmem:[%s10 + $0x2a0] sm:$0xff]
    %v4480 = vld [vmem:[%s10 + $0x2a8] sm:$0xff]
    %v4481 = vld [vmem:[%s10 + $0x2b0] sm:$0xff]
    %v4482 = vld [vmem:[%s10 + $0x2b8] sm:$0xff]
    %v4483 = vld [vmem:[%s10 + $0x2c0] sm:$0xff]
    %v4484 = vld [vmem:[%s10 + $0x2c8] sm:$0xff]
    %v4485 = vld [vmem:[%s10 + $0x2d0] sm:$0xff]
    %v4486 = vld [vmem:[%s10 + $0x2d8] sm:$0xff]
    %v4487 = vld [vmem:[%s10 + $0x2e0] sm:$0xff]
    %v4488 = vld [vmem:[%s10 + $0x2e8] sm:$0xff]
    %v4489 = vld [vmem:[%s10 + $0x2f0] sm:$0xff]
    %v4490 = vld [vmem:[%s10 + $0x2f8] sm:$0xff]
    %v4491 = vld [vmem:[%s10 + $0x300] sm:$0xff]
    %v4492 = vld [vmem:[%s10 + $0x308] sm:$0xff]
    %v4493 = vld [vmem:[%s10 + $0x310] sm:$0xff]
    %v4494 = vld [vmem:[%s10 + $0x318] sm:$0xff]
    %v4495 = vld [vmem:[%s10 + $0x320] sm:$0xff]
    %v4496 = vld [vmem:[%s10 + $0x328] sm:$0xff]
    %v4497 = vld [vmem:[%s10 + $0x330] sm:$0xff]
    %v4498 = vld [vmem:[%s10 + $0x338] sm:$0xff]
    %v4499 = vld [vmem:[%s10 + $0x340] sm:$0xff]
    %v4500 = vld [vmem:[%s10 + $0x348] sm:$0xff]
    %v4501 = vld [vmem:[%s10 + $0x350] sm:$0xff]
    %v4502 = vld [vmem:[%s10 + $0x358] sm:$0xff]
    %v4503 = vld [vmem:[%s10 + $0x360] sm:$0xff]
    %v4504 = vld [vmem:[%s10 + $0x368] sm:$0xff]
    %v4505 = vld [vmem:[%s10 + $0x370] sm:$0xff]
    %v4506 = vld [vmem:[%s10 + $0x378] sm:$0xff]
    %v4507 = vld [vmem:[%s10 + $0x380] sm:$0xff]
    %v4508 = vld [vmem:[%s10 + $0x388] sm:$0xff]
    %v4509 = vld [vmem:[%s10 + $0x390] sm:$0xff]
    %v4510 = vld [vmem:[%s10 + $0x398] sm:$0xff]
    %v4511 = vld [vmem:[%s10 + $0x3a0] sm:$0xff]
    %v4512 = vld [vmem:[%s10 + $0x3a8] sm:$0xff]
    %v4513 = vld [vmem:[%s10 + $0x3b0] sm:$0xff]
    %v4514 = vld [vmem:[%s10 + $0x3b8] sm:$0xff]
    %v4515 = vld [vmem:[%s10 + $0x3c0] sm:$0xff]
    %v4516 = vld [vmem:[%s10 + $0x3c8] sm:$0xff]
    %v4517 = vld [vmem:[%s10 + $0x3d0] sm:$0xff]
    %v4518 = vld [vmem:[%s10 + $0x3d8] sm:$0xff]
    %v4519 = vld [vmem:[%s10 + $0x3e0] sm:$0xff]
    %v4520 = vld [vmem:[%s10 + $0x3e8] sm:$0xff]
    %v4521 = vld [vmem:[%s10 + $0x3f0] sm:$0xff]
    %v4522 = vld [vmem:[%s10 + $0x3f8] sm:$0xff]
    %v4523 = vld [vmem:[%s10 + $0x400] sm:$0xff]
    %v4524 = vld [vmem:[%s10 + $0x408] sm:$0xff]
    %v4525 = vld [vmem:[%s10 + $0x410] sm:$0xff]
    %v4526 = vld [vmem:[%s10 + $0x418] sm:$0xff]
    %v4527 = vld [vmem:[%s10 + $0x420] sm:$0xff]
    %v4528 = vld [vmem:[%s10 + $0x428] sm:$0xff]
    %v4529 = vld [vmem:[%s10 + $0x430] sm:$0xff]
    %v4530 = vld [vmem:[%s10 + $0x438] sm:$0xff]
    %v4531 = vld [vmem:[%s10 + $0x440] sm:$0xff]
    %v4532 = vld [vmem:[%s10 + $0x448] sm:$0xff]
    %v4533 = vld [vmem:[%s10 + $0x450] sm:$0xff]
    %v4534 = vld [vmem:[%s10 + $0x458] sm:$0xff]
    %v4535 = vld [vmem:[%s10 + $0x460] sm:$0xff]
    %v4536 = vld [vmem:[%s10 + $0x468] sm:$0xff]
    %v4537 = vld [vmem:[%s10 + $0x470] sm:$0xff]
    %v4538 = vld [vmem:[%s10 + $0x478] sm:$0xff]
    %v4539 = vld [vmem:[%s10 + $0x480] sm:$0xff]
    %v4540 = vld [vmem:[%s10 + $0x488] sm:$0xff]
    %v4541 = vld [vmem:[%s10 + $0x490] sm:$0xff]
    %v4542 = vld [vmem:[%s10 + $0x498] sm:$0xff]
    %v4543 = vld [vmem:[%s10 + $0x4a0] sm:$0xff]
    %v4544 = vld [vmem:[%s10 + $0x4a8] sm:$0xff]
    %v4545 = vld [vmem:[%s10 + $0x4b0] sm:$0xff]
    %v4546 = vld [vmem:[%s10 + $0x4b8] sm:$0xff]
    %v4547 = vld [vmem:[%s10 + $0x4c0] sm:$0xff]
    %v4548 = vld [vmem:[%s10 + $0x4c8] sm:$0xff]
    %v4549 = vld [vmem:[%s10 + $0x4d0] sm:$0xff]
    %v4550 = vld [vmem:[%s10 + $0x4d8] sm:$0xff]
    %v4551 = vld [vmem:[%s10 + $0x4e0] sm:$0xff]
    %v4552 = vld [vmem:[%s10 + $0x4e8] sm:$0xff]
    %v4553 = vld [vmem:[%s10 + $0x4f0] sm:$0xff]
    %v4554 = vld [vmem:[%s10 + $0x4f8] sm:$0xff]
    %v4555 = vld [vmem:[%s10 + $0x500] sm:$0xff]
    %v4556 = vld [vmem:[%s10 + $0x508] sm:$0xff]
    %v4557 = vld [vmem:[%s10 + $0x510] sm:$0xff]
    %v4558 = vld [vmem:[%s10 + $0x518] sm:$0xff]
    %v4559 = vld [vmem:[%s10 + $0x520] sm:$0xff]
    %v4560 = vld [vmem:[%s10 + $0x528] sm:$0xff]
    %v4561 = vld [vmem:[%s10 + $0x530] sm:$0xff]
    %v4562 = vld [vmem:[%s10 + $0x538] sm:$0xff]
    %v4563 = vld [vmem:[%s10 + $0x540] sm:$0xff]
    %v4564 = vld [vmem:[%s10 + $0x548] sm:$0xff]
    %v4565 = vld [vmem:[%s10 + $0x550] sm:$0xff]
    %v4566 = vld [vmem:[%s10 + $0x558] sm:$0xff]
    %v4567 = vld [vmem:[%s10 + $0x560] sm:$0xff]
    %v4568 = vld [vmem:[%s10 + $0x568] sm:$0xff]
    %v4569 = vld [vmem:[%s10 + $0x570] sm:$0xff]
    %v4570 = vld [vmem:[%s10 + $0x578] sm:$0xff]
    %v4571 = vld [vmem:[%s10 + $0x580] sm:$0xff]
    %v4572 = vld [vmem:[%s10 + $0x588] sm:$0xff]
    %v4573 = vld [vmem:[%s10 + $0x590] sm:$0xff]
    %v4574 = vld [vmem:[%s10 + $0x598] sm:$0xff]
    %v4575 = vld [vmem:[%s10 + $0x5a0] sm:$0xff]
    %v4576 = vld [vmem:[%s10 + $0x5a8] sm:$0xff]
    %v4577 = vld [vmem:[%s10 + $0x5b0] sm:$0xff]
    %v4578 = vld [vmem:[%s10 + $0x5b8] sm:$0xff]
    %v4579 = vld [vmem:[%s10 + $0x5c0] sm:$0xff]
    %v4580 = vld [vmem:[%s10 + $0x5c8] sm:$0xff]
    %v4581 = vld [vmem:[%s10 + $0x5d0] sm:$0xff]
    %v4582 = vld [vmem:[%s10 + $0x5d8] sm:$0xff]
    %v4583 = vld [vmem:[%s10 + $0x5e0] sm:$0xff]
    %v4584 = vld [vmem:[%s10 + $0x5e8] sm:$0xff]
    %v4585 = vld [vmem:[%s10 + $0x5f0] sm:$0xff]
    %v4586 = vld [vmem:[%s10 + $0x5f8] sm:$0xff]
    %v4587 = vld [vmem:[%s11] sm:$0xf]
    %v4589 = vlaneseq
    %v4590 = vshrl.u32 %v4589, 7
    %v4591 = vsub.s32 0, %v4590
    %v4592 = vrot.slane %v4587, %v4591
    %v4593 = vlaneseq
    %v4594 = vshrl.u32 %v4593, 7
    %v4595 = vsub.s32 1, %v4594
    %v4596 = vrot.slane %v4587, %v4595
    %v4597 = vlaneseq
    %v4598 = vshrl.u32 %v4597, 7
    %v4599 = vsub.s32 2, %v4598
    %v4600 = vrot.slane %v4587, %v4599
    %v4601 = vlaneseq
    %v4602 = vshrl.u32 %v4601, 7
    %v4603 = vsub.s32 3, %v4602
    %v4604 = vrot.slane %v4587, %v4603
    %v4801 = vunpack.c.l.b16 %v4395
    %v4802 = vunpack.c.h.b16 %v4395
    %v4803 = vunpack.c.l.b16 %v4396
    %v4804 = vunpack.c.h.b16 %v4396
    %v4805 = vunpack.c.l.b16 %v4397
    %v4806 = vunpack.c.h.b16 %v4397
    %v4807 = vunpack.c.l.b16 %v4398
    %v4808 = vunpack.c.h.b16 %v4398
    %v4809 = vunpack.c.l.b16 %v4399
    %v4810 = vunpack.c.h.b16 %v4399
    %v4811 = vunpack.c.l.b16 %v4400
    %v4812 = vunpack.c.h.b16 %v4400
    %v4813 = vunpack.c.l.b16 %v4401
    %v4814 = vunpack.c.h.b16 %v4401
    %v4815 = vunpack.c.l.b16 %v4402
    %v4816 = vunpack.c.h.b16 %v4402
    %v4817 = vunpack.c.l.b16 %v4403
    %v4818 = vunpack.c.h.b16 %v4403
    %v4819 = vunpack.c.l.b16 %v4404
    %v4820 = vunpack.c.h.b16 %v4404
    %v4821 = vunpack.c.l.b16 %v4405
    %v4822 = vunpack.c.h.b16 %v4405
    %v4823 = vunpack.c.l.b16 %v4406
    %v4824 = vunpack.c.h.b16 %v4406
    %v4825 = vunpack.c.l.b16 %v4407
    %v4826 = vunpack.c.h.b16 %v4407
    %v4827 = vunpack.c.l.b16 %v4408
    %v4828 = vunpack.c.h.b16 %v4408
    %v4829 = vunpack.c.l.b16 %v4409
    %v4830 = vunpack.c.h.b16 %v4409
    %v4831 = vunpack.c.l.b16 %v4410
    %v4832 = vunpack.c.h.b16 %v4410
    %v4833 = vunpack.c.l.b16 %v4411
    %v4834 = vunpack.c.h.b16 %v4411
    %v4835 = vunpack.c.l.b16 %v4412
    %v4836 = vunpack.c.h.b16 %v4412
    %v4837 = vunpack.c.l.b16 %v4413
    %v4838 = vunpack.c.h.b16 %v4413
    %v4839 = vunpack.c.l.b16 %v4414
    %v4840 = vunpack.c.h.b16 %v4414
    %v4841 = vunpack.c.l.b16 %v4415
    %v4842 = vunpack.c.h.b16 %v4415
    %v4843 = vunpack.c.l.b16 %v4416
    %v4844 = vunpack.c.h.b16 %v4416
    %v4845 = vunpack.c.l.b16 %v4417
    %v4846 = vunpack.c.h.b16 %v4417
    %v4847 = vunpack.c.l.b16 %v4418
    %v4848 = vunpack.c.h.b16 %v4418
    %v4849 = vunpack.c.l.b16 %v4419
    %v4850 = vunpack.c.h.b16 %v4419
    %v4851 = vunpack.c.l.b16 %v4420
    %v4852 = vunpack.c.h.b16 %v4420
    %v4853 = vunpack.c.l.b16 %v4421
    %v4854 = vunpack.c.h.b16 %v4421
    %v4855 = vunpack.c.l.b16 %v4422
    %v4856 = vunpack.c.h.b16 %v4422
    %v4857 = vunpack.c.l.b16 %v4423
    %v4858 = vunpack.c.h.b16 %v4423
    %v4859 = vunpack.c.l.b16 %v4424
    %v4860 = vunpack.c.h.b16 %v4424
    %v4861 = vunpack.c.l.b16 %v4425
    %v4862 = vunpack.c.h.b16 %v4425
    %v4863 = vunpack.c.l.b16 %v4426
    %v4864 = vunpack.c.h.b16 %v4426
    %v4865 = vunpack.c.l.b16 %v4427
    %v4866 = vunpack.c.h.b16 %v4427
    %v4867 = vunpack.c.l.b16 %v4428
    %v4868 = vunpack.c.h.b16 %v4428
    %v4869 = vunpack.c.l.b16 %v4429
    %v4870 = vunpack.c.h.b16 %v4429
    %v4871 = vunpack.c.l.b16 %v4430
    %v4872 = vunpack.c.h.b16 %v4430
    %v4873 = vunpack.c.l.b16 %v4431
    %v4874 = vunpack.c.h.b16 %v4431
    %v4875 = vunpack.c.l.b16 %v4432
    %v4876 = vunpack.c.h.b16 %v4432
    %v4877 = vunpack.c.l.b16 %v4433
    %v4878 = vunpack.c.h.b16 %v4433
    %v4879 = vunpack.c.l.b16 %v4434
    %v4880 = vunpack.c.h.b16 %v4434
    %v4881 = vunpack.c.l.b16 %v4435
    %v4882 = vunpack.c.h.b16 %v4435
    %v4883 = vunpack.c.l.b16 %v4436
    %v4884 = vunpack.c.h.b16 %v4436
    %v4885 = vunpack.c.l.b16 %v4437
    %v4886 = vunpack.c.h.b16 %v4437
    %v4887 = vunpack.c.l.b16 %v4438
    %v4888 = vunpack.c.h.b16 %v4438
    %v4889 = vunpack.c.l.b16 %v4439
    %v4890 = vunpack.c.h.b16 %v4439
    %v4891 = vunpack.c.l.b16 %v4440
    %v4892 = vunpack.c.h.b16 %v4440
    %v4893 = vunpack.c.l.b16 %v4441
    %v4894 = vunpack.c.h.b16 %v4441
    %v4895 = vunpack.c.l.b16 %v4442
    %v4896 = vunpack.c.h.b16 %v4442
    %v4897 = vunpack.c.l.b16 %v4443
    %v4898 = vunpack.c.h.b16 %v4443
    %v4899 = vunpack.c.l.b16 %v4444
    %v4900 = vunpack.c.h.b16 %v4444
    %v4901 = vunpack.c.l.b16 %v4445
    %v4902 = vunpack.c.h.b16 %v4445
    %v4903 = vunpack.c.l.b16 %v4446
    %v4904 = vunpack.c.h.b16 %v4446
    %v4905 = vunpack.c.l.b16 %v4447
    %v4906 = vunpack.c.h.b16 %v4447
    %v4907 = vunpack.c.l.b16 %v4448
    %v4908 = vunpack.c.h.b16 %v4448
    %v4909 = vunpack.c.l.b16 %v4449
    %v4910 = vunpack.c.h.b16 %v4449
    %v4911 = vunpack.c.l.b16 %v4450
    %v4912 = vunpack.c.h.b16 %v4450
    %v4913 = vunpack.c.l.b16 %v4451
    %v4914 = vunpack.c.h.b16 %v4451
    %v4915 = vunpack.c.l.b16 %v4452
    %v4916 = vunpack.c.h.b16 %v4452
    %v4917 = vunpack.c.l.b16 %v4453
    %v4918 = vunpack.c.h.b16 %v4453
    %v4919 = vunpack.c.l.b16 %v4454
    %v4920 = vunpack.c.h.b16 %v4454
    %v4921 = vunpack.c.l.b16 %v4455
    %v4922 = vunpack.c.h.b16 %v4455
    %v4923 = vunpack.c.l.b16 %v4456
    %v4924 = vunpack.c.h.b16 %v4456
    %v4925 = vunpack.c.l.b16 %v4457
    %v4926 = vunpack.c.h.b16 %v4457
    %v4927 = vunpack.c.l.b16 %v4458
    %v4928 = vunpack.c.h.b16 %v4458
    %v4929 = vunpack.c.l.b16 %v4459
    %v4930 = vunpack.c.h.b16 %v4459
    %v4931 = vunpack.c.l.b16 %v4460
    %v4932 = vunpack.c.h.b16 %v4460
    %v4933 = vunpack.c.l.b16 %v4461
    %v4934 = vunpack.c.h.b16 %v4461
    %v4935 = vunpack.c.l.b16 %v4462
    %v4936 = vunpack.c.h.b16 %v4462
    %v4937 = vunpack.c.l.b16 %v4463
    %v4938 = vunpack.c.h.b16 %v4463
    %v4939 = vunpack.c.l.b16 %v4464
    %v4940 = vunpack.c.h.b16 %v4464
    %v4941 = vunpack.c.l.b16 %v4465
    %v4942 = vunpack.c.h.b16 %v4465
    %v4943 = vunpack.c.l.b16 %v4466
    %v4944 = vunpack.c.h.b16 %v4466
    %v4945 = vunpack.c.l.b16 %v4467
    %v4946 = vunpack.c.h.b16 %v4467
    %v4947 = vunpack.c.l.b16 %v4468
    %v4948 = vunpack.c.h.b16 %v4468
    %v4949 = vunpack.c.l.b16 %v4469
    %v4950 = vunpack.c.h.b16 %v4469
    %v4951 = vunpack.c.l.b16 %v4470
    %v4952 = vunpack.c.h.b16 %v4470
    %v4953 = vunpack.c.l.b16 %v4471
    %v4954 = vunpack.c.h.b16 %v4471
    %v4955 = vunpack.c.l.b16 %v4472
    %v4956 = vunpack.c.h.b16 %v4472
    %v4957 = vunpack.c.l.b16 %v4473
    %v4958 = vunpack.c.h.b16 %v4473
    %v4959 = vunpack.c.l.b16 %v4474
    %v4960 = vunpack.c.h.b16 %v4474
    %v4961 = vunpack.c.l.b16 %v4475
    %v4962 = vunpack.c.h.b16 %v4475
    %v4963 = vunpack.c.l.b16 %v4476
    %v4964 = vunpack.c.h.b16 %v4476
    %v4965 = vunpack.c.l.b16 %v4477
    %v4966 = vunpack.c.h.b16 %v4477
    %v4967 = vunpack.c.l.b16 %v4478
    %v4968 = vunpack.c.h.b16 %v4478
    %v4969 = vunpack.c.l.b16 %v4479
    %v4970 = vunpack.c.h.b16 %v4479
    %v4971 = vunpack.c.l.b16 %v4480
    %v4972 = vunpack.c.h.b16 %v4480
    %v4973 = vunpack.c.l.b16 %v4481
    %v4974 = vunpack.c.h.b16 %v4481
    %v4975 = vunpack.c.l.b16 %v4482
    %v4976 = vunpack.c.h.b16 %v4482
    %v4977 = vunpack.c.l.b16 %v4483
    %v4978 = vunpack.c.h.b16 %v4483
    %v4979 = vunpack.c.l.b16 %v4484
    %v4980 = vunpack.c.h.b16 %v4484
    %v4981 = vunpack.c.l.b16 %v4485
    %v4982 = vunpack.c.h.b16 %v4485
    %v4983 = vunpack.c.l.b16 %v4486
    %v4984 = vunpack.c.h.b16 %v4486
    %v4985 = vunpack.c.l.b16 %v4487
    %v4986 = vunpack.c.h.b16 %v4487
    %v4987 = vunpack.c.l.b16 %v4488
    %v4988 = vunpack.c.h.b16 %v4488
    %v4989 = vunpack.c.l.b16 %v4489
    %v4990 = vunpack.c.h.b16 %v4489
    %v4991 = vunpack.c.l.b16 %v4490
    %v4992 = vunpack.c.h.b16 %v4490
    %v4993 = vunpack.c.l.b16 %v4491
    %v4994 = vunpack.c.h.b16 %v4491
    %v4995 = vunpack.c.l.b16 %v4492
    %v4996 = vunpack.c.h.b16 %v4492
    %v4997 = vunpack.c.l.b16 %v4493
    %v4998 = vunpack.c.h.b16 %v4493
    %v4999 = vunpack.c.l.b16 %v4494
    %v5000 = vunpack.c.h.b16 %v4494
    %v5001 = vunpack.c.l.b16 %v4495
    %v5002 = vunpack.c.h.b16 %v4495
    %v5003 = vunpack.c.l.b16 %v4496
    %v5004 = vunpack.c.h.b16 %v4496
    %v5005 = vunpack.c.l.b16 %v4497
    %v5006 = vunpack.c.h.b16 %v4497
    %v5007 = vunpack.c.l.b16 %v4498
    %v5008 = vunpack.c.h.b16 %v4498
    %v5009 = vunpack.c.l.b16 %v4499
    %v5010 = vunpack.c.h.b16 %v4499
    %v5011 = vunpack.c.l.b16 %v4500
    %v5012 = vunpack.c.h.b16 %v4500
    %v5013 = vunpack.c.l.b16 %v4501
    %v5014 = vunpack.c.h.b16 %v4501
    %v5015 = vunpack.c.l.b16 %v4502
    %v5016 = vunpack.c.h.b16 %v4502
    %v5017 = vunpack.c.l.b16 %v4503
    %v5018 = vunpack.c.h.b16 %v4503
    %v5019 = vunpack.c.l.b16 %v4504
    %v5020 = vunpack.c.h.b16 %v4504
    %v5021 = vunpack.c.l.b16 %v4505
    %v5022 = vunpack.c.h.b16 %v4505
    %v5023 = vunpack.c.l.b16 %v4506
    %v5024 = vunpack.c.h.b16 %v4506
    %v5025 = vunpack.c.l.b16 %v4507
    %v5026 = vunpack.c.h.b16 %v4507
    %v5027 = vunpack.c.l.b16 %v4508
    %v5028 = vunpack.c.h.b16 %v4508
    %v5029 = vunpack.c.l.b16 %v4509
    %v5030 = vunpack.c.h.b16 %v4509
    %v5031 = vunpack.c.l.b16 %v4510
    %v5032 = vunpack.c.h.b16 %v4510
    %v5033 = vunpack.c.l.b16 %v4511
    %v5034 = vunpack.c.h.b16 %v4511
    %v5035 = vunpack.c.l.b16 %v4512
    %v5036 = vunpack.c.h.b16 %v4512
    %v5037 = vunpack.c.l.b16 %v4513
    %v5038 = vunpack.c.h.b16 %v4513
    %v5039 = vunpack.c.l.b16 %v4514
    %v5040 = vunpack.c.h.b16 %v4514
    %v5041 = vunpack.c.l.b16 %v4515
    %v5042 = vunpack.c.h.b16 %v4515
    %v5043 = vunpack.c.l.b16 %v4516
    %v5044 = vunpack.c.h.b16 %v4516
    %v5045 = vunpack.c.l.b16 %v4517
    %v5046 = vunpack.c.h.b16 %v4517
    %v5047 = vunpack.c.l.b16 %v4518
    %v5048 = vunpack.c.h.b16 %v4518
    %v5049 = vunpack.c.l.b16 %v4519
    %v5050 = vunpack.c.h.b16 %v4519
    %v5051 = vunpack.c.l.b16 %v4520
    %v5052 = vunpack.c.h.b16 %v4520
    %v5053 = vunpack.c.l.b16 %v4521
    %v5054 = vunpack.c.h.b16 %v4521
    %v5055 = vunpack.c.l.b16 %v4522
    %v5056 = vunpack.c.h.b16 %v4522
    %v5057 = vunpack.c.l.b16 %v4523
    %v5058 = vunpack.c.h.b16 %v4523
    %v5059 = vunpack.c.l.b16 %v4524
    %v5060 = vunpack.c.h.b16 %v4524
    %v5061 = vunpack.c.l.b16 %v4525
    %v5062 = vunpack.c.h.b16 %v4525
    %v5063 = vunpack.c.l.b16 %v4526
    %v5064 = vunpack.c.h.b16 %v4526
    %v5065 = vunpack.c.l.b16 %v4527
    %v5066 = vunpack.c.h.b16 %v4527
    %v5067 = vunpack.c.l.b16 %v4528
    %v5068 = vunpack.c.h.b16 %v4528
    %v5069 = vunpack.c.l.b16 %v4529
    %v5070 = vunpack.c.h.b16 %v4529
    %v5071 = vunpack.c.l.b16 %v4530
    %v5072 = vunpack.c.h.b16 %v4530
    %v5073 = vunpack.c.l.b16 %v4531
    %v5074 = vunpack.c.h.b16 %v4531
    %v5075 = vunpack.c.l.b16 %v4532
    %v5076 = vunpack.c.h.b16 %v4532
    %v5077 = vunpack.c.l.b16 %v4533
    %v5078 = vunpack.c.h.b16 %v4533
    %v5079 = vunpack.c.l.b16 %v4534
    %v5080 = vunpack.c.h.b16 %v4534
    %v5081 = vunpack.c.l.b16 %v4535
    %v5082 = vunpack.c.h.b16 %v4535
    %v5083 = vunpack.c.l.b16 %v4536
    %v5084 = vunpack.c.h.b16 %v4536
    %v5085 = vunpack.c.l.b16 %v4537
    %v5086 = vunpack.c.h.b16 %v4537
    %v5087 = vunpack.c.l.b16 %v4538
    %v5088 = vunpack.c.h.b16 %v4538
    %v5089 = vunpack.c.l.b16 %v4539
    %v5090 = vunpack.c.h.b16 %v4539
    %v5091 = vunpack.c.l.b16 %v4540
    %v5092 = vunpack.c.h.b16 %v4540
    %v5093 = vunpack.c.l.b16 %v4541
    %v5094 = vunpack.c.h.b16 %v4541
    %v5095 = vunpack.c.l.b16 %v4542
    %v5096 = vunpack.c.h.b16 %v4542
    %v5097 = vunpack.c.l.b16 %v4543
    %v5098 = vunpack.c.h.b16 %v4543
    %v5099 = vunpack.c.l.b16 %v4544
    %v5100 = vunpack.c.h.b16 %v4544
    %v5101 = vunpack.c.l.b16 %v4545
    %v5102 = vunpack.c.h.b16 %v4545
    %v5103 = vunpack.c.l.b16 %v4546
    %v5104 = vunpack.c.h.b16 %v4546
    %v5105 = vunpack.c.l.b16 %v4547
    %v5106 = vunpack.c.h.b16 %v4547
    %v5107 = vunpack.c.l.b16 %v4548
    %v5108 = vunpack.c.h.b16 %v4548
    %v5109 = vunpack.c.l.b16 %v4549
    %v5110 = vunpack.c.h.b16 %v4549
    %v5111 = vunpack.c.l.b16 %v4550
    %v5112 = vunpack.c.h.b16 %v4550
    %v5113 = vunpack.c.l.b16 %v4551
    %v5114 = vunpack.c.h.b16 %v4551
    %v5115 = vunpack.c.l.b16 %v4552
    %v5116 = vunpack.c.h.b16 %v4552
    %v5117 = vunpack.c.l.b16 %v4553
    %v5118 = vunpack.c.h.b16 %v4553
    %v5119 = vunpack.c.l.b16 %v4554
    %v5120 = vunpack.c.h.b16 %v4554
    %v5121 = vunpack.c.l.b16 %v4555
    %v5122 = vunpack.c.h.b16 %v4555
    %v5123 = vunpack.c.l.b16 %v4556
    %v5124 = vunpack.c.h.b16 %v4556
    %v5125 = vunpack.c.l.b16 %v4557
    %v5126 = vunpack.c.h.b16 %v4557
    %v5127 = vunpack.c.l.b16 %v4558
    %v5128 = vunpack.c.h.b16 %v4558
    %v5129 = vunpack.c.l.b16 %v4559
    %v5130 = vunpack.c.h.b16 %v4559
    %v5131 = vunpack.c.l.b16 %v4560
    %v5132 = vunpack.c.h.b16 %v4560
    %v5133 = vunpack.c.l.b16 %v4561
    %v5134 = vunpack.c.h.b16 %v4561
    %v5135 = vunpack.c.l.b16 %v4562
    %v5136 = vunpack.c.h.b16 %v4562
    %v5137 = vunpack.c.l.b16 %v4563
    %v5138 = vunpack.c.h.b16 %v4563
    %v5139 = vunpack.c.l.b16 %v4564
    %v5140 = vunpack.c.h.b16 %v4564
    %v5141 = vunpack.c.l.b16 %v4565
    %v5142 = vunpack.c.h.b16 %v4565
    %v5143 = vunpack.c.l.b16 %v4566
    %v5144 = vunpack.c.h.b16 %v4566
    %v5145 = vunpack.c.l.b16 %v4567
    %v5146 = vunpack.c.h.b16 %v4567
    %v5147 = vunpack.c.l.b16 %v4568
    %v5148 = vunpack.c.h.b16 %v4568
    %v5149 = vunpack.c.l.b16 %v4569
    %v5150 = vunpack.c.h.b16 %v4569
    %v5151 = vunpack.c.l.b16 %v4570
    %v5152 = vunpack.c.h.b16 %v4570
    %v5153 = vunpack.c.l.b16 %v4571
    %v5154 = vunpack.c.h.b16 %v4571
    %v5155 = vunpack.c.l.b16 %v4572
    %v5156 = vunpack.c.h.b16 %v4572
    %v5157 = vunpack.c.l.b16 %v4573
    %v5158 = vunpack.c.h.b16 %v4573
    %v5159 = vunpack.c.l.b16 %v4574
    %v5160 = vunpack.c.h.b16 %v4574
    %v5161 = vunpack.c.l.b16 %v4575
    %v5162 = vunpack.c.h.b16 %v4575
    %v5163 = vunpack.c.l.b16 %v4576
    %v5164 = vunpack.c.h.b16 %v4576
    %v5165 = vunpack.c.l.b16 %v4577
    %v5166 = vunpack.c.h.b16 %v4577
    %v5167 = vunpack.c.l.b16 %v4578
    %v5168 = vunpack.c.h.b16 %v4578
    %v5169 = vunpack.c.l.b16 %v4579
    %v5170 = vunpack.c.h.b16 %v4579
    %v5171 = vunpack.c.l.b16 %v4580
    %v5172 = vunpack.c.h.b16 %v4580
    %v5173 = vunpack.c.l.b16 %v4581
    %v5174 = vunpack.c.h.b16 %v4581
    %v5175 = vunpack.c.l.b16 %v4582
    %v5176 = vunpack.c.h.b16 %v4582
    %v5177 = vunpack.c.l.b16 %v4583
    %v5178 = vunpack.c.h.b16 %v4583
    %v5179 = vunpack.c.l.b16 %v4584
    %v5180 = vunpack.c.h.b16 %v4584
    %v5181 = vunpack.c.l.b16 %v4585
    %v5182 = vunpack.c.h.b16 %v4585
    %v5183 = vunpack.c.l.b16 %v4586
    %v5184 = vunpack.c.h.b16 %v4586
    %v5185 = vpack.c.b16 %v4805, %v4801
    %v5186 = vpack.c.b16 %v4806, %v4802
    %v5187 = vpack.c.b16 %v4807, %v4803
    %v5188 = vpack.c.b16 %v4808, %v4804
    %v5189 = vpack.c.b16 %v4813, %v4809
    %v5190 = vpack.c.b16 %v4814, %v4810
    %v5191 = vpack.c.b16 %v4815, %v4811
    %v5192 = vpack.c.b16 %v4816, %v4812
    %v5193 = vpack.c.b16 %v4821, %v4817
    %v5194 = vpack.c.b16 %v4822, %v4818
    %v5195 = vpack.c.b16 %v4823, %v4819
    %v5196 = vpack.c.b16 %v4824, %v4820
    %v5197 = vpack.c.b16 %v4829, %v4825
    %v5198 = vpack.c.b16 %v4830, %v4826
    %v5199 = vpack.c.b16 %v4831, %v4827
    %v5200 = vpack.c.b16 %v4832, %v4828
    %v5201 = vpack.c.b16 %v4837, %v4833
    %v5202 = vpack.c.b16 %v4838, %v4834
    %v5203 = vpack.c.b16 %v4839, %v4835
    %v5204 = vpack.c.b16 %v4840, %v4836
    %v5205 = vpack.c.b16 %v4845, %v4841
    %v5206 = vpack.c.b16 %v4846, %v4842
    %v5207 = vpack.c.b16 %v4847, %v4843
    %v5208 = vpack.c.b16 %v4848, %v4844
    %v5209 = vpack.c.b16 %v4853, %v4849
    %v5210 = vpack.c.b16 %v4854, %v4850
    %v5211 = vpack.c.b16 %v4855, %v4851
    %v5212 = vpack.c.b16 %v4856, %v4852
    %v5213 = vpack.c.b16 %v4861, %v4857
    %v5214 = vpack.c.b16 %v4862, %v4858
    %v5215 = vpack.c.b16 %v4863, %v4859
    %v5216 = vpack.c.b16 %v4864, %v4860
    %v5217 = vpack.c.b16 %v4869, %v4865
    %v5218 = vpack.c.b16 %v4870, %v4866
    %v5219 = vpack.c.b16 %v4871, %v4867
    %v5220 = vpack.c.b16 %v4872, %v4868
    %v5221 = vpack.c.b16 %v4877, %v4873
    %v5222 = vpack.c.b16 %v4878, %v4874
    %v5223 = vpack.c.b16 %v4879, %v4875
    %v5224 = vpack.c.b16 %v4880, %v4876
    %v5225 = vpack.c.b16 %v4885, %v4881
    %v5226 = vpack.c.b16 %v4886, %v4882
    %v5227 = vpack.c.b16 %v4887, %v4883
    %v5228 = vpack.c.b16 %v4888, %v4884
    %v5229 = vpack.c.b16 %v4893, %v4889
    %v5230 = vpack.c.b16 %v4894, %v4890
    %v5231 = vpack.c.b16 %v4895, %v4891
    %v5232 = vpack.c.b16 %v4896, %v4892
    %v5233 = vpack.c.b16 %v4901, %v4897
    %v5234 = vpack.c.b16 %v4902, %v4898
    %v5235 = vpack.c.b16 %v4903, %v4899
    %v5236 = vpack.c.b16 %v4904, %v4900
    %v5237 = vpack.c.b16 %v4909, %v4905
    %v5238 = vpack.c.b16 %v4910, %v4906
    %v5239 = vpack.c.b16 %v4911, %v4907
    %v5240 = vpack.c.b16 %v4912, %v4908
    %v5241 = vpack.c.b16 %v4917, %v4913
    %v5242 = vpack.c.b16 %v4918, %v4914
    %v5243 = vpack.c.b16 %v4919, %v4915
    %v5244 = vpack.c.b16 %v4920, %v4916
    %v5245 = vpack.c.b16 %v4925, %v4921
    %v5246 = vpack.c.b16 %v4926, %v4922
    %v5247 = vpack.c.b16 %v4927, %v4923
    %v5248 = vpack.c.b16 %v4928, %v4924
    %v5249 = vpack.c.b16 %v4933, %v4929
    %v5250 = vpack.c.b16 %v4934, %v4930
    %v5251 = vpack.c.b16 %v4935, %v4931
    %v5252 = vpack.c.b16 %v4936, %v4932
    %v5253 = vpack.c.b16 %v4941, %v4937
    %v5254 = vpack.c.b16 %v4942, %v4938
    %v5255 = vpack.c.b16 %v4943, %v4939
    %v5256 = vpack.c.b16 %v4944, %v4940
    %v5257 = vpack.c.b16 %v4949, %v4945
    %v5258 = vpack.c.b16 %v4950, %v4946
    %v5259 = vpack.c.b16 %v4951, %v4947
    %v5260 = vpack.c.b16 %v4952, %v4948
    %v5261 = vpack.c.b16 %v4957, %v4953
    %v5262 = vpack.c.b16 %v4958, %v4954
    %v5263 = vpack.c.b16 %v4959, %v4955
    %v5264 = vpack.c.b16 %v4960, %v4956
    %v5265 = vpack.c.b16 %v4965, %v4961
    %v5266 = vpack.c.b16 %v4966, %v4962
    %v5267 = vpack.c.b16 %v4967, %v4963
    %v5268 = vpack.c.b16 %v4968, %v4964
    %v5269 = vpack.c.b16 %v4973, %v4969
    %v5270 = vpack.c.b16 %v4974, %v4970
    %v5271 = vpack.c.b16 %v4975, %v4971
    %v5272 = vpack.c.b16 %v4976, %v4972
    %v5273 = vpack.c.b16 %v4981, %v4977
    %v5274 = vpack.c.b16 %v4982, %v4978
    %v5275 = vpack.c.b16 %v4983, %v4979
    %v5276 = vpack.c.b16 %v4984, %v4980
    %v5277 = vpack.c.b16 %v4989, %v4985
    %v5278 = vpack.c.b16 %v4990, %v4986
    %v5279 = vpack.c.b16 %v4991, %v4987
    %v5280 = vpack.c.b16 %v4992, %v4988
    %v5281 = vpack.c.b16 %v4997, %v4993
    %v5282 = vpack.c.b16 %v4998, %v4994
    %v5283 = vpack.c.b16 %v4999, %v4995
    %v5284 = vpack.c.b16 %v5000, %v4996
    %v5285 = vpack.c.b16 %v5005, %v5001
    %v5286 = vpack.c.b16 %v5006, %v5002
    %v5287 = vpack.c.b16 %v5007, %v5003
    %v5288 = vpack.c.b16 %v5008, %v5004
    %v5289 = vpack.c.b16 %v5013, %v5009
    %v5290 = vpack.c.b16 %v5014, %v5010
    %v5291 = vpack.c.b16 %v5015, %v5011
    %v5292 = vpack.c.b16 %v5016, %v5012
    %v5293 = vpack.c.b16 %v5021, %v5017
    %v5294 = vpack.c.b16 %v5022, %v5018
    %v5295 = vpack.c.b16 %v5023, %v5019
    %v5296 = vpack.c.b16 %v5024, %v5020
    %v5297 = vpack.c.b16 %v5029, %v5025
    %v5298 = vpack.c.b16 %v5030, %v5026
    %v5299 = vpack.c.b16 %v5031, %v5027
    %v5300 = vpack.c.b16 %v5032, %v5028
    %v5301 = vpack.c.b16 %v5037, %v5033
    %v5302 = vpack.c.b16 %v5038, %v5034
    %v5303 = vpack.c.b16 %v5039, %v5035
    %v5304 = vpack.c.b16 %v5040, %v5036
    %v5305 = vpack.c.b16 %v5045, %v5041
    %v5306 = vpack.c.b16 %v5046, %v5042
    %v5307 = vpack.c.b16 %v5047, %v5043
    %v5308 = vpack.c.b16 %v5048, %v5044
    %v5309 = vpack.c.b16 %v5053, %v5049
    %v5310 = vpack.c.b16 %v5054, %v5050
    %v5311 = vpack.c.b16 %v5055, %v5051
    %v5312 = vpack.c.b16 %v5056, %v5052
    %v5313 = vpack.c.b16 %v5061, %v5057
    %v5314 = vpack.c.b16 %v5062, %v5058
    %v5315 = vpack.c.b16 %v5063, %v5059
    %v5316 = vpack.c.b16 %v5064, %v5060
    %v5317 = vpack.c.b16 %v5069, %v5065
    %v5318 = vpack.c.b16 %v5070, %v5066
    %v5319 = vpack.c.b16 %v5071, %v5067
    %v5320 = vpack.c.b16 %v5072, %v5068
    %v5321 = vpack.c.b16 %v5077, %v5073
    %v5322 = vpack.c.b16 %v5078, %v5074
    %v5323 = vpack.c.b16 %v5079, %v5075
    %v5324 = vpack.c.b16 %v5080, %v5076
    %v5325 = vpack.c.b16 %v5085, %v5081
    %v5326 = vpack.c.b16 %v5086, %v5082
    %v5327 = vpack.c.b16 %v5087, %v5083
    %v5328 = vpack.c.b16 %v5088, %v5084
    %v5329 = vpack.c.b16 %v5093, %v5089
    %v5330 = vpack.c.b16 %v5094, %v5090
    %v5331 = vpack.c.b16 %v5095, %v5091
    %v5332 = vpack.c.b16 %v5096, %v5092
    %v5333 = vpack.c.b16 %v5101, %v5097
    %v5334 = vpack.c.b16 %v5102, %v5098
    %v5335 = vpack.c.b16 %v5103, %v5099
    %v5336 = vpack.c.b16 %v5104, %v5100
    %v5337 = vpack.c.b16 %v5109, %v5105
    %v5338 = vpack.c.b16 %v5110, %v5106
    %v5339 = vpack.c.b16 %v5111, %v5107
    %v5340 = vpack.c.b16 %v5112, %v5108
    %v5341 = vpack.c.b16 %v5117, %v5113
    %v5342 = vpack.c.b16 %v5118, %v5114
    %v5343 = vpack.c.b16 %v5119, %v5115
    %v5344 = vpack.c.b16 %v5120, %v5116
    %v5345 = vpack.c.b16 %v5125, %v5121
    %v5346 = vpack.c.b16 %v5126, %v5122
    %v5347 = vpack.c.b16 %v5127, %v5123
    %v5348 = vpack.c.b16 %v5128, %v5124
    %v5349 = vpack.c.b16 %v5133, %v5129
    %v5350 = vpack.c.b16 %v5134, %v5130
    %v5351 = vpack.c.b16 %v5135, %v5131
    %v5352 = vpack.c.b16 %v5136, %v5132
    %v5353 = vpack.c.b16 %v5141, %v5137
    %v5354 = vpack.c.b16 %v5142, %v5138
    %v5355 = vpack.c.b16 %v5143, %v5139
    %v5356 = vpack.c.b16 %v5144, %v5140
    %v5357 = vpack.c.b16 %v5149, %v5145
    %v5358 = vpack.c.b16 %v5150, %v5146
    %v5359 = vpack.c.b16 %v5151, %v5147
    %v5360 = vpack.c.b16 %v5152, %v5148
    %v5361 = vpack.c.b16 %v5157, %v5153
    %v5362 = vpack.c.b16 %v5158, %v5154
    %v5363 = vpack.c.b16 %v5159, %v5155
    %v5364 = vpack.c.b16 %v5160, %v5156
    %v5365 = vpack.c.b16 %v5165, %v5161
    %v5366 = vpack.c.b16 %v5166, %v5162
    %v5367 = vpack.c.b16 %v5167, %v5163
    %v5368 = vpack.c.b16 %v5168, %v5164
    %v5369 = vpack.c.b16 %v5173, %v5169
    %v5370 = vpack.c.b16 %v5174, %v5170
    %v5371 = vpack.c.b16 %v5175, %v5171
    %v5372 = vpack.c.b16 %v5176, %v5172
    %v5373 = vpack.c.b16 %v5181, %v5177
    %v5374 = vpack.c.b16 %v5182, %v5178
    %v5375 = vpack.c.b16 %v5183, %v5179
    %v5376 = vpack.c.b16 %v5184, %v5180
    %5569 = vmatprep.subr.bf16.mxu0 %v5186
    %5570 = vmatpush1.bf16.msra.mxu0 %v5185
    %5571 = vmatprep.subr.bf16.mxu0 %v5190
    %5572 = vmatpush1.bf16.msra.mxu0 %v5189
    %5573 = vmatprep.subr.bf16.mxu0 %v5194
    %5574 = vmatpush1.bf16.msra.mxu0 %v5193
    %5575 = vmatprep.subr.bf16.mxu0 %v5198
    %5576 = vmatpush1.bf16.msra.mxu0 %v5197
    %5577 = vmatprep.subr.bf16.mxu0 %v5202
    %5578 = vmatpush1.bf16.msra.mxu0 %v5201
    %5579 = vmatprep.subr.bf16.mxu0 %v5206
    %5580 = vmatpush1.bf16.msra.mxu0 %v5205
    %5581 = vmatprep.subr.bf16.mxu0 %v5210
    %5582 = vmatpush1.bf16.msra.mxu0 %v5209
    %5583 = vmatprep.subr.bf16.mxu0 %v5214
    %5584 = vmatpush1.bf16.msra.mxu0 %v5213
    %5585 = vmatprep.subr.bf16.mxu0 %v5218
    %5586 = vmatpush1.bf16.msra.mxu0 %v5217
    %5587 = vmatprep.subr.bf16.mxu0 %v5222
    %5588 = vmatpush1.bf16.msra.mxu0 %v5221
    %5589 = vmatprep.subr.bf16.mxu0 %v5226
    %5590 = vmatpush1.bf16.msra.mxu0 %v5225
    %5591 = vmatprep.subr.bf16.mxu0 %v5230
    %5592 = vmatpush1.bf16.msra.mxu0 %v5229
    %5593 = vmatprep.subr.bf16.mxu0 %v5234
    %5594 = vmatpush1.bf16.msra.mxu0 %v5233
    %5595 = vmatprep.subr.bf16.mxu0 %v5238
    %5596 = vmatpush1.bf16.msra.mxu0 %v5237
    %5597 = vmatprep.subr.bf16.mxu0 %v5242
    %5598 = vmatpush1.bf16.msra.mxu0 %v5241
    %5599 = vmatprep.subr.bf16.mxu0 %v5246
    %5600 = vmatpush1.bf16.msra.mxu0 %v5245
    %5601 = vmatprep.mubr.bf16.mxu0 %v4329
    %5602 = vmatmul.mubr.bf16.gmra.mrb[0].mxu0 %v4325
    %v5603 = vpop.f32.mrb[0].mxu0
    %v5604 = vadd.f32 %v4592, %v5603
    %v5605 = vpop.f32.mrb[0].mxu0
    %v5606 = vadd.f32 %v4596, %v5605
    %v5607 = vpop.f32.mrb[0].mxu0
    %v5608 = vadd.f32 %v4592, %v5607
    %v5609 = vpop.f32.mrb[0].mxu0
    %v5610 = vadd.f32 %v4596, %v5609
    %5611 = vdwg.mxu0
    %5612 = vmatprep.subr.bf16.mxu0 %v5250
    %5613 = vmatpush1.bf16.msra.mxu0 %v5249
    %5614 = vmatprep.subr.bf16.mxu0 %v5254
    %5615 = vmatpush1.bf16.msra.mxu0 %v5253
    %5616 = vmatprep.subr.bf16.mxu0 %v5258
    %5617 = vmatpush1.bf16.msra.mxu0 %v5257
    %5618 = vmatprep.subr.bf16.mxu0 %v5262
    %5619 = vmatpush1.bf16.msra.mxu0 %v5261
    %5620 = vmatprep.subr.bf16.mxu0 %v5266
    %5621 = vmatpush1.bf16.msra.mxu0 %v5265
    %5622 = vmatprep.subr.bf16.mxu0 %v5270
    %5623 = vmatpush1.bf16.msra.mxu0 %v5269
    %5624 = vmatprep.subr.bf16.mxu0 %v5274
    %5625 = vmatpush1.bf16.msra.mxu0 %v5273
    %5626 = vmatprep.subr.bf16.mxu0 %v5278
    %5627 = vmatpush1.bf16.msra.mxu0 %v5277
    %5628 = vmatprep.subr.bf16.mxu0 %v5282
    %5629 = vmatpush1.bf16.msra.mxu0 %v5281
    %5630 = vmatprep.subr.bf16.mxu0 %v5286
    %5631 = vmatpush1.bf16.msra.mxu0 %v5285
    %5632 = vmatprep.subr.bf16.mxu0 %v5290
    %5633 = vmatpush1.bf16.msra.mxu0 %v5289
    %5634 = vmatprep.subr.bf16.mxu0 %v5294
    %5635 = vmatpush1.bf16.msra.mxu0 %v5293
    %5636 = vmatprep.subr.bf16.mxu0 %v5298
    %5637 = vmatpush1.bf16.msra.mxu0 %v5297
    %5638 = vmatprep.subr.bf16.mxu0 %v5302
    %5639 = vmatpush1.bf16.msra.mxu0 %v5301
    %5640 = vmatprep.subr.bf16.mxu0 %v5306
    %5641 = vmatpush1.bf16.msra.mxu0 %v5305
    %5642 = vmatprep.subr.bf16.mxu0 %v5310
    %5643 = vmatpush1.bf16.msra.mxu0 %v5309
    %5644 = vmatprep.mubr.bf16.mxu0 %v4337
    %5645 = vmatmul.mubr.bf16.gmra.mrb[0].mxu0 %v4333
    %v5646 = vpop.f32.mrb[0].mxu0
    %v5647 = vadd.f32 %v5604, %v5646
    %v5648 = vpop.f32.mrb[0].mxu0
    %v5649 = vadd.f32 %v5606, %v5648
    %v5650 = vpop.f32.mrb[0].mxu0
    %v5651 = vadd.f32 %v5608, %v5650
    %v5652 = vpop.f32.mrb[0].mxu0
    %v5653 = vadd.f32 %v5610, %v5652
    %5654 = vdwg.mxu0
    %5655 = vmatprep.subr.bf16.mxu0 %v5314
    %5656 = vmatpush1.bf16.msra.mxu0 %v5313
    %5657 = vmatprep.subr.bf16.mxu0 %v5318
    %5658 = vmatpush1.bf16.msra.mxu0 %v5317
    %5659 = vmatprep.subr.bf16.mxu0 %v5322
    %5660 = vmatpush1.bf16.msra.mxu0 %v5321
    %5661 = vmatprep.subr.bf16.mxu0 %v5326
    %5662 = vmatpush1.bf16.msra.mxu0 %v5325
    %5663 = vmatprep.subr.bf16.mxu0 %v5330
    %5664 = vmatpush1.bf16.msra.mxu0 %v5329
    %5665 = vmatprep.subr.bf16.mxu0 %v5334
    %5666 = vmatpush1.bf16.msra.mxu0 %v5333
    %5667 = vmatprep.subr.bf16.mxu0 %v5338
    %5668 = vmatpush1.bf16.msra.mxu0 %v5337
    %5669 = vmatprep.subr.bf16.mxu0 %v5342
    %5670 = vmatpush1.bf16.msra.mxu0 %v5341
    %5671 = vmatprep.subr.bf16.mxu0 %v5346
    %5672 = vmatpush1.bf16.msra.mxu0 %v5345
    %5673 = vmatprep.subr.bf16.mxu0 %v5350
    %5674 = vmatpush1.bf16.msra.mxu0 %v5349
    %5675 = vmatprep.subr.bf16.mxu0 %v5354
    %5676 = vmatpush1.bf16.msra.mxu0 %v5353
    %5677 = vmatprep.subr.bf16.mxu0 %v5358
    %5678 = vmatpush1.bf16.msra.mxu0 %v5357
    %5679 = vmatprep.subr.bf16.mxu0 %v5362
    %5680 = vmatpush1.bf16.msra.mxu0 %v5361
    %5681 = vmatprep.subr.bf16.mxu0 %v5366
    %5682 = vmatpush1.bf16.msra.mxu0 %v5365
    %5683 = vmatprep.subr.bf16.mxu0 %v5370
    %5684 = vmatpush1.bf16.msra.mxu0 %v5369
    %5685 = vmatprep.subr.bf16.mxu0 %v5374
    %5686 = vmatpush1.bf16.msra.mxu0 %v5373
    %5687 = vmatprep.mubr.bf16.mxu0 %v4345
    %5688 = vmatmul.mubr.bf16.gmra.mrb[0].mxu0 %v4341
    %v5689 = vpop.f32.mrb[0].mxu0
    %v5690 = vadd.f32 %v5647, %v5689
    %v5691 = vpop.f32.mrb[0].mxu0
    %v5692 = vadd.f32 %v5649, %v5691
    %v5693 = vpop.f32.mrb[0].mxu0
    %v5694 = vadd.f32 %v5651, %v5693
    %v5695 = vpop.f32.mrb[0].mxu0
    %v5696 = vadd.f32 %v5653, %v5695
    %5697 = vdwg.mxu0
    %5698 = vmatprep.subr.bf16.mxu0 %v5188
    %5699 = vmatpush1.bf16.msra.mxu0 %v5187
    %5700 = vmatprep.subr.bf16.mxu0 %v5192
    %5701 = vmatpush1.bf16.msra.mxu0 %v5191
    %5702 = vmatprep.subr.bf16.mxu0 %v5196
    %5703 = vmatpush1.bf16.msra.mxu0 %v5195
    %5704 = vmatprep.subr.bf16.mxu0 %v5200
    %5705 = vmatpush1.bf16.msra.mxu0 %v5199
    %5706 = vmatprep.subr.bf16.mxu0 %v5204
    %5707 = vmatpush1.bf16.msra.mxu0 %v5203
    %5708 = vmatprep.subr.bf16.mxu0 %v5208
    %5709 = vmatpush1.bf16.msra.mxu0 %v5207
    %5710 = vmatprep.subr.bf16.mxu0 %v5212
    %5711 = vmatpush1.bf16.msra.mxu0 %v5211
    %5712 = vmatprep.subr.bf16.mxu0 %v5216
    %5713 = vmatpush1.bf16.msra.mxu0 %v5215
    %5714 = vmatprep.subr.bf16.mxu0 %v5220
    %5715 = vmatpush1.bf16.msra.mxu0 %v5219
    %5716 = vmatprep.subr.bf16.mxu0 %v5224
    %5717 = vmatpush1.bf16.msra.mxu0 %v5223
    %5718 = vmatprep.subr.bf16.mxu0 %v5228
    %5719 = vmatpush1.bf16.msra.mxu0 %v5227
    %5720 = vmatprep.subr.bf16.mxu0 %v5232
    %5721 = vmatpush1.bf16.msra.mxu0 %v5231
    %5722 = vmatprep.subr.bf16.mxu0 %v5236
    %5723 = vmatpush1.bf16.msra.mxu0 %v5235
    %5724 = vmatprep.subr.bf16.mxu0 %v5240
    %5725 = vmatpush1.bf16.msra.mxu0 %v5239
    %5726 = vmatprep.subr.bf16.mxu0 %v5244
    %5727 = vmatpush1.bf16.msra.mxu0 %v5243
    %5728 = vmatprep.subr.bf16.mxu0 %v5248
    %5729 = vmatpush1.bf16.msra.mxu0 %v5247
    %5730 = vmatprep.mubr.bf16.mxu0 %v4329
    %5731 = vmatmul.mubr.bf16.gmra.mrb[0].mxu0 %v4325
    %v5732 = vpop.f32.mrb[0].mxu0
    %v5733 = vadd.f32 %v4600, %v5732
    %v5734 = vpop.f32.mrb[0].mxu0
    %v5735 = vadd.f32 %v4604, %v5734
    %v5736 = vpop.f32.mrb[0].mxu0
    %v5737 = vadd.f32 %v4600, %v5736
    %v5738 = vpop.f32.mrb[0].mxu0
    %v5739 = vadd.f32 %v4604, %v5738
    %5740 = vdwg.mxu0
    %5741 = vmatprep.subr.bf16.mxu0 %v5252
    %5742 = vmatpush1.bf16.msra.mxu0 %v5251
    %5743 = vmatprep.subr.bf16.mxu0 %v5256
    %5744 = vmatpush1.bf16.msra.mxu0 %v5255
    %5745 = vmatprep.subr.bf16.mxu0 %v5260
    %5746 = vmatpush1.bf16.msra.mxu0 %v5259
    %5747 = vmatprep.subr.bf16.mxu0 %v5264
    %5748 = vmatpush1.bf16.msra.mxu0 %v5263
    %5749 = vmatprep.subr.bf16.mxu0 %v5268
    %5750 = vmatpush1.bf16.msra.mxu0 %v5267
    %5751 = vmatprep.subr.bf16.mxu0 %v5272
    %5752 = vmatpush1.bf16.msra.mxu0 %v5271
    %5753 = vmatprep.subr.bf16.mxu0 %v5276
    %5754 = vmatpush1.bf16.msra.mxu0 %v5275
    %5755 = vmatprep.subr.bf16.mxu0 %v5280
    %5756 = vmatpush1.bf16.msra.mxu0 %v5279
    %5757 = vmatprep.subr.bf16.mxu0 %v5284
    %5758 = vmatpush1.bf16.msra.mxu0 %v5283
    %5759 = vmatprep.subr.bf16.mxu0 %v5288
    %5760 = vmatpush1.bf16.msra.mxu0 %v5287
    %5761 = vmatprep.subr.bf16.mxu0 %v5292
    %5762 = vmatpush1.bf16.msra.mxu0 %v5291
    %5763 = vmatprep.subr.bf16.mxu0 %v5296
    %5764 = vmatpush1.bf16.msra.mxu0 %v5295
    %5765 = vmatprep.subr.bf16.mxu0 %v5300
    %5766 = vmatpush1.bf16.msra.mxu0 %v5299
    %5767 = vmatprep.subr.bf16.mxu0 %v5304
    %5768 = vmatpush1.bf16.msra.mxu0 %v5303
    %5769 = vmatprep.subr.bf16.mxu0 %v5308
    %5770 = vmatpush1.bf16.msra.mxu0 %v5307
    %5771 = vmatprep.subr.bf16.mxu0 %v5312
    %5772 = vmatpush1.bf16.msra.mxu0 %v5311
    %5773 = vmatprep.mubr.bf16.mxu0 %v4337
    %5774 = vmatmul.mubr.bf16.gmra.mrb[0].mxu0 %v4333
    %v5775 = vpop.f32.mrb[0].mxu0
    %v5776 = vadd.f32 %v5733, %v5775
    %v5777 = vpop.f32.mrb[0].mxu0
    %v5778 = vadd.f32 %v5735, %v5777
    %v5779 = vpop.f32.mrb[0].mxu0
    %v5780 = vadd.f32 %v5737, %v5779
    %v5781 = vpop.f32.mrb[0].mxu0
    %v5782 = vadd.f32 %v5739, %v5781
    %5783 = vdwg.mxu0
    %5784 = vmatprep.subr.bf16.mxu0 %v5316
    %5785 = vmatpush1.bf16.msra.mxu0 %v5315
    %5786 = vmatprep.subr.bf16.mxu0 %v5320
    %5787 = vmatpush1.bf16.msra.mxu0 %v5319
    %5788 = vmatprep.subr.bf16.mxu0 %v5324
    %5789 = vmatpush1.bf16.msra.mxu0 %v5323
    %5790 = vmatprep.subr.bf16.mxu0 %v5328
    %5791 = vmatpush1.bf16.msra.mxu0 %v5327
    %5792 = vmatprep.subr.bf16.mxu0 %v5332
    %5793 = vmatpush1.bf16.msra.mxu0 %v5331
    %5794 = vmatprep.subr.bf16.mxu0 %v5336
    %5795 = vmatpush1.bf16.msra.mxu0 %v5335
    %5796 = vmatprep.subr.bf16.mxu0 %v5340
    %5797 = vmatpush1.bf16.msra.mxu0 %v5339
    %5798 = vmatprep.subr.bf16.mxu0 %v5344
    %5799 = vmatpush1.bf16.msra.mxu0 %v5343
    %5800 = vmatprep.subr.bf16.mxu0 %v5348
    %5801 = vmatpush1.bf16.msra.mxu0 %v5347
    %5802 = vmatprep.subr.bf16.mxu0 %v5352
    %5803 = vmatpush1.bf16.msra.mxu0 %v5351
    %5804 = vmatprep.subr.bf16.mxu0 %v5356
    %5805 = vmatpush1.bf16.msra.mxu0 %v5355
    %5806 = vmatprep.subr.bf16.mxu0 %v5360
    %5807 = vmatpush1.bf16.msra.mxu0 %v5359
    %5808 = vmatprep.subr.bf16.mxu0 %v5364
    %5809 = vmatpush1.bf16.msra.mxu0 %v5363
    %5810 = vmatprep.subr.bf16.mxu0 %v5368
    %5811 = vmatpush1.bf16.msra.mxu0 %v5367
    %5812 = vmatprep.subr.bf16.mxu0 %v5372
    %5813 = vmatpush1.bf16.msra.mxu0 %v5371
    %5814 = vmatprep.subr.bf16.mxu0 %v5376
    %5815 = vmatpush1.bf16.msra.mxu0 %v5375
    %5816 = vmatprep.mubr.bf16.mxu0 %v4345
    %5817 = vmatmul.mubr.bf16.gmra.mrb[0].mxu0 %v4341
    %v5818 = vpop.f32.mrb[0].mxu0
    %v5819 = vadd.f32 %v5776, %v5818
    %v5820 = vpop.f32.mrb[0].mxu0
    %v5821 = vadd.f32 %v5778, %v5820
    %v5822 = vpop.f32.mrb[0].mxu0
    %v5823 = vadd.f32 %v5780, %v5822
    %v5824 = vpop.f32.mrb[0].mxu0
    %v5825 = vadd.f32 %v5782, %v5824
    %5826 = vdwg.mxu0
    %v5827 = vld [vmem:[#allocation5] sm:$0xff]
    %v5828 = vld [vmem:[#allocation5 + $0x8] sm:$0xff]
    %v5829 = vld [vmem:[#allocation5 + $0x10] sm:$0xff]
    %v5830 = vld [vmem:[#allocation5 + $0x18] sm:$0xff]
    %v5831 = vld [vmem:[#allocation5 + $0x20] sm:$0xff]
    %v5832 = vld [vmem:[#allocation5 + $0x28] sm:$0xff]
    %v5833 = vld [vmem:[#allocation5 + $0x30] sm:$0xff]
    %v5834 = vld [vmem:[#allocation5 + $0x38] sm:$0xff]
    %v5835 = vld [vmem:[#allocation5 + $0x40] sm:$0xff]
    %v5836 = vld [vmem:[#allocation5 + $0x48] sm:$0xff]
    %v5837 = vld [vmem:[#allocation5 + $0x50] sm:$0xff]
    %v5838 = vld [vmem:[#allocation5 + $0x58] sm:$0xff]
    %v5839 = vld [vmem:[#allocation5 + $0x60] sm:$0xff]
    %v5840 = vld [vmem:[#allocation5 + $0x68] sm:$0xff]
    %v5841 = vld [vmem:[#allocation5 + $0x70] sm:$0xff]
    %v5842 = vld [vmem:[#allocation5 + $0x78] sm:$0xff]
    %v5843 = vld [vmem:[#allocation5 + $0x80] sm:$0xff]
    %v5844 = vld [vmem:[#allocation5 + $0x88] sm:$0xff]
    %v5845 = vld [vmem:[#allocation5 + $0x90] sm:$0xff]
    %v5846 = vld [vmem:[#allocation5 + $0x98] sm:$0xff]
    %v5847 = vld [vmem:[#allocation5 + $0xa0] sm:$0xff]
    %v5848 = vld [vmem:[#allocation5 + $0xa8] sm:$0xff]
    %v5849 = vld [vmem:[#allocation5 + $0xb0] sm:$0xff]
    %v5850 = vld [vmem:[#allocation5 + $0xb8] sm:$0xff]
    %v5851 = vld [vmem:[#allocation5 + $0xc0] sm:$0xff]
    %v5852 = vld [vmem:[#allocation5 + $0xc8] sm:$0xff]
    %v5853 = vld [vmem:[#allocation5 + $0xd0] sm:$0xff]
    %v5854 = vld [vmem:[#allocation5 + $0xd8] sm:$0xff]
    %v5855 = vld [vmem:[#allocation5 + $0xe0] sm:$0xff]
    %v5856 = vld [vmem:[#allocation5 + $0xe8] sm:$0xff]
    %v5857 = vld [vmem:[#allocation5 + $0xf0] sm:$0xff]
    %v5858 = vld [vmem:[#allocation5 + $0xf8] sm:$0xff]
    %v5859 = vld [vmem:[#allocation5 + $0x100] sm:$0xff]
    %v5860 = vld [vmem:[#allocation5 + $0x108] sm:$0xff]
    %v5861 = vld [vmem:[#allocation5 + $0x110] sm:$0xff]
    %v5862 = vld [vmem:[#allocation5 + $0x118] sm:$0xff]
    %v5863 = vld [vmem:[#allocation5 + $0x120] sm:$0xff]
    %v5864 = vld [vmem:[#allocation5 + $0x128] sm:$0xff]
    %v5865 = vld [vmem:[#allocation5 + $0x130] sm:$0xff]
    %v5866 = vld [vmem:[#allocation5 + $0x138] sm:$0xff]
    %v5867 = vld [vmem:[#allocation5 + $0x140] sm:$0xff]
    %v5868 = vld [vmem:[#allocation5 + $0x148] sm:$0xff]
    %v5869 = vld [vmem:[#allocation5 + $0x150] sm:$0xff]
    %v5870 = vld [vmem:[#allocation5 + $0x158] sm:$0xff]
    %v5871 = vld [vmem:[#allocation5 + $0x160] sm:$0xff]
    %v5872 = vld [vmem:[#allocation5 + $0x168] sm:$0xff]
    %v5873 = vld [vmem:[#allocation5 + $0x170] sm:$0xff]
    %v5874 = vld [vmem:[#allocation5 + $0x178] sm:$0xff]
    %v5875 = vld [vmem:[#allocation5 + $0x180] sm:$0xff]
    %v5876 = vld [vmem:[#allocation5 + $0x188] sm:$0xff]
    %v5877 = vld [vmem:[#allocation5 + $0x190] sm:$0xff]
    %v5878 = vld [vmem:[#allocation5 + $0x198] sm:$0xff]
    %v5879 = vld [vmem:[#allocation5 + $0x1a0] sm:$0xff]
    %v5880 = vld [vmem:[#allocation5 + $0x1a8] sm:$0xff]
    %v5881 = vld [vmem:[#allocation5 + $0x1b0] sm:$0xff]
    %v5882 = vld [vmem:[#allocation5 + $0x1b8] sm:$0xff]
    %v5883 = vld [vmem:[#allocation5 + $0x1c0] sm:$0xff]
    %v5884 = vld [vmem:[#allocation5 + $0x1c8] sm:$0xff]
    %v5885 = vld [vmem:[#allocation5 + $0x1d0] sm:$0xff]
    %v5886 = vld [vmem:[#allocation5 + $0x1d8] sm:$0xff]
    %v5887 = vld [vmem:[#allocation5 + $0x1e0] sm:$0xff]
    %v5888 = vld [vmem:[#allocation5 + $0x1e8] sm:$0xff]
    %v5889 = vld [vmem:[#allocation5 + $0x1f0] sm:$0xff]
    %v5890 = vld [vmem:[#allocation5 + $0x1f8] sm:$0xff]
    %v5891 = vld [vmem:[#allocation5 + $0x200] sm:$0xff]
    %v5892 = vld [vmem:[#allocation5 + $0x208] sm:$0xff]
    %v5893 = vld [vmem:[#allocation5 + $0x210] sm:$0xff]
    %v5894 = vld [vmem:[#allocation5 + $0x218] sm:$0xff]
    %v5895 = vld [vmem:[#allocation5 + $0x220] sm:$0xff]
    %v5896 = vld [vmem:[#allocation5 + $0x228] sm:$0xff]
    %v5897 = vld [vmem:[#allocation5 + $0x230] sm:$0xff]
    %v5898 = vld [vmem:[#allocation5 + $0x238] sm:$0xff]
    %v5899 = vld [vmem:[#allocation5 + $0x240] sm:$0xff]
    %v5900 = vld [vmem:[#allocation5 + $0x248] sm:$0xff]
    %v5901 = vld [vmem:[#allocation5 + $0x250] sm:$0xff]
    %v5902 = vld [vmem:[#allocation5 + $0x258] sm:$0xff]
    %v5903 = vld [vmem:[#allocation5 + $0x260] sm:$0xff]
    %v5904 = vld [vmem:[#allocation5 + $0x268] sm:$0xff]
    %v5905 = vld [vmem:[#allocation5 + $0x270] sm:$0xff]
    %v5906 = vld [vmem:[#allocation5 + $0x278] sm:$0xff]
    %v5907 = vld [vmem:[#allocation5 + $0x280] sm:$0xff]
    %v5908 = vld [vmem:[#allocation5 + $0x288] sm:$0xff]
    %v5909 = vld [vmem:[#allocation5 + $0x290] sm:$0xff]
    %v5910 = vld [vmem:[#allocation5 + $0x298] sm:$0xff]
    %v5911 = vld [vmem:[#allocation5 + $0x2a0] sm:$0xff]
    %v5912 = vld [vmem:[#allocation5 + $0x2a8] sm:$0xff]
    %v5913 = vld [vmem:[#allocation5 + $0x2b0] sm:$0xff]
    %v5914 = vld [vmem:[#allocation5 + $0x2b8] sm:$0xff]
    %v5915 = vld [vmem:[#allocation5 + $0x2c0] sm:$0xff]
    %v5916 = vld [vmem:[#allocation5 + $0x2c8] sm:$0xff]
    %v5917 = vld [vmem:[#allocation5 + $0x2d0] sm:$0xff]
    %v5918 = vld [vmem:[#allocation5 + $0x2d8] sm:$0xff]
    %v5919 = vld [vmem:[#allocation5 + $0x2e0] sm:$0xff]
    %v5920 = vld [vmem:[#allocation5 + $0x2e8] sm:$0xff]
    %v5921 = vld [vmem:[#allocation5 + $0x2f0] sm:$0xff]
    %v5922 = vld [vmem:[#allocation5 + $0x2f8] sm:$0xff]
    %v5923 = vld [vmem:[#allocation5 + $0x300] sm:$0xff]
    %v5924 = vld [vmem:[#allocation5 + $0x308] sm:$0xff]
    %v5925 = vld [vmem:[#allocation5 + $0x310] sm:$0xff]
    %v5926 = vld [vmem:[#allocation5 + $0x318] sm:$0xff]
    %v5927 = vld [vmem:[#allocation5 + $0x320] sm:$0xff]
    %v5928 = vld [vmem:[#allocation5 + $0x328] sm:$0xff]
    %v5929 = vld [vmem:[#allocation5 + $0x330] sm:$0xff]
    %v5930 = vld [vmem:[#allocation5 + $0x338] sm:$0xff]
    %v5931 = vld [vmem:[#allocation5 + $0x340] sm:$0xff]
    %v5932 = vld [vmem:[#allocation5 + $0x348] sm:$0xff]
    %v5933 = vld [vmem:[#allocation5 + $0x350] sm:$0xff]
    %v5934 = vld [vmem:[#allocation5 + $0x358] sm:$0xff]
    %v5935 = vld [vmem:[#allocation5 + $0x360] sm:$0xff]
    %v5936 = vld [vmem:[#allocation5 + $0x368] sm:$0xff]
    %v5937 = vld [vmem:[#allocation5 + $0x370] sm:$0xff]
    %v5938 = vld [vmem:[#allocation5 + $0x378] sm:$0xff]
    %v5939 = vld [vmem:[#allocation5 + $0x380] sm:$0xff]
    %v5940 = vld [vmem:[#allocation5 + $0x388] sm:$0xff]
    %v5941 = vld [vmem:[#allocation5 + $0x390] sm:$0xff]
    %v5942 = vld [vmem:[#allocation5 + $0x398] sm:$0xff]
    %v5943 = vld [vmem:[#allocation5 + $0x3a0] sm:$0xff]
    %v5944 = vld [vmem:[#allocation5 + $0x3a8] sm:$0xff]
    %v5945 = vld [vmem:[#allocation5 + $0x3b0] sm:$0xff]
    %v5946 = vld [vmem:[#allocation5 + $0x3b8] sm:$0xff]
    %v5947 = vld [vmem:[#allocation5 + $0x3c0] sm:$0xff]
    %v5948 = vld [vmem:[#allocation5 + $0x3c8] sm:$0xff]
    %v5949 = vld [vmem:[#allocation5 + $0x3d0] sm:$0xff]
    %v5950 = vld [vmem:[#allocation5 + $0x3d8] sm:$0xff]
    %v5951 = vld [vmem:[#allocation5 + $0x3e0] sm:$0xff]
    %v5952 = vld [vmem:[#allocation5 + $0x3e8] sm:$0xff]
    %v5953 = vld [vmem:[#allocation5 + $0x3f0] sm:$0xff]
    %v5954 = vld [vmem:[#allocation5 + $0x3f8] sm:$0xff]
    %v5955 = vld [vmem:[#allocation5 + $0x400] sm:$0xff]
    %v5956 = vld [vmem:[#allocation5 + $0x408] sm:$0xff]
    %v5957 = vld [vmem:[#allocation5 + $0x410] sm:$0xff]
    %v5958 = vld [vmem:[#allocation5 + $0x418] sm:$0xff]
    %v5959 = vld [vmem:[#allocation5 + $0x420] sm:$0xff]
    %v5960 = vld [vmem:[#allocation5 + $0x428] sm:$0xff]
    %v5961 = vld [vmem:[#allocation5 + $0x430] sm:$0xff]
    %v5962 = vld [vmem:[#allocation5 + $0x438] sm:$0xff]
    %v5963 = vld [vmem:[#allocation5 + $0x440] sm:$0xff]
    %v5964 = vld [vmem:[#allocation5 + $0x448] sm:$0xff]
    %v5965 = vld [vmem:[#allocation5 + $0x450] sm:$0xff]
    %v5966 = vld [vmem:[#allocation5 + $0x458] sm:$0xff]
    %v5967 = vld [vmem:[#allocation5 + $0x460] sm:$0xff]
    %v5968 = vld [vmem:[#allocation5 + $0x468] sm:$0xff]
    %v5969 = vld [vmem:[#allocation5 + $0x470] sm:$0xff]
    %v5970 = vld [vmem:[#allocation5 + $0x478] sm:$0xff]
    %v5971 = vld [vmem:[#allocation5 + $0x480] sm:$0xff]
    %v5972 = vld [vmem:[#allocation5 + $0x488] sm:$0xff]
    %v5973 = vld [vmem:[#allocation5 + $0x490] sm:$0xff]
    %v5974 = vld [vmem:[#allocation5 + $0x498] sm:$0xff]
    %v5975 = vld [vmem:[#allocation5 + $0x4a0] sm:$0xff]
    %v5976 = vld [vmem:[#allocation5 + $0x4a8] sm:$0xff]
    %v5977 = vld [vmem:[#allocation5 + $0x4b0] sm:$0xff]
    %v5978 = vld [vmem:[#allocation5 + $0x4b8] sm:$0xff]
    %v5979 = vld [vmem:[#allocation5 + $0x4c0] sm:$0xff]
    %v5980 = vld [vmem:[#allocation5 + $0x4c8] sm:$0xff]
    %v5981 = vld [vmem:[#allocation5 + $0x4d0] sm:$0xff]
    %v5982 = vld [vmem:[#allocation5 + $0x4d8] sm:$0xff]
    %v5983 = vld [vmem:[#allocation5 + $0x4e0] sm:$0xff]
    %v5984 = vld [vmem:[#allocation5 + $0x4e8] sm:$0xff]
    %v5985 = vld [vmem:[#allocation5 + $0x4f0] sm:$0xff]
    %v5986 = vld [vmem:[#allocation5 + $0x4f8] sm:$0xff]
    %v5987 = vld [vmem:[#allocation5 + $0x500] sm:$0xff]
    %v5988 = vld [vmem:[#allocation5 + $0x508] sm:$0xff]
    %v5989 = vld [vmem:[#allocation5 + $0x510] sm:$0xff]
    %v5990 = vld [vmem:[#allocation5 + $0x518] sm:$0xff]
    %v5991 = vld [vmem:[#allocation5 + $0x520] sm:$0xff]
    %v5992 = vld [vmem:[#allocation5 + $0x528] sm:$0xff]
    %v5993 = vld [vmem:[#allocation5 + $0x530] sm:$0xff]
    %v5994 = vld [vmem:[#allocation5 + $0x538] sm:$0xff]
    %v5995 = vld [vmem:[#allocation5 + $0x540] sm:$0xff]
    %v5996 = vld [vmem:[#allocation5 + $0x548] sm:$0xff]
    %v5997 = vld [vmem:[#allocation5 + $0x550] sm:$0xff]
    %v5998 = vld [vmem:[#allocation5 + $0x558] sm:$0xff]
    %v5999 = vld [vmem:[#allocation5 + $0x560] sm:$0xff]
    %v6000 = vld [vmem:[#allocation5 + $0x568] sm:$0xff]
    %v6001 = vld [vmem:[#allocation5 + $0x570] sm:$0xff]
    %v6002 = vld [vmem:[#allocation5 + $0x578] sm:$0xff]
    %v6003 = vld [vmem:[#allocation5 + $0x580] sm:$0xff]
    %v6004 = vld [vmem:[#allocation5 + $0x588] sm:$0xff]
    %v6005 = vld [vmem:[#allocation5 + $0x590] sm:$0xff]
    %v6006 = vld [vmem:[#allocation5 + $0x598] sm:$0xff]
    %v6007 = vld [vmem:[#allocation5 + $0x5a0] sm:$0xff]
    %v6008 = vld [vmem:[#allocation5 + $0x5a8] sm:$0xff]
    %v6009 = vld [vmem:[#allocation5 + $0x5b0] sm:$0xff]
    %v6010 = vld [vmem:[#allocation5 + $0x5b8] sm:$0xff]
    %v6011 = vld [vmem:[#allocation5 + $0x5c0] sm:$0xff]
    %v6012 = vld [vmem:[#allocation5 + $0x5c8] sm:$0xff]
    %v6013 = vld [vmem:[#allocation5 + $0x5d0] sm:$0xff]
    %v6014 = vld [vmem:[#allocation5 + $0x5d8] sm:$0xff]
    %v6015 = vld [vmem:[#allocation5 + $0x5e0] sm:$0xff]
    %v6016 = vld [vmem:[#allocation5 + $0x5e8] sm:$0xff]
    %v6017 = vld [vmem:[#allocation5 + $0x5f0] sm:$0xff]
    %v6018 = vld [vmem:[#allocation5 + $0x5f8] sm:$0xff]
    %v6019 = vld [vmem:[#allocation7] sm:$0xf]
    %v6021 = vlaneseq
    %v6022 = vshrl.u32 %v6021, 7
    %v6023 = vsub.s32 0, %v6022
    %v6024 = vrot.slane %v6019, %v6023
    %v6025 = vlaneseq
    %v6026 = vshrl.u32 %v6025, 7
    %v6027 = vsub.s32 1, %v6026
    %v6028 = vrot.slane %v6019, %v6027
    %v6029 = vlaneseq
    %v6030 = vshrl.u32 %v6029, 7
    %v6031 = vsub.s32 2, %v6030
    %v6032 = vrot.slane %v6019, %v6031
    %v6033 = vlaneseq
    %v6034 = vshrl.u32 %v6033, 7
    %v6035 = vsub.s32 3, %v6034
    %v6036 = vrot.slane %v6019, %v6035
    %v6233 = vunpack.c.l.b16 %v5827
    %v6234 = vunpack.c.h.b16 %v5827
    %v6235 = vunpack.c.l.b16 %v5828
    %v6236 = vunpack.c.h.b16 %v5828
    %v6237 = vunpack.c.l.b16 %v5829
    %v6238 = vunpack.c.h.b16 %v5829
    %v6239 = vunpack.c.l.b16 %v5830
    %v6240 = vunpack.c.h.b16 %v5830
    %v6241 = vunpack.c.l.b16 %v5831
    %v6242 = vunpack.c.h.b16 %v5831
    %v6243 = vunpack.c.l.b16 %v5832
    %v6244 = vunpack.c.h.b16 %v5832
    %v6245 = vunpack.c.l.b16 %v5833
    %v6246 = vunpack.c.h.b16 %v5833
    %v6247 = vunpack.c.l.b16 %v5834
    %v6248 = vunpack.c.h.b16 %v5834
    %v6249 = vunpack.c.l.b16 %v5835
    %v6250 = vunpack.c.h.b16 %v5835
    %v6251 = vunpack.c.l.b16 %v5836
    %v6252 = vunpack.c.h.b16 %v5836
    %v6253 = vunpack.c.l.b16 %v5837
    %v6254 = vunpack.c.h.b16 %v5837
    %v6255 = vunpack.c.l.b16 %v5838
    %v6256 = vunpack.c.h.b16 %v5838
    %v6257 = vunpack.c.l.b16 %v5839
    %v6258 = vunpack.c.h.b16 %v5839
    %v6259 = vunpack.c.l.b16 %v5840
    %v6260 = vunpack.c.h.b16 %v5840
    %v6261 = vunpack.c.l.b16 %v5841
    %v6262 = vunpack.c.h.b16 %v5841
    %v6263 = vunpack.c.l.b16 %v5842
    %v6264 = vunpack.c.h.b16 %v5842
    %v6265 = vunpack.c.l.b16 %v5843
    %v6266 = vunpack.c.h.b16 %v5843
    %v6267 = vunpack.c.l.b16 %v5844
    %v6268 = vunpack.c.h.b16 %v5844
    %v6269 = vunpack.c.l.b16 %v5845
    %v6270 = vunpack.c.h.b16 %v5845
    %v6271 = vunpack.c.l.b16 %v5846
    %v6272 = vunpack.c.h.b16 %v5846
    %v6273 = vunpack.c.l.b16 %v5847
    %v6274 = vunpack.c.h.b16 %v5847
    %v6275 = vunpack.c.l.b16 %v5848
    %v6276 = vunpack.c.h.b16 %v5848
    %v6277 = vunpack.c.l.b16 %v5849
    %v6278 = vunpack.c.h.b16 %v5849
    %v6279 = vunpack.c.l.b16 %v5850
    %v6280 = vunpack.c.h.b16 %v5850
    %v6281 = vunpack.c.l.b16 %v5851
    %v6282 = vunpack.c.h.b16 %v5851
    %v6283 = vunpack.c.l.b16 %v5852
    %v6284 = vunpack.c.h.b16 %v5852
    %v6285 = vunpack.c.l.b16 %v5853
    %v6286 = vunpack.c.h.b16 %v5853
    %v6287 = vunpack.c.l.b16 %v5854
    %v6288 = vunpack.c.h.b16 %v5854
    %v6289 = vunpack.c.l.b16 %v5855
    %v6290 = vunpack.c.h.b16 %v5855
    %v6291 = vunpack.c.l.b16 %v5856
    %v6292 = vunpack.c.h.b16 %v5856
    %v6293 = vunpack.c.l.b16 %v5857
    %v6294 = vunpack.c.h.b16 %v5857
    %v6295 = vunpack.c.l.b16 %v5858
    %v6296 = vunpack.c.h.b16 %v5858
    %v6297 = vunpack.c.l.b16 %v5859
    %v6298 = vunpack.c.h.b16 %v5859
    %v6299 = vunpack.c.l.b16 %v5860
    %v6300 = vunpack.c.h.b16 %v5860
    %v6301 = vunpack.c.l.b16 %v5861
    %v6302 = vunpack.c.h.b16 %v5861
    %v6303 = vunpack.c.l.b16 %v5862
    %v6304 = vunpack.c.h.b16 %v5862
    %v6305 = vunpack.c.l.b16 %v5863
    %v6306 = vunpack.c.h.b16 %v5863
    %v6307 = vunpack.c.l.b16 %v5864
    %v6308 = vunpack.c.h.b16 %v5864
    %v6309 = vunpack.c.l.b16 %v5865
    %v6310 = vunpack.c.h.b16 %v5865
    %v6311 = vunpack.c.l.b16 %v5866
    %v6312 = vunpack.c.h.b16 %v5866
    %v6313 = vunpack.c.l.b16 %v5867
    %v6314 = vunpack.c.h.b16 %v5867
    %v6315 = vunpack.c.l.b16 %v5868
    %v6316 = vunpack.c.h.b16 %v5868
    %v6317 = vunpack.c.l.b16 %v5869
    %v6318 = vunpack.c.h.b16 %v5869
    %v6319 = vunpack.c.l.b16 %v5870
    %v6320 = vunpack.c.h.b16 %v5870
    %v6321 = vunpack.c.l.b16 %v5871
    %v6322 = vunpack.c.h.b16 %v5871
    %v6323 = vunpack.c.l.b16 %v5872
    %v6324 = vunpack.c.h.b16 %v5872
    %v6325 = vunpack.c.l.b16 %v5873
    %v6326 = vunpack.c.h.b16 %v5873
    %v6327 = vunpack.c.l.b16 %v5874
    %v6328 = vunpack.c.h.b16 %v5874
    %v6329 = vunpack.c.l.b16 %v5875
    %v6330 = vunpack.c.h.b16 %v5875
    %v6331 = vunpack.c.l.b16 %v5876
    %v6332 = vunpack.c.h.b16 %v5876
    %v6333 = vunpack.c.l.b16 %v5877
    %v6334 = vunpack.c.h.b16 %v5877
    %v6335 = vunpack.c.l.b16 %v5878
    %v6336 = vunpack.c.h.b16 %v5878
    %v6337 = vunpack.c.l.b16 %v5879
    %v6338 = vunpack.c.h.b16 %v5879
    %v6339 = vunpack.c.l.b16 %v5880
    %v6340 = vunpack.c.h.b16 %v5880
    %v6341 = vunpack.c.l.b16 %v5881
    %v6342 = vunpack.c.h.b16 %v5881
    %v6343 = vunpack.c.l.b16 %v5882
    %v6344 = vunpack.c.h.b16 %v5882
    %v6345 = vunpack.c.l.b16 %v5883
    %v6346 = vunpack.c.h.b16 %v5883
    %v6347 = vunpack.c.l.b16 %v5884
    %v6348 = vunpack.c.h.b16 %v5884
    %v6349 = vunpack.c.l.b16 %v5885
    %v6350 = vunpack.c.h.b16 %v5885
    %v6351 = vunpack.c.l.b16 %v5886
    %v6352 = vunpack.c.h.b16 %v5886
    %v6353 = vunpack.c.l.b16 %v5887
    %v6354 = vunpack.c.h.b16 %v5887
    %v6355 = vunpack.c.l.b16 %v5888
    %v6356 = vunpack.c.h.b16 %v5888
    %v6357 = vunpack.c.l.b16 %v5889
    %v6358 = vunpack.c.h.b16 %v5889
    %v6359 = vunpack.c.l.b16 %v5890
    %v6360 = vunpack.c.h.b16 %v5890
    %v6361 = vunpack.c.l.b16 %v5891
    %v6362 = vunpack.c.h.b16 %v5891
    %v6363 = vunpack.c.l.b16 %v5892
    %v6364 = vunpack.c.h.b16 %v5892
    %v6365 = vunpack.c.l.b16 %v5893
    %v6366 = vunpack.c.h.b16 %v5893
    %v6367 = vunpack.c.l.b16 %v5894
    %v6368 = vunpack.c.h.b16 %v5894
    %v6369 = vunpack.c.l.b16 %v5895
    %v6370 = vunpack.c.h.b16 %v5895
    %v6371 = vunpack.c.l.b16 %v5896
    %v6372 = vunpack.c.h.b16 %v5896
    %v6373 = vunpack.c.l.b16 %v5897
    %v6374 = vunpack.c.h.b16 %v5897
    %v6375 = vunpack.c.l.b16 %v5898
    %v6376 = vunpack.c.h.b16 %v5898
    %v6377 = vunpack.c.l.b16 %v5899
    %v6378 = vunpack.c.h.b16 %v5899
    %v6379 = vunpack.c.l.b16 %v5900
    %v6380 = vunpack.c.h.b16 %v5900
    %v6381 = vunpack.c.l.b16 %v5901
    %v6382 = vunpack.c.h.b16 %v5901
    %v6383 = vunpack.c.l.b16 %v5902
    %v6384 = vunpack.c.h.b16 %v5902
    %v6385 = vunpack.c.l.b16 %v5903
    %v6386 = vunpack.c.h.b16 %v5903
    %v6387 = vunpack.c.l.b16 %v5904
    %v6388 = vunpack.c.h.b16 %v5904
    %v6389 = vunpack.c.l.b16 %v5905
    %v6390 = vunpack.c.h.b16 %v5905
    %v6391 = vunpack.c.l.b16 %v5906
    %v6392 = vunpack.c.h.b16 %v5906
    %v6393 = vunpack.c.l.b16 %v5907
    %v6394 = vunpack.c.h.b16 %v5907
    %v6395 = vunpack.c.l.b16 %v5908
    %v6396 = vunpack.c.h.b16 %v5908
    %v6397 = vunpack.c.l.b16 %v5909
    %v6398 = vunpack.c.h.b16 %v5909
    %v6399 = vunpack.c.l.b16 %v5910
    %v6400 = vunpack.c.h.b16 %v5910
    %v6401 = vunpack.c.l.b16 %v5911
    %v6402 = vunpack.c.h.b16 %v5911
    %v6403 = vunpack.c.l.b16 %v5912
    %v6404 = vunpack.c.h.b16 %v5912
    %v6405 = vunpack.c.l.b16 %v5913
    %v6406 = vunpack.c.h.b16 %v5913
    %v6407 = vunpack.c.l.b16 %v5914
    %v6408 = vunpack.c.h.b16 %v5914
    %v6409 = vunpack.c.l.b16 %v5915
    %v6410 = vunpack.c.h.b16 %v5915
    %v6411 = vunpack.c.l.b16 %v5916
    %v6412 = vunpack.c.h.b16 %v5916
    %v6413 = vunpack.c.l.b16 %v5917
    %v6414 = vunpack.c.h.b16 %v5917
    %v6415 = vunpack.c.l.b16 %v5918
    %v6416 = vunpack.c.h.b16 %v5918
    %v6417 = vunpack.c.l.b16 %v5919
    %v6418 = vunpack.c.h.b16 %v5919
    %v6419 = vunpack.c.l.b16 %v5920
    %v6420 = vunpack.c.h.b16 %v5920
    %v6421 = vunpack.c.l.b16 %v5921
    %v6422 = vunpack.c.h.b16 %v5921
    %v6423 = vunpack.c.l.b16 %v5922
    %v6424 = vunpack.c.h.b16 %v5922
    %v6425 = vunpack.c.l.b16 %v5923
    %v6426 = vunpack.c.h.b16 %v5923
    %v6427 = vunpack.c.l.b16 %v5924
    %v6428 = vunpack.c.h.b16 %v5924
    %v6429 = vunpack.c.l.b16 %v5925
    %v6430 = vunpack.c.h.b16 %v5925
    %v6431 = vunpack.c.l.b16 %v5926
    %v6432 = vunpack.c.h.b16 %v5926
    %v6433 = vunpack.c.l.b16 %v5927
    %v6434 = vunpack.c.h.b16 %v5927
    %v6435 = vunpack.c.l.b16 %v5928
    %v6436 = vunpack.c.h.b16 %v5928
    %v6437 = vunpack.c.l.b16 %v5929
    %v6438 = vunpack.c.h.b16 %v5929
    %v6439 = vunpack.c.l.b16 %v5930
    %v6440 = vunpack.c.h.b16 %v5930
    %v6441 = vunpack.c.l.b16 %v5931
    %v6442 = vunpack.c.h.b16 %v5931
    %v6443 = vunpack.c.l.b16 %v5932
    %v6444 = vunpack.c.h.b16 %v5932
    %v6445 = vunpack.c.l.b16 %v5933
    %v6446 = vunpack.c.h.b16 %v5933
    %v6447 = vunpack.c.l.b16 %v5934
    %v6448 = vunpack.c.h.b16 %v5934
    %v6449 = vunpack.c.l.b16 %v5935
    %v6450 = vunpack.c.h.b16 %v5935
    %v6451 = vunpack.c.l.b16 %v5936
    %v6452 = vunpack.c.h.b16 %v5936
    %v6453 = vunpack.c.l.b16 %v5937
    %v6454 = vunpack.c.h.b16 %v5937
    %v6455 = vunpack.c.l.b16 %v5938
    %v6456 = vunpack.c.h.b16 %v5938
    %v6457 = vunpack.c.l.b16 %v5939
    %v6458 = vunpack.c.h.b16 %v5939
    %v6459 = vunpack.c.l.b16 %v5940
    %v6460 = vunpack.c.h.b16 %v5940
    %v6461 = vunpack.c.l.b16 %v5941
    %v6462 = vunpack.c.h.b16 %v5941
    %v6463 = vunpack.c.l.b16 %v5942
    %v6464 = vunpack.c.h.b16 %v5942
    %v6465 = vunpack.c.l.b16 %v5943
    %v6466 = vunpack.c.h.b16 %v5943
    %v6467 = vunpack.c.l.b16 %v5944
    %v6468 = vunpack.c.h.b16 %v5944
    %v6469 = vunpack.c.l.b16 %v5945
    %v6470 = vunpack.c.h.b16 %v5945
    %v6471 = vunpack.c.l.b16 %v5946
    %v6472 = vunpack.c.h.b16 %v5946
    %v6473 = vunpack.c.l.b16 %v5947
    %v6474 = vunpack.c.h.b16 %v5947
    %v6475 = vunpack.c.l.b16 %v5948
    %v6476 = vunpack.c.h.b16 %v5948
    %v6477 = vunpack.c.l.b16 %v5949
    %v6478 = vunpack.c.h.b16 %v5949
    %v6479 = vunpack.c.l.b16 %v5950
    %v6480 = vunpack.c.h.b16 %v5950
    %v6481 = vunpack.c.l.b16 %v5951
    %v6482 = vunpack.c.h.b16 %v5951
    %v6483 = vunpack.c.l.b16 %v5952
    %v6484 = vunpack.c.h.b16 %v5952
    %v6485 = vunpack.c.l.b16 %v5953
    %v6486 = vunpack.c.h.b16 %v5953
    %v6487 = vunpack.c.l.b16 %v5954
    %v6488 = vunpack.c.h.b16 %v5954
    %v6489 = vunpack.c.l.b16 %v5955
    %v6490 = vunpack.c.h.b16 %v5955
    %v6491 = vunpack.c.l.b16 %v5956
    %v6492 = vunpack.c.h.b16 %v5956
    %v6493 = vunpack.c.l.b16 %v5957
    %v6494 = vunpack.c.h.b16 %v5957
    %v6495 = vunpack.c.l.b16 %v5958
    %v6496 = vunpack.c.h.b16 %v5958
    %v6497 = vunpack.c.l.b16 %v5959
    %v6498 = vunpack.c.h.b16 %v5959
    %v6499 = vunpack.c.l.b16 %v5960
    %v6500 = vunpack.c.h.b16 %v5960
    %v6501 = vunpack.c.l.b16 %v5961
    %v6502 = vunpack.c.h.b16 %v5961
    %v6503 = vunpack.c.l.b16 %v5962
    %v6504 = vunpack.c.h.b16 %v5962
    %v6505 = vunpack.c.l.b16 %v5963
    %v6506 = vunpack.c.h.b16 %v5963
    %v6507 = vunpack.c.l.b16 %v5964
    %v6508 = vunpack.c.h.b16 %v5964
    %v6509 = vunpack.c.l.b16 %v5965
    %v6510 = vunpack.c.h.b16 %v5965
    %v6511 = vunpack.c.l.b16 %v5966
    %v6512 = vunpack.c.h.b16 %v5966
    %v6513 = vunpack.c.l.b16 %v5967
    %v6514 = vunpack.c.h.b16 %v5967
    %v6515 = vunpack.c.l.b16 %v5968
    %v6516 = vunpack.c.h.b16 %v5968
    %v6517 = vunpack.c.l.b16 %v5969
    %v6518 = vunpack.c.h.b16 %v5969
    %v6519 = vunpack.c.l.b16 %v5970
    %v6520 = vunpack.c.h.b16 %v5970
    %v6521 = vunpack.c.l.b16 %v5971
    %v6522 = vunpack.c.h.b16 %v5971
    %v6523 = vunpack.c.l.b16 %v5972
    %v6524 = vunpack.c.h.b16 %v5972
    %v6525 = vunpack.c.l.b16 %v5973
    %v6526 = vunpack.c.h.b16 %v5973
    %v6527 = vunpack.c.l.b16 %v5974
    %v6528 = vunpack.c.h.b16 %v5974
    %v6529 = vunpack.c.l.b16 %v5975
    %v6530 = vunpack.c.h.b16 %v5975
    %v6531 = vunpack.c.l.b16 %v5976
    %v6532 = vunpack.c.h.b16 %v5976
    %v6533 = vunpack.c.l.b16 %v5977
    %v6534 = vunpack.c.h.b16 %v5977
    %v6535 = vunpack.c.l.b16 %v5978
    %v6536 = vunpack.c.h.b16 %v5978
    %v6537 = vunpack.c.l.b16 %v5979
    %v6538 = vunpack.c.h.b16 %v5979
    %v6539 = vunpack.c.l.b16 %v5980
    %v6540 = vunpack.c.h.b16 %v5980
    %v6541 = vunpack.c.l.b16 %v5981
    %v6542 = vunpack.c.h.b16 %v5981
    %v6543 = vunpack.c.l.b16 %v5982
    %v6544 = vunpack.c.h.b16 %v5982
    %v6545 = vunpack.c.l.b16 %v5983
    %v6546 = vunpack.c.h.b16 %v5983
    %v6547 = vunpack.c.l.b16 %v5984
    %v6548 = vunpack.c.h.b16 %v5984
    %v6549 = vunpack.c.l.b16 %v5985
    %v6550 = vunpack.c.h.b16 %v5985
    %v6551 = vunpack.c.l.b16 %v5986
    %v6552 = vunpack.c.h.b16 %v5986
    %v6553 = vunpack.c.l.b16 %v5987
    %v6554 = vunpack.c.h.b16 %v5987
    %v6555 = vunpack.c.l.b16 %v5988
    %v6556 = vunpack.c.h.b16 %v5988
    %v6557 = vunpack.c.l.b16 %v5989
    %v6558 = vunpack.c.h.b16 %v5989
    %v6559 = vunpack.c.l.b16 %v5990
    %v6560 = vunpack.c.h.b16 %v5990
    %v6561 = vunpack.c.l.b16 %v5991
    %v6562 = vunpack.c.h.b16 %v5991
    %v6563 = vunpack.c.l.b16 %v5992
    %v6564 = vunpack.c.h.b16 %v5992
    %v6565 = vunpack.c.l.b16 %v5993
    %v6566 = vunpack.c.h.b16 %v5993
    %v6567 = vunpack.c.l.b16 %v5994
    %v6568 = vunpack.c.h.b16 %v5994
    %v6569 = vunpack.c.l.b16 %v5995
    %v6570 = vunpack.c.h.b16 %v5995
    %v6571 = vunpack.c.l.b16 %v5996
    %v6572 = vunpack.c.h.b16 %v5996
    %v6573 = vunpack.c.l.b16 %v5997
    %v6574 = vunpack.c.h.b16 %v5997
    %v6575 = vunpack.c.l.b16 %v5998
    %v6576 = vunpack.c.h.b16 %v5998
    %v6577 = vunpack.c.l.b16 %v5999
    %v6578 = vunpack.c.h.b16 %v5999
    %v6579 = vunpack.c.l.b16 %v6000
    %v6580 = vunpack.c.h.b16 %v6000
    %v6581 = vunpack.c.l.b16 %v6001
    %v6582 = vunpack.c.h.b16 %v6001
    %v6583 = vunpack.c.l.b16 %v6002
    %v6584 = vunpack.c.h.b16 %v6002
    %v6585 = vunpack.c.l.b16 %v6003
    %v6586 = vunpack.c.h.b16 %v6003
    %v6587 = vunpack.c.l.b16 %v6004
    %v6588 = vunpack.c.h.b16 %v6004
    %v6589 = vunpack.c.l.b16 %v6005
    %v6590 = vunpack.c.h.b16 %v6005
    %v6591 = vunpack.c.l.b16 %v6006
    %v6592 = vunpack.c.h.b16 %v6006
    %v6593 = vunpack.c.l.b16 %v6007
    %v6594 = vunpack.c.h.b16 %v6007
    %v6595 = vunpack.c.l.b16 %v6008
    %v6596 = vunpack.c.h.b16 %v6008
    %v6597 = vunpack.c.l.b16 %v6009
    %v6598 = vunpack.c.h.b16 %v6009
    %v6599 = vunpack.c.l.b16 %v6010
    %v6600 = vunpack.c.h.b16 %v6010
    %v6601 = vunpack.c.l.b16 %v6011
    %v6602 = vunpack.c.h.b16 %v6011
    %v6603 = vunpack.c.l.b16 %v6012
    %v6604 = vunpack.c.h.b16 %v6012
    %v6605 = vunpack.c.l.b16 %v6013
    %v6606 = vunpack.c.h.b16 %v6013
    %v6607 = vunpack.c.l.b16 %v6014
    %v6608 = vunpack.c.h.b16 %v6014
    %v6609 = vunpack.c.l.b16 %v6015
    %v6610 = vunpack.c.h.b16 %v6015
    %v6611 = vunpack.c.l.b16 %v6016
    %v6612 = vunpack.c.h.b16 %v6016
    %v6613 = vunpack.c.l.b16 %v6017
    %v6614 = vunpack.c.h.b16 %v6017
    %v6615 = vunpack.c.l.b16 %v6018
    %v6616 = vunpack.c.h.b16 %v6018
    %v6617 = vpack.c.b16 %v6237, %v6233
    %v6618 = vpack.c.b16 %v6238, %v6234
    %v6619 = vpack.c.b16 %v6239, %v6235
    %v6620 = vpack.c.b16 %v6240, %v6236
    %v6621 = vpack.c.b16 %v6245, %v6241
    %v6622 = vpack.c.b16 %v6246, %v6242
    %v6623 = vpack.c.b16 %v6247, %v6243
    %v6624 = vpack.c.b16 %v6248, %v6244
    %v6625 = vpack.c.b16 %v6253, %v6249
    %v6626 = vpack.c.b16 %v6254, %v6250
    %v6627 = vpack.c.b16 %v6255, %v6251
    %v6628 = vpack.c.b16 %v6256, %v6252
    %v6629 = vpack.c.b16 %v6261, %v6257
    %v6630 = vpack.c.b16 %v6262, %v6258
    %v6631 = vpack.c.b16 %v6263, %v6259
    %v6632 = vpack.c.b16 %v6264, %v6260
    %v6633 = vpack.c.b16 %v6269, %v6265
    %v6634 = vpack.c.b16 %v6270, %v6266
    %v6635 = vpack.c.b16 %v6271, %v6267
    %v6636 = vpack.c.b16 %v6272, %v6268
    %v6637 = vpack.c.b16 %v6277, %v6273
    %v6638 = vpack.c.b16 %v6278, %v6274
    %v6639 = vpack.c.b16 %v6279, %v6275
    %v6640 = vpack.c.b16 %v6280, %v6276
    %v6641 = vpack.c.b16 %v6285, %v6281
    %v6642 = vpack.c.b16 %v6286, %v6282
    %v6643 = vpack.c.b16 %v6287, %v6283
    %v6644 = vpack.c.b16 %v6288, %v6284
    %v6645 = vpack.c.b16 %v6293, %v6289
    %v6646 = vpack.c.b16 %v6294, %v6290
    %v6647 = vpack.c.b16 %v6295, %v6291
    %v6648 = vpack.c.b16 %v6296, %v6292
    %v6649 = vpack.c.b16 %v6301, %v6297
    %v6650 = vpack.c.b16 %v6302, %v6298
    %v6651 = vpack.c.b16 %v6303, %v6299
    %v6652 = vpack.c.b16 %v6304, %v6300
    %v6653 = vpack.c.b16 %v6309, %v6305
    %v6654 = vpack.c.b16 %v6310, %v6306
    %v6655 = vpack.c.b16 %v6311, %v6307
    %v6656 = vpack.c.b16 %v6312, %v6308
    %v6657 = vpack.c.b16 %v6317, %v6313
    %v6658 = vpack.c.b16 %v6318, %v6314
    %v6659 = vpack.c.b16 %v6319, %v6315
    %v6660 = vpack.c.b16 %v6320, %v6316
    %v6661 = vpack.c.b16 %v6325, %v6321
    %v6662 = vpack.c.b16 %v6326, %v6322
    %v6663 = vpack.c.b16 %v6327, %v6323
    %v6664 = vpack.c.b16 %v6328, %v6324
    %v6665 = vpack.c.b16 %v6333, %v6329
    %v6666 = vpack.c.b16 %v6334, %v6330
    %v6667 = vpack.c.b16 %v6335, %v6331
    %v6668 = vpack.c.b16 %v6336, %v6332
    %v6669 = vpack.c.b16 %v6341, %v6337
    %v6670 = vpack.c.b16 %v6342, %v6338
    %v6671 = vpack.c.b16 %v6343, %v6339
    %v6672 = vpack.c.b16 %v6344, %v6340
    %v6673 = vpack.c.b16 %v6349, %v6345
    %v6674 = vpack.c.b16 %v6350, %v6346
    %v6675 = vpack.c.b16 %v6351, %v6347
    %v6676 = vpack.c.b16 %v6352, %v6348
    %v6677 = vpack.c.b16 %v6357, %v6353
    %v6678 = vpack.c.b16 %v6358, %v6354
    %v6679 = vpack.c.b16 %v6359, %v6355
    %v6680 = vpack.c.b16 %v6360, %v6356
    %v6681 = vpack.c.b16 %v6365, %v6361
    %v6682 = vpack.c.b16 %v6366, %v6362
    %v6683 = vpack.c.b16 %v6367, %v6363
    %v6684 = vpack.c.b16 %v6368, %v6364
    %v6685 = vpack.c.b16 %v6373, %v6369
    %v6686 = vpack.c.b16 %v6374, %v6370
    %v6687 = vpack.c.b16 %v6375, %v6371
    %v6688 = vpack.c.b16 %v6376, %v6372
    %v6689 = vpack.c.b16 %v6381, %v6377
    %v6690 = vpack.c.b16 %v6382, %v6378
    %v6691 = vpack.c.b16 %v6383, %v6379
    %v6692 = vpack.c.b16 %v6384, %v6380
    %v6693 = vpack.c.b16 %v6389, %v6385
    %v6694 = vpack.c.b16 %v6390, %v6386
    %v6695 = vpack.c.b16 %v6391, %v6387
    %v6696 = vpack.c.b16 %v6392, %v6388
    %v6697 = vpack.c.b16 %v6397, %v6393
    %v6698 = vpack.c.b16 %v6398, %v6394
    %v6699 = vpack.c.b16 %v6399, %v6395
    %v6700 = vpack.c.b16 %v6400, %v6396
    %v6701 = vpack.c.b16 %v6405, %v6401
    %v6702 = vpack.c.b16 %v6406, %v6402
    %v6703 = vpack.c.b16 %v6407, %v6403
    %v6704 = vpack.c.b16 %v6408, %v6404
    %v6705 = vpack.c.b16 %v6413, %v6409
    %v6706 = vpack.c.b16 %v6414, %v6410
    %v6707 = vpack.c.b16 %v6415, %v6411
    %v6708 = vpack.c.b16 %v6416, %v6412
    %v6709 = vpack.c.b16 %v6421, %v6417
    %v6710 = vpack.c.b16 %v6422, %v6418
    %v6711 = vpack.c.b16 %v6423, %v6419
    %v6712 = vpack.c.b16 %v6424, %v6420
    %v6713 = vpack.c.b16 %v6429, %v6425
    %v6714 = vpack.c.b16 %v6430, %v6426
    %v6715 = vpack.c.b16 %v6431, %v6427
    %v6716 = vpack.c.b16 %v6432, %v6428
    %v6717 = vpack.c.b16 %v6437, %v6433
    %v6718 = vpack.c.b16 %v6438, %v6434
    %v6719 = vpack.c.b16 %v6439, %v6435
    %v6720 = vpack.c.b16 %v6440, %v6436
    %v6721 = vpack.c.b16 %v6445, %v6441
    %v6722 = vpack.c.b16 %v6446, %v6442
    %v6723 = vpack.c.b16 %v6447, %v6443
    %v6724 = vpack.c.b16 %v6448, %v6444
    %v6725 = vpack.c.b16 %v6453, %v6449
    %v6726 = vpack.c.b16 %v6454, %v6450
    %v6727 = vpack.c.b16 %v6455, %v6451
    %v6728 = vpack.c.b16 %v6456, %v6452
    %v6729 = vpack.c.b16 %v6461, %v6457
    %v6730 = vpack.c.b16 %v6462, %v6458
    %v6731 = vpack.c.b16 %v6463, %v6459
    %v6732 = vpack.c.b16 %v6464, %v6460
    %v6733 = vpack.c.b16 %v6469, %v6465
    %v6734 = vpack.c.b16 %v6470, %v6466
    %v6735 = vpack.c.b16 %v6471, %v6467
    %v6736 = vpack.c.b16 %v6472, %v6468
    %v6737 = vpack.c.b16 %v6477, %v6473
    %v6738 = vpack.c.b16 %v6478, %v6474
    %v6739 = vpack.c.b16 %v6479, %v6475
    %v6740 = vpack.c.b16 %v6480, %v6476
    %v6741 = vpack.c.b16 %v6485, %v6481
    %v6742 = vpack.c.b16 %v6486, %v6482
    %v6743 = vpack.c.b16 %v6487, %v6483
    %v6744 = vpack.c.b16 %v6488, %v6484
    %v6745 = vpack.c.b16 %v6493, %v6489
    %v6746 = vpack.c.b16 %v6494, %v6490
    %v6747 = vpack.c.b16 %v6495, %v6491
    %v6748 = vpack.c.b16 %v6496, %v6492
    %v6749 = vpack.c.b16 %v6501, %v6497
    %v6750 = vpack.c.b16 %v6502, %v6498
    %v6751 = vpack.c.b16 %v6503, %v6499
    %v6752 = vpack.c.b16 %v6504, %v6500
    %v6753 = vpack.c.b16 %v6509, %v6505
    %v6754 = vpack.c.b16 %v6510, %v6506
    %v6755 = vpack.c.b16 %v6511, %v6507
    %v6756 = vpack.c.b16 %v6512, %v6508
    %v6757 = vpack.c.b16 %v6517, %v6513
    %v6758 = vpack.c.b16 %v6518, %v6514
    %v6759 = vpack.c.b16 %v6519, %v6515
    %v6760 = vpack.c.b16 %v6520, %v6516
    %v6761 = vpack.c.b16 %v6525, %v6521
    %v6762 = vpack.c.b16 %v6526, %v6522
    %v6763 = vpack.c.b16 %v6527, %v6523
    %v6764 = vpack.c.b16 %v6528, %v6524
    %v6765 = vpack.c.b16 %v6533, %v6529
    %v6766 = vpack.c.b16 %v6534, %v6530
    %v6767 = vpack.c.b16 %v6535, %v6531
    %v6768 = vpack.c.b16 %v6536, %v6532
    %v6769 = vpack.c.b16 %v6541, %v6537
    %v6770 = vpack.c.b16 %v6542, %v6538
    %v6771 = vpack.c.b16 %v6543, %v6539
    %v6772 = vpack.c.b16 %v6544, %v6540
    %v6773 = vpack.c.b16 %v6549, %v6545
    %v6774 = vpack.c.b16 %v6550, %v6546
    %v6775 = vpack.c.b16 %v6551, %v6547
    %v6776 = vpack.c.b16 %v6552, %v6548
    %v6777 = vpack.c.b16 %v6557, %v6553
    %v6778 = vpack.c.b16 %v6558, %v6554
    %v6779 = vpack.c.b16 %v6559, %v6555
    %v6780 = vpack.c.b16 %v6560, %v6556
    %v6781 = vpack.c.b16 %v6565, %v6561
    %v6782 = vpack.c.b16 %v6566, %v6562
    %v6783 = vpack.c.b16 %v6567, %v6563
    %v6784 = vpack.c.b16 %v6568, %v6564
    %v6785 = vpack.c.b16 %v6573, %v6569
    %v6786 = vpack.c.b16 %v6574, %v6570
    %v6787 = vpack.c.b16 %v6575, %v6571
    %v6788 = vpack.c.b16 %v6576, %v6572
    %v6789 = vpack.c.b16 %v6581, %v6577
    %v6790 = vpack.c.b16 %v6582, %v6578
    %v6791 = vpack.c.b16 %v6583, %v6579
    %v6792 = vpack.c.b16 %v6584, %v6580
    %v6793 = vpack.c.b16 %v6589, %v6585
    %v6794 = vpack.c.b16 %v6590, %v6586
    %v6795 = vpack.c.b16 %v6591, %v6587
    %v6796 = vpack.c.b16 %v6592, %v6588
    %v6797 = vpack.c.b16 %v6597, %v6593
    %v6798 = vpack.c.b16 %v6598, %v6594
    %v6799 = vpack.c.b16 %v6599, %v6595
    %v6800 = vpack.c.b16 %v6600, %v6596
    %v6801 = vpack.c.b16 %v6605, %v6601
    %v6802 = vpack.c.b16 %v6606, %v6602
    %v6803 = vpack.c.b16 %v6607, %v6603
    %v6804 = vpack.c.b16 %v6608, %v6604
    %v6805 = vpack.c.b16 %v6613, %v6609
    %v6806 = vpack.c.b16 %v6614, %v6610
    %v6807 = vpack.c.b16 %v6615, %v6611
    %v6808 = vpack.c.b16 %v6616, %v6612
    %7001 = vmatprep.subr.bf16.mxu0 %v6618
    %7002 = vmatpush1.bf16.msra.mxu0 %v6617
    %7003 = vmatprep.subr.bf16.mxu0 %v6622
    %7004 = vmatpush1.bf16.msra.mxu0 %v6621
    %7005 = vmatprep.subr.bf16.mxu0 %v6626
    %7006 = vmatpush1.bf16.msra.mxu0 %v6625
    %7007 = vmatprep.subr.bf16.mxu0 %v6630
    %7008 = vmatpush1.bf16.msra.mxu0 %v6629
    %7009 = vmatprep.subr.bf16.mxu0 %v6634
    %7010 = vmatpush1.bf16.msra.mxu0 %v6633
    %7011 = vmatprep.subr.bf16.mxu0 %v6638
    %7012 = vmatpush1.bf16.msra.mxu0 %v6637
    %7013 = vmatprep.subr.bf16.mxu0 %v6642
    %7014 = vmatpush1.bf16.msra.mxu0 %v6641
    %7015 = vmatprep.subr.bf16.mxu0 %v6646
    %7016 = vmatpush1.bf16.msra.mxu0 %v6645
    %7017 = vmatprep.subr.bf16.mxu0 %v6650
    %7018 = vmatpush1.bf16.msra.mxu0 %v6649
    %7019 = vmatprep.subr.bf16.mxu0 %v6654
    %7020 = vmatpush1.bf16.msra.mxu0 %v6653
    %7021 = vmatprep.subr.bf16.mxu0 %v6658
    %7022 = vmatpush1.bf16.msra.mxu0 %v6657
    %7023 = vmatprep.subr.bf16.mxu0 %v6662
    %7024 = vmatpush1.bf16.msra.mxu0 %v6661
    %7025 = vmatprep.subr.bf16.mxu0 %v6666
    %7026 = vmatpush1.bf16.msra.mxu0 %v6665
    %7027 = vmatprep.subr.bf16.mxu0 %v6670
    %7028 = vmatpush1.bf16.msra.mxu0 %v6669
    %7029 = vmatprep.subr.bf16.mxu0 %v6674
    %7030 = vmatpush1.bf16.msra.mxu0 %v6673
    %7031 = vmatprep.subr.bf16.mxu0 %v6678
    %7032 = vmatpush1.bf16.msra.mxu0 %v6677
    %7033 = vmatprep.mubr.bf16.mxu0 %v4353
    %7034 = vmatmul.mubr.bf16.gmra.mrb[0].mxu0 %v4349
    %v7035 = vpop.f32.mrb[0].mxu0
    %v7036 = vadd.f32 %v6024, %v7035
    %v7037 = vpop.f32.mrb[0].mxu0
    %v7038 = vadd.f32 %v6028, %v7037
    %v7039 = vpop.f32.mrb[0].mxu0
    %v7040 = vadd.f32 %v6024, %v7039
    %v7041 = vpop.f32.mrb[0].mxu0
    %v7042 = vadd.f32 %v6028, %v7041
    %7043 = vdwg.mxu0
    %7044 = vmatprep.subr.bf16.mxu0 %v6682
    %7045 = vmatpush1.bf16.msra.mxu0 %v6681
    %7046 = vmatprep.subr.bf16.mxu0 %v6686
    %7047 = vmatpush1.bf16.msra.mxu0 %v6685
    %7048 = vmatprep.subr.bf16.mxu0 %v6690
    %7049 = vmatpush1.bf16.msra.mxu0 %v6689
    %7050 = vmatprep.subr.bf16.mxu0 %v6694
    %7051 = vmatpush1.bf16.msra.mxu0 %v6693
    %7052 = vmatprep.subr.bf16.mxu0 %v6698
    %7053 = vmatpush1.bf16.msra.mxu0 %v6697
    %7054 = vmatprep.subr.bf16.mxu0 %v6702
    %7055 = vmatpush1.bf16.msra.mxu0 %v6701
    %7056 = vmatprep.subr.bf16.mxu0 %v6706
    %7057 = vmatpush1.bf16.msra.mxu0 %v6705
    %7058 = vmatprep.subr.bf16.mxu0 %v6710
    %7059 = vmatpush1.bf16.msra.mxu0 %v6709
    %7060 = vmatprep.subr.bf16.mxu0 %v6714
    %7061 = vmatpush1.bf16.msra.mxu0 %v6713
    %7062 = vmatprep.subr.bf16.mxu0 %v6718
    %7063 = vmatpush1.bf16.msra.mxu0 %v6717
    %7064 = vmatprep.subr.bf16.mxu0 %v6722
    %7065 = vmatpush1.bf16.msra.mxu0 %v6721
    %7066 = vmatprep.subr.bf16.mxu0 %v6726
    %7067 = vmatpush1.bf16.msra.mxu0 %v6725
    %7068 = vmatprep.subr.bf16.mxu0 %v6730
    %7069 = vmatpush1.bf16.msra.mxu0 %v6729
    %7070 = vmatprep.subr.bf16.mxu0 %v6734
    %7071 = vmatpush1.bf16.msra.mxu0 %v6733
    %7072 = vmatprep.subr.bf16.mxu0 %v6738
    %7073 = vmatpush1.bf16.msra.mxu0 %v6737
    %7074 = vmatprep.subr.bf16.mxu0 %v6742
    %7075 = vmatpush1.bf16.msra.mxu0 %v6741
    %7076 = vmatprep.mubr.bf16.mxu0 %v4361
    %7077 = vmatmul.mubr.bf16.gmra.mrb[0].mxu0 %v4357
    %v7078 = vpop.f32.mrb[0].mxu0
    %v7079 = vadd.f32 %v7036, %v7078
    %v7080 = vpop.f32.mrb[0].mxu0
    %v7081 = vadd.f32 %v7038, %v7080
    %v7082 = vpop.f32.mrb[0].mxu0
    %v7083 = vadd.f32 %v7040, %v7082
    %v7084 = vpop.f32.mrb[0].mxu0
    %v7085 = vadd.f32 %v7042, %v7084
    %7086 = vdwg.mxu0
    %7087 = vmatprep.subr.bf16.mxu0 %v6746
    %7088 = vmatpush1.bf16.msra.mxu0 %v6745
    %7089 = vmatprep.subr.bf16.mxu0 %v6750
    %7090 = vmatpush1.bf16.msra.mxu0 %v6749
    %7091 = vmatprep.subr.bf16.mxu0 %v6754
    %7092 = vmatpush1.bf16.msra.mxu0 %v6753
    %7093 = vmatprep.subr.bf16.mxu0 %v6758
    %7094 = vmatpush1.bf16.msra.mxu0 %v6757
    %7095 = vmatprep.subr.bf16.mxu0 %v6762
    %7096 = vmatpush1.bf16.msra.mxu0 %v6761
    %7097 = vmatprep.subr.bf16.mxu0 %v6766
    %7098 = vmatpush1.bf16.msra.mxu0 %v6765
    %7099 = vmatprep.subr.bf16.mxu0 %v6770
    %7100 = vmatpush1.bf16.msra.mxu0 %v6769
    %7101 = vmatprep.subr.bf16.mxu0 %v6774
    %7102 = vmatpush1.bf16.msra.mxu0 %v6773
    %7103 = vmatprep.subr.bf16.mxu0 %v6778
    %7104 = vmatpush1.bf16.msra.mxu0 %v6777
    %7105 = vmatprep.subr.bf16.mxu0 %v6782
    %7106 = vmatpush1.bf16.msra.mxu0 %v6781
    %7107 = vmatprep.subr.bf16.mxu0 %v6786
    %7108 = vmatpush1.bf16.msra.mxu0 %v6785
    %7109 = vmatprep.subr.bf16.mxu0 %v6790
    %7110 = vmatpush1.bf16.msra.mxu0 %v6789
    %7111 = vmatprep.subr.bf16.mxu0 %v6794
    %7112 = vmatpush1.bf16.msra.mxu0 %v6793
    %7113 = vmatprep.subr.bf16.mxu0 %v6798
    %7114 = vmatpush1.bf16.msra.mxu0 %v6797
    %7115 = vmatprep.subr.bf16.mxu0 %v6802
    %7116 = vmatpush1.bf16.msra.mxu0 %v6801
    %7117 = vmatprep.subr.bf16.mxu0 %v6806
    %7118 = vmatpush1.bf16.msra.mxu0 %v6805
    %7119 = vmatprep.mubr.bf16.mxu0 %v4369
    %7120 = vmatmul.mubr.bf16.gmra.mrb[0].mxu0 %v4365
    %v7121 = vpop.f32.mrb[0].mxu0
    %v7122 = vadd.f32 %v7079, %v7121
    %v7123 = vpop.f32.mrb[0].mxu0
    %v7124 = vadd.f32 %v7081, %v7123
    %v7125 = vpop.f32.mrb[0].mxu0
    %v7126 = vadd.f32 %v7083, %v7125
    %v7127 = vpop.f32.mrb[0].mxu0
    %v7128 = vadd.f32 %v7085, %v7127
    %7129 = vdwg.mxu0
    %7130 = vmatprep.subr.bf16.mxu0 %v6620
    %7131 = vmatpush1.bf16.msra.mxu0 %v6619
    %7132 = vmatprep.subr.bf16.mxu0 %v6624
    %7133 = vmatpush1.bf16.msra.mxu0 %v6623
    %7134 = vmatprep.subr.bf16.mxu0 %v6628
    %7135 = vmatpush1.bf16.msra.mxu0 %v6627
    %7136 = vmatprep.subr.bf16.mxu0 %v6632
    %7137 = vmatpush1.bf16.msra.mxu0 %v6631
    %7138 = vmatprep.subr.bf16.mxu0 %v6636
    %7139 = vmatpush1.bf16.msra.mxu0 %v6635
    %7140 = vmatprep.subr.bf16.mxu0 %v6640
    %7141 = vmatpush1.bf16.msra.mxu0 %v6639
    %7142 = vmatprep.subr.bf16.mxu0 %v6644
    %7143 = vmatpush1.bf16.msra.mxu0 %v6643
    %7144 = vmatprep.subr.bf16.mxu0 %v6648
    %7145 = vmatpush1.bf16.msra.mxu0 %v6647
    %7146 = vmatprep.subr.bf16.mxu0 %v6652
    %7147 = vmatpush1.bf16.msra.mxu0 %v6651
    %7148 = vmatprep.subr.bf16.mxu0 %v6656
    %7149 = vmatpush1.bf16.msra.mxu0 %v6655
    %7150 = vmatprep.subr.bf16.mxu0 %v6660
    %7151 = vmatpush1.bf16.msra.mxu0 %v6659
    %7152 = vmatprep.subr.bf16.mxu0 %v6664
    %7153 = vmatpush1.bf16.msra.mxu0 %v6663
    %7154 = vmatprep.subr.bf16.mxu0 %v6668
    %7155 = vmatpush1.bf16.msra.mxu0 %v6667
    %7156 = vmatprep.subr.bf16.mxu0 %v6672
    %7157 = vmatpush1.bf16.msra.mxu0 %v6671
    %7158 = vmatprep.subr.bf16.mxu0 %v6676
    %7159 = vmatpush1.bf16.msra.mxu0 %v6675
    %7160 = vmatprep.subr.bf16.mxu0 %v6680
    %7161 = vmatpush1.bf16.msra.mxu0 %v6679
    %7162 = vmatprep.mubr.bf16.mxu0 %v4353
    %7163 = vmatmul.mubr.bf16.gmra.mrb[0].mxu0 %v4349
    %v7164 = vpop.f32.mrb[0].mxu0
    %v7165 = vadd.f32 %v6032, %v7164
    %v7166 = vpop.f32.mrb[0].mxu0
    %v7167 = vadd.f32 %v6036, %v7166
    %v7168 = vpop.f32.mrb[0].mxu0
    %v7169 = vadd.f32 %v6032, %v7168
    %v7170 = vpop.f32.mrb[0].mxu0
    %v7171 = vadd.f32 %v6036, %v7170
    %7172 = vdwg.mxu0
    %7173 = vmatprep.subr.bf16.mxu0 %v6684
    %7174 = vmatpush1.bf16.msra.mxu0 %v6683
    %7175 = vmatprep.subr.bf16.mxu0 %v6688
    %7176 = vmatpush1.bf16.msra.mxu0 %v6687
    %7177 = vmatprep.subr.bf16.mxu0 %v6692
    %7178 = vmatpush1.bf16.msra.mxu0 %v6691
    %7179 = vmatprep.subr.bf16.mxu0 %v6696
    %7180 = vmatpush1.bf16.msra.mxu0 %v6695
    %7181 = vmatprep.subr.bf16.mxu0 %v6700
    %7182 = vmatpush1.bf16.msra.mxu0 %v6699
    %7183 = vmatprep.subr.bf16.mxu0 %v6704
    %7184 = vmatpush1.bf16.msra.mxu0 %v6703
    %7185 = vmatprep.subr.bf16.mxu0 %v6708
    %7186 = vmatpush1.bf16.msra.mxu0 %v6707
    %7187 = vmatprep.subr.bf16.mxu0 %v6712
    %7188 = vmatpush1.bf16.msra.mxu0 %v6711
    %7189 = vmatprep.subr.bf16.mxu0 %v6716
    %7190 = vmatpush1.bf16.msra.mxu0 %v6715
    %7191 = vmatprep.subr.bf16.mxu0 %v6720
    %7192 = vmatpush1.bf16.msra.mxu0 %v6719
    %7193 = vmatprep.subr.bf16.mxu0 %v6724
    %7194 = vmatpush1.bf16.msra.mxu0 %v6723
    %7195 = vmatprep.subr.bf16.mxu0 %v6728
    %7196 = vmatpush1.bf16.msra.mxu0 %v6727
    %7197 = vmatprep.subr.bf16.mxu0 %v6732
    %7198 = vmatpush1.bf16.msra.mxu0 %v6731
    %7199 = vmatprep.subr.bf16.mxu0 %v6736
    %7200 = vmatpush1.bf16.msra.mxu0 %v6735
    %7201 = vmatprep.subr.bf16.mxu0 %v6740
    %7202 = vmatpush1.bf16.msra.mxu0 %v6739
    %7203 = vmatprep.subr.bf16.mxu0 %v6744
    %7204 = vmatpush1.bf16.msra.mxu0 %v6743
    %7205 = vmatprep.mubr.bf16.mxu0 %v4361
    %7206 = vmatmul.mubr.bf16.gmra.mrb[0].mxu0 %v4357
    %v7207 = vpop.f32.mrb[0].mxu0
    %v7208 = vadd.f32 %v7165, %v7207
    %v7209 = vpop.f32.mrb[0].mxu0
    %v7210 = vadd.f32 %v7167, %v7209
    %v7211 = vpop.f32.mrb[0].mxu0
    %v7212 = vadd.f32 %v7169, %v7211
    %v7213 = vpop.f32.mrb[0].mxu0
    %v7214 = vadd.f32 %v7171, %v7213
    %7215 = vdwg.mxu0
    %7216 = vmatprep.subr.bf16.mxu0 %v6748
    %7217 = vmatpush1.bf16.msra.mxu0 %v6747
    %7218 = vmatprep.subr.bf16.mxu0 %v6752
    %7219 = vmatpush1.bf16.msra.mxu0 %v6751
    %7220 = vmatprep.subr.bf16.mxu0 %v6756
    %7221 = vmatpush1.bf16.msra.mxu0 %v6755
    %7222 = vmatprep.subr.bf16.mxu0 %v6760
    %7223 = vmatpush1.bf16.msra.mxu0 %v6759
    %7224 = vmatprep.subr.bf16.mxu0 %v6764
    %7225 = vmatpush1.bf16.msra.mxu0 %v6763
    %7226 = vmatprep.subr.bf16.mxu0 %v6768
    %7227 = vmatpush1.bf16.msra.mxu0 %v6767
    %7228 = vmatprep.subr.bf16.mxu0 %v6772
    %7229 = vmatpush1.bf16.msra.mxu0 %v6771
    %7230 = vmatprep.subr.bf16.mxu0 %v6776
    %7231 = vmatpush1.bf16.msra.mxu0 %v6775
    %7232 = vmatprep.subr.bf16.mxu0 %v6780
    %7233 = vmatpush1.bf16.msra.mxu0 %v6779
    %7234 = vmatprep.subr.bf16.mxu0 %v6784
    %7235 = vmatpush1.bf16.msra.mxu0 %v6783
    %7236 = vmatprep.subr.bf16.mxu0 %v6788
    %7237 = vmatpush1.bf16.msra.mxu0 %v6787
    %7238 = vmatprep.subr.bf16.mxu0 %v6792
    %7239 = vmatpush1.bf16.msra.mxu0 %v6791
    %7240 = vmatprep.subr.bf16.mxu0 %v6796
    %7241 = vmatpush1.bf16.msra.mxu0 %v6795
    %7242 = vmatprep.subr.bf16.mxu0 %v6800
    %7243 = vmatpush1.bf16.msra.mxu0 %v6799
    %7244 = vmatprep.subr.bf16.mxu0 %v6804
    %7245 = vmatpush1.bf16.msra.mxu0 %v6803
    %7246 = vmatprep.subr.bf16.mxu0 %v6808
    %7247 = vmatpush1.bf16.msra.mxu0 %v6807
    %7248 = vmatprep.mubr.bf16.mxu0 %v4369
    %7249 = vmatmul.mubr.bf16.gmra.mrb[0].mxu0 %v4365
    %v7250 = vpop.f32.mrb[0].mxu0
    %v7251 = vadd.f32 %v7208, %v7250
    %v7252 = vpop.f32.mrb[0].mxu0
    %v7253 = vadd.f32 %v7210, %v7252
    %v7254 = vpop.f32.mrb[0].mxu0
    %v7255 = vadd.f32 %v7212, %v7254
    %v7256 = vpop.f32.mrb[0].mxu0
    %v7257 = vadd.f32 %v7214, %v7256
    %7258 = vdwg.mxu0
    %v7259 = vld [vmem:[#allocation8] sm:$0xff]
    %v7260 = vld [vmem:[#allocation8 + $0x8] sm:$0xff]
    %v7261 = vld [vmem:[#allocation8 + $0x10] sm:$0xff]
    %v7262 = vld [vmem:[#allocation8 + $0x18] sm:$0xff]
    %v7263 = vld [vmem:[#allocation8 + $0x20] sm:$0xff]
    %v7264 = vld [vmem:[#allocation8 + $0x28] sm:$0xff]
    %v7265 = vld [vmem:[#allocation8 + $0x30] sm:$0xff]
    %v7266 = vld [vmem:[#allocation8 + $0x38] sm:$0xff]
    %v7267 = vld [vmem:[#allocation8 + $0x40] sm:$0xff]
    %v7268 = vld [vmem:[#allocation8 + $0x48] sm:$0xff]
    %v7269 = vld [vmem:[#allocation8 + $0x50] sm:$0xff]
    %v7270 = vld [vmem:[#allocation8 + $0x58] sm:$0xff]
    %v7271 = vld [vmem:[#allocation8 + $0x60] sm:$0xff]
    %v7272 = vld [vmem:[#allocation8 + $0x68] sm:$0xff]
    %v7273 = vld [vmem:[#allocation8 + $0x70] sm:$0xff]
    %v7274 = vld [vmem:[#allocation8 + $0x78] sm:$0xff]
    %v7275 = vld [vmem:[#allocation8 + $0x80] sm:$0xff]
    %v7276 = vld [vmem:[#allocation8 + $0x88] sm:$0xff]
    %v7277 = vld [vmem:[#allocation8 + $0x90] sm:$0xff]
    %v7278 = vld [vmem:[#allocation8 + $0x98] sm:$0xff]
    %v7279 = vld [vmem:[#allocation8 + $0xa0] sm:$0xff]
    %v7280 = vld [vmem:[#allocation8 + $0xa8] sm:$0xff]
    %v7281 = vld [vmem:[#allocation8 + $0xb0] sm:$0xff]
    %v7282 = vld [vmem:[#allocation8 + $0xb8] sm:$0xff]
    %v7283 = vld [vmem:[#allocation8 + $0xc0] sm:$0xff]
    %v7284 = vld [vmem:[#allocation8 + $0xc8] sm:$0xff]
    %v7285 = vld [vmem:[#allocation8 + $0xd0] sm:$0xff]
    %v7286 = vld [vmem:[#allocation8 + $0xd8] sm:$0xff]
    %v7287 = vld [vmem:[#allocation8 + $0xe0] sm:$0xff]
    %v7288 = vld [vmem:[#allocation8 + $0xe8] sm:$0xff]
    %v7289 = vld [vmem:[#allocation8 + $0xf0] sm:$0xff]
    %v7290 = vld [vmem:[#allocation8 + $0xf8] sm:$0xff]
    %v7291 = vld [vmem:[#allocation8 + $0x100] sm:$0xff]
    %v7292 = vld [vmem:[#allocation8 + $0x108] sm:$0xff]
    %v7293 = vld [vmem:[#allocation8 + $0x110] sm:$0xff]
    %v7294 = vld [vmem:[#allocation8 + $0x118] sm:$0xff]
    %v7295 = vld [vmem:[#allocation8 + $0x120] sm:$0xff]
    %v7296 = vld [vmem:[#allocation8 + $0x128] sm:$0xff]
    %v7297 = vld [vmem:[#allocation8 + $0x130] sm:$0xff]
    %v7298 = vld [vmem:[#allocation8 + $0x138] sm:$0xff]
    %v7299 = vld [vmem:[#allocation8 + $0x140] sm:$0xff]
    %v7300 = vld [vmem:[#allocation8 + $0x148] sm:$0xff]
    %v7301 = vld [vmem:[#allocation8 + $0x150] sm:$0xff]
    %v7302 = vld [vmem:[#allocation8 + $0x158] sm:$0xff]
    %v7303 = vld [vmem:[#allocation8 + $0x160] sm:$0xff]
    %v7304 = vld [vmem:[#allocation8 + $0x168] sm:$0xff]
    %v7305 = vld [vmem:[#allocation8 + $0x170] sm:$0xff]
    %v7306 = vld [vmem:[#allocation8 + $0x178] sm:$0xff]
    %v7307 = vld [vmem:[#allocation8 + $0x180] sm:$0xff]
    %v7308 = vld [vmem:[#allocation8 + $0x188] sm:$0xff]
    %v7309 = vld [vmem:[#allocation8 + $0x190] sm:$0xff]
    %v7310 = vld [vmem:[#allocation8 + $0x198] sm:$0xff]
    %v7311 = vld [vmem:[#allocation8 + $0x1a0] sm:$0xff]
    %v7312 = vld [vmem:[#allocation8 + $0x1a8] sm:$0xff]
    %v7313 = vld [vmem:[#allocation8 + $0x1b0] sm:$0xff]
    %v7314 = vld [vmem:[#allocation8 + $0x1b8] sm:$0xff]
    %v7315 = vld [vmem:[#allocation8 + $0x1c0] sm:$0xff]
    %v7316 = vld [vmem:[#allocation8 + $0x1c8] sm:$0xff]
    %v7317 = vld [vmem:[#allocation8 + $0x1d0] sm:$0xff]
    %v7318 = vld [vmem:[#allocation8 + $0x1d8] sm:$0xff]
    %v7319 = vld [vmem:[#allocation8 + $0x1e0] sm:$0xff]
    %v7320 = vld [vmem:[#allocation8 + $0x1e8] sm:$0xff]
    %v7321 = vld [vmem:[#allocation8 + $0x1f0] sm:$0xff]
    %v7322 = vld [vmem:[#allocation8 + $0x1f8] sm:$0xff]
    %v7323 = vpack.c.bf16 %v5694, %v5690
    %v7324 = vpack.c.bf16 %v5696, %v5692
    %v7325 = vpack.c.bf16 %v5823, %v5819
    %v7326 = vpack.c.bf16 %v5825, %v5821
    %v7327 = vld [vmem:[#allocation8 + $0x200] sm:$0xff]
    %v7328 = vld [vmem:[#allocation8 + $0x208] sm:$0xff]
    %v7329 = vld [vmem:[#allocation8 + $0x210] sm:$0xff]
    %v7330 = vld [vmem:[#allocation8 + $0x218] sm:$0xff]
    %v7331 = vld [vmem:[#allocation8 + $0x220] sm:$0xff]
    %v7332 = vld [vmem:[#allocation8 + $0x228] sm:$0xff]
    %v7333 = vld [vmem:[#allocation8 + $0x230] sm:$0xff]
    %v7334 = vld [vmem:[#allocation8 + $0x238] sm:$0xff]
    %v7335 = vld [vmem:[#allocation8 + $0x240] sm:$0xff]
    %v7336 = vld [vmem:[#allocation8 + $0x248] sm:$0xff]
    %v7337 = vld [vmem:[#allocation8 + $0x250] sm:$0xff]
    %v7338 = vld [vmem:[#allocation8 + $0x258] sm:$0xff]
    %v7339 = vld [vmem:[#allocation8 + $0x260] sm:$0xff]
    %v7340 = vld [vmem:[#allocation8 + $0x268] sm:$0xff]
    %v7341 = vld [vmem:[#allocation8 + $0x270] sm:$0xff]
    %v7342 = vld [vmem:[#allocation8 + $0x278] sm:$0xff]
    %v7343 = vld [vmem:[#allocation8 + $0x280] sm:$0xff]
    %v7344 = vld [vmem:[#allocation8 + $0x288] sm:$0xff]
    %v7345 = vld [vmem:[#allocation8 + $0x290] sm:$0xff]
    %v7346 = vld [vmem:[#allocation8 + $0x298] sm:$0xff]
    %v7347 = vld [vmem:[#allocation8 + $0x2a0] sm:$0xff]
    %v7348 = vld [vmem:[#allocation8 + $0x2a8] sm:$0xff]
    %v7349 = vld [vmem:[#allocation8 + $0x2b0] sm:$0xff]
    %v7350 = vld [vmem:[#allocation8 + $0x2b8] sm:$0xff]
    %v7351 = vld [vmem:[#allocation8 + $0x2c0] sm:$0xff]
    %v7352 = vld [vmem:[#allocation8 + $0x2c8] sm:$0xff]
    %v7353 = vld [vmem:[#allocation8 + $0x2d0] sm:$0xff]
    %v7354 = vld [vmem:[#allocation8 + $0x2d8] sm:$0xff]
    %v7355 = vld [vmem:[#allocation8 + $0x2e0] sm:$0xff]
    %v7356 = vld [vmem:[#allocation8 + $0x2e8] sm:$0xff]
    %v7357 = vld [vmem:[#allocation8 + $0x2f0] sm:$0xff]
    %v7358 = vld [vmem:[#allocation8 + $0x2f8] sm:$0xff]
    %v7359 = vld [vmem:[#allocation8 + $0x300] sm:$0xff]
    %v7360 = vld [vmem:[#allocation8 + $0x308] sm:$0xff]
    %v7361 = vld [vmem:[#allocation8 + $0x310] sm:$0xff]
    %v7362 = vld [vmem:[#allocation8 + $0x318] sm:$0xff]
    %v7363 = vld [vmem:[#allocation8 + $0x320] sm:$0xff]
    %v7364 = vld [vmem:[#allocation8 + $0x328] sm:$0xff]
    %v7365 = vld [vmem:[#allocation8 + $0x330] sm:$0xff]
    %v7366 = vld [vmem:[#allocation8 + $0x338] sm:$0xff]
    %v7367 = vld [vmem:[#allocation8 + $0x340] sm:$0xff]
    %v7368 = vld [vmem:[#allocation8 + $0x348] sm:$0xff]
    %v7369 = vld [vmem:[#allocation8 + $0x350] sm:$0xff]
    %v7370 = vld [vmem:[#allocation8 + $0x358] sm:$0xff]
    %v7371 = vld [vmem:[#allocation8 + $0x360] sm:$0xff]
    %v7372 = vld [vmem:[#allocation8 + $0x368] sm:$0xff]
    %v7373 = vld [vmem:[#allocation8 + $0x370] sm:$0xff]
    %v7374 = vld [vmem:[#allocation8 + $0x378] sm:$0xff]
    %v7375 = vld [vmem:[#allocation8 + $0x380] sm:$0xff]
    %v7376 = vld [vmem:[#allocation8 + $0x388] sm:$0xff]
    %v7377 = vld [vmem:[#allocation8 + $0x390] sm:$0xff]
    %v7378 = vld [vmem:[#allocation8 + $0x398] sm:$0xff]
    %v7379 = vld [vmem:[#allocation8 + $0x3a0] sm:$0xff]
    %v7380 = vld [vmem:[#allocation8 + $0x3a8] sm:$0xff]
    %v7381 = vld [vmem:[#allocation8 + $0x3b0] sm:$0xff]
    %v7382 = vld [vmem:[#allocation8 + $0x3b8] sm:$0xff]
    %v7383 = vld [vmem:[#allocation8 + $0x3c0] sm:$0xff]
    %v7384 = vld [vmem:[#allocation8 + $0x3c8] sm:$0xff]
    %v7385 = vld [vmem:[#allocation8 + $0x3d0] sm:$0xff]
    %v7386 = vld [vmem:[#allocation8 + $0x3d8] sm:$0xff]
    %v7387 = vld [vmem:[#allocation8 + $0x3e0] sm:$0xff]
    %v7388 = vld [vmem:[#allocation8 + $0x3e8] sm:$0xff]
    %v7389 = vld [vmem:[#allocation8 + $0x3f0] sm:$0xff]
    %v7390 = vld [vmem:[#allocation8 + $0x3f8] sm:$0xff]
    %v7455 = vunpack.c.l.b16 %v7327
    %v7456 = vunpack.c.h.b16 %v7327
    %v7457 = vunpack.c.l.b16 %v7328
    %v7458 = vunpack.c.h.b16 %v7328
    %v7459 = vunpack.c.l.b16 %v7329
    %v7460 = vunpack.c.h.b16 %v7329
    %v7461 = vunpack.c.l.b16 %v7330
    %v7462 = vunpack.c.h.b16 %v7330
    %v7463 = vunpack.c.l.b16 %v7331
    %v7464 = vunpack.c.h.b16 %v7331
    %v7465 = vunpack.c.l.b16 %v7332
    %v7466 = vunpack.c.h.b16 %v7332
    %v7467 = vunpack.c.l.b16 %v7333
    %v7468 = vunpack.c.h.b16 %v7333
    %v7469 = vunpack.c.l.b16 %v7334
    %v7470 = vunpack.c.h.b16 %v7334
    %v7471 = vunpack.c.l.b16 %v7335
    %v7472 = vunpack.c.h.b16 %v7335
    %v7473 = vunpack.c.l.b16 %v7336
    %v7474 = vunpack.c.h.b16 %v7336
    %v7475 = vunpack.c.l.b16 %v7337
    %v7476 = vunpack.c.h.b16 %v7337
    %v7477 = vunpack.c.l.b16 %v7338
    %v7478 = vunpack.c.h.b16 %v7338
    %v7479 = vunpack.c.l.b16 %v7339
    %v7480 = vunpack.c.h.b16 %v7339
    %v7481 = vunpack.c.l.b16 %v7340
    %v7482 = vunpack.c.h.b16 %v7340
    %v7483 = vunpack.c.l.b16 %v7341
    %v7484 = vunpack.c.h.b16 %v7341
    %v7485 = vunpack.c.l.b16 %v7342
    %v7486 = vunpack.c.h.b16 %v7342
    %v7487 = vunpack.c.l.b16 %v7343
    %v7488 = vunpack.c.h.b16 %v7343
    %v7489 = vunpack.c.l.b16 %v7344
    %v7490 = vunpack.c.h.b16 %v7344
    %v7491 = vunpack.c.l.b16 %v7345
    %v7492 = vunpack.c.h.b16 %v7345
    %v7493 = vunpack.c.l.b16 %v7346
    %v7494 = vunpack.c.h.b16 %v7346
    %v7495 = vunpack.c.l.b16 %v7347
    %v7496 = vunpack.c.h.b16 %v7347
    %v7497 = vunpack.c.l.b16 %v7348
    %v7498 = vunpack.c.h.b16 %v7348
    %v7499 = vunpack.c.l.b16 %v7349
    %v7500 = vunpack.c.h.b16 %v7349
    %v7501 = vunpack.c.l.b16 %v7350
    %v7502 = vunpack.c.h.b16 %v7350
    %v7503 = vunpack.c.l.b16 %v7351
    %v7504 = vunpack.c.h.b16 %v7351
    %v7505 = vunpack.c.l.b16 %v7352
    %v7506 = vunpack.c.h.b16 %v7352
    %v7507 = vunpack.c.l.b16 %v7353
    %v7508 = vunpack.c.h.b16 %v7353
    %v7509 = vunpack.c.l.b16 %v7354
    %v7510 = vunpack.c.h.b16 %v7354
    %v7511 = vunpack.c.l.b16 %v7355
    %v7512 = vunpack.c.h.b16 %v7355
    %v7513 = vunpack.c.l.b16 %v7356
    %v7514 = vunpack.c.h.b16 %v7356
    %v7515 = vunpack.c.l.b16 %v7357
    %v7516 = vunpack.c.h.b16 %v7357
    %v7517 = vunpack.c.l.b16 %v7358
    %v7518 = vunpack.c.h.b16 %v7358
    %v7519 = vunpack.c.l.b16 %v7359
    %v7520 = vunpack.c.h.b16 %v7359
    %v7521 = vunpack.c.l.b16 %v7360
    %v7522 = vunpack.c.h.b16 %v7360
    %v7523 = vunpack.c.l.b16 %v7361
    %v7524 = vunpack.c.h.b16 %v7361
    %v7525 = vunpack.c.l.b16 %v7362
    %v7526 = vunpack.c.h.b16 %v7362
    %v7527 = vunpack.c.l.b16 %v7363
    %v7528 = vunpack.c.h.b16 %v7363
    %v7529 = vunpack.c.l.b16 %v7364
    %v7530 = vunpack.c.h.b16 %v7364
    %v7531 = vunpack.c.l.b16 %v7365
    %v7532 = vunpack.c.h.b16 %v7365
    %v7533 = vunpack.c.l.b16 %v7366
    %v7534 = vunpack.c.h.b16 %v7366
    %v7535 = vunpack.c.l.b16 %v7367
    %v7536 = vunpack.c.h.b16 %v7367
    %v7537 = vunpack.c.l.b16 %v7368
    %v7538 = vunpack.c.h.b16 %v7368
    %v7539 = vunpack.c.l.b16 %v7369
    %v7540 = vunpack.c.h.b16 %v7369
    %v7541 = vunpack.c.l.b16 %v7370
    %v7542 = vunpack.c.h.b16 %v7370
    %v7543 = vunpack.c.l.b16 %v7371
    %v7544 = vunpack.c.h.b16 %v7371
    %v7545 = vunpack.c.l.b16 %v7372
    %v7546 = vunpack.c.h.b16 %v7372
    %v7547 = vunpack.c.l.b16 %v7373
    %v7548 = vunpack.c.h.b16 %v7373
    %v7549 = vunpack.c.l.b16 %v7374
    %v7550 = vunpack.c.h.b16 %v7374
    %v7551 = vunpack.c.l.b16 %v7375
    %v7552 = vunpack.c.h.b16 %v7375
    %v7553 = vunpack.c.l.b16 %v7376
    %v7554 = vunpack.c.h.b16 %v7376
    %v7555 = vunpack.c.l.b16 %v7377
    %v7556 = vunpack.c.h.b16 %v7377
    %v7557 = vunpack.c.l.b16 %v7378
    %v7558 = vunpack.c.h.b16 %v7378
    %v7559 = vunpack.c.l.b16 %v7379
    %v7560 = vunpack.c.h.b16 %v7379
    %v7561 = vunpack.c.l.b16 %v7380
    %v7562 = vunpack.c.h.b16 %v7380
    %v7563 = vunpack.c.l.b16 %v7381
    %v7564 = vunpack.c.h.b16 %v7381
    %v7565 = vunpack.c.l.b16 %v7382
    %v7566 = vunpack.c.h.b16 %v7382
    %v7567 = vunpack.c.l.b16 %v7383
    %v7568 = vunpack.c.h.b16 %v7383
    %v7569 = vunpack.c.l.b16 %v7384
    %v7570 = vunpack.c.h.b16 %v7384
    %v7571 = vunpack.c.l.b16 %v7385
    %v7572 = vunpack.c.h.b16 %v7385
    %v7573 = vunpack.c.l.b16 %v7386
    %v7574 = vunpack.c.h.b16 %v7386
    %v7575 = vunpack.c.l.b16 %v7387
    %v7576 = vunpack.c.h.b16 %v7387
    %v7577 = vunpack.c.l.b16 %v7388
    %v7578 = vunpack.c.h.b16 %v7388
    %v7579 = vunpack.c.l.b16 %v7389
    %v7580 = vunpack.c.h.b16 %v7389
    %v7581 = vunpack.c.l.b16 %v7390
    %v7582 = vunpack.c.h.b16 %v7390
    %v7583 = vpack.c.b16 %v7457, %v7455
    %v7584 = vpack.c.b16 %v7458, %v7456
    %v7585 = vpack.c.b16 %v7461, %v7459
    %v7586 = vpack.c.b16 %v7462, %v7460
    %v7587 = vpack.c.b16 %v7465, %v7463
    %v7588 = vpack.c.b16 %v7466, %v7464
    %v7589 = vpack.c.b16 %v7469, %v7467
    %v7590 = vpack.c.b16 %v7470, %v7468
    %v7591 = vpack.c.b16 %v7473, %v7471
    %v7592 = vpack.c.b16 %v7474, %v7472
    %v7593 = vpack.c.b16 %v7477, %v7475
    %v7594 = vpack.c.b16 %v7478, %v7476
    %v7595 = vpack.c.b16 %v7481, %v7479
    %v7596 = vpack.c.b16 %v7482, %v7480
    %v7597 = vpack.c.b16 %v7485, %v7483
    %v7598 = vpack.c.b16 %v7486, %v7484
    %v7599 = vpack.c.b16 %v7489, %v7487
    %v7600 = vpack.c.b16 %v7490, %v7488
    %v7601 = vpack.c.b16 %v7493, %v7491
    %v7602 = vpack.c.b16 %v7494, %v7492
    %v7603 = vpack.c.b16 %v7497, %v7495
    %v7604 = vpack.c.b16 %v7498, %v7496
    %v7605 = vpack.c.b16 %v7501, %v7499
    %v7606 = vpack.c.b16 %v7502, %v7500
    %v7607 = vpack.c.b16 %v7505, %v7503
    %v7608 = vpack.c.b16 %v7506, %v7504
    %v7609 = vpack.c.b16 %v7509, %v7507
    %v7610 = vpack.c.b16 %v7510, %v7508
    %v7611 = vpack.c.b16 %v7513, %v7511
    %v7612 = vpack.c.b16 %v7514, %v7512
    %v7613 = vpack.c.b16 %v7517, %v7515
    %v7614 = vpack.c.b16 %v7518, %v7516
    %v7615 = vpack.c.b16 %v7521, %v7519
    %v7616 = vpack.c.b16 %v7522, %v7520
    %v7617 = vpack.c.b16 %v7525, %v7523
    %v7618 = vpack.c.b16 %v7526, %v7524
    %v7619 = vpack.c.b16 %v7529, %v7527
    %v7620 = vpack.c.b16 %v7530, %v7528
    %v7621 = vpack.c.b16 %v7533, %v7531
    %v7622 = vpack.c.b16 %v7534, %v7532
    %v7623 = vpack.c.b16 %v7537, %v7535
    %v7624 = vpack.c.b16 %v7538, %v7536
    %v7625 = vpack.c.b16 %v7541, %v7539
    %v7626 = vpack.c.b16 %v7542, %v7540
    %v7627 = vpack.c.b16 %v7545, %v7543
    %v7628 = vpack.c.b16 %v7546, %v7544
    %v7629 = vpack.c.b16 %v7549, %v7547
    %v7630 = vpack.c.b16 %v7550, %v7548
    %v7631 = vpack.c.b16 %v7553, %v7551
    %v7632 = vpack.c.b16 %v7554, %v7552
    %v7633 = vpack.c.b16 %v7557, %v7555
    %v7634 = vpack.c.b16 %v7558, %v7556
    %v7635 = vpack.c.b16 %v7561, %v7559
    %v7636 = vpack.c.b16 %v7562, %v7560
    %v7637 = vpack.c.b16 %v7565, %v7563
    %v7638 = vpack.c.b16 %v7566, %v7564
    %v7639 = vpack.c.b16 %v7569, %v7567
    %v7640 = vpack.c.b16 %v7570, %v7568
    %v7641 = vpack.c.b16 %v7573, %v7571
    %v7642 = vpack.c.b16 %v7574, %v7572
    %v7643 = vpack.c.b16 %v7577, %v7575
    %v7644 = vpack.c.b16 %v7578, %v7576
    %v7645 = vpack.c.b16 %v7581, %v7579
    %v7646 = vpack.c.b16 %v7582, %v7580
    %7711 = vmatprep.subr.bf16.mxu0 %v7584
    %7712 = vmatpush1.bf16.msra.mxu0 %v7583
    %7713 = vmatprep.subr.bf16.mxu0 %v7586
    %7714 = vmatpush1.bf16.msra.mxu0 %v7585
    %7715 = vmatprep.subr.bf16.mxu0 %v7588
    %7716 = vmatpush1.bf16.msra.mxu0 %v7587
    %7717 = vmatprep.subr.bf16.mxu0 %v7590
    %7718 = vmatpush1.bf16.msra.mxu0 %v7589
    %7719 = vmatprep.subr.bf16.mxu0 %v7592
    %7720 = vmatpush1.bf16.msra.mxu0 %v7591
    %7721 = vmatprep.subr.bf16.mxu0 %v7594
    %7722 = vmatpush1.bf16.msra.mxu0 %v7593
    %7723 = vmatprep.subr.bf16.mxu0 %v7596
    %7724 = vmatpush1.bf16.msra.mxu0 %v7595
    %7725 = vmatprep.subr.bf16.mxu0 %v7598
    %7726 = vmatpush1.bf16.msra.mxu0 %v7597
    %7727 = vmatprep.subr.bf16.mxu0 %v7600
    %7728 = vmatpush1.bf16.msra.mxu0 %v7599
    %7729 = vmatprep.subr.bf16.mxu0 %v7602
    %7730 = vmatpush1.bf16.msra.mxu0 %v7601
    %7731 = vmatprep.subr.bf16.mxu0 %v7604
    %7732 = vmatpush1.bf16.msra.mxu0 %v7603
    %7733 = vmatprep.subr.bf16.mxu0 %v7606
    %7734 = vmatpush1.bf16.msra.mxu0 %v7605
    %7735 = vmatprep.subr.bf16.mxu0 %v7608
    %7736 = vmatpush1.bf16.msra.mxu0 %v7607
    %7737 = vmatprep.subr.bf16.mxu0 %v7610
    %7738 = vmatpush1.bf16.msra.mxu0 %v7609
    %7739 = vmatprep.subr.bf16.mxu0 %v7612
    %7740 = vmatpush1.bf16.msra.mxu0 %v7611
    %7741 = vmatprep.subr.bf16.mxu0 %v7614
    %7742 = vmatpush1.bf16.msra.mxu0 %v7613
    %7743 = vmatprep.mubr.bf16.mxu0 %v7324
    %7744 = vmatmul.mubr.bf16.gmra.mrb[0].mxu0 %v7323
    %v7745 = vpop.f32.mrb[0].mxu0
    %v7746 = vadd.f32 0.0, %v7745
    %v7747 = vpop.f32.mrb[0].mxu0
    %v7748 = vadd.f32 0.0, %v7747
    %v7749 = vpop.f32.mrb[0].mxu0
    %v7750 = vadd.f32 0.0, %v7749
    %v7751 = vpop.f32.mrb[0].mxu0
    %v7752 = vadd.f32 0.0, %v7751
    %7753 = vdwg.mxu0
    %7754 = vmatprep.subr.bf16.mxu0 %v7616
    %7755 = vmatpush1.bf16.msra.mxu0 %v7615
    %7756 = vmatprep.subr.bf16.mxu0 %v7618
    %7757 = vmatpush1.bf16.msra.mxu0 %v7617
    %7758 = vmatprep.subr.bf16.mxu0 %v7620
    %7759 = vmatpush1.bf16.msra.mxu0 %v7619
    %7760 = vmatprep.subr.bf16.mxu0 %v7622
    %7761 = vmatpush1.bf16.msra.mxu0 %v7621
    %7762 = vmatprep.subr.bf16.mxu0 %v7624
    %7763 = vmatpush1.bf16.msra.mxu0 %v7623
    %7764 = vmatprep.subr.bf16.mxu0 %v7626
    %7765 = vmatpush1.bf16.msra.mxu0 %v7625
    %7766 = vmatprep.subr.bf16.mxu0 %v7628
    %7767 = vmatpush1.bf16.msra.mxu0 %v7627
    %7768 = vmatprep.subr.bf16.mxu0 %v7630
    %7769 = vmatpush1.bf16.msra.mxu0 %v7629
    %7770 = vmatprep.subr.bf16.mxu0 %v7632
    %7771 = vmatpush1.bf16.msra.mxu0 %v7631
    %7772 = vmatprep.subr.bf16.mxu0 %v7634
    %7773 = vmatpush1.bf16.msra.mxu0 %v7633
    %7774 = vmatprep.subr.bf16.mxu0 %v7636
    %7775 = vmatpush1.bf16.msra.mxu0 %v7635
    %7776 = vmatprep.subr.bf16.mxu0 %v7638
    %7777 = vmatpush1.bf16.msra.mxu0 %v7637
    %7778 = vmatprep.subr.bf16.mxu0 %v7640
    %7779 = vmatpush1.bf16.msra.mxu0 %v7639
    %7780 = vmatprep.subr.bf16.mxu0 %v7642
    %7781 = vmatpush1.bf16.msra.mxu0 %v7641
    %7782 = vmatprep.subr.bf16.mxu0 %v7644
    %7783 = vmatpush1.bf16.msra.mxu0 %v7643
    %7784 = vmatprep.subr.bf16.mxu0 %v7646
    %7785 = vmatpush1.bf16.msra.mxu0 %v7645
    %7786 = vmatprep.mubr.bf16.mxu0 %v7326
    %7787 = vmatmul.mubr.bf16.gmra.mrb[0].mxu0 %v7325
    %v7788 = vpop.f32.mrb[0].mxu0
    %v7789 = vadd.f32 %v7746, %v7788
    %v7790 = vpop.f32.mrb[0].mxu0
    %v7791 = vadd.f32 %v7748, %v7790
    %v7792 = vpop.f32.mrb[0].mxu0
    %v7793 = vadd.f32 %v7750, %v7792
    %v7794 = vpop.f32.mrb[0].mxu0
    %v7795 = vadd.f32 %v7752, %v7794
    %7796 = vdwg.mxu0
    %v7861 = vunpack.c.l.b16 %v7259
    %v7862 = vunpack.c.h.b16 %v7259
    %v7863 = vunpack.c.l.b16 %v7260
    %v7864 = vunpack.c.h.b16 %v7260
    %v7865 = vunpack.c.l.b16 %v7261
    %v7866 = vunpack.c.h.b16 %v7261
    %v7867 = vunpack.c.l.b16 %v7262
    %v7868 = vunpack.c.h.b16 %v7262
    %v7869 = vunpack.c.l.b16 %v7263
    %v7870 = vunpack.c.h.b16 %v7263
    %v7871 = vunpack.c.l.b16 %v7264
    %v7872 = vunpack.c.h.b16 %v7264
    %v7873 = vunpack.c.l.b16 %v7265
    %v7874 = vunpack.c.h.b16 %v7265
    %v7875 = vunpack.c.l.b16 %v7266
    %v7876 = vunpack.c.h.b16 %v7266
    %v7877 = vunpack.c.l.b16 %v7267
    %v7878 = vunpack.c.h.b16 %v7267
    %v7879 = vunpack.c.l.b16 %v7268
    %v7880 = vunpack.c.h.b16 %v7268
    %v7881 = vunpack.c.l.b16 %v7269
    %v7882 = vunpack.c.h.b16 %v7269
    %v7883 = vunpack.c.l.b16 %v7270
    %v7884 = vunpack.c.h.b16 %v7270
    %v7885 = vunpack.c.l.b16 %v7271
    %v7886 = vunpack.c.h.b16 %v7271
    %v7887 = vunpack.c.l.b16 %v7272
    %v7888 = vunpack.c.h.b16 %v7272
    %v7889 = vunpack.c.l.b16 %v7273
    %v7890 = vunpack.c.h.b16 %v7273
    %v7891 = vunpack.c.l.b16 %v7274
    %v7892 = vunpack.c.h.b16 %v7274
    %v7893 = vunpack.c.l.b16 %v7275
    %v7894 = vunpack.c.h.b16 %v7275
    %v7895 = vunpack.c.l.b16 %v7276
    %v7896 = vunpack.c.h.b16 %v7276
    %v7897 = vunpack.c.l.b16 %v7277
    %v7898 = vunpack.c.h.b16 %v7277
    %v7899 = vunpack.c.l.b16 %v7278
    %v7900 = vunpack.c.h.b16 %v7278
    %v7901 = vunpack.c.l.b16 %v7279
    %v7902 = vunpack.c.h.b16 %v7279
    %v7903 = vunpack.c.l.b16 %v7280
    %v7904 = vunpack.c.h.b16 %v7280
    %v7905 = vunpack.c.l.b16 %v7281
    %v7906 = vunpack.c.h.b16 %v7281
    %v7907 = vunpack.c.l.b16 %v7282
    %v7908 = vunpack.c.h.b16 %v7282
    %v7909 = vunpack.c.l.b16 %v7283
    %v7910 = vunpack.c.h.b16 %v7283
    %v7911 = vunpack.c.l.b16 %v7284
    %v7912 = vunpack.c.h.b16 %v7284
    %v7913 = vunpack.c.l.b16 %v7285
    %v7914 = vunpack.c.h.b16 %v7285
    %v7915 = vunpack.c.l.b16 %v7286
    %v7916 = vunpack.c.h.b16 %v7286
    %v7917 = vunpack.c.l.b16 %v7287
    %v7918 = vunpack.c.h.b16 %v7287
    %v7919 = vunpack.c.l.b16 %v7288
    %v7920 = vunpack.c.h.b16 %v7288
    %v7921 = vunpack.c.l.b16 %v7289
    %v7922 = vunpack.c.h.b16 %v7289
    %v7923 = vunpack.c.l.b16 %v7290
    %v7924 = vunpack.c.h.b16 %v7290
    %v7925 = vunpack.c.l.b16 %v7291
    %v7926 = vunpack.c.h.b16 %v7291
    %v7927 = vunpack.c.l.b16 %v7292
    %v7928 = vunpack.c.h.b16 %v7292
    %v7929 = vunpack.c.l.b16 %v7293
    %v7930 = vunpack.c.h.b16 %v7293
    %v7931 = vunpack.c.l.b16 %v7294
    %v7932 = vunpack.c.h.b16 %v7294
    %v7933 = vunpack.c.l.b16 %v7295
    %v7934 = vunpack.c.h.b16 %v7295
    %v7935 = vunpack.c.l.b16 %v7296
    %v7936 = vunpack.c.h.b16 %v7296
    %v7937 = vunpack.c.l.b16 %v7297
    %v7938 = vunpack.c.h.b16 %v7297
    %v7939 = vunpack.c.l.b16 %v7298
    %v7940 = vunpack.c.h.b16 %v7298
    %v7941 = vunpack.c.l.b16 %v7299
    %v7942 = vunpack.c.h.b16 %v7299
    %v7943 = vunpack.c.l.b16 %v7300
    %v7944 = vunpack.c.h.b16 %v7300
    %v7945 = vunpack.c.l.b16 %v7301
    %v7946 = vunpack.c.h.b16 %v7301
    %v7947 = vunpack.c.l.b16 %v7302
    %v7948 = vunpack.c.h.b16 %v7302
    %v7949 = vunpack.c.l.b16 %v7303
    %v7950 = vunpack.c.h.b16 %v7303
    %v7951 = vunpack.c.l.b16 %v7304
    %v7952 = vunpack.c.h.b16 %v7304
    %v7953 = vunpack.c.l.b16 %v7305
    %v7954 = vunpack.c.h.b16 %v7305
    %v7955 = vunpack.c.l.b16 %v7306
    %v7956 = vunpack.c.h.b16 %v7306
    %v7957 = vunpack.c.l.b16 %v7307
    %v7958 = vunpack.c.h.b16 %v7307
    %v7959 = vunpack.c.l.b16 %v7308
    %v7960 = vunpack.c.h.b16 %v7308
    %v7961 = vunpack.c.l.b16 %v7309
    %v7962 = vunpack.c.h.b16 %v7309
    %v7963 = vunpack.c.l.b16 %v7310
    %v7964 = vunpack.c.h.b16 %v7310
    %v7965 = vunpack.c.l.b16 %v7311
    %v7966 = vunpack.c.h.b16 %v7311
    %v7967 = vunpack.c.l.b16 %v7312
    %v7968 = vunpack.c.h.b16 %v7312
    %v7969 = vunpack.c.l.b16 %v7313
    %v7970 = vunpack.c.h.b16 %v7313
    %v7971 = vunpack.c.l.b16 %v7314
    %v7972 = vunpack.c.h.b16 %v7314
    %v7973 = vunpack.c.l.b16 %v7315
    %v7974 = vunpack.c.h.b16 %v7315
    %v7975 = vunpack.c.l.b16 %v7316
    %v7976 = vunpack.c.h.b16 %v7316
    %v7977 = vunpack.c.l.b16 %v7317
    %v7978 = vunpack.c.h.b16 %v7317
    %v7979 = vunpack.c.l.b16 %v7318
    %v7980 = vunpack.c.h.b16 %v7318
    %v7981 = vunpack.c.l.b16 %v7319
    %v7982 = vunpack.c.h.b16 %v7319
    %v7983 = vunpack.c.l.b16 %v7320
    %v7984 = vunpack.c.h.b16 %v7320
    %v7985 = vunpack.c.l.b16 %v7321
    %v7986 = vunpack.c.h.b16 %v7321
    %v7987 = vunpack.c.l.b16 %v7322
    %v7988 = vunpack.c.h.b16 %v7322
    %v7989 = vpack.c.b16 %v7863, %v7861
    %v7990 = vpack.c.b16 %v7864, %v7862
    %v7991 = vpack.c.b16 %v7867, %v7865
    %v7992 = vpack.c.b16 %v7868, %v7866
    %v7993 = vpack.c.b16 %v7871, %v7869
    %v7994 = vpack.c.b16 %v7872, %v7870
    %v7995 = vpack.c.b16 %v7875, %v7873
    %v7996 = vpack.c.b16 %v7876, %v7874
    %v7997 = vpack.c.b16 %v7879, %v7877
    %v7998 = vpack.c.b16 %v7880, %v7878
    %v7999 = vpack.c.b16 %v7883, %v7881
    %v8000 = vpack.c.b16 %v7884, %v7882
    %v8001 = vpack.c.b16 %v7887, %v7885
    %v8002 = vpack.c.b16 %v7888, %v7886
    %v8003 = vpack.c.b16 %v7891, %v7889
    %v8004 = vpack.c.b16 %v7892, %v7890
    %v8005 = vpack.c.b16 %v7895, %v7893
    %v8006 = vpack.c.b16 %v7896, %v7894
    %v8007 = vpack.c.b16 %v7899, %v7897
    %v8008 = vpack.c.b16 %v7900, %v7898
    %v8009 = vpack.c.b16 %v7903, %v7901
    %v8010 = vpack.c.b16 %v7904, %v7902
    %v8011 = vpack.c.b16 %v7907, %v7905
    %v8012 = vpack.c.b16 %v7908, %v7906
    %v8013 = vpack.c.b16 %v7911, %v7909
    %v8014 = vpack.c.b16 %v7912, %v7910
    %v8015 = vpack.c.b16 %v7915, %v7913
    %v8016 = vpack.c.b16 %v7916, %v7914
    %v8017 = vpack.c.b16 %v7919, %v7917
    %v8018 = vpack.c.b16 %v7920, %v7918
    %v8019 = vpack.c.b16 %v7923, %v7921
    %v8020 = vpack.c.b16 %v7924, %v7922
    %v8021 = vpack.c.b16 %v7927, %v7925
    %v8022 = vpack.c.b16 %v7928, %v7926
    %v8023 = vpack.c.b16 %v7931, %v7929
    %v8024 = vpack.c.b16 %v7932, %v7930
    %v8025 = vpack.c.b16 %v7935, %v7933
    %v8026 = vpack.c.b16 %v7936, %v7934
    %v8027 = vpack.c.b16 %v7939, %v7937
    %v8028 = vpack.c.b16 %v7940, %v7938
    %v8029 = vpack.c.b16 %v7943, %v7941
    %v8030 = vpack.c.b16 %v7944, %v7942
    %v8031 = vpack.c.b16 %v7947, %v7945
    %v8032 = vpack.c.b16 %v7948, %v7946
    %v8033 = vpack.c.b16 %v7951, %v7949
    %v8034 = vpack.c.b16 %v7952, %v7950
    %v8035 = vpack.c.b16 %v7955, %v7953
    %v8036 = vpack.c.b16 %v7956, %v7954
    %v8037 = vpack.c.b16 %v7959, %v7957
    %v8038 = vpack.c.b16 %v7960, %v7958
    %v8039 = vpack.c.b16 %v7963, %v7961
    %v8040 = vpack.c.b16 %v7964, %v7962
    %v8041 = vpack.c.b16 %v7967, %v7965
    %v8042 = vpack.c.b16 %v7968, %v7966
    %v8043 = vpack.c.b16 %v7971, %v7969
    %v8044 = vpack.c.b16 %v7972, %v7970
    %v8045 = vpack.c.b16 %v7975, %v7973
    %v8046 = vpack.c.b16 %v7976, %v7974
    %v8047 = vpack.c.b16 %v7979, %v7977
    %v8048 = vpack.c.b16 %v7980, %v7978
    %v8049 = vpack.c.b16 %v7983, %v7981
    %v8050 = vpack.c.b16 %v7984, %v7982
    %v8051 = vpack.c.b16 %v7987, %v7985
    %v8052 = vpack.c.b16 %v7988, %v7986
    %8117 = vmatprep.subr.bf16.mxu0 %v7990
    %8118 = vmatpush1.bf16.msra.mxu0 %v7989
    %8119 = vmatprep.subr.bf16.mxu0 %v7992
    %8120 = vmatpush1.bf16.msra.mxu0 %v7991
    %8121 = vmatprep.subr.bf16.mxu0 %v7994
    %8122 = vmatpush1.bf16.msra.mxu0 %v7993
    %8123 = vmatprep.subr.bf16.mxu0 %v7996
    %8124 = vmatpush1.bf16.msra.mxu0 %v7995
    %8125 = vmatprep.subr.bf16.mxu0 %v7998
    %8126 = vmatpush1.bf16.msra.mxu0 %v7997
    %8127 = vmatprep.subr.bf16.mxu0 %v8000
    %8128 = vmatpush1.bf16.msra.mxu0 %v7999
    %8129 = vmatprep.subr.bf16.mxu0 %v8002
    %8130 = vmatpush1.bf16.msra.mxu0 %v8001
    %8131 = vmatprep.subr.bf16.mxu0 %v8004
    %8132 = vmatpush1.bf16.msra.mxu0 %v8003
    %8133 = vmatprep.subr.bf16.mxu0 %v8006
    %8134 = vmatpush1.bf16.msra.mxu0 %v8005
    %8135 = vmatprep.subr.bf16.mxu0 %v8008
    %8136 = vmatpush1.bf16.msra.mxu0 %v8007
    %8137 = vmatprep.subr.bf16.mxu0 %v8010
    %8138 = vmatpush1.bf16.msra.mxu0 %v8009
    %8139 = vmatprep.subr.bf16.mxu0 %v8012
    %8140 = vmatpush1.bf16.msra.mxu0 %v8011
    %8141 = vmatprep.subr.bf16.mxu0 %v8014
    %8142 = vmatpush1.bf16.msra.mxu0 %v8013
    %8143 = vmatprep.subr.bf16.mxu0 %v8016
    %8144 = vmatpush1.bf16.msra.mxu0 %v8015
    %8145 = vmatprep.subr.bf16.mxu0 %v8018
    %8146 = vmatpush1.bf16.msra.mxu0 %v8017
    %8147 = vmatprep.subr.bf16.mxu0 %v8020
    %8148 = vmatpush1.bf16.msra.mxu0 %v8019
    %8149 = vmatprep.mubr.bf16.mxu0 %v4385
    %8150 = vmatmul.mubr.bf16.gmra.mrb[0].mxu0 %v4381
    %v8151 = vpop.f32.mrb[0].mxu0
    %v8152 = vadd.f32 %v7789, %v8151
    %v8153 = vpop.f32.mrb[0].mxu0
    %v8154 = vadd.f32 %v7791, %v8153
    %v8155 = vpop.f32.mrb[0].mxu0
    %v8156 = vadd.f32 %v7793, %v8155
    %v8157 = vpop.f32.mrb[0].mxu0
    %v8158 = vadd.f32 %v7795, %v8157
    %8159 = vdwg.mxu0
    %8160 = vmatprep.subr.bf16.mxu0 %v8022
    %8161 = vmatpush1.bf16.msra.mxu0 %v8021
    %8162 = vmatprep.subr.bf16.mxu0 %v8024
    %8163 = vmatpush1.bf16.msra.mxu0 %v8023
    %8164 = vmatprep.subr.bf16.mxu0 %v8026
    %8165 = vmatpush1.bf16.msra.mxu0 %v8025
    %8166 = vmatprep.subr.bf16.mxu0 %v8028
    %8167 = vmatpush1.bf16.msra.mxu0 %v8027
    %8168 = vmatprep.subr.bf16.mxu0 %v8030
    %8169 = vmatpush1.bf16.msra.mxu0 %v8029
    %8170 = vmatprep.subr.bf16.mxu0 %v8032
    %8171 = vmatpush1.bf16.msra.mxu0 %v8031
    %8172 = vmatprep.subr.bf16.mxu0 %v8034
    %8173 = vmatpush1.bf16.msra.mxu0 %v8033
    %8174 = vmatprep.subr.bf16.mxu0 %v8036
    %8175 = vmatpush1.bf16.msra.mxu0 %v8035
    %8176 = vmatprep.subr.bf16.mxu0 %v8038
    %8177 = vmatpush1.bf16.msra.mxu0 %v8037
    %8178 = vmatprep.subr.bf16.mxu0 %v8040
    %8179 = vmatpush1.bf16.msra.mxu0 %v8039
    %8180 = vmatprep.subr.bf16.mxu0 %v8042
    %8181 = vmatpush1.bf16.msra.mxu0 %v8041
    %8182 = vmatprep.subr.bf16.mxu0 %v8044
    %8183 = vmatpush1.bf16.msra.mxu0 %v8043
    %8184 = vmatprep.subr.bf16.mxu0 %v8046
    %8185 = vmatpush1.bf16.msra.mxu0 %v8045
    %8186 = vmatprep.subr.bf16.mxu0 %v8048
    %8187 = vmatpush1.bf16.msra.mxu0 %v8047
    %8188 = vmatprep.subr.bf16.mxu0 %v8050
    %8189 = vmatpush1.bf16.msra.mxu0 %v8049
    %8190 = vmatprep.subr.bf16.mxu0 %v8052
    %8191 = vmatpush1.bf16.msra.mxu0 %v8051
    %8192 = vmatprep.mubr.bf16.mxu0 %v4393
    %8193 = vmatmul.mubr.bf16.gmra.mrb[0].mxu0 %v4389
    %v8194 = vpop.f32.mrb[0].mxu0
    %v8195 = vadd.f32 %v8152, %v8194
    %v8196 = vpop.f32.mrb[0].mxu0
    %v8197 = vadd.f32 %v8154, %v8196
    %v8198 = vpop.f32.mrb[0].mxu0
    %v8199 = vadd.f32 %v8156, %v8198
    %v8200 = vpop.f32.mrb[0].mxu0
    %v8201 = vadd.f32 %v8158, %v8200
    %8202 = vdwg.mxu0
    %v8203 = vpack.c.bf16 %v7126, %v7122
    %v8204 = vpack.c.bf16 %v7128, %v7124
    %v8205 = vpack.c.bf16 %v7255, %v7251
    %v8206 = vpack.c.bf16 %v7257, %v7253
    %v8207 = vld [vmem:[#allocation8 + $0x400] sm:$0xff]
    %v8208 = vld [vmem:[#allocation8 + $0x408] sm:$0xff]
    %v8209 = vld [vmem:[#allocation8 + $0x410] sm:$0xff]
    %v8210 = vld [vmem:[#allocation8 + $0x418] sm:$0xff]
    %v8211 = vld [vmem:[#allocation8 + $0x420] sm:$0xff]
    %v8212 = vld [vmem:[#allocation8 + $0x428] sm:$0xff]
    %v8213 = vld [vmem:[#allocation8 + $0x430] sm:$0xff]
    %v8214 = vld [vmem:[#allocation8 + $0x438] sm:$0xff]
    %v8215 = vld [vmem:[#allocation8 + $0x440] sm:$0xff]
    %v8216 = vld [vmem:[#allocation8 + $0x448] sm:$0xff]
    %v8217 = vld [vmem:[#allocation8 + $0x450] sm:$0xff]
    %v8218 = vld [vmem:[#allocation8 + $0x458] sm:$0xff]
    %v8219 = vld [vmem:[#allocation8 + $0x460] sm:$0xff]
    %v8220 = vld [vmem:[#allocation8 + $0x468] sm:$0xff]
    %v8221 = vld [vmem:[#allocation8 + $0x470] sm:$0xff]
    %v8222 = vld [vmem:[#allocation8 + $0x478] sm:$0xff]
    %v8223 = vld [vmem:[#allocation8 + $0x480] sm:$0xff]
    %v8224 = vld [vmem:[#allocation8 + $0x488] sm:$0xff]
    %v8225 = vld [vmem:[#allocation8 + $0x490] sm:$0xff]
    %v8226 = vld [vmem:[#allocation8 + $0x498] sm:$0xff]
    %v8227 = vld [vmem:[#allocation8 + $0x4a0] sm:$0xff]
    %v8228 = vld [vmem:[#allocation8 + $0x4a8] sm:$0xff]
    %v8229 = vld [vmem:[#allocation8 + $0x4b0] sm:$0xff]
    %v8230 = vld [vmem:[#allocation8 + $0x4b8] sm:$0xff]
    %v8231 = vld [vmem:[#allocation8 + $0x4c0] sm:$0xff]
    %v8232 = vld [vmem:[#allocation8 + $0x4c8] sm:$0xff]
    %v8233 = vld [vmem:[#allocation8 + $0x4d0] sm:$0xff]
    %v8234 = vld [vmem:[#allocation8 + $0x4d8] sm:$0xff]
    %v8235 = vld [vmem:[#allocation8 + $0x4e0] sm:$0xff]
    %v8236 = vld [vmem:[#allocation8 + $0x4e8] sm:$0xff]
    %v8237 = vld [vmem:[#allocation8 + $0x4f0] sm:$0xff]
    %v8238 = vld [vmem:[#allocation8 + $0x4f8] sm:$0xff]
    %v8239 = vld [vmem:[#allocation8 + $0x500] sm:$0xff]
    %v8240 = vld [vmem:[#allocation8 + $0x508] sm:$0xff]
    %v8241 = vld [vmem:[#allocation8 + $0x510] sm:$0xff]
    %v8242 = vld [vmem:[#allocation8 + $0x518] sm:$0xff]
    %v8243 = vld [vmem:[#allocation8 + $0x520] sm:$0xff]
    %v8244 = vld [vmem:[#allocation8 + $0x528] sm:$0xff]
    %v8245 = vld [vmem:[#allocation8 + $0x530] sm:$0xff]
    %v8246 = vld [vmem:[#allocation8 + $0x538] sm:$0xff]
    %v8247 = vld [vmem:[#allocation8 + $0x540] sm:$0xff]
    %v8248 = vld [vmem:[#allocation8 + $0x548] sm:$0xff]
    %v8249 = vld [vmem:[#allocation8 + $0x550] sm:$0xff]
    %v8250 = vld [vmem:[#allocation8 + $0x558] sm:$0xff]
    %v8251 = vld [vmem:[#allocation8 + $0x560] sm:$0xff]
    %v8252 = vld [vmem:[#allocation8 + $0x568] sm:$0xff]
    %v8253 = vld [vmem:[#allocation8 + $0x570] sm:$0xff]
    %v8254 = vld [vmem:[#allocation8 + $0x578] sm:$0xff]
    %v8255 = vld [vmem:[#allocation8 + $0x580] sm:$0xff]
    %v8256 = vld [vmem:[#allocation8 + $0x588] sm:$0xff]
    %v8257 = vld [vmem:[#allocation8 + $0x590] sm:$0xff]
    %v8258 = vld [vmem:[#allocation8 + $0x598] sm:$0xff]
    %v8259 = vld [vmem:[#allocation8 + $0x5a0] sm:$0xff]
    %v8260 = vld [vmem:[#allocation8 + $0x5a8] sm:$0xff]
    %v8261 = vld [vmem:[#allocation8 + $0x5b0] sm:$0xff]
    %v8262 = vld [vmem:[#allocation8 + $0x5b8] sm:$0xff]
    %v8263 = vld [vmem:[#allocation8 + $0x5c0] sm:$0xff]
    %v8264 = vld [vmem:[#allocation8 + $0x5c8] sm:$0xff]
    %v8265 = vld [vmem:[#allocation8 + $0x5d0] sm:$0xff]
    %v8266 = vld [vmem:[#allocation8 + $0x5d8] sm:$0xff]
    %v8267 = vld [vmem:[#allocation8 + $0x5e0] sm:$0xff]
    %v8268 = vld [vmem:[#allocation8 + $0x5e8] sm:$0xff]
    %v8269 = vld [vmem:[#allocation8 + $0x5f0] sm:$0xff]
    %v8270 = vld [vmem:[#allocation8 + $0x5f8] sm:$0xff]
    %v8335 = vunpack.c.l.b16 %v8207
    %v8336 = vunpack.c.h.b16 %v8207
    %v8337 = vunpack.c.l.b16 %v8208
    %v8338 = vunpack.c.h.b16 %v8208
    %v8339 = vunpack.c.l.b16 %v8209
    %v8340 = vunpack.c.h.b16 %v8209
    %v8341 = vunpack.c.l.b16 %v8210
    %v8342 = vunpack.c.h.b16 %v8210
    %v8343 = vunpack.c.l.b16 %v8211
    %v8344 = vunpack.c.h.b16 %v8211
    %v8345 = vunpack.c.l.b16 %v8212
    %v8346 = vunpack.c.h.b16 %v8212
    %v8347 = vunpack.c.l.b16 %v8213
    %v8348 = vunpack.c.h.b16 %v8213
    %v8349 = vunpack.c.l.b16 %v8214
    %v8350 = vunpack.c.h.b16 %v8214
    %v8351 = vunpack.c.l.b16 %v8215
    %v8352 = vunpack.c.h.b16 %v8215
    %v8353 = vunpack.c.l.b16 %v8216
    %v8354 = vunpack.c.h.b16 %v8216
    %v8355 = vunpack.c.l.b16 %v8217
    %v8356 = vunpack.c.h.b16 %v8217
    %v8357 = vunpack.c.l.b16 %v8218
    %v8358 = vunpack.c.h.b16 %v8218
    %v8359 = vunpack.c.l.b16 %v8219
    %v8360 = vunpack.c.h.b16 %v8219
    %v8361 = vunpack.c.l.b16 %v8220
    %v8362 = vunpack.c.h.b16 %v8220
    %v8363 = vunpack.c.l.b16 %v8221
    %v8364 = vunpack.c.h.b16 %v8221
    %v8365 = vunpack.c.l.b16 %v8222
    %v8366 = vunpack.c.h.b16 %v8222
    %v8367 = vunpack.c.l.b16 %v8223
    %v8368 = vunpack.c.h.b16 %v8223
    %v8369 = vunpack.c.l.b16 %v8224
    %v8370 = vunpack.c.h.b16 %v8224
    %v8371 = vunpack.c.l.b16 %v8225
    %v8372 = vunpack.c.h.b16 %v8225
    %v8373 = vunpack.c.l.b16 %v8226
    %v8374 = vunpack.c.h.b16 %v8226
    %v8375 = vunpack.c.l.b16 %v8227
    %v8376 = vunpack.c.h.b16 %v8227
    %v8377 = vunpack.c.l.b16 %v8228
    %v8378 = vunpack.c.h.b16 %v8228
    %v8379 = vunpack.c.l.b16 %v8229
    %v8380 = vunpack.c.h.b16 %v8229
    %v8381 = vunpack.c.l.b16 %v8230
    %v8382 = vunpack.c.h.b16 %v8230
    %v8383 = vunpack.c.l.b16 %v8231
    %v8384 = vunpack.c.h.b16 %v8231
    %v8385 = vunpack.c.l.b16 %v8232
    %v8386 = vunpack.c.h.b16 %v8232
    %v8387 = vunpack.c.l.b16 %v8233
    %v8388 = vunpack.c.h.b16 %v8233
    %v8389 = vunpack.c.l.b16 %v8234
    %v8390 = vunpack.c.h.b16 %v8234
    %v8391 = vunpack.c.l.b16 %v8235
    %v8392 = vunpack.c.h.b16 %v8235
    %v8393 = vunpack.c.l.b16 %v8236
    %v8394 = vunpack.c.h.b16 %v8236
    %v8395 = vunpack.c.l.b16 %v8237
    %v8396 = vunpack.c.h.b16 %v8237
    %v8397 = vunpack.c.l.b16 %v8238
    %v8398 = vunpack.c.h.b16 %v8238
    %v8399 = vunpack.c.l.b16 %v8239
    %v8400 = vunpack.c.h.b16 %v8239
    %v8401 = vunpack.c.l.b16 %v8240
    %v8402 = vunpack.c.h.b16 %v8240
    %v8403 = vunpack.c.l.b16 %v8241
    %v8404 = vunpack.c.h.b16 %v8241
    %v8405 = vunpack.c.l.b16 %v8242
    %v8406 = vunpack.c.h.b16 %v8242
    %v8407 = vunpack.c.l.b16 %v8243
    %v8408 = vunpack.c.h.b16 %v8243
    %v8409 = vunpack.c.l.b16 %v8244
    %v8410 = vunpack.c.h.b16 %v8244
    %v8411 = vunpack.c.l.b16 %v8245
    %v8412 = vunpack.c.h.b16 %v8245
    %v8413 = vunpack.c.l.b16 %v8246
    %v8414 = vunpack.c.h.b16 %v8246
    %v8415 = vunpack.c.l.b16 %v8247
    %v8416 = vunpack.c.h.b16 %v8247
    %v8417 = vunpack.c.l.b16 %v8248
    %v8418 = vunpack.c.h.b16 %v8248
    %v8419 = vunpack.c.l.b16 %v8249
    %v8420 = vunpack.c.h.b16 %v8249
    %v8421 = vunpack.c.l.b16 %v8250
    %v8422 = vunpack.c.h.b16 %v8250
    %v8423 = vunpack.c.l.b16 %v8251
    %v8424 = vunpack.c.h.b16 %v8251
    %v8425 = vunpack.c.l.b16 %v8252
    %v8426 = vunpack.c.h.b16 %v8252
    %v8427 = vunpack.c.l.b16 %v8253
    %v8428 = vunpack.c.h.b16 %v8253
    %v8429 = vunpack.c.l.b16 %v8254
    %v8430 = vunpack.c.h.b16 %v8254
    %v8431 = vunpack.c.l.b16 %v8255
    %v8432 = vunpack.c.h.b16 %v8255
    %v8433 = vunpack.c.l.b16 %v8256
    %v8434 = vunpack.c.h.b16 %v8256
    %v8435 = vunpack.c.l.b16 %v8257
    %v8436 = vunpack.c.h.b16 %v8257
    %v8437 = vunpack.c.l.b16 %v8258
    %v8438 = vunpack.c.h.b16 %v8258
    %v8439 = vunpack.c.l.b16 %v8259
    %v8440 = vunpack.c.h.b16 %v8259
    %v8441 = vunpack.c.l.b16 %v8260
    %v8442 = vunpack.c.h.b16 %v8260
    %v8443 = vunpack.c.l.b16 %v8261
    %v8444 = vunpack.c.h.b16 %v8261
    %v8445 = vunpack.c.l.b16 %v8262
    %v8446 = vunpack.c.h.b16 %v8262
    %v8447 = vunpack.c.l.b16 %v8263
    %v8448 = vunpack.c.h.b16 %v8263
    %v8449 = vunpack.c.l.b16 %v8264
    %v8450 = vunpack.c.h.b16 %v8264
    %v8451 = vunpack.c.l.b16 %v8265
    %v8452 = vunpack.c.h.b16 %v8265
    %v8453 = vunpack.c.l.b16 %v8266
    %v8454 = vunpack.c.h.b16 %v8266
    %v8455 = vunpack.c.l.b16 %v8267
    %v8456 = vunpack.c.h.b16 %v8267
    %v8457 = vunpack.c.l.b16 %v8268
    %v8458 = vunpack.c.h.b16 %v8268
    %v8459 = vunpack.c.l.b16 %v8269
    %v8460 = vunpack.c.h.b16 %v8269
    %v8461 = vunpack.c.l.b16 %v8270
    %v8462 = vunpack.c.h.b16 %v8270
    %v8463 = vpack.c.b16 %v8337, %v8335
    %v8464 = vpack.c.b16 %v8338, %v8336
    %v8465 = vpack.c.b16 %v8341, %v8339
    %v8466 = vpack.c.b16 %v8342, %v8340
    %v8467 = vpack.c.b16 %v8345, %v8343
    %v8468 = vpack.c.b16 %v8346, %v8344
    %v8469 = vpack.c.b16 %v8349, %v8347
    %v8470 = vpack.c.b16 %v8350, %v8348
    %v8471 = vpack.c.b16 %v8353, %v8351
    %v8472 = vpack.c.b16 %v8354, %v8352
    %v8473 = vpack.c.b16 %v8357, %v8355
    %v8474 = vpack.c.b16 %v8358, %v8356
    %v8475 = vpack.c.b16 %v8361, %v8359
    %v8476 = vpack.c.b16 %v8362, %v8360
    %v8477 = vpack.c.b16 %v8365, %v8363
    %v8478 = vpack.c.b16 %v8366, %v8364
    %v8479 = vpack.c.b16 %v8369, %v8367
    %v8480 = vpack.c.b16 %v8370, %v8368
    %v8481 = vpack.c.b16 %v8373, %v8371
    %v8482 = vpack.c.b16 %v8374, %v8372
    %v8483 = vpack.c.b16 %v8377, %v8375
    %v8484 = vpack.c.b16 %v8378, %v8376
    %v8485 = vpack.c.b16 %v8381, %v8379
    %v8486 = vpack.c.b16 %v8382, %v8380
    %v8487 = vpack.c.b16 %v8385, %v8383
    %v8488 = vpack.c.b16 %v8386, %v8384
    %v8489 = vpack.c.b16 %v8389, %v8387
    %v8490 = vpack.c.b16 %v8390, %v8388
    %v8491 = vpack.c.b16 %v8393, %v8391
    %v8492 = vpack.c.b16 %v8394, %v8392
    %v8493 = vpack.c.b16 %v8397, %v8395
    %v8494 = vpack.c.b16 %v8398, %v8396
    %v8495 = vpack.c.b16 %v8401, %v8399
    %v8496 = vpack.c.b16 %v8402, %v8400
    %v8497 = vpack.c.b16 %v8405, %v8403
    %v8498 = vpack.c.b16 %v8406, %v8404
    %v8499 = vpack.c.b16 %v8409, %v8407
    %v8500 = vpack.c.b16 %v8410, %v8408
    %v8501 = vpack.c.b16 %v8413, %v8411
    %v8502 = vpack.c.b16 %v8414, %v8412
    %v8503 = vpack.c.b16 %v8417, %v8415
    %v8504 = vpack.c.b16 %v8418, %v8416
    %v8505 = vpack.c.b16 %v8421, %v8419
    %v8506 = vpack.c.b16 %v8422, %v8420
    %v8507 = vpack.c.b16 %v8425, %v8423
    %v8508 = vpack.c.b16 %v8426, %v8424
    %v8509 = vpack.c.b16 %v8429, %v8427
    %v8510 = vpack.c.b16 %v8430, %v8428
    %v8511 = vpack.c.b16 %v8433, %v8431
    %v8512 = vpack.c.b16 %v8434, %v8432
    %v8513 = vpack.c.b16 %v8437, %v8435
    %v8514 = vpack.c.b16 %v8438, %v8436
    %v8515 = vpack.c.b16 %v8441, %v8439
    %v8516 = vpack.c.b16 %v8442, %v8440
    %v8517 = vpack.c.b16 %v8445, %v8443
    %v8518 = vpack.c.b16 %v8446, %v8444
    %v8519 = vpack.c.b16 %v8449, %v8447
    %v8520 = vpack.c.b16 %v8450, %v8448
    %v8521 = vpack.c.b16 %v8453, %v8451
    %v8522 = vpack.c.b16 %v8454, %v8452
    %v8523 = vpack.c.b16 %v8457, %v8455
    %v8524 = vpack.c.b16 %v8458, %v8456
    %v8525 = vpack.c.b16 %v8461, %v8459
    %v8526 = vpack.c.b16 %v8462, %v8460
    %8591 = vmatprep.subr.bf16.mxu0 %v8464
    %8592 = vmatpush1.bf16.msra.mxu0 %v8463
    %8593 = vmatprep.subr.bf16.mxu0 %v8466
    %8594 = vmatpush1.bf16.msra.mxu0 %v8465
    %8595 = vmatprep.subr.bf16.mxu0 %v8468
    %8596 = vmatpush1.bf16.msra.mxu0 %v8467
    %8597 = vmatprep.subr.bf16.mxu0 %v8470
    %8598 = vmatpush1.bf16.msra.mxu0 %v8469
    %8599 = vmatprep.subr.bf16.mxu0 %v8472
    %8600 = vmatpush1.bf16.msra.mxu0 %v8471
    %8601 = vmatprep.subr.bf16.mxu0 %v8474
    %8602 = vmatpush1.bf16.msra.mxu0 %v8473
    %8603 = vmatprep.subr.bf16.mxu0 %v8476
    %8604 = vmatpush1.bf16.msra.mxu0 %v8475
    %8605 = vmatprep.subr.bf16.mxu0 %v8478
    %8606 = vmatpush1.bf16.msra.mxu0 %v8477
    %8607 = vmatprep.subr.bf16.mxu0 %v8480
    %8608 = vmatpush1.bf16.msra.mxu0 %v8479
    %8609 = vmatprep.subr.bf16.mxu0 %v8482
    %8610 = vmatpush1.bf16.msra.mxu0 %v8481
    %8611 = vmatprep.subr.bf16.mxu0 %v8484
    %8612 = vmatpush1.bf16.msra.mxu0 %v8483
    %8613 = vmatprep.subr.bf16.mxu0 %v8486
    %8614 = vmatpush1.bf16.msra.mxu0 %v8485
    %8615 = vmatprep.subr.bf16.mxu0 %v8488
    %8616 = vmatpush1.bf16.msra.mxu0 %v8487
    %8617 = vmatprep.subr.bf16.mxu0 %v8490
    %8618 = vmatpush1.bf16.msra.mxu0 %v8489
    %8619 = vmatprep.subr.bf16.mxu0 %v8492
    %8620 = vmatpush1.bf16.msra.mxu0 %v8491
    %8621 = vmatprep.subr.bf16.mxu0 %v8494
    %8622 = vmatpush1.bf16.msra.mxu0 %v8493
    %8623 = vmatprep.mubr.bf16.mxu0 %v8204
    %8624 = vmatmul.mubr.bf16.gmra.mrb[0].mxu0 %v8203
    %v8625 = vpop.f32.mrb[0].mxu0
    %v8626 = vadd.f32 0.0, %v8625
    %v8627 = vpop.f32.mrb[0].mxu0
    %v8628 = vadd.f32 0.0, %v8627
    %v8629 = vpop.f32.mrb[0].mxu0
    %v8630 = vadd.f32 0.0, %v8629
    %v8631 = vpop.f32.mrb[0].mxu0
    %v8632 = vadd.f32 0.0, %v8631
    %8633 = vdwg.mxu0
    %8634 = vmatprep.subr.bf16.mxu0 %v8496
    %8635 = vmatpush1.bf16.msra.mxu0 %v8495
    %8636 = vmatprep.subr.bf16.mxu0 %v8498
    %8637 = vmatpush1.bf16.msra.mxu0 %v8497
    %8638 = vmatprep.subr.bf16.mxu0 %v8500
    %8639 = vmatpush1.bf16.msra.mxu0 %v8499
    %8640 = vmatprep.subr.bf16.mxu0 %v8502
    %8641 = vmatpush1.bf16.msra.mxu0 %v8501
    %8642 = vmatprep.subr.bf16.mxu0 %v8504
    %8643 = vmatpush1.bf16.msra.mxu0 %v8503
    %8644 = vmatprep.subr.bf16.mxu0 %v8506
    %8645 = vmatpush1.bf16.msra.mxu0 %v8505
    %8646 = vmatprep.subr.bf16.mxu0 %v8508
    %8647 = vmatpush1.bf16.msra.mxu0 %v8507
    %8648 = vmatprep.subr.bf16.mxu0 %v8510
    %8649 = vmatpush1.bf16.msra.mxu0 %v8509
    %8650 = vmatprep.subr.bf16.mxu0 %v8512
    %8651 = vmatpush1.bf16.msra.mxu0 %v8511
    %8652 = vmatprep.subr.bf16.mxu0 %v8514
    %8653 = vmatpush1.bf16.msra.mxu0 %v8513
    %8654 = vmatprep.subr.bf16.mxu0 %v8516
    %8655 = vmatpush1.bf16.msra.mxu0 %v8515
    %8656 = vmatprep.subr.bf16.mxu0 %v8518
    %8657 = vmatpush1.bf16.msra.mxu0 %v8517
    %8658 = vmatprep.subr.bf16.mxu0 %v8520
    %8659 = vmatpush1.bf16.msra.mxu0 %v8519
    %8660 = vmatprep.subr.bf16.mxu0 %v8522
    %8661 = vmatpush1.bf16.msra.mxu0 %v8521
    %8662 = vmatprep.subr.bf16.mxu0 %v8524
    %8663 = vmatpush1.bf16.msra.mxu0 %v8523
    %8664 = vmatprep.subr.bf16.mxu0 %v8526
    %8665 = vmatpush1.bf16.msra.mxu0 %v8525
    %8666 = vmatprep.mubr.bf16.mxu0 %v8206
    %8667 = vmatmul.mubr.bf16.gmra.mrb[0].mxu0 %v8205
    %v8668 = vpop.f32.mrb[0].mxu0
    %v8669 = vadd.f32 %v8626, %v8668
    %v8670 = vpop.f32.mrb[0].mxu0
    %v8671 = vadd.f32 %v8628, %v8670
    %v8672 = vpop.f32.mrb[0].mxu0
    %v8673 = vadd.f32 %v8630, %v8672
    %v8674 = vpop.f32.mrb[0].mxu0
    %v8675 = vadd.f32 %v8632, %v8674
    %8676 = vdwg.mxu0
    %v8677 = vadd.f32 %v8195, %v8669
    %v8678 = vadd.f32 %v8197, %v8671
    %v8679 = vadd.f32 %v8199, %v8673
    %v8680 = vadd.f32 %v8201, %v8675
    %v8681 = vld [vmem:[#allocation10] sm:$0x3]
    %v8683 = vlaneseq
    %v8684 = vshrl.u32 %v8683, 7
    %v8685 = vsub.s32 0, %v8684
    %v8686 = vrot.slane %v8681, %v8685
    %v8687 = vlaneseq
    %v8688 = vshrl.u32 %v8687, 7
    %v8689 = vsub.s32 1, %v8688
    %v8690 = vrot.slane %v8681, %v8689
    %v8693 = vadd.f32 %v8677, %v8686
    %v8694 = vadd.f32 %v8678, %v8690
    %v8695 = vadd.f32 %v8679, %v8686
    %v8696 = vadd.f32 %v8680, %v8690
    %v8697 = vmax.f32 %v8693, 0.0
    %v8698 = vmax.f32 %v8694, 0.0
    %v8699 = vmax.f32 %v8695, 0.0
    %v8700 = vmax.f32 %v8696, 0.0
    %v8701 = vpack.c.bf16 %v8699, %v8697
    %v8702 = vpack.c.bf16 %v8700, %v8698
    %v8703 = vld [vmem:[#allocation11] sm:$0xf]
    %v8704 = vld [vmem:[#allocation11 + $0x4] sm:$0xf]
    %v8705 = vld [vmem:[#allocation11 + $0x8] sm:$0xf]
    %v8706 = vld [vmem:[#allocation11 + $0xc] sm:$0xf]
    %v8707 = vld [vmem:[#allocation11 + $0x10] sm:$0xf]
    %v8708 = vld [vmem:[#allocation11 + $0x14] sm:$0xf]
    %v8709 = vld [vmem:[#allocation11 + $0x18] sm:$0xf]
    %v8710 = vld [vmem:[#allocation11 + $0x1c] sm:$0xf]
    %v8711 = vld [vmem:[#allocation11 + $0x20] sm:$0xf]
    %v8712 = vld [vmem:[#allocation11 + $0x24] sm:$0xf]
    %v8713 = vld [vmem:[#allocation11 + $0x28] sm:$0xf]
    %v8714 = vld [vmem:[#allocation11 + $0x2c] sm:$0xf]
    %v8715 = vld [vmem:[#allocation11 + $0x30] sm:$0xf]
    %v8716 = vld [vmem:[#allocation11 + $0x34] sm:$0xf]
    %v8717 = vld [vmem:[#allocation11 + $0x38] sm:$0xf]
    %v8718 = vld [vmem:[#allocation11 + $0x3c] sm:$0xf]
    %v8719 = vld [vmem:[#allocation11 + $0x40] sm:$0xf]
    %v8720 = vld [vmem:[#allocation11 + $0x44] sm:$0xf]
    %v8721 = vld [vmem:[#allocation11 + $0x48] sm:$0xf]
    %v8722 = vld [vmem:[#allocation11 + $0x4c] sm:$0xf]
    %v8723 = vld [vmem:[#allocation11 + $0x50] sm:$0xf]
    %v8724 = vld [vmem:[#allocation11 + $0x54] sm:$0xf]
    %v8725 = vld [vmem:[#allocation11 + $0x58] sm:$0xf]
    %v8726 = vld [vmem:[#allocation11 + $0x5c] sm:$0xf]
    %v8727 = vld [vmem:[#allocation11 + $0x60] sm:$0xf]
    %v8728 = vld [vmem:[#allocation11 + $0x64] sm:$0xf]
    %v8729 = vld [vmem:[#allocation11 + $0x68] sm:$0xf]
    %v8730 = vld [vmem:[#allocation11 + $0x6c] sm:$0xf]
    %v8731 = vld [vmem:[#allocation11 + $0x70] sm:$0xf]
    %v8732 = vld [vmem:[#allocation11 + $0x74] sm:$0xf]
    %v8733 = vld [vmem:[#allocation11 + $0x78] sm:$0xf]
    %v8734 = vld [vmem:[#allocation11 + $0x7c] sm:$0xf]
    %v8735 = vld [vmem:[#allocation13] sm:$0x1]
    %v8737 = vlaneseq
    %v8738 = vshrl.u32 %v8737, 7
    %v8739 = vsub.s32 0, %v8738
    %v8740 = vrot.slane %v8735, %v8739
    %v8774 = vunpack.c.l.b16 %v8703
    %v8775 = vunpack.c.l.b16 %v8704
    %v8776 = vunpack.c.l.b16 %v8705
    %v8777 = vunpack.c.l.b16 %v8706
    %v8778 = vunpack.c.l.b16 %v8707
    %v8779 = vunpack.c.l.b16 %v8708
    %v8780 = vunpack.c.l.b16 %v8709
    %v8781 = vunpack.c.l.b16 %v8710
    %v8782 = vunpack.c.l.b16 %v8711
    %v8783 = vunpack.c.l.b16 %v8712
    %v8784 = vunpack.c.l.b16 %v8713
    %v8785 = vunpack.c.l.b16 %v8714
    %v8786 = vunpack.c.l.b16 %v8715
    %v8787 = vunpack.c.l.b16 %v8716
    %v8788 = vunpack.c.l.b16 %v8717
    %v8789 = vunpack.c.l.b16 %v8718
    %v8790 = vunpack.c.l.b16 %v8719
    %v8791 = vunpack.c.l.b16 %v8720
    %v8792 = vunpack.c.l.b16 %v8721
    %v8793 = vunpack.c.l.b16 %v8722
    %v8794 = vunpack.c.l.b16 %v8723
    %v8795 = vunpack.c.l.b16 %v8724
    %v8796 = vunpack.c.l.b16 %v8725
    %v8797 = vunpack.c.l.b16 %v8726
    %v8798 = vunpack.c.l.b16 %v8727
    %v8799 = vunpack.c.l.b16 %v8728
    %v8800 = vunpack.c.l.b16 %v8729
    %v8801 = vunpack.c.l.b16 %v8730
    %v8802 = vunpack.c.l.b16 %v8731
    %v8803 = vunpack.c.l.b16 %v8732
    %v8804 = vunpack.c.l.b16 %v8733
    %v8805 = vunpack.c.l.b16 %v8734
    %v8806 = vpack.c.b16 %v8775, %v8774
    %v8807 = vpack.c.b16 %v8777, %v8776
    %v8808 = vpack.c.b16 %v8779, %v8778
    %v8809 = vpack.c.b16 %v8781, %v8780
    %v8810 = vpack.c.b16 %v8783, %v8782
    %v8811 = vpack.c.b16 %v8785, %v8784
    %v8812 = vpack.c.b16 %v8787, %v8786
    %v8813 = vpack.c.b16 %v8789, %v8788
    %v8814 = vpack.c.b16 %v8791, %v8790
    %v8815 = vpack.c.b16 %v8793, %v8792
    %v8816 = vpack.c.b16 %v8795, %v8794
    %v8817 = vpack.c.b16 %v8797, %v8796
    %v8818 = vpack.c.b16 %v8799, %v8798
    %v8819 = vpack.c.b16 %v8801, %v8800
    %v8820 = vpack.c.b16 %v8803, %v8802
    %v8821 = vpack.c.b16 %v8805, %v8804
    %8838 = vmatprep.subr.bf16.mxu0 0
    %8839 = vmatpush1.bf16.msra.mxu0 %v8806
    %8840 = vmatprep.subr.bf16.mxu0 0
    %8841 = vmatpush1.bf16.msra.mxu0 %v8807
    %8842 = vmatprep.subr.bf16.mxu0 0
    %8843 = vmatpush1.bf16.msra.mxu0 %v8808
    %8844 = vmatprep.subr.bf16.mxu0 0
    %8845 = vmatpush1.bf16.msra.mxu0 %v8809
    %8846 = vmatprep.subr.bf16.mxu0 0
    %8847 = vmatpush1.bf16.msra.mxu0 %v8810
    %8848 = vmatprep.subr.bf16.mxu0 0
    %8849 = vmatpush1.bf16.msra.mxu0 %v8811
    %8850 = vmatprep.subr.bf16.mxu0 0
    %8851 = vmatpush1.bf16.msra.mxu0 %v8812
    %8852 = vmatprep.subr.bf16.mxu0 0
    %8853 = vmatpush1.bf16.msra.mxu0 %v8813
    %8854 = vmatprep.subr.bf16.mxu0 0
    %8855 = vmatpush1.bf16.msra.mxu0 %v8814
    %8856 = vmatprep.subr.bf16.mxu0 0
    %8857 = vmatpush1.bf16.msra.mxu0 %v8815
    %8858 = vmatprep.subr.bf16.mxu0 0
    %8859 = vmatpush1.bf16.msra.mxu0 %v8816
    %8860 = vmatprep.subr.bf16.mxu0 0
    %8861 = vmatpush1.bf16.msra.mxu0 %v8817
    %8862 = vmatprep.subr.bf16.mxu0 0
    %8863 = vmatpush1.bf16.msra.mxu0 %v8818
    %8864 = vmatprep.subr.bf16.mxu0 0
    %8865 = vmatpush1.bf16.msra.mxu0 %v8819
    %8866 = vmatprep.subr.bf16.mxu0 0
    %8867 = vmatpush1.bf16.msra.mxu0 %v8820
    %8868 = vmatprep.subr.bf16.mxu0 0
    %8869 = vmatpush1.bf16.msra.mxu0 %v8821
    %8870 = vmatprep.mubr.bf16.mxu0 %v8702
    %8871 = vmatmul.mubr.bf16.gmra.mrb[0].mxu0 %v8701
    %v8872 = vpop.f32.mrb[0].mxu0
    %v8873 = vadd.f32 %v8740, %v8872
    %v8874 = vpop.f32.mrb[0].mxu0
    %v8875 = vpop.f32.mrb[0].mxu0
    %v8876 = vadd.f32 %v8740, %v8875
    %v8877 = vpop.f32.mrb[0].mxu0
    %8878 = vdwg.mxu0
    %8879 = vst [vmem:[%s19] sm:$0xff] %v8873
    %8880 = vst [vmem:[%s19 + $0x8] sm:$0xf] %v8876
    // Predicated region
    $region102: #{multimodal_encoder_forward.1} parent=1 // pred_check
      _
    $region103: #{multimodal_encoder_forward.1} parent=1 // pred_check_branch
      %8882 = sbr.rel (0) target = $region105
    $region104: #{multimodal_encoder_forward.1} parent=1 // pred_region
      %s8884 = ssub.s32 1024, 1024
      %8885 = vsyncadd [#allocation4], %s8884
      %s8886 = sshll.u32 [#allocation14], 4
      %s8887 = int_to_ptr.vmem [resolvable:$true] %s8886
      %8892 = dma.vmem_to_hbm [thread:$0]  %s8887, 1024, %s18, [#allocation4], 512, 512, 32
    $region105: #{multimodal_encoder_forward.1} parent=1 // pred_fallthru
      _
    // Predicated region
    $region106: #{multimodal_encoder_forward.1} parent=1 // pred_check
      _
    $region107: #{multimodal_encoder_forward.1} parent=1 // pred_check_branch
      %8894 = sbr.rel (0) target = $region109
    $region108: #{multimodal_encoder_forward.1} parent=1 // pred_region
      _
    $region109: #{multimodal_encoder_forward.1} parent=1 // pred_fallthru
      _
    // Predicated region
    $region110: #{multimodal_encoder_forward.1} parent=1 // pred_check
      _
    $region111: #{multimodal_encoder_forward.1} parent=1 // pred_check_branch
      %8896 = sbr.rel (0) target = $region113
    $region112: #{multimodal_encoder_forward.1} parent=1 // pred_region
      %8897 = dma.done [#allocation4], 1024
    $region113: #{multimodal_encoder_forward.1} parent=1 // pred_fallthru
      _
    // Predicated region
    $region114: #{multimodal_encoder_forward.1} parent=1 // pred_check
      _
    $region115: #{multimodal_encoder_forward.1} parent=1 // pred_check_branch
      %8899 = sbr.rel (0) target = $region117
    $region116: #{multimodal_encoder_forward.1} parent=1 // pred_region
      _
    $region117: #{multimodal_encoder_forward.1} parent=1 // pred_fallthru
      _
    %8900 = vsyncpa [#allocation3], 1
    %8901 = vsyncpa [#allocation6], 1
    %8902 = vsyncpa [#allocation9], 1
    %8903 = vsyncpa [#allocation12], 1
    %8904 = vsyncpa [#allocation4], 1

</llo_original>
